<compile_context>
chip_gen: v5e
topology: v5e:2x2
jax: 0.10.0
libtpu: 0.0.40
codegen_flags: <defaults>
</compile_context>

<pallas_src>
import functools
import math

import jax
import jax.numpy as jnp
from jax.experimental import pallas as pl
from jax.experimental.pallas import tpu as pltpu

EPS = 1e-6  # LayerNorm eps, added to the (unbiased) std as in the reference.


def _layernorm(x, gamma, beta):
    """Matches the PyTorch reference: unbiased std, eps added to the std.

    Two-pass mean/var, all statistics in f32 (even when matmuls run in bf16).
    """
    d = x.shape[-1]
    mean = jnp.sum(x, axis=-1, keepdims=True) * (1.0 / d)
    xc = x - mean
    var = jnp.sum(xc * xc, axis=-1, keepdims=True) * (1.0 / (d - 1))
    std = jnp.sqrt(var)
    return gamma * xc / (std + EPS) + beta


# ------------------------------ fused decoder layer ------------------------------

def decoder_layer_kernel(x_ref, mem_ref, tmask_ref, smask_ref,
                         g0_ref, be0_ref, g1_ref, be1_ref, g2_ref, be2_ref,
                         sa_wq, sa_bq, sa_wk, sa_bk, sa_wv, sa_bv, sa_wo, sa_bo,
                         ca_wq, ca_bq, ca_wk, ca_bk, ca_wv, ca_bv, ca_wo, ca_bo,
                         ff_w1, ff_b1, ff_w2, ff_b2,
                         o_ref, *, num_heads, compute_dtype):
    BT, T, D = x_ref.shape
    S = mem_ref.shape[1]
    H = num_heads
    dk = D // H
    scale = 1.0 / math.sqrt(dk)
    cdt = compute_dtype
    exact = jnp.dtype(cdt) == jnp.dtype(jnp.float32)   # validation build

    # Residual stream stays f32 in VMEM/vregs for the whole layer.
    x = x_ref[...].astype(jnp.float32).reshape(BT * T, D)
    mem = mem_ref[...].reshape(BT * S, D)              # already compute dtype

    # int8 keep-masks -> bool ONCE (no f32 expansion, no per-head compares).
    tkeep = tmask_ref[...] != 0                        # (BT, T, T)
    skeep = smask_ref[...] != 0                        # (BT, T, S)

    def mha(resid, q_in_c, kv_in_c, keep, s_len,
            wq_r, bq_r, wk_r, bk_r, wv_r, bv_r, wo_r, bo_r):
        # resid: (BT*T, D) f32; q_in_c: (BT*T, D) cdt; kv_in_c: (BT*s_len, D) cdt.
        # Projections: bf16 operands, f32 accumulation; 1/sqrt(dk) folded into Q
        # on the f32 side (before the cast), bias adds in f32.
        q = (jnp.dot(q_in_c, wq_r[...], preferred_element_type=jnp.float32)
             + bq_r[...]) * scale
        k = jnp.dot(kv_in_c, wk_r[...], preferred_element_type=jnp.float32) + bk_r[...]
        v = jnp.dot(kv_in_c, wv_r[...], preferred_element_type=jnp.float32) + bv_r[...]

        qb = q.astype(cdt).reshape(BT, T, D)                       # (BT, T, D)
        # Hoist the K transpose: one whole-K minor-dim swap instead of per-head
        # transposed contractions inside the head loop.
        kT = jnp.swapaxes(k.reshape(BT, s_len, D), 1, 2).astype(cdt)   # (BT, D, S)
        vb = v.astype(cdt).reshape(BT, s_len, D)                   # (BT, S, D)

        ctx_parts = []
        for h in range(H):                          # static unroll over heads
            lo, hi = h * dk, (h + 1) * dk
            sc = jnp.einsum('btd,bds->bts', qb[:, :, lo:hi], kT[:, lo:hi, :],
                            preferred_element_type=jnp.float32)
            sc = jnp.where(keep, sc, -1e9)          # mask fill in f32
            sc = sc - jnp.max(sc, axis=-1, keepdims=True)
            p = jnp.exp(sc)
            denom = jnp.sum(p, axis=-1, keepdims=True)
            if exact:
                p = p / denom                       # exact for 1e-4 validation
            else:
                p = p * pl.reciprocal(denom, approx=True)   # EUP, ~free
            # Probabilities cast to bf16 for the P@V matmul; f32 accumulation.
            ctx_parts.append(
                jnp.einsum('bts,bsd->btd', p.astype(cdt), vb[:, :, lo:hi],
                           preferred_element_type=jnp.float32))

        # Lane-dense concat of head contexts + a SINGLE K=D output projection
        # (replaces H small-K matmuls and H full-width VPU adds).
        ctx = jnp.concatenate(ctx_parts, axis=-1).astype(cdt).reshape(BT * T, D)
        out = jnp.dot(ctx, wo_r[...], preferred_element_type=jnp.float32) + bo_r[...]
        return resid + out                          # residual (dropout = identity)

    # sublayer 0: x + self_attn(norm(x), norm(x), norm(x), tgt_mask)
    xn0 = _layernorm(x, g0_ref[...], be0_ref[...]).astype(cdt)
    x = mha(x, xn0, xn0, tkeep, T,
            sa_wq, sa_bq, sa_wk, sa_bk, sa_wv, sa_bv, sa_wo, sa_bo)

    # sublayer 1: x + src_attn(norm(x), memory, memory, src_mask)
    xn1 = _layernorm(x, g1_ref[...], be1_ref[...]).astype(cdt)
    x = mha(x, xn1, mem, skeep, S,
            ca_wq, ca_bq, ca_wk, ca_bk, ca_wv, ca_bv, ca_wo, ca_bo)

    # sublayer 2: x + FFN(norm(x))
    xn2 = _layernorm(x, g2_ref[...], be2_ref[...]).astype(cdt)
    hdn = jnp.maximum(
        jnp.dot(xn2, ff_w1[...], preferred_element_type=jnp.float32) + ff_b1[...],
        0.0)
    x = x + (jnp.dot(hdn.astype(cdt), ff_w2[...], preferred_element_type=jnp.float32)
             + ff_b2[...])

    o_ref[...] = x.reshape(BT, T, D).astype(o_ref.dtype)


# ------------------------------ wrapper / tiling ----------------------------------

def _pick_batch_tile(B, T, target_rows=512, num_cores=1):
    """Fold as many batch rows per program as fit `target_rows` of matmul M.

    Single-TC chips (v5e/v6e): the grid is a serial loop, so just take the
    biggest tile that fits (fewer ~0.35us grid steps, better weight reuse).
    Multi-TC chips (v7x): keep the step count a multiple of the core count so
    the "parallel" batch axis shards evenly across TensorCores.
    """
    best = 1
    for bt in range(1, B + 1):
        if B % bt:
            continue
        if bt * T > target_rows:
            continue
        if num_cores > 1 and (B // bt) % num_cores != 0:
            continue
        best = bt
    return best


def _device_defaults():
    """Best-effort per-generation tuning: (#TensorCores on the grid, VMEM limit)."""
    num_cores, vmem = 1, 48 * 1024 * 1024            # conservative fallback
    try:
        kind = jax.devices()[0].device_kind.lower()
        if "v7" in kind:                             # 2 TCs, 64 MiB VMEM per TC
            num_cores, vmem = 2, 40 * 1024 * 1024
        elif "v5" in kind or "v6" in kind:           # 1 TC, 128 MiB VMEM
            num_cores, vmem = 1, 96 * 1024 * 1024
    except Exception:
        pass
    return num_cores, vmem


def decoder_layer(x, memory, src_mask, tgt_mask, params, num_heads,
                  batch_tile=None, compute_dtype=jnp.bfloat16):
    B, T, D = x.shape
    S = memory.shape[1]
    num_cores, vmem_limit = _device_defaults()
    BT = (_pick_batch_tile(B, T, num_cores=num_cores)
          if batch_tile is None else batch_tile)
    assert B % BT == 0

    # int8 keep-masks: 4x less mask DMA / VMEM than f32, kept int8 in-kernel.
    tgt_mask_i8 = (tgt_mask > 0).astype(jnp.int8)
    src_mask_i8 = (src_mask > 0).astype(jnp.int8)

    sa, ca, ff = params["self_attn"], params["src_attn"], params["ff"]
    dff = ff["w1"].shape[1]

    # Weights (and the K/V source `memory`) cast ONCE wrapper-side: halves
    # weight DMA + VMEM when compute_dtype is bf16.  Biases/LN params stay f32.
    wc = lambda a: a.astype(compute_dtype)
    operands = (
        x, memory.astype(compute_dtype), tgt_mask_i8, src_mask_i8,
        params["ln0"]["gamma"], params["ln0"]["beta"],
        params["ln1"]["gamma"], params["ln1"]["beta"],
        params["ln2"]["gamma"], params["ln2"]["beta"],
        wc(sa["wq"]), sa["bq"], wc(sa["wk"]), sa["bk"],
        wc(sa["wv"]), sa["bv"], wc(sa["wo"]), sa["bo"],
        wc(ca["wq"]), ca["bq"], wc(ca["wk"]), ca["bk"],
        wc(ca["wv"]), ca["bv"], wc(ca["wo"]), ca["bo"],
        wc(ff["w1"]), ff["b1"], wc(ff["w2"]), ff["b2"],
    )

    kernel = functools.partial(decoder_layer_kernel, num_heads=num_heads,
                               compute_dtype=compute_dtype)

    def build(weight_buffers):
        batched = lambda *shp: pl.BlockSpec((BT,) + shp, lambda b: (b, 0, 0))

        def shared(*shp):
            # Invariant weights/biases: constant index map -> single buffer is
            # enough; the default 2-deep pipeline would only double their VMEM.
            kw = {}
            if weight_buffers is not None:
                kw["pipeline_mode"] = pl.Buffered(weight_buffers)
            return pl.BlockSpec(shp, lambda b: (0,) * len(shp), **kw)

        return pl.pallas_call(
            kernel,
            out_shape=jax.ShapeDtypeStruct((B, T, D), x.dtype),
            grid=(B // BT,),
            in_specs=[
                batched(T, D),                    # x
                batched(S, D),                    # memory (compute dtype)
                batched(T, T),                    # tgt mask (int8)
                batched(T, S),                    # src mask (int8)
                shared(1, D), shared(1, D),       # ln0 gamma, beta
                shared(1, D), shared(1, D),       # ln1 gamma, beta
                shared(1, D), shared(1, D),       # ln2 gamma, beta
                shared(D, D), shared(1, D),       # self-attn Wq, bq
                shared(D, D), shared(1, D),       # Wk, bk
                shared(D, D), shared(1, D),       # Wv, bv
                shared(D, D), shared(1, D),       # Wo, bo
                shared(D, D), shared(1, D),       # src-attn Wq, bq
                shared(D, D), shared(1, D),       # Wk, bk
                shared(D, D), shared(1, D),       # Wv, bv
                shared(D, D), shared(1, D),       # Wo, bo
                shared(D, dff), shared(1, dff),   # FFN W1, b1
                shared(dff, D), shared(1, D),     # FFN W2, b2
            ],
            out_specs=batched(T, D),
            compiler_params=pltpu.CompilerParams(
                dimension_semantics=("parallel",),
                vmem_limit_bytes=vmem_limit,
            ),
        )

    if hasattr(pl, "Buffered"):
        try:
            return build(1)(*operands)
        except Exception:
            pass  # pipeline_mode unsupported in this jax -> default buffering
    return build(None)(*operands)


# ----------------------------------- reference -----------------------------------

def ref_decoder_layer(x, memory, src_mask, tgt_mask, params, num_heads):
    def ln(z, p):
        d = z.shape[-1]
        mean = z.mean(-1, keepdims=True)
        var = ((z - mean) ** 2).sum(-1, keepdims=True) / (d - 1)
        std = jnp.sqrt(var)
        return p["gamma"] * (z - mean) / (std + EPS) + p["beta"]

    def mha(q_in, kv_in, mask, p):
        q = q_in @ p["wq"] + p["bq"]
        k = kv_in @ p["wk"] + p["bk"]
        v = kv_in @ p["wv"] + p["bv"]
        B, T, D = q.shape
        S = k.shape[1]
        dk = D // num_heads
        qh = q.reshape(B, T, num_heads, dk).transpose(0, 2, 1, 3)
        kh = k.reshape(B, S, num_heads, dk).transpose(0, 2, 1, 3)
        vh = v.reshape(B, S, num_heads, dk).transpose(0, 2, 1, 3)
        scores = jnp.einsum('bhtd,bhsd->bhts', qh, kh) * (1.0 / math.sqrt(dk))
        scores = jnp.where(mask[:, None] > 0, scores, -1e9)
        pa = jax.nn.softmax(scores, axis=-1)
        out = jnp.einsum('bhts,bhsd->bhtd', pa, vh)
        out = out.transpose(0, 2, 1, 3).reshape(B, T, D)
        return out @ p["wo"] + p["bo"]

    x = x + mha(ln(x, params["ln0"]), ln(x, params["ln0"]), tgt_mask,
                params["self_attn"])
    x = x + mha(ln(x, params["ln1"]), memory, src_mask, params["src_attn"])
    xn = ln(x, params["ln2"])
    ff = jnp.maximum(xn @ params["ff"]["w1"] + params["ff"]["b1"], 0.0)
    ff = ff @ params["ff"]["w2"] + params["ff"]["b2"]
    return x + ff


# ------------------------------------- main ---------------------------------------

def make_params(key, D, dff):
    ks = jax.random.split(key, 6)
    n = lambda k, shp: (0.02 * jax.random.normal(k, shp)).astype(jnp.float32)

    def attn_params(k0):
        kk = jax.random.split(k0, 8)
        return {"wq": n(kk[0], (D, D)), "bq": n(kk[1], (1, D)),
                "wk": n(kk[2], (D, D)), "bk": n(kk[3], (1, D)),
                "wv": n(kk[4], (D, D)), "bv": n(kk[5], (1, D)),
                "wo": n(kk[6], (D, D)), "bo": n(kk[7], (1, D))}

    def ln_params():
        return {"gamma": jnp.ones((1, D), jnp.float32),
                "beta": jnp.zeros((1, D), jnp.float32)}

    return {
        "self_attn": attn_params(ks[0]),
        "src_attn": attn_params(ks[1]),
        "ff": {"w1": n(ks[2], (D, dff)), "b1": n(ks[3], (1, dff)),
               "w2": n(ks[4], (dff, D)), "b2": n(ks[5], (1, D))},
        "ln0": ln_params(), "ln1": ln_params(), "ln2": ln_params(),
    }


if __name__ == "__main__":
    B, T, S, D, H, DFF = 2, 8, 8, 32, 4, 64

    key = jax.random.PRNGKey(0)
    kx, km, kp = jax.random.split(key, 3)
    x = jax.random.normal(kx, (B, T, D), jnp.float32)
    memory = jax.random.normal(km, (B, S, D), jnp.float32)

    # tgt mask: causal; src mask: all ones (no padding) — 1 = keep.
    tgt_mask = jnp.tril(jnp.ones((T, T), jnp.float32))[None].repeat(B, axis=0)
    src_mask = jnp.ones((B, T, S), jnp.float32)

    params = make_params(kp, D, DFF)

    ref = jax.block_until_ready(
        ref_decoder_layer(x, memory, src_mask, tgt_mask, params, H))

    # f32 path: exact-math validation against the reference (tight tolerance).
    out_f32 = jax.block_until_ready(
        decoder_layer(x, memory, src_mask, tgt_mask, params, H,
                      compute_dtype=jnp.float32))
    assert out_f32.shape == (B, T, D)
    assert jnp.allclose(out_f32, ref, atol=1e-4, rtol=1e-4), (
        f"f32 path max abs diff {jnp.max(jnp.abs(out_f32 - ref))}")

    # bf16 path (production default): bf16 MXU operands, f32 accumulation.
    out_bf16 = jax.block_until_ready(
        decoder_layer(x, memory, src_mask, tgt_mask, params, H))
    assert out_bf16.shape == (B, T, D)
    assert jnp.allclose(out_bf16, ref, atol=2e-2, rtol=2e-2), (
        f"bf16 path max abs diff {jnp.max(jnp.abs(out_bf16 - ref))}")

    print("KERNEL_OK")
</pallas_src>

<mosaic_0001>
module attributes {stable_mosaic.version = 11 : i64} {
  func.func @decoder_layer_kernel(%arg0: i32, %arg1: memref<2x8x32xf32, #tpu.memory_space<vmem>>, %arg2: memref<2x8x32xf32, #tpu.memory_space<vmem>>, %arg3: memref<2x8x8xi8, #tpu.memory_space<vmem>>, %arg4: memref<2x8x8xi8, #tpu.memory_space<vmem>>, %arg5: memref<1x32xf32, #tpu.memory_space<vmem>>, %arg6: memref<1x32xf32, #tpu.memory_space<vmem>>, %arg7: memref<1x32xf32, #tpu.memory_space<vmem>>, %arg8: memref<1x32xf32, #tpu.memory_space<vmem>>, %arg9: memref<1x32xf32, #tpu.memory_space<vmem>>, %arg10: memref<1x32xf32, #tpu.memory_space<vmem>>, %arg11: memref<32x32xf32, #tpu.memory_space<vmem>>, %arg12: memref<1x32xf32, #tpu.memory_space<vmem>>, %arg13: memref<32x32xf32, #tpu.memory_space<vmem>>, %arg14: memref<1x32xf32, #tpu.memory_space<vmem>>, %arg15: memref<32x32xf32, #tpu.memory_space<vmem>>, %arg16: memref<1x32xf32, #tpu.memory_space<vmem>>, %arg17: memref<32x32xf32, #tpu.memory_space<vmem>>, %arg18: memref<1x32xf32, #tpu.memory_space<vmem>>, %arg19: memref<32x32xf32, #tpu.memory_space<vmem>>, %arg20: memref<1x32xf32, #tpu.memory_space<vmem>>, %arg21: memref<32x32xf32, #tpu.memory_space<vmem>>, %arg22: memref<1x32xf32, #tpu.memory_space<vmem>>, %arg23: memref<32x32xf32, #tpu.memory_space<vmem>>, %arg24: memref<1x32xf32, #tpu.memory_space<vmem>>, %arg25: memref<32x32xf32, #tpu.memory_space<vmem>>, %arg26: memref<1x32xf32, #tpu.memory_space<vmem>>, %arg27: memref<32x64xf32, #tpu.memory_space<vmem>>, %arg28: memref<1x64xf32, #tpu.memory_space<vmem>>, %arg29: memref<64x32xf32, #tpu.memory_space<vmem>>, %arg30: memref<1x32xf32, #tpu.memory_space<vmem>>, %arg31: memref<2x8x32xf32, #tpu.memory_space<vmem>>) attributes {dimension_semantics = [#tpu.dimension_semantics<parallel>], iteration_bounds = array<i64: 1>, scalar_prefetch = 0 : i64, scratch_operands = 0 : i64, tpu.core_type = #tpu.core_type<tc>, window_params = [{transform_indices = @transform_0, window_bounds = array<i64: 2, 8, 32>}, {transform_indices = @transform_1, window_bounds = array<i64: 2, 8, 32>}, {transform_indices = @transform_2, window_bounds = array<i64: 2, 8, 8>}, {transform_indices = @transform_3, window_bounds = array<i64: 2, 8, 8>}, {pipeline_mode = #tpu.pipeline_mode<synchronous>, transform_indices = @transform_4, window_bounds = array<i64: 1, 32>}, {pipeline_mode = #tpu.pipeline_mode<synchronous>, transform_indices = @transform_5, window_bounds = array<i64: 1, 32>}, {pipeline_mode = #tpu.pipeline_mode<synchronous>, transform_indices = @transform_6, window_bounds = array<i64: 1, 32>}, {pipeline_mode = #tpu.pipeline_mode<synchronous>, transform_indices = @transform_7, window_bounds = array<i64: 1, 32>}, {pipeline_mode = #tpu.pipeline_mode<synchronous>, transform_indices = @transform_8, window_bounds = array<i64: 1, 32>}, {pipeline_mode = #tpu.pipeline_mode<synchronous>, transform_indices = @transform_9, window_bounds = array<i64: 1, 32>}, {pipeline_mode = #tpu.pipeline_mode<synchronous>, transform_indices = @transform_10, window_bounds = array<i64: 32, 32>}, {pipeline_mode = #tpu.pipeline_mode<synchronous>, transform_indices = @transform_11, window_bounds = array<i64: 1, 32>}, {pipeline_mode = #tpu.pipeline_mode<synchronous>, transform_indices = @transform_12, window_bounds = array<i64: 32, 32>}, {pipeline_mode = #tpu.pipeline_mode<synchronous>, transform_indices = @transform_13, window_bounds = array<i64: 1, 32>}, {pipeline_mode = #tpu.pipeline_mode<synchronous>, transform_indices = @transform_14, window_bounds = array<i64: 32, 32>}, {pipeline_mode = #tpu.pipeline_mode<synchronous>, transform_indices = @transform_15, window_bounds = array<i64: 1, 32>}, {pipeline_mode = #tpu.pipeline_mode<synchronous>, transform_indices = @transform_16, window_bounds = array<i64: 32, 32>}, {pipeline_mode = #tpu.pipeline_mode<synchronous>, transform_indices = @transform_17, window_bounds = array<i64: 1, 32>}, {pipeline_mode = #tpu.pipeline_mode<synchronous>, transform_indices = @transform_18, window_bounds = array<i64: 32, 32>}, {pipeline_mode = #tpu.pipeline_mode<synchronous>, transform_indices = @transform_19, window_bounds = array<i64: 1, 32>}, {pipeline_mode = #tpu.pipeline_mode<synchronous>, transform_indices = @transform_20, window_bounds = array<i64: 32, 32>}, {pipeline_mode = #tpu.pipeline_mode<synchronous>, transform_indices = @transform_21, window_bounds = array<i64: 1, 32>}, {pipeline_mode = #tpu.pipeline_mode<synchronous>, transform_indices = @transform_22, window_bounds = array<i64: 32, 32>}, {pipeline_mode = #tpu.pipeline_mode<synchronous>, transform_indices = @transform_23, window_bounds = array<i64: 1, 32>}, {pipeline_mode = #tpu.pipeline_mode<synchronous>, transform_indices = @transform_24, window_bounds = array<i64: 32, 32>}, {pipeline_mode = #tpu.pipeline_mode<synchronous>, transform_indices = @transform_25, window_bounds = array<i64: 1, 32>}, {pipeline_mode = #tpu.pipeline_mode<synchronous>, transform_indices = @transform_26, window_bounds = array<i64: 32, 64>}, {pipeline_mode = #tpu.pipeline_mode<synchronous>, transform_indices = @transform_27, window_bounds = array<i64: 1, 64>}, {pipeline_mode = #tpu.pipeline_mode<synchronous>, transform_indices = @transform_28, window_bounds = array<i64: 64, 32>}, {pipeline_mode = #tpu.pipeline_mode<synchronous>, transform_indices = @transform_29, window_bounds = array<i64: 1, 32>}, {transform_indices = @transform_30, window_bounds = array<i64: 2, 8, 32>}]} {
    %c0 = arith.constant 0 : index
    %c0_0 = arith.constant 0 : index
    %c0_1 = arith.constant 0 : index
    %0 = vector.load %arg1[%c0, %c0_0, %c0_1] : memref<2x8x32xf32, #tpu.memory_space<vmem>>, vector<2x8x32xf32>
    %1 = vector.shape_cast %0 : vector<2x8x32xf32> to vector<16x32xf32>
    %c0_2 = arith.constant 0 : index
    %c0_3 = arith.constant 0 : index
    %c0_4 = arith.constant 0 : index
    %2 = vector.load %arg2[%c0_2, %c0_3, %c0_4] : memref<2x8x32xf32, #tpu.memory_space<vmem>>, vector<2x8x32xf32>
    %3 = vector.shape_cast %2 : vector<2x8x32xf32> to vector<16x32xf32>
    %c0_5 = arith.constant 0 : index
    %c0_6 = arith.constant 0 : index
    %c0_7 = arith.constant 0 : index
    %4 = vector.load %arg3[%c0_5, %c0_6, %c0_7] : memref<2x8x8xi8, #tpu.memory_space<vmem>>, vector<2x8x8xi8>
    %c0_i8 = arith.constant 0 : i8
    %5 = vector.broadcast %c0_i8 : i8 to vector<2x8x8xi8>
    %6 = arith.cmpi ne, %4, %5 : vector<2x8x8xi8>
    %c0_8 = arith.constant 0 : index
    %c0_9 = arith.constant 0 : index
    %c0_10 = arith.constant 0 : index
    %7 = vector.load %arg4[%c0_8, %c0_9, %c0_10] : memref<2x8x8xi8, #tpu.memory_space<vmem>>, vector<2x8x8xi8>
    %c0_i8_11 = arith.constant 0 : i8
    %8 = vector.broadcast %c0_i8_11 : i8 to vector<2x8x8xi8>
    %9 = arith.cmpi ne, %7, %8 : vector<2x8x8xi8>
    %c0_12 = arith.constant 0 : index
    %c0_13 = arith.constant 0 : index
    %10 = vector.load %arg5[%c0_12, %c0_13] : memref<1x32xf32, #tpu.memory_space<vmem>>, vector<1x32xf32>
    %c0_14 = arith.constant 0 : index
    %c0_15 = arith.constant 0 : index
    %11 = vector.load %arg6[%c0_14, %c0_15] : memref<1x32xf32, #tpu.memory_space<vmem>>, vector<1x32xf32>
    %cst = arith.constant dense<0.000000e+00> : vector<16xf32>
    %12 = vector.multi_reduction <add>, %1, %cst [1] : vector<16x32xf32> to vector<16xf32>
    %13 = vector.shape_cast %12 : vector<16xf32> to vector<16x1xf32>
    %cst_16 = arith.constant 3.125000e-02 : f32
    %14 = vector.broadcast %cst_16 : f32 to vector<16x1xf32>
    %15 = arith.mulf %13, %14 : vector<16x1xf32>
    %16 = vector.broadcast %15 : vector<16x1xf32> to vector<16x32xf32>
    %17 = arith.subf %1, %16 : vector<16x32xf32>
    %18 = arith.mulf %17, %17 : vector<16x32xf32>
    %cst_17 = arith.constant dense<0.000000e+00> : vector<16xf32>
    %19 = vector.multi_reduction <add>, %18, %cst_17 [1] : vector<16x32xf32> to vector<16xf32>
    %20 = vector.shape_cast %19 : vector<16xf32> to vector<16x1xf32>
    %cst_18 = arith.constant 0.0322580636 : f32
    %21 = vector.broadcast %cst_18 : f32 to vector<16x1xf32>
    %22 = arith.mulf %20, %21 : vector<16x1xf32>
    %23 = math.sqrt %22 : vector<16x1xf32>
    %24 = vector.broadcast %10 : vector<1x32xf32> to vector<16x32xf32>
    %25 = arith.mulf %24, %17 : vector<16x32xf32>
    %cst_19 = arith.constant 9.99999997E-7 : f32
    %26 = vector.broadcast %cst_19 : f32 to vector<16x1xf32>
    %27 = arith.addf %23, %26 : vector<16x1xf32>
    %28 = vector.broadcast %27 : vector<16x1xf32> to vector<16x32xf32>
    %29 = arith.divf %25, %28 : vector<16x32xf32>
    %30 = vector.broadcast %11 : vector<1x32xf32> to vector<16x32xf32>
    %31 = arith.addf %29, %30 : vector<16x32xf32>
    %c0_20 = arith.constant 0 : index
    %c0_21 = arith.constant 0 : index
    %32 = vector.load %arg11[%c0_20, %c0_21] : memref<32x32xf32, #tpu.memory_space<vmem>>, vector<32x32xf32>
    %cst_22 = arith.constant dense<0.000000e+00> : vector<16x32xf32>
    %33 = tpu.matmul %31, %32, %cst_22 {dimension_numbers = #tpu.dot_dimension_numbers<[1], [0], [0], [1], [0, 0, 1, 1], [], []>} : vector<16x32xf32>, vector<32x32xf32>, vector<16x32xf32> -> vector<16x32xf32>
    %c0_23 = arith.constant 0 : index
    %c0_24 = arith.constant 0 : index
    %34 = vector.load %arg12[%c0_23, %c0_24] : memref<1x32xf32, #tpu.memory_space<vmem>>, vector<1x32xf32>
    %35 = vector.broadcast %34 : vector<1x32xf32> to vector<16x32xf32>
    %36 = arith.addf %33, %35 : vector<16x32xf32>
    %cst_25 = arith.constant 0.353553385 : f32
    %37 = vector.broadcast %cst_25 : f32 to vector<16x32xf32>
    %38 = arith.mulf %36, %37 : vector<16x32xf32>
    %c0_26 = arith.constant 0 : index
    %c0_27 = arith.constant 0 : index
    %39 = vector.load %arg13[%c0_26, %c0_27] : memref<32x32xf32, #tpu.memory_space<vmem>>, vector<32x32xf32>
    %cst_28 = arith.constant dense<0.000000e+00> : vector<16x32xf32>
    %40 = tpu.matmul %31, %39, %cst_28 {dimension_numbers = #tpu.dot_dimension_numbers<[1], [0], [0], [1], [0, 0, 1, 1], [], []>} : vector<16x32xf32>, vector<32x32xf32>, vector<16x32xf32> -> vector<16x32xf32>
    %c0_29 = arith.constant 0 : index
    %c0_30 = arith.constant 0 : index
    %41 = vector.load %arg14[%c0_29, %c0_30] : memref<1x32xf32, #tpu.memory_space<vmem>>, vector<1x32xf32>
    %42 = vector.broadcast %41 : vector<1x32xf32> to vector<16x32xf32>
    %43 = arith.addf %40, %42 : vector<16x32xf32>
    %c0_31 = arith.constant 0 : index
    %c0_32 = arith.constant 0 : index
    %44 = vector.load %arg15[%c0_31, %c0_32] : memref<32x32xf32, #tpu.memory_space<vmem>>, vector<32x32xf32>
    %cst_33 = arith.constant dense<0.000000e+00> : vector<16x32xf32>
    %45 = tpu.matmul %31, %44, %cst_33 {dimension_numbers = #tpu.dot_dimension_numbers<[1], [0], [0], [1], [0, 0, 1, 1], [], []>} : vector<16x32xf32>, vector<32x32xf32>, vector<16x32xf32> -> vector<16x32xf32>
    %c0_34 = arith.constant 0 : index
    %c0_35 = arith.constant 0 : index
    %46 = vector.load %arg16[%c0_34, %c0_35] : memref<1x32xf32, #tpu.memory_space<vmem>>, vector<1x32xf32>
    %47 = vector.broadcast %46 : vector<1x32xf32> to vector<16x32xf32>
    %48 = arith.addf %45, %47 : vector<16x32xf32>
    %49 = vector.shape_cast %38 : vector<16x32xf32> to vector<2x8x32xf32>
    %50 = vector.shape_cast %43 : vector<16x32xf32> to vector<2x8x32xf32>
    %51 = tpu.transpose %50, [0, 2, 1] : vector<2x8x32xf32> -> vector<2x32x8xf32>
    %52 = vector.shape_cast %48 : vector<16x32xf32> to vector<2x8x32xf32>
    %53 = vector.extract_strided_slice %49 {offsets = [0, 0, 0], sizes = [2, 8, 8], strides = [1, 1, 1]} : vector<2x8x32xf32> to vector<2x8x8xf32>
    %54 = vector.extract_strided_slice %51 {offsets = [0, 0, 0], sizes = [2, 8, 8], strides = [1, 1, 1]} : vector<2x32x8xf32> to vector<2x8x8xf32>
    "tpu.trace_start"() <{level = 10 : i32, message = "btd,bds->bts"}> : () -> ()
    %cst_36 = arith.constant dense<0.000000e+00> : vector<2x8x8xf32>
    %55 = tpu.matmul %53, %54, %cst_36 {dimension_numbers = #tpu.dot_dimension_numbers<[2], [1], [1], [2], [0, 0, 0, 1, 1, 2], [0], [0]>} : vector<2x8x8xf32>, vector<2x8x8xf32>, vector<2x8x8xf32> -> vector<2x8x8xf32>
    %cst_37 = arith.constant -1.000000e+09 : f32
    "tpu.trace_stop"() : () -> ()
    %56 = vector.broadcast %cst_37 : f32 to vector<2x8x8xf32>
    %57 = arith.select %6, %55, %56 : vector<2x8x8xi1>, vector<2x8x8xf32>
    %cst_38 = arith.constant dense<0xFF800000> : vector<2x8xf32>
    %58 = vector.multi_reduction <maximumf>, %57, %cst_38 [2] : vector<2x8x8xf32> to vector<2x8xf32>
    %59 = vector.shape_cast %58 : vector<2x8xf32> to vector<2x8x1xf32>
    %60 = vector.broadcast %59 : vector<2x8x1xf32> to vector<2x8x8xf32>
    %61 = arith.subf %57, %60 : vector<2x8x8xf32>
    %62 = math.exp %61 : vector<2x8x8xf32>
    %cst_39 = arith.constant dense<0.000000e+00> : vector<2x8xf32>
    %63 = vector.multi_reduction <add>, %62, %cst_39 [2] : vector<2x8x8xf32> to vector<2x8xf32>
    %64 = vector.shape_cast %63 : vector<2x8xf32> to vector<2x8x1xf32>
    %65 = vector.broadcast %64 : vector<2x8x1xf32> to vector<2x8x8xf32>
    %66 = arith.divf %62, %65 : vector<2x8x8xf32>
    %67 = vector.extract_strided_slice %52 {offsets = [0, 0, 0], sizes = [2, 8, 8], strides = [1, 1, 1]} : vector<2x8x32xf32> to vector<2x8x8xf32>
    "tpu.trace_start"() <{level = 10 : i32, message = "bts,bsd->btd"}> : () -> ()
    %cst_40 = arith.constant dense<0.000000e+00> : vector<2x8x8xf32>
    %68 = tpu.matmul %66, %67, %cst_40 {dimension_numbers = #tpu.dot_dimension_numbers<[2], [1], [1], [2], [0, 0, 0, 1, 1, 2], [0], [0]>} : vector<2x8x8xf32>, vector<2x8x8xf32>, vector<2x8x8xf32> -> vector<2x8x8xf32>
    "tpu.trace_stop"() : () -> ()
    %69 = vector.extract_strided_slice %49 {offsets = [0, 0, 8], sizes = [2, 8, 8], strides = [1, 1, 1]} : vector<2x8x32xf32> to vector<2x8x8xf32>
    %70 = vector.extract_strided_slice %51 {offsets = [0, 8, 0], sizes = [2, 8, 8], strides = [1, 1, 1]} : vector<2x32x8xf32> to vector<2x8x8xf32>
    "tpu.trace_start"() <{level = 10 : i32, message = "btd,bds->bts"}> : () -> ()
    %cst_41 = arith.constant dense<0.000000e+00> : vector<2x8x8xf32>
    %71 = tpu.matmul %69, %70, %cst_41 {dimension_numbers = #tpu.dot_dimension_numbers<[2], [1], [1], [2], [0, 0, 0, 1, 1, 2], [0], [0]>} : vector<2x8x8xf32>, vector<2x8x8xf32>, vector<2x8x8xf32> -> vector<2x8x8xf32>
    %cst_42 = arith.constant -1.000000e+09 : f32
    "tpu.trace_stop"() : () -> ()
    %72 = vector.broadcast %cst_42 : f32 to vector<2x8x8xf32>
    %73 = arith.select %6, %71, %72 : vector<2x8x8xi1>, vector<2x8x8xf32>
    %cst_43 = arith.constant dense<0xFF800000> : vector<2x8xf32>
    %74 = vector.multi_reduction <maximumf>, %73, %cst_43 [2] : vector<2x8x8xf32> to vector<2x8xf32>
    %75 = vector.shape_cast %74 : vector<2x8xf32> to vector<2x8x1xf32>
    %76 = vector.broadcast %75 : vector<2x8x1xf32> to vector<2x8x8xf32>
    %77 = arith.subf %73, %76 : vector<2x8x8xf32>
    %78 = math.exp %77 : vector<2x8x8xf32>
    %cst_44 = arith.constant dense<0.000000e+00> : vector<2x8xf32>
    %79 = vector.multi_reduction <add>, %78, %cst_44 [2] : vector<2x8x8xf32> to vector<2x8xf32>
    %80 = vector.shape_cast %79 : vector<2x8xf32> to vector<2x8x1xf32>
    %81 = vector.broadcast %80 : vector<2x8x1xf32> to vector<2x8x8xf32>
    %82 = arith.divf %78, %81 : vector<2x8x8xf32>
    %83 = vector.extract_strided_slice %52 {offsets = [0, 0, 8], sizes = [2, 8, 8], strides = [1, 1, 1]} : vector<2x8x32xf32> to vector<2x8x8xf32>
    "tpu.trace_start"() <{level = 10 : i32, message = "bts,bsd->btd"}> : () -> ()
    %cst_45 = arith.constant dense<0.000000e+00> : vector<2x8x8xf32>
    %84 = tpu.matmul %82, %83, %cst_45 {dimension_numbers = #tpu.dot_dimension_numbers<[2], [1], [1], [2], [0, 0, 0, 1, 1, 2], [0], [0]>} : vector<2x8x8xf32>, vector<2x8x8xf32>, vector<2x8x8xf32> -> vector<2x8x8xf32>
    "tpu.trace_stop"() : () -> ()
    %85 = vector.extract_strided_slice %49 {offsets = [0, 0, 16], sizes = [2, 8, 8], strides = [1, 1, 1]} : vector<2x8x32xf32> to vector<2x8x8xf32>
    %86 = vector.extract_strided_slice %51 {offsets = [0, 16, 0], sizes = [2, 8, 8], strides = [1, 1, 1]} : vector<2x32x8xf32> to vector<2x8x8xf32>
    "tpu.trace_start"() <{level = 10 : i32, message = "btd,bds->bts"}> : () -> ()
    %cst_46 = arith.constant dense<0.000000e+00> : vector<2x8x8xf32>
    %87 = tpu.matmul %85, %86, %cst_46 {dimension_numbers = #tpu.dot_dimension_numbers<[2], [1], [1], [2], [0, 0, 0, 1, 1, 2], [0], [0]>} : vector<2x8x8xf32>, vector<2x8x8xf32>, vector<2x8x8xf32> -> vector<2x8x8xf32>
    %cst_47 = arith.constant -1.000000e+09 : f32
    "tpu.trace_stop"() : () -> ()
    %88 = vector.broadcast %cst_47 : f32 to vector<2x8x8xf32>
    %89 = arith.select %6, %87, %88 : vector<2x8x8xi1>, vector<2x8x8xf32>
    %cst_48 = arith.constant dense<0xFF800000> : vector<2x8xf32>
    %90 = vector.multi_reduction <maximumf>, %89, %cst_48 [2] : vector<2x8x8xf32> to vector<2x8xf32>
    %91 = vector.shape_cast %90 : vector<2x8xf32> to vector<2x8x1xf32>
    %92 = vector.broadcast %91 : vector<2x8x1xf32> to vector<2x8x8xf32>
    %93 = arith.subf %89, %92 : vector<2x8x8xf32>
    %94 = math.exp %93 : vector<2x8x8xf32>
    %cst_49 = arith.constant dense<0.000000e+00> : vector<2x8xf32>
    %95 = vector.multi_reduction <add>, %94, %cst_49 [2] : vector<2x8x8xf32> to vector<2x8xf32>
    %96 = vector.shape_cast %95 : vector<2x8xf32> to vector<2x8x1xf32>
    %97 = vector.broadcast %96 : vector<2x8x1xf32> to vector<2x8x8xf32>
    %98 = arith.divf %94, %97 : vector<2x8x8xf32>
    %99 = vector.extract_strided_slice %52 {offsets = [0, 0, 16], sizes = [2, 8, 8], strides = [1, 1, 1]} : vector<2x8x32xf32> to vector<2x8x8xf32>
    "tpu.trace_start"() <{level = 10 : i32, message = "bts,bsd->btd"}> : () -> ()
    %cst_50 = arith.constant dense<0.000000e+00> : vector<2x8x8xf32>
    %100 = tpu.matmul %98, %99, %cst_50 {dimension_numbers = #tpu.dot_dimension_numbers<[2], [1], [1], [2], [0, 0, 0, 1, 1, 2], [0], [0]>} : vector<2x8x8xf32>, vector<2x8x8xf32>, vector<2x8x8xf32> -> vector<2x8x8xf32>
    "tpu.trace_stop"() : () -> ()
    %101 = vector.extract_strided_slice %49 {offsets = [0, 0, 24], sizes = [2, 8, 8], strides = [1, 1, 1]} : vector<2x8x32xf32> to vector<2x8x8xf32>
    %102 = vector.extract_strided_slice %51 {offsets = [0, 24, 0], sizes = [2, 8, 8], strides = [1, 1, 1]} : vector<2x32x8xf32> to vector<2x8x8xf32>
    "tpu.trace_start"() <{level = 10 : i32, message = "btd,bds->bts"}> : () -> ()
    %cst_51 = arith.constant dense<0.000000e+00> : vector<2x8x8xf32>
    %103 = tpu.matmul %101, %102, %cst_51 {dimension_numbers = #tpu.dot_dimension_numbers<[2], [1], [1], [2], [0, 0, 0, 1, 1, 2], [0], [0]>} : vector<2x8x8xf32>, vector<2x8x8xf32>, vector<2x8x8xf32> -> vector<2x8x8xf32>
    %cst_52 = arith.constant -1.000000e+09 : f32
    "tpu.trace_stop"() : () -> ()
    %104 = vector.broadcast %cst_52 : f32 to vector<2x8x8xf32>
    %105 = arith.select %6, %103, %104 : vector<2x8x8xi1>, vector<2x8x8xf32>
    %cst_53 = arith.constant dense<0xFF800000> : vector<2x8xf32>
    %106 = vector.multi_reduction <maximumf>, %105, %cst_53 [2] : vector<2x8x8xf32> to vector<2x8xf32>
    %107 = vector.shape_cast %106 : vector<2x8xf32> to vector<2x8x1xf32>
    %108 = vector.broadcast %107 : vector<2x8x1xf32> to vector<2x8x8xf32>
    %109 = arith.subf %105, %108 : vector<2x8x8xf32>
    %110 = math.exp %109 : vector<2x8x8xf32>
    %cst_54 = arith.constant dense<0.000000e+00> : vector<2x8xf32>
    %111 = vector.multi_reduction <add>, %110, %cst_54 [2] : vector<2x8x8xf32> to vector<2x8xf32>
    %112 = vector.shape_cast %111 : vector<2x8xf32> to vector<2x8x1xf32>
    %113 = vector.broadcast %112 : vector<2x8x1xf32> to vector<2x8x8xf32>
    %114 = arith.divf %110, %113 : vector<2x8x8xf32>
    %115 = vector.extract_strided_slice %52 {offsets = [0, 0, 24], sizes = [2, 8, 8], strides = [1, 1, 1]} : vector<2x8x32xf32> to vector<2x8x8xf32>
    "tpu.trace_start"() <{level = 10 : i32, message = "bts,bsd->btd"}> : () -> ()
    %cst_55 = arith.constant dense<0.000000e+00> : vector<2x8x8xf32>
    %116 = tpu.matmul %114, %115, %cst_55 {dimension_numbers = #tpu.dot_dimension_numbers<[2], [1], [1], [2], [0, 0, 0, 1, 1, 2], [0], [0]>} : vector<2x8x8xf32>, vector<2x8x8xf32>, vector<2x8x8xf32> -> vector<2x8x8xf32>
    "tpu.trace_stop"() : () -> ()
    %117 = tpu.concatenate %68, %84, %100, %116 in 2 : vector<2x8x8xf32>, vector<2x8x8xf32>, vector<2x8x8xf32>, vector<2x8x8xf32> -> vector<2x8x32xf32>
    %118 = vector.shape_cast %117 : vector<2x8x32xf32> to vector<16x32xf32>
    %c0_56 = arith.constant 0 : index
    %c0_57 = arith.constant 0 : index
    %119 = vector.load %arg17[%c0_56, %c0_57] : memref<32x32xf32, #tpu.memory_space<vmem>>, vector<32x32xf32>
    %cst_58 = arith.constant dense<0.000000e+00> : vector<16x32xf32>
    %120 = tpu.matmul %118, %119, %cst_58 {dimension_numbers = #tpu.dot_dimension_numbers<[1], [0], [0], [1], [0, 0, 1, 1], [], []>} : vector<16x32xf32>, vector<32x32xf32>, vector<16x32xf32> -> vector<16x32xf32>
    %c0_59 = arith.constant 0 : index
    %c0_60 = arith.constant 0 : index
    %121 = vector.load %arg18[%c0_59, %c0_60] : memref<1x32xf32, #tpu.memory_space<vmem>>, vector<1x32xf32>
    %122 = vector.broadcast %121 : vector<1x32xf32> to vector<16x32xf32>
    %123 = arith.addf %120, %122 : vector<16x32xf32>
    %124 = arith.addf %1, %123 : vector<16x32xf32>
    %c0_61 = arith.constant 0 : index
    %c0_62 = arith.constant 0 : index
    %125 = vector.load %arg7[%c0_61, %c0_62] : memref<1x32xf32, #tpu.memory_space<vmem>>, vector<1x32xf32>
    %c0_63 = arith.constant 0 : index
    %c0_64 = arith.constant 0 : index
    %126 = vector.load %arg8[%c0_63, %c0_64] : memref<1x32xf32, #tpu.memory_space<vmem>>, vector<1x32xf32>
    %cst_65 = arith.constant dense<0.000000e+00> : vector<16xf32>
    %127 = vector.multi_reduction <add>, %124, %cst_65 [1] : vector<16x32xf32> to vector<16xf32>
    %128 = vector.shape_cast %127 : vector<16xf32> to vector<16x1xf32>
    %cst_66 = arith.constant 3.125000e-02 : f32
    %129 = vector.broadcast %cst_66 : f32 to vector<16x1xf32>
    %130 = arith.mulf %128, %129 : vector<16x1xf32>
    %131 = vector.broadcast %130 : vector<16x1xf32> to vector<16x32xf32>
    %132 = arith.subf %124, %131 : vector<16x32xf32>
    %133 = arith.mulf %132, %132 : vector<16x32xf32>
    %cst_67 = arith.constant dense<0.000000e+00> : vector<16xf32>
    %134 = vector.multi_reduction <add>, %133, %cst_67 [1] : vector<16x32xf32> to vector<16xf32>
    %135 = vector.shape_cast %134 : vector<16xf32> to vector<16x1xf32>
    %cst_68 = arith.constant 0.0322580636 : f32
    %136 = vector.broadcast %cst_68 : f32 to vector<16x1xf32>
    %137 = arith.mulf %135, %136 : vector<16x1xf32>
    %138 = math.sqrt %137 : vector<16x1xf32>
    %139 = vector.broadcast %125 : vector<1x32xf32> to vector<16x32xf32>
    %140 = arith.mulf %139, %132 : vector<16x32xf32>
    %cst_69 = arith.constant 9.99999997E-7 : f32
    %141 = vector.broadcast %cst_69 : f32 to vector<16x1xf32>
    %142 = arith.addf %138, %141 : vector<16x1xf32>
    %143 = vector.broadcast %142 : vector<16x1xf32> to vector<16x32xf32>
    %144 = arith.divf %140, %143 : vector<16x32xf32>
    %145 = vector.broadcast %126 : vector<1x32xf32> to vector<16x32xf32>
    %146 = arith.addf %144, %145 : vector<16x32xf32>
    %c0_70 = arith.constant 0 : index
    %c0_71 = arith.constant 0 : index
    %147 = vector.load %arg19[%c0_70, %c0_71] : memref<32x32xf32, #tpu.memory_space<vmem>>, vector<32x32xf32>
    %cst_72 = arith.constant dense<0.000000e+00> : vector<16x32xf32>
    %148 = tpu.matmul %146, %147, %cst_72 {dimension_numbers = #tpu.dot_dimension_numbers<[1], [0], [0], [1], [0, 0, 1, 1], [], []>} : vector<16x32xf32>, vector<32x32xf32>, vector<16x32xf32> -> vector<16x32xf32>
    %c0_73 = arith.constant 0 : index
    %c0_74 = arith.constant 0 : index
    %149 = vector.load %arg20[%c0_73, %c0_74] : memref<1x32xf32, #tpu.memory_space<vmem>>, vector<1x32xf32>
    %150 = vector.broadcast %149 : vector<1x32xf32> to vector<16x32xf32>
    %151 = arith.addf %148, %150 : vector<16x32xf32>
    %cst_75 = arith.constant 0.353553385 : f32
    %152 = vector.broadcast %cst_75 : f32 to vector<16x32xf32>
    %153 = arith.mulf %151, %152 : vector<16x32xf32>
    %c0_76 = arith.constant 0 : index
    %c0_77 = arith.constant 0 : index
    %154 = vector.load %arg21[%c0_76, %c0_77] : memref<32x32xf32, #tpu.memory_space<vmem>>, vector<32x32xf32>
    %cst_78 = arith.constant dense<0.000000e+00> : vector<16x32xf32>
    %155 = tpu.matmul %3, %154, %cst_78 {dimension_numbers = #tpu.dot_dimension_numbers<[1], [0], [0], [1], [0, 0, 1, 1], [], []>} : vector<16x32xf32>, vector<32x32xf32>, vector<16x32xf32> -> vector<16x32xf32>
    %c0_79 = arith.constant 0 : index
    %c0_80 = arith.constant 0 : index
    %156 = vector.load %arg22[%c0_79, %c0_80] : memref<1x32xf32, #tpu.memory_space<vmem>>, vector<1x32xf32>
    %157 = vector.broadcast %156 : vector<1x32xf32> to vector<16x32xf32>
    %158 = arith.addf %155, %157 : vector<16x32xf32>
    %c0_81 = arith.constant 0 : index
    %c0_82 = arith.constant 0 : index
    %159 = vector.load %arg23[%c0_81, %c0_82] : memref<32x32xf32, #tpu.memory_space<vmem>>, vector<32x32xf32>
    %cst_83 = arith.constant dense<0.000000e+00> : vector<16x32xf32>
    %160 = tpu.matmul %3, %159, %cst_83 {dimension_numbers = #tpu.dot_dimension_numbers<[1], [0], [0], [1], [0, 0, 1, 1], [], []>} : vector<16x32xf32>, vector<32x32xf32>, vector<16x32xf32> -> vector<16x32xf32>
    %c0_84 = arith.constant 0 : index
    %c0_85 = arith.constant 0 : index
    %161 = vector.load %arg24[%c0_84, %c0_85] : memref<1x32xf32, #tpu.memory_space<vmem>>, vector<1x32xf32>
    %162 = vector.broadcast %161 : vector<1x32xf32> to vector<16x32xf32>
    %163 = arith.addf %160, %162 : vector<16x32xf32>
    %164 = vector.shape_cast %153 : vector<16x32xf32> to vector<2x8x32xf32>
    %165 = vector.shape_cast %158 : vector<16x32xf32> to vector<2x8x32xf32>
    %166 = tpu.transpose %165, [0, 2, 1] : vector<2x8x32xf32> -> vector<2x32x8xf32>
    %167 = vector.shape_cast %163 : vector<16x32xf32> to vector<2x8x32xf32>
    %168 = vector.extract_strided_slice %164 {offsets = [0, 0, 0], sizes = [2, 8, 8], strides = [1, 1, 1]} : vector<2x8x32xf32> to vector<2x8x8xf32>
    %169 = vector.extract_strided_slice %166 {offsets = [0, 0, 0], sizes = [2, 8, 8], strides = [1, 1, 1]} : vector<2x32x8xf32> to vector<2x8x8xf32>
    "tpu.trace_start"() <{level = 10 : i32, message = "btd,bds->bts"}> : () -> ()
    %cst_86 = arith.constant dense<0.000000e+00> : vector<2x8x8xf32>
    %170 = tpu.matmul %168, %169, %cst_86 {dimension_numbers = #tpu.dot_dimension_numbers<[2], [1], [1], [2], [0, 0, 0, 1, 1, 2], [0], [0]>} : vector<2x8x8xf32>, vector<2x8x8xf32>, vector<2x8x8xf32> -> vector<2x8x8xf32>
    %cst_87 = arith.constant -1.000000e+09 : f32
    "tpu.trace_stop"() : () -> ()
    %171 = vector.broadcast %cst_87 : f32 to vector<2x8x8xf32>
    %172 = arith.select %9, %170, %171 : vector<2x8x8xi1>, vector<2x8x8xf32>
    %cst_88 = arith.constant dense<0xFF800000> : vector<2x8xf32>
    %173 = vector.multi_reduction <maximumf>, %172, %cst_88 [2] : vector<2x8x8xf32> to vector<2x8xf32>
    %174 = vector.shape_cast %173 : vector<2x8xf32> to vector<2x8x1xf32>
    %175 = vector.broadcast %174 : vector<2x8x1xf32> to vector<2x8x8xf32>
    %176 = arith.subf %172, %175 : vector<2x8x8xf32>
    %177 = math.exp %176 : vector<2x8x8xf32>
    %cst_89 = arith.constant dense<0.000000e+00> : vector<2x8xf32>
    %178 = vector.multi_reduction <add>, %177, %cst_89 [2] : vector<2x8x8xf32> to vector<2x8xf32>
    %179 = vector.shape_cast %178 : vector<2x8xf32> to vector<2x8x1xf32>
    %180 = vector.broadcast %179 : vector<2x8x1xf32> to vector<2x8x8xf32>
    %181 = arith.divf %177, %180 : vector<2x8x8xf32>
    %182 = vector.extract_strided_slice %167 {offsets = [0, 0, 0], sizes = [2, 8, 8], strides = [1, 1, 1]} : vector<2x8x32xf32> to vector<2x8x8xf32>
    "tpu.trace_start"() <{level = 10 : i32, message = "bts,bsd->btd"}> : () -> ()
    %cst_90 = arith.constant dense<0.000000e+00> : vector<2x8x8xf32>
    %183 = tpu.matmul %181, %182, %cst_90 {dimension_numbers = #tpu.dot_dimension_numbers<[2], [1], [1], [2], [0, 0, 0, 1, 1, 2], [0], [0]>} : vector<2x8x8xf32>, vector<2x8x8xf32>, vector<2x8x8xf32> -> vector<2x8x8xf32>
    "tpu.trace_stop"() : () -> ()
    %184 = vector.extract_strided_slice %164 {offsets = [0, 0, 8], sizes = [2, 8, 8], strides = [1, 1, 1]} : vector<2x8x32xf32> to vector<2x8x8xf32>
    %185 = vector.extract_strided_slice %166 {offsets = [0, 8, 0], sizes = [2, 8, 8], strides = [1, 1, 1]} : vector<2x32x8xf32> to vector<2x8x8xf32>
    "tpu.trace_start"() <{level = 10 : i32, message = "btd,bds->bts"}> : () -> ()
    %cst_91 = arith.constant dense<0.000000e+00> : vector<2x8x8xf32>
    %186 = tpu.matmul %184, %185, %cst_91 {dimension_numbers = #tpu.dot_dimension_numbers<[2], [1], [1], [2], [0, 0, 0, 1, 1, 2], [0], [0]>} : vector<2x8x8xf32>, vector<2x8x8xf32>, vector<2x8x8xf32> -> vector<2x8x8xf32>
    %cst_92 = arith.constant -1.000000e+09 : f32
    "tpu.trace_stop"() : () -> ()
    %187 = vector.broadcast %cst_92 : f32 to vector<2x8x8xf32>
    %188 = arith.select %9, %186, %187 : vector<2x8x8xi1>, vector<2x8x8xf32>
    %cst_93 = arith.constant dense<0xFF800000> : vector<2x8xf32>
    %189 = vector.multi_reduction <maximumf>, %188, %cst_93 [2] : vector<2x8x8xf32> to vector<2x8xf32>
    %190 = vector.shape_cast %189 : vector<2x8xf32> to vector<2x8x1xf32>
    %191 = vector.broadcast %190 : vector<2x8x1xf32> to vector<2x8x8xf32>
    %192 = arith.subf %188, %191 : vector<2x8x8xf32>
    %193 = math.exp %192 : vector<2x8x8xf32>
    %cst_94 = arith.constant dense<0.000000e+00> : vector<2x8xf32>
    %194 = vector.multi_reduction <add>, %193, %cst_94 [2] : vector<2x8x8xf32> to vector<2x8xf32>
    %195 = vector.shape_cast %194 : vector<2x8xf32> to vector<2x8x1xf32>
    %196 = vector.broadcast %195 : vector<2x8x1xf32> to vector<2x8x8xf32>
    %197 = arith.divf %193, %196 : vector<2x8x8xf32>
    %198 = vector.extract_strided_slice %167 {offsets = [0, 0, 8], sizes = [2, 8, 8], strides = [1, 1, 1]} : vector<2x8x32xf32> to vector<2x8x8xf32>
    "tpu.trace_start"() <{level = 10 : i32, message = "bts,bsd->btd"}> : () -> ()
    %cst_95 = arith.constant dense<0.000000e+00> : vector<2x8x8xf32>
    %199 = tpu.matmul %197, %198, %cst_95 {dimension_numbers = #tpu.dot_dimension_numbers<[2], [1], [1], [2], [0, 0, 0, 1, 1, 2], [0], [0]>} : vector<2x8x8xf32>, vector<2x8x8xf32>, vector<2x8x8xf32> -> vector<2x8x8xf32>
    "tpu.trace_stop"() : () -> ()
    %200 = vector.extract_strided_slice %164 {offsets = [0, 0, 16], sizes = [2, 8, 8], strides = [1, 1, 1]} : vector<2x8x32xf32> to vector<2x8x8xf32>
    %201 = vector.extract_strided_slice %166 {offsets = [0, 16, 0], sizes = [2, 8, 8], strides = [1, 1, 1]} : vector<2x32x8xf32> to vector<2x8x8xf32>
    "tpu.trace_start"() <{level = 10 : i32, message = "btd,bds->bts"}> : () -> ()
    %cst_96 = arith.constant dense<0.000000e+00> : vector<2x8x8xf32>
    %202 = tpu.matmul %200, %201, %cst_96 {dimension_numbers = #tpu.dot_dimension_numbers<[2], [1], [1], [2], [0, 0, 0, 1, 1, 2], [0], [0]>} : vector<2x8x8xf32>, vector<2x8x8xf32>, vector<2x8x8xf32> -> vector<2x8x8xf32>
    %cst_97 = arith.constant -1.000000e+09 : f32
    "tpu.trace_stop"() : () -> ()
    %203 = vector.broadcast %cst_97 : f32 to vector<2x8x8xf32>
    %204 = arith.select %9, %202, %203 : vector<2x8x8xi1>, vector<2x8x8xf32>
    %cst_98 = arith.constant dense<0xFF800000> : vector<2x8xf32>
    %205 = vector.multi_reduction <maximumf>, %204, %cst_98 [2] : vector<2x8x8xf32> to vector<2x8xf32>
    %206 = vector.shape_cast %205 : vector<2x8xf32> to vector<2x8x1xf32>
    %207 = vector.broadcast %206 : vector<2x8x1xf32> to vector<2x8x8xf32>
    %208 = arith.subf %204, %207 : vector<2x8x8xf32>
    %209 = math.exp %208 : vector<2x8x8xf32>
    %cst_99 = arith.constant dense<0.000000e+00> : vector<2x8xf32>
    %210 = vector.multi_reduction <add>, %209, %cst_99 [2] : vector<2x8x8xf32> to vector<2x8xf32>
    %211 = vector.shape_cast %210 : vector<2x8xf32> to vector<2x8x1xf32>
    %212 = vector.broadcast %211 : vector<2x8x1xf32> to vector<2x8x8xf32>
    %213 = arith.divf %209, %212 : vector<2x8x8xf32>
    %214 = vector.extract_strided_slice %167 {offsets = [0, 0, 16], sizes = [2, 8, 8], strides = [1, 1, 1]} : vector<2x8x32xf32> to vector<2x8x8xf32>
    "tpu.trace_start"() <{level = 10 : i32, message = "bts,bsd->btd"}> : () -> ()
    %cst_100 = arith.constant dense<0.000000e+00> : vector<2x8x8xf32>
    %215 = tpu.matmul %213, %214, %cst_100 {dimension_numbers = #tpu.dot_dimension_numbers<[2], [1], [1], [2], [0, 0, 0, 1, 1, 2], [0], [0]>} : vector<2x8x8xf32>, vector<2x8x8xf32>, vector<2x8x8xf32> -> vector<2x8x8xf32>
    "tpu.trace_stop"() : () -> ()
    %216 = vector.extract_strided_slice %164 {offsets = [0, 0, 24], sizes = [2, 8, 8], strides = [1, 1, 1]} : vector<2x8x32xf32> to vector<2x8x8xf32>
    %217 = vector.extract_strided_slice %166 {offsets = [0, 24, 0], sizes = [2, 8, 8], strides = [1, 1, 1]} : vector<2x32x8xf32> to vector<2x8x8xf32>
    "tpu.trace_start"() <{level = 10 : i32, message = "btd,bds->bts"}> : () -> ()
    %cst_101 = arith.constant dense<0.000000e+00> : vector<2x8x8xf32>
    %218 = tpu.matmul %216, %217, %cst_101 {dimension_numbers = #tpu.dot_dimension_numbers<[2], [1], [1], [2], [0, 0, 0, 1, 1, 2], [0], [0]>} : vector<2x8x8xf32>, vector<2x8x8xf32>, vector<2x8x8xf32> -> vector<2x8x8xf32>
    %cst_102 = arith.constant -1.000000e+09 : f32
    "tpu.trace_stop"() : () -> ()
    %219 = vector.broadcast %cst_102 : f32 to vector<2x8x8xf32>
    %220 = arith.select %9, %218, %219 : vector<2x8x8xi1>, vector<2x8x8xf32>
    %cst_103 = arith.constant dense<0xFF800000> : vector<2x8xf32>
    %221 = vector.multi_reduction <maximumf>, %220, %cst_103 [2] : vector<2x8x8xf32> to vector<2x8xf32>
    %222 = vector.shape_cast %221 : vector<2x8xf32> to vector<2x8x1xf32>
    %223 = vector.broadcast %222 : vector<2x8x1xf32> to vector<2x8x8xf32>
    %224 = arith.subf %220, %223 : vector<2x8x8xf32>
    %225 = math.exp %224 : vector<2x8x8xf32>
    %cst_104 = arith.constant dense<0.000000e+00> : vector<2x8xf32>
    %226 = vector.multi_reduction <add>, %225, %cst_104 [2] : vector<2x8x8xf32> to vector<2x8xf32>
    %227 = vector.shape_cast %226 : vector<2x8xf32> to vector<2x8x1xf32>
    %228 = vector.broadcast %227 : vector<2x8x1xf32> to vector<2x8x8xf32>
    %229 = arith.divf %225, %228 : vector<2x8x8xf32>
    %230 = vector.extract_strided_slice %167 {offsets = [0, 0, 24], sizes = [2, 8, 8], strides = [1, 1, 1]} : vector<2x8x32xf32> to vector<2x8x8xf32>
    "tpu.trace_start"() <{level = 10 : i32, message = "bts,bsd->btd"}> : () -> ()
    %cst_105 = arith.constant dense<0.000000e+00> : vector<2x8x8xf32>
    %231 = tpu.matmul %229, %230, %cst_105 {dimension_numbers = #tpu.dot_dimension_numbers<[2], [1], [1], [2], [0, 0, 0, 1, 1, 2], [0], [0]>} : vector<2x8x8xf32>, vector<2x8x8xf32>, vector<2x8x8xf32> -> vector<2x8x8xf32>
    "tpu.trace_stop"() : () -> ()
    %232 = tpu.concatenate %183, %199, %215, %231 in 2 : vector<2x8x8xf32>, vector<2x8x8xf32>, vector<2x8x8xf32>, vector<2x8x8xf32> -> vector<2x8x32xf32>
    %233 = vector.shape_cast %232 : vector<2x8x32xf32> to vector<16x32xf32>
    %c0_106 = arith.constant 0 : index
    %c0_107 = arith.constant 0 : index
    %234 = vector.load %arg25[%c0_106, %c0_107] : memref<32x32xf32, #tpu.memory_space<vmem>>, vector<32x32xf32>
    %cst_108 = arith.constant dense<0.000000e+00> : vector<16x32xf32>
    %235 = tpu.matmul %233, %234, %cst_108 {dimension_numbers = #tpu.dot_dimension_numbers<[1], [0], [0], [1], [0, 0, 1, 1], [], []>} : vector<16x32xf32>, vector<32x32xf32>, vector<16x32xf32> -> vector<16x32xf32>
    %c0_109 = arith.constant 0 : index
    %c0_110 = arith.constant 0 : index
    %236 = vector.load %arg26[%c0_109, %c0_110] : memref<1x32xf32, #tpu.memory_space<vmem>>, vector<1x32xf32>
    %237 = vector.broadcast %236 : vector<1x32xf32> to vector<16x32xf32>
    %238 = arith.addf %235, %237 : vector<16x32xf32>
    %239 = arith.addf %124, %238 : vector<16x32xf32>
    %c0_111 = arith.constant 0 : index
    %c0_112 = arith.constant 0 : index
    %240 = vector.load %arg9[%c0_111, %c0_112] : memref<1x32xf32, #tpu.memory_space<vmem>>, vector<1x32xf32>
    %c0_113 = arith.constant 0 : index
    %c0_114 = arith.constant 0 : index
    %241 = vector.load %arg10[%c0_113, %c0_114] : memref<1x32xf32, #tpu.memory_space<vmem>>, vector<1x32xf32>
    %cst_115 = arith.constant dense<0.000000e+00> : vector<16xf32>
    %242 = vector.multi_reduction <add>, %239, %cst_115 [1] : vector<16x32xf32> to vector<16xf32>
    %243 = vector.shape_cast %242 : vector<16xf32> to vector<16x1xf32>
    %cst_116 = arith.constant 3.125000e-02 : f32
    %244 = vector.broadcast %cst_116 : f32 to vector<16x1xf32>
    %245 = arith.mulf %243, %244 : vector<16x1xf32>
    %246 = vector.broadcast %245 : vector<16x1xf32> to vector<16x32xf32>
    %247 = arith.subf %239, %246 : vector<16x32xf32>
    %248 = arith.mulf %247, %247 : vector<16x32xf32>
    %cst_117 = arith.constant dense<0.000000e+00> : vector<16xf32>
    %249 = vector.multi_reduction <add>, %248, %cst_117 [1] : vector<16x32xf32> to vector<16xf32>
    %250 = vector.shape_cast %249 : vector<16xf32> to vector<16x1xf32>
    %cst_118 = arith.constant 0.0322580636 : f32
    %251 = vector.broadcast %cst_118 : f32 to vector<16x1xf32>
    %252 = arith.mulf %250, %251 : vector<16x1xf32>
    %253 = math.sqrt %252 : vector<16x1xf32>
    %254 = vector.broadcast %240 : vector<1x32xf32> to vector<16x32xf32>
    %255 = arith.mulf %254, %247 : vector<16x32xf32>
    %cst_119 = arith.constant 9.99999997E-7 : f32
    %256 = vector.broadcast %cst_119 : f32 to vector<16x1xf32>
    %257 = arith.addf %253, %256 : vector<16x1xf32>
    %258 = vector.broadcast %257 : vector<16x1xf32> to vector<16x32xf32>
    %259 = arith.divf %255, %258 : vector<16x32xf32>
    %260 = vector.broadcast %241 : vector<1x32xf32> to vector<16x32xf32>
    %261 = arith.addf %259, %260 : vector<16x32xf32>
    %c0_120 = arith.constant 0 : index
    %c0_121 = arith.constant 0 : index
    %262 = vector.load %arg27[%c0_120, %c0_121] : memref<32x64xf32, #tpu.memory_space<vmem>>, vector<32x64xf32>
    %cst_122 = arith.constant dense<0.000000e+00> : vector<16x64xf32>
    %263 = tpu.matmul %261, %262, %cst_122 {dimension_numbers = #tpu.dot_dimension_numbers<[1], [0], [0], [1], [0, 0, 1, 1], [], []>} : vector<16x32xf32>, vector<32x64xf32>, vector<16x64xf32> -> vector<16x64xf32>
    %c0_123 = arith.constant 0 : index
    %c0_124 = arith.constant 0 : index
    %264 = vector.load %arg28[%c0_123, %c0_124] : memref<1x64xf32, #tpu.memory_space<vmem>>, vector<1x64xf32>
    %265 = vector.broadcast %264 : vector<1x64xf32> to vector<16x64xf32>
    %266 = arith.addf %263, %265 : vector<16x64xf32>
    %cst_125 = arith.constant 0.000000e+00 : f32
    %267 = vector.broadcast %cst_125 : f32 to vector<16x64xf32>
    %268 = arith.maximumf %266, %267 : vector<16x64xf32>
    %c0_126 = arith.constant 0 : index
    %c0_127 = arith.constant 0 : index
    %269 = vector.load %arg29[%c0_126, %c0_127] : memref<64x32xf32, #tpu.memory_space<vmem>>, vector<64x32xf32>
    %cst_128 = arith.constant dense<0.000000e+00> : vector<16x32xf32>
    %270 = tpu.matmul %268, %269, %cst_128 {dimension_numbers = #tpu.dot_dimension_numbers<[1], [0], [0], [1], [0, 0, 1, 1], [], []>} : vector<16x64xf32>, vector<64x32xf32>, vector<16x32xf32> -> vector<16x32xf32>
    %c0_129 = arith.constant 0 : index
    %c0_130 = arith.constant 0 : index
    %271 = vector.load %arg30[%c0_129, %c0_130] : memref<1x32xf32, #tpu.memory_space<vmem>>, vector<1x32xf32>
    %272 = vector.broadcast %271 : vector<1x32xf32> to vector<16x32xf32>
    %273 = arith.addf %270, %272 : vector<16x32xf32>
    %274 = arith.addf %239, %273 : vector<16x32xf32>
    %275 = vector.shape_cast %274 : vector<16x32xf32> to vector<2x8x32xf32>
    %c0_131 = arith.constant 0 : index
    %c0_132 = arith.constant 0 : index
    %c0_133 = arith.constant 0 : index
    %276 = vector.load %arg31[%c0_131, %c0_132, %c0_133] : memref<2x8x32xf32, #tpu.memory_space<vmem>>, vector<2x8x32xf32>
    tpu.vector_store %arg31[%c0_131, %c0_132, %c0_133], %275 {strides = array<i32>} : memref<2x8x32xf32, #tpu.memory_space<vmem>>, vector<2x8x32xf32>,
    return
  }
  func.func @transform_0(%arg0: i32) -> (i32, i32, i32) {
    %c0_i32 = arith.constant 0 : i32
    %c0_i32_0 = arith.constant 0 : i32
    %c0_i32_1 = arith.constant 0 : i32
    return %arg0, %c0_i32, %c0_i32_0 : i32, i32, i32
  }
  func.func @transform_1(%arg0: i32) -> (i32, i32, i32) {
    %c0_i32 = arith.constant 0 : i32
    %c0_i32_0 = arith.constant 0 : i32
    %c0_i32_1 = arith.constant 0 : i32
    return %arg0, %c0_i32, %c0_i32_0 : i32, i32, i32
  }
  func.func @transform_2(%arg0: i32) -> (i32, i32, i32) {
    %c0_i32 = arith.constant 0 : i32
    %c0_i32_0 = arith.constant 0 : i32
    %c0_i32_1 = arith.constant 0 : i32
    return %arg0, %c0_i32, %c0_i32_0 : i32, i32, i32
  }
  func.func @transform_3(%arg0: i32) -> (i32, i32, i32) {
    %c0_i32 = arith.constant 0 : i32
    %c0_i32_0 = arith.constant 0 : i32
    %c0_i32_1 = arith.constant 0 : i32
    return %arg0, %c0_i32, %c0_i32_0 : i32, i32, i32
  }
  func.func @transform_4(%arg0: i32) -> (i32, i32) {
    %c0_i32 = arith.constant 0 : i32
    %c0_i32_0 = arith.constant 0 : i32
    %c0_i32_1 = arith.constant 0 : i32
    return %c0_i32, %c0_i32_0 : i32, i32
  }
  func.func @transform_5(%arg0: i32) -> (i32, i32) {
    %c0_i32 = arith.constant 0 : i32
    %c0_i32_0 = arith.constant 0 : i32
    %c0_i32_1 = arith.constant 0 : i32
    return %c0_i32, %c0_i32_0 : i32, i32
  }
  func.func @transform_6(%arg0: i32) -> (i32, i32) {
    %c0_i32 = arith.constant 0 : i32
    %c0_i32_0 = arith.constant 0 : i32
    %c0_i32_1 = arith.constant 0 : i32
    return %c0_i32, %c0_i32_0 : i32, i32
  }
  func.func @transform_7(%arg0: i32) -> (i32, i32) {
    %c0_i32 = arith.constant 0 : i32
    %c0_i32_0 = arith.constant 0 : i32
    %c0_i32_1 = arith.constant 0 : i32
    return %c0_i32, %c0_i32_0 : i32, i32
  }
  func.func @transform_8(%arg0: i32) -> (i32, i32) {
    %c0_i32 = arith.constant 0 : i32
    %c0_i32_0 = arith.constant 0 : i32
    %c0_i32_1 = arith.constant 0 : i32
    return %c0_i32, %c0_i32_0 : i32, i32
  }
  func.func @transform_9(%arg0: i32) -> (i32, i32) {
    %c0_i32 = arith.constant 0 : i32
    %c0_i32_0 = arith.constant 0 : i32
    %c0_i32_1 = arith.constant 0 : i32
    return %c0_i32, %c0_i32_0 : i32, i32
  }
  func.func @transform_10(%arg0: i32) -> (i32, i32) {
    %c0_i32 = arith.constant 0 : i32
    %c0_i32_0 = arith.constant 0 : i32
    %c0_i32_1 = arith.constant 0 : i32
    return %c0_i32, %c0_i32_0 : i32, i32
  }
  func.func @transform_11(%arg0: i32) -> (i32, i32) {
    %c0_i32 = arith.constant 0 : i32
    %c0_i32_0 = arith.constant 0 : i32
    %c0_i32_1 = arith.constant 0 : i32
    return %c0_i32, %c0_i32_0 : i32, i32
  }
  func.func @transform_12(%arg0: i32) -> (i32, i32) {
    %c0_i32 = arith.constant 0 : i32
    %c0_i32_0 = arith.constant 0 : i32
    %c0_i32_1 = arith.constant 0 : i32
    return %c0_i32, %c0_i32_0 : i32, i32
  }
  func.func @transform_13(%arg0: i32) -> (i32, i32) {
    %c0_i32 = arith.constant 0 : i32
    %c0_i32_0 = arith.constant 0 : i32
    %c0_i32_1 = arith.constant 0 : i32
    return %c0_i32, %c0_i32_0 : i32, i32
  }
  func.func @transform_14(%arg0: i32) -> (i32, i32) {
    %c0_i32 = arith.constant 0 : i32
    %c0_i32_0 = arith.constant 0 : i32
    %c0_i32_1 = arith.constant 0 : i32
    return %c0_i32, %c0_i32_0 : i32, i32
  }
  func.func @transform_15(%arg0: i32) -> (i32, i32) {
    %c0_i32 = arith.constant 0 : i32
    %c0_i32_0 = arith.constant 0 : i32
    %c0_i32_1 = arith.constant 0 : i32
    return %c0_i32, %c0_i32_0 : i32, i32
  }
  func.func @transform_16(%arg0: i32) -> (i32, i32) {
    %c0_i32 = arith.constant 0 : i32
    %c0_i32_0 = arith.constant 0 : i32
    %c0_i32_1 = arith.constant 0 : i32
    return %c0_i32, %c0_i32_0 : i32, i32
  }
  func.func @transform_17(%arg0: i32) -> (i32, i32) {
    %c0_i32 = arith.constant 0 : i32
    %c0_i32_0 = arith.constant 0 : i32
    %c0_i32_1 = arith.constant 0 : i32
    return %c0_i32, %c0_i32_0 : i32, i32
  }
  func.func @transform_18(%arg0: i32) -> (i32, i32) {
    %c0_i32 = arith.constant 0 : i32
    %c0_i32_0 = arith.constant 0 : i32
    %c0_i32_1 = arith.constant 0 : i32
    return %c0_i32, %c0_i32_0 : i32, i32
  }
  func.func @transform_19(%arg0: i32) -> (i32, i32) {
    %c0_i32 = arith.constant 0 : i32
    %c0_i32_0 = arith.constant 0 : i32
    %c0_i32_1 = arith.constant 0 : i32
    return %c0_i32, %c0_i32_0 : i32, i32
  }
  func.func @transform_20(%arg0: i32) -> (i32, i32) {
    %c0_i32 = arith.constant 0 : i32
    %c0_i32_0 = arith.constant 0 : i32
    %c0_i32_1 = arith.constant 0 : i32
    return %c0_i32, %c0_i32_0 : i32, i32
  }
  func.func @transform_21(%arg0: i32) -> (i32, i32) {
    %c0_i32 = arith.constant 0 : i32
    %c0_i32_0 = arith.constant 0 : i32
    %c0_i32_1 = arith.constant 0 : i32
    return %c0_i32, %c0_i32_0 : i32, i32
  }
  func.func @transform_22(%arg0: i32) -> (i32, i32) {
    %c0_i32 = arith.constant 0 : i32
    %c0_i32_0 = arith.constant 0 : i32
    %c0_i32_1 = arith.constant 0 : i32
    return %c0_i32, %c0_i32_0 : i32, i32
  }
  func.func @transform_23(%arg0: i32) -> (i32, i32) {
    %c0_i32 = arith.constant 0 : i32
    %c0_i32_0 = arith.constant 0 : i32
    %c0_i32_1 = arith.constant 0 : i32
    return %c0_i32, %c0_i32_0 : i32, i32
  }
  func.func @transform_24(%arg0: i32) -> (i32, i32) {
    %c0_i32 = arith.constant 0 : i32
    %c0_i32_0 = arith.constant 0 : i32
    %c0_i32_1 = arith.constant 0 : i32
    return %c0_i32, %c0_i32_0 : i32, i32
  }
  func.func @transform_25(%arg0: i32) -> (i32, i32) {
    %c0_i32 = arith.constant 0 : i32
    %c0_i32_0 = arith.constant 0 : i32
    %c0_i32_1 = arith.constant 0 : i32
    return %c0_i32, %c0_i32_0 : i32, i32
  }
  func.func @transform_26(%arg0: i32) -> (i32, i32) {
    %c0_i32 = arith.constant 0 : i32
    %c0_i32_0 = arith.constant 0 : i32
    %c0_i32_1 = arith.constant 0 : i32
    return %c0_i32, %c0_i32_0 : i32, i32
  }
  func.func @transform_27(%arg0: i32) -> (i32, i32) {
    %c0_i32 = arith.constant 0 : i32
    %c0_i32_0 = arith.constant 0 : i32
    %c0_i32_1 = arith.constant 0 : i32
    return %c0_i32, %c0_i32_0 : i32, i32
  }
  func.func @transform_28(%arg0: i32) -> (i32, i32) {
    %c0_i32 = arith.constant 0 : i32
    %c0_i32_0 = arith.constant 0 : i32
    %c0_i32_1 = arith.constant 0 : i32
    return %c0_i32, %c0_i32_0 : i32, i32
  }
  func.func @transform_29(%arg0: i32) -> (i32, i32) {
    %c0_i32 = arith.constant 0 : i32
    %c0_i32_0 = arith.constant 0 : i32
    %c0_i32_1 = arith.constant 0 : i32
    return %c0_i32, %c0_i32_0 : i32, i32
  }
  func.func @transform_30(%arg0: i32) -> (i32, i32, i32) {
    %c0_i32 = arith.constant 0 : i32
    %c0_i32_0 = arith.constant 0 : i32
    %c0_i32_1 = arith.constant 0 : i32
    return %arg0, %c0_i32, %c0_i32_0 : i32, i32, i32
  }
}

module attributes {stable_mosaic.version = 11 : i64} {
  func.func @decoder_layer_kernel(%arg0: i32, %arg1: memref<2x8x32xf32, #tpu.memory_space<vmem>>, %arg2: memref<2x8x32xf32, #tpu.memory_space<vmem>>, %arg3: memref<2x8x8xi8, #tpu.memory_space<vmem>>, %arg4: memref<2x8x8xi8, #tpu.memory_space<vmem>>, %arg5: memref<1x32xf32, #tpu.memory_space<vmem>>, %arg6: memref<1x32xf32, #tpu.memory_space<vmem>>, %arg7: memref<1x32xf32, #tpu.memory_space<vmem>>, %arg8: memref<1x32xf32, #tpu.memory_space<vmem>>, %arg9: memref<1x32xf32, #tpu.memory_space<vmem>>, %arg10: memref<1x32xf32, #tpu.memory_space<vmem>>, %arg11: memref<32x32xf32, #tpu.memory_space<vmem>>, %arg12: memref<1x32xf32, #tpu.memory_space<vmem>>, %arg13: memref<32x32xf32, #tpu.memory_space<vmem>>, %arg14: memref<1x32xf32, #tpu.memory_space<vmem>>, %arg15: memref<32x32xf32, #tpu.memory_space<vmem>>, %arg16: memref<1x32xf32, #tpu.memory_space<vmem>>, %arg17: memref<32x32xf32, #tpu.memory_space<vmem>>, %arg18: memref<1x32xf32, #tpu.memory_space<vmem>>, %arg19: memref<32x32xf32, #tpu.memory_space<vmem>>, %arg20: memref<1x32xf32, #tpu.memory_space<vmem>>, %arg21: memref<32x32xf32, #tpu.memory_space<vmem>>, %arg22: memref<1x32xf32, #tpu.memory_space<vmem>>, %arg23: memref<32x32xf32, #tpu.memory_space<vmem>>, %arg24: memref<1x32xf32, #tpu.memory_space<vmem>>, %arg25: memref<32x32xf32, #tpu.memory_space<vmem>>, %arg26: memref<1x32xf32, #tpu.memory_space<vmem>>, %arg27: memref<32x64xf32, #tpu.memory_space<vmem>>, %arg28: memref<1x64xf32, #tpu.memory_space<vmem>>, %arg29: memref<64x32xf32, #tpu.memory_space<vmem>>, %arg30: memref<1x32xf32, #tpu.memory_space<vmem>>, %arg31: memref<2x8x32xf32, #tpu.memory_space<vmem>>) attributes {dimension_semantics = [#tpu.dimension_semantics<parallel>], iteration_bounds = array<i64: 1>, scalar_prefetch = 0 : i64, scratch_operands = 0 : i64, tpu.core_type = #tpu.core_type<tc>, window_params = [{transform_indices = @transform_0, window_bounds = array<i64: 2, 8, 32>}, {transform_indices = @transform_1, window_bounds = array<i64: 2, 8, 32>}, {transform_indices = @transform_2, window_bounds = array<i64: 2, 8, 8>}, {transform_indices = @transform_3, window_bounds = array<i64: 2, 8, 8>}, {pipeline_mode = #tpu.pipeline_mode<synchronous>, transform_indices = @transform_4, window_bounds = array<i64: 1, 32>}, {pipeline_mode = #tpu.pipeline_mode<synchronous>, transform_indices = @transform_5, window_bounds = array<i64: 1, 32>}, {pipeline_mode = #tpu.pipeline_mode<synchronous>, transform_indices = @transform_6, window_bounds = array<i64: 1, 32>}, {pipeline_mode = #tpu.pipeline_mode<synchronous>, transform_indices = @transform_7, window_bounds = array<i64: 1, 32>}, {pipeline_mode = #tpu.pipeline_mode<synchronous>, transform_indices = @transform_8, window_bounds = array<i64: 1, 32>}, {pipeline_mode = #tpu.pipeline_mode<synchronous>, transform_indices = @transform_9, window_bounds = array<i64: 1, 32>}, {pipeline_mode = #tpu.pipeline_mode<synchronous>, transform_indices = @transform_10, window_bounds = array<i64: 32, 32>}, {pipeline_mode = #tpu.pipeline_mode<synchronous>, transform_indices = @transform_11, window_bounds = array<i64: 1, 32>}, {pipeline_mode = #tpu.pipeline_mode<synchronous>, transform_indices = @transform_12, window_bounds = array<i64: 32, 32>}, {pipeline_mode = #tpu.pipeline_mode<synchronous>, transform_indices = @transform_13, window_bounds = array<i64: 1, 32>}, {pipeline_mode = #tpu.pipeline_mode<synchronous>, transform_indices = @transform_14, window_bounds = array<i64: 32, 32>}, {pipeline_mode = #tpu.pipeline_mode<synchronous>, transform_indices = @transform_15, window_bounds = array<i64: 1, 32>}, {pipeline_mode = #tpu.pipeline_mode<synchronous>, transform_indices = @transform_16, window_bounds = array<i64: 32, 32>}, {pipeline_mode = #tpu.pipeline_mode<synchronous>, transform_indices = @transform_17, window_bounds = array<i64: 1, 32>}, {pipeline_mode = #tpu.pipeline_mode<synchronous>, transform_indices = @transform_18, window_bounds = array<i64: 32, 32>}, {pipeline_mode = #tpu.pipeline_mode<synchronous>, transform_indices = @transform_19, window_bounds = array<i64: 1, 32>}, {pipeline_mode = #tpu.pipeline_mode<synchronous>, transform_indices = @transform_20, window_bounds = array<i64: 32, 32>}, {pipeline_mode = #tpu.pipeline_mode<synchronous>, transform_indices = @transform_21, window_bounds = array<i64: 1, 32>}, {pipeline_mode = #tpu.pipeline_mode<synchronous>, transform_indices = @transform_22, window_bounds = array<i64: 32, 32>}, {pipeline_mode = #tpu.pipeline_mode<synchronous>, transform_indices = @transform_23, window_bounds = array<i64: 1, 32>}, {pipeline_mode = #tpu.pipeline_mode<synchronous>, transform_indices = @transform_24, window_bounds = array<i64: 32, 32>}, {pipeline_mode = #tpu.pipeline_mode<synchronous>, transform_indices = @transform_25, window_bounds = array<i64: 1, 32>}, {pipeline_mode = #tpu.pipeline_mode<synchronous>, transform_indices = @transform_26, window_bounds = array<i64: 32, 64>}, {pipeline_mode = #tpu.pipeline_mode<synchronous>, transform_indices = @transform_27, window_bounds = array<i64: 1, 64>}, {pipeline_mode = #tpu.pipeline_mode<synchronous>, transform_indices = @transform_28, window_bounds = array<i64: 64, 32>}, {pipeline_mode = #tpu.pipeline_mode<synchronous>, transform_indices = @transform_29, window_bounds = array<i64: 1, 32>}, {transform_indices = @transform_30, window_bounds = array<i64: 2, 8, 32>}]} {
    %c0 = arith.constant 0 : index
    %c0_0 = arith.constant 0 : index
    %c0_1 = arith.constant 0 : index
    %0 = vector.load %arg1[%c0, %c0_0, %c0_1] : memref<2x8x32xf32, #tpu.memory_space<vmem>>, vector<2x8x32xf32>
    %1 = vector.shape_cast %0 : vector<2x8x32xf32> to vector<16x32xf32>
    %c0_2 = arith.constant 0 : index
    %c0_3 = arith.constant 0 : index
    %c0_4 = arith.constant 0 : index
    %2 = vector.load %arg2[%c0_2, %c0_3, %c0_4] : memref<2x8x32xf32, #tpu.memory_space<vmem>>, vector<2x8x32xf32>
    %3 = vector.shape_cast %2 : vector<2x8x32xf32> to vector<16x32xf32>
    %c0_5 = arith.constant 0 : index
    %c0_6 = arith.constant 0 : index
    %c0_7 = arith.constant 0 : index
    %4 = vector.load %arg3[%c0_5, %c0_6, %c0_7] : memref<2x8x8xi8, #tpu.memory_space<vmem>>, vector<2x8x8xi8>
    %c0_i8 = arith.constant 0 : i8
    %5 = vector.broadcast %c0_i8 : i8 to vector<2x8x8xi8>
    %6 = arith.cmpi ne, %4, %5 : vector<2x8x8xi8>
    %c0_8 = arith.constant 0 : index
    %c0_9 = arith.constant 0 : index
    %c0_10 = arith.constant 0 : index
    %7 = vector.load %arg4[%c0_8, %c0_9, %c0_10] : memref<2x8x8xi8, #tpu.memory_space<vmem>>, vector<2x8x8xi8>
    %c0_i8_11 = arith.constant 0 : i8
    %8 = vector.broadcast %c0_i8_11 : i8 to vector<2x8x8xi8>
    %9 = arith.cmpi ne, %7, %8 : vector<2x8x8xi8>
    %c0_12 = arith.constant 0 : index
    %c0_13 = arith.constant 0 : index
    %10 = vector.load %arg5[%c0_12, %c0_13] : memref<1x32xf32, #tpu.memory_space<vmem>>, vector<1x32xf32>
    %c0_14 = arith.constant 0 : index
    %c0_15 = arith.constant 0 : index
    %11 = vector.load %arg6[%c0_14, %c0_15] : memref<1x32xf32, #tpu.memory_space<vmem>>, vector<1x32xf32>
    %cst = arith.constant dense<0.000000e+00> : vector<16xf32>
    %12 = vector.multi_reduction <add>, %1, %cst [1] : vector<16x32xf32> to vector<16xf32>
    %13 = vector.shape_cast %12 : vector<16xf32> to vector<16x1xf32>
    %cst_16 = arith.constant 3.125000e-02 : f32
    %14 = vector.broadcast %cst_16 : f32 to vector<16x1xf32>
    %15 = arith.mulf %13, %14 : vector<16x1xf32>
    %16 = vector.broadcast %15 : vector<16x1xf32> to vector<16x32xf32>
    %17 = arith.subf %1, %16 : vector<16x32xf32>
    %18 = arith.mulf %17, %17 : vector<16x32xf32>
    %cst_17 = arith.constant dense<0.000000e+00> : vector<16xf32>
    %19 = vector.multi_reduction <add>, %18, %cst_17 [1] : vector<16x32xf32> to vector<16xf32>
    %20 = vector.shape_cast %19 : vector<16xf32> to vector<16x1xf32>
    %cst_18 = arith.constant 0.0322580636 : f32
    %21 = vector.broadcast %cst_18 : f32 to vector<16x1xf32>
    %22 = arith.mulf %20, %21 : vector<16x1xf32>
    %23 = math.sqrt %22 : vector<16x1xf32>
    %24 = vector.broadcast %10 : vector<1x32xf32> to vector<16x32xf32>
    %25 = arith.mulf %24, %17 : vector<16x32xf32>
    %cst_19 = arith.constant 9.99999997E-7 : f32
    %26 = vector.broadcast %cst_19 : f32 to vector<16x1xf32>
    %27 = arith.addf %23, %26 : vector<16x1xf32>
    %28 = vector.broadcast %27 : vector<16x1xf32> to vector<16x32xf32>
    %29 = arith.divf %25, %28 : vector<16x32xf32>
    %30 = vector.broadcast %11 : vector<1x32xf32> to vector<16x32xf32>
    %31 = arith.addf %29, %30 : vector<16x32xf32>
    %c0_20 = arith.constant 0 : index
    %c0_21 = arith.constant 0 : index
    %32 = vector.load %arg11[%c0_20, %c0_21] : memref<32x32xf32, #tpu.memory_space<vmem>>, vector<32x32xf32>
    %cst_22 = arith.constant dense<0.000000e+00> : vector<16x32xf32>
    %33 = tpu.matmul %31, %32, %cst_22 {dimension_numbers = #tpu.dot_dimension_numbers<[1], [0], [0], [1], [0, 0, 1, 1], [], []>} : vector<16x32xf32>, vector<32x32xf32>, vector<16x32xf32> -> vector<16x32xf32>
    %c0_23 = arith.constant 0 : index
    %c0_24 = arith.constant 0 : index
    %34 = vector.load %arg12[%c0_23, %c0_24] : memref<1x32xf32, #tpu.memory_space<vmem>>, vector<1x32xf32>
    %35 = vector.broadcast %34 : vector<1x32xf32> to vector<16x32xf32>
    %36 = arith.addf %33, %35 : vector<16x32xf32>
    %cst_25 = arith.constant 0.353553385 : f32
    %37 = vector.broadcast %cst_25 : f32 to vector<16x32xf32>
    %38 = arith.mulf %36, %37 : vector<16x32xf32>
    %c0_26 = arith.constant 0 : index
    %c0_27 = arith.constant 0 : index
    %39 = vector.load %arg13[%c0_26, %c0_27] : memref<32x32xf32, #tpu.memory_space<vmem>>, vector<32x32xf32>
    %cst_28 = arith.constant dense<0.000000e+00> : vector<16x32xf32>
    %40 = tpu.matmul %31, %39, %cst_28 {dimension_numbers = #tpu.dot_dimension_numbers<[1], [0], [0], [1], [0, 0, 1, 1], [], []>} : vector<16x32xf32>, vector<32x32xf32>, vector<16x32xf32> -> vector<16x32xf32>
    %c0_29 = arith.constant 0 : index
    %c0_30 = arith.constant 0 : index
    %41 = vector.load %arg14[%c0_29, %c0_30] : memref<1x32xf32, #tpu.memory_space<vmem>>, vector<1x32xf32>
    %42 = vector.broadcast %41 : vector<1x32xf32> to vector<16x32xf32>
    %43 = arith.addf %40, %42 : vector<16x32xf32>
    %c0_31 = arith.constant 0 : index
    %c0_32 = arith.constant 0 : index
    %44 = vector.load %arg15[%c0_31, %c0_32] : memref<32x32xf32, #tpu.memory_space<vmem>>, vector<32x32xf32>
    %cst_33 = arith.constant dense<0.000000e+00> : vector<16x32xf32>
    %45 = tpu.matmul %31, %44, %cst_33 {dimension_numbers = #tpu.dot_dimension_numbers<[1], [0], [0], [1], [0, 0, 1, 1], [], []>} : vector<16x32xf32>, vector<32x32xf32>, vector<16x32xf32> -> vector<16x32xf32>
    %c0_34 = arith.constant 0 : index
    %c0_35 = arith.constant 0 : index
    %46 = vector.load %arg16[%c0_34, %c0_35] : memref<1x32xf32, #tpu.memory_space<vmem>>, vector<1x32xf32>
    %47 = vector.broadcast %46 : vector<1x32xf32> to vector<16x32xf32>
    %48 = arith.addf %45, %47 : vector<16x32xf32>
    %49 = vector.shape_cast %38 : vector<16x32xf32> to vector<2x8x32xf32>
    %50 = vector.shape_cast %43 : vector<16x32xf32> to vector<2x8x32xf32>
    %51 = tpu.transpose %50, [0, 2, 1] : vector<2x8x32xf32> -> vector<2x32x8xf32>
    %52 = vector.shape_cast %48 : vector<16x32xf32> to vector<2x8x32xf32>
    %53 = vector.extract_strided_slice %49 {offsets = [0, 0, 0], sizes = [2, 8, 8], strides = [1, 1, 1]} : vector<2x8x32xf32> to vector<2x8x8xf32>
    %54 = vector.extract_strided_slice %51 {offsets = [0, 0, 0], sizes = [2, 8, 8], strides = [1, 1, 1]} : vector<2x32x8xf32> to vector<2x8x8xf32>
    "tpu.trace_start"() <{level = 10 : i32, message = "btd,bds->bts"}> : () -> ()
    %cst_36 = arith.constant dense<0.000000e+00> : vector<2x8x8xf32>
    %55 = tpu.matmul %53, %54, %cst_36 {dimension_numbers = #tpu.dot_dimension_numbers<[2], [1], [1], [2], [0, 0, 0, 1, 1, 2], [0], [0]>} : vector<2x8x8xf32>, vector<2x8x8xf32>, vector<2x8x8xf32> -> vector<2x8x8xf32>
    %cst_37 = arith.constant -1.000000e+09 : f32
    "tpu.trace_stop"() : () -> ()
    %56 = vector.broadcast %cst_37 : f32 to vector<2x8x8xf32>
    %57 = arith.select %6, %55, %56 : vector<2x8x8xi1>, vector<2x8x8xf32>
    %cst_38 = arith.constant dense<0xFF800000> : vector<2x8xf32>
    %58 = vector.multi_reduction <maximumf>, %57, %cst_38 [2] : vector<2x8x8xf32> to vector<2x8xf32>
    %59 = vector.shape_cast %58 : vector<2x8xf32> to vector<2x8x1xf32>
    %60 = vector.broadcast %59 : vector<2x8x1xf32> to vector<2x8x8xf32>
    %61 = arith.subf %57, %60 : vector<2x8x8xf32>
    %62 = math.exp %61 : vector<2x8x8xf32>
    %cst_39 = arith.constant dense<0.000000e+00> : vector<2x8xf32>
    %63 = vector.multi_reduction <add>, %62, %cst_39 [2] : vector<2x8x8xf32> to vector<2x8xf32>
    %64 = vector.shape_cast %63 : vector<2x8xf32> to vector<2x8x1xf32>
    %65 = vector.broadcast %64 : vector<2x8x1xf32> to vector<2x8x8xf32>
    %66 = arith.divf %62, %65 : vector<2x8x8xf32>
    %67 = vector.extract_strided_slice %52 {offsets = [0, 0, 0], sizes = [2, 8, 8], strides = [1, 1, 1]} : vector<2x8x32xf32> to vector<2x8x8xf32>
    "tpu.trace_start"() <{level = 10 : i32, message = "bts,bsd->btd"}> : () -> ()
    %cst_40 = arith.constant dense<0.000000e+00> : vector<2x8x8xf32>
    %68 = tpu.matmul %66, %67, %cst_40 {dimension_numbers = #tpu.dot_dimension_numbers<[2], [1], [1], [2], [0, 0, 0, 1, 1, 2], [0], [0]>} : vector<2x8x8xf32>, vector<2x8x8xf32>, vector<2x8x8xf32> -> vector<2x8x8xf32>
    "tpu.trace_stop"() : () -> ()
    %69 = vector.extract_strided_slice %49 {offsets = [0, 0, 8], sizes = [2, 8, 8], strides = [1, 1, 1]} : vector<2x8x32xf32> to vector<2x8x8xf32>
    %70 = vector.extract_strided_slice %51 {offsets = [0, 8, 0], sizes = [2, 8, 8], strides = [1, 1, 1]} : vector<2x32x8xf32> to vector<2x8x8xf32>
    "tpu.trace_start"() <{level = 10 : i32, message = "btd,bds->bts"}> : () -> ()
    %cst_41 = arith.constant dense<0.000000e+00> : vector<2x8x8xf32>
    %71 = tpu.matmul %69, %70, %cst_41 {dimension_numbers = #tpu.dot_dimension_numbers<[2], [1], [1], [2], [0, 0, 0, 1, 1, 2], [0], [0]>} : vector<2x8x8xf32>, vector<2x8x8xf32>, vector<2x8x8xf32> -> vector<2x8x8xf32>
    %cst_42 = arith.constant -1.000000e+09 : f32
    "tpu.trace_stop"() : () -> ()
    %72 = vector.broadcast %cst_42 : f32 to vector<2x8x8xf32>
    %73 = arith.select %6, %71, %72 : vector<2x8x8xi1>, vector<2x8x8xf32>
    %cst_43 = arith.constant dense<0xFF800000> : vector<2x8xf32>
    %74 = vector.multi_reduction <maximumf>, %73, %cst_43 [2] : vector<2x8x8xf32> to vector<2x8xf32>
    %75 = vector.shape_cast %74 : vector<2x8xf32> to vector<2x8x1xf32>
    %76 = vector.broadcast %75 : vector<2x8x1xf32> to vector<2x8x8xf32>
    %77 = arith.subf %73, %76 : vector<2x8x8xf32>
    %78 = math.exp %77 : vector<2x8x8xf32>
    %cst_44 = arith.constant dense<0.000000e+00> : vector<2x8xf32>
    %79 = vector.multi_reduction <add>, %78, %cst_44 [2] : vector<2x8x8xf32> to vector<2x8xf32>
    %80 = vector.shape_cast %79 : vector<2x8xf32> to vector<2x8x1xf32>
    %81 = vector.broadcast %80 : vector<2x8x1xf32> to vector<2x8x8xf32>
    %82 = arith.divf %78, %81 : vector<2x8x8xf32>
    %83 = vector.extract_strided_slice %52 {offsets = [0, 0, 8], sizes = [2, 8, 8], strides = [1, 1, 1]} : vector<2x8x32xf32> to vector<2x8x8xf32>
    "tpu.trace_start"() <{level = 10 : i32, message = "bts,bsd->btd"}> : () -> ()
    %cst_45 = arith.constant dense<0.000000e+00> : vector<2x8x8xf32>
    %84 = tpu.matmul %82, %83, %cst_45 {dimension_numbers = #tpu.dot_dimension_numbers<[2], [1], [1], [2], [0, 0, 0, 1, 1, 2], [0], [0]>} : vector<2x8x8xf32>, vector<2x8x8xf32>, vector<2x8x8xf32> -> vector<2x8x8xf32>
    "tpu.trace_stop"() : () -> ()
    %85 = vector.extract_strided_slice %49 {offsets = [0, 0, 16], sizes = [2, 8, 8], strides = [1, 1, 1]} : vector<2x8x32xf32> to vector<2x8x8xf32>
    %86 = vector.extract_strided_slice %51 {offsets = [0, 16, 0], sizes = [2, 8, 8], strides = [1, 1, 1]} : vector<2x32x8xf32> to vector<2x8x8xf32>
    "tpu.trace_start"() <{level = 10 : i32, message = "btd,bds->bts"}> : () -> ()
    %cst_46 = arith.constant dense<0.000000e+00> : vector<2x8x8xf32>
    %87 = tpu.matmul %85, %86, %cst_46 {dimension_numbers = #tpu.dot_dimension_numbers<[2], [1], [1], [2], [0, 0, 0, 1, 1, 2], [0], [0]>} : vector<2x8x8xf32>, vector<2x8x8xf32>, vector<2x8x8xf32> -> vector<2x8x8xf32>
    %cst_47 = arith.constant -1.000000e+09 : f32
    "tpu.trace_stop"() : () -> ()
    %88 = vector.broadcast %cst_47 : f32 to vector<2x8x8xf32>
    %89 = arith.select %6, %87, %88 : vector<2x8x8xi1>, vector<2x8x8xf32>
    %cst_48 = arith.constant dense<0xFF800000> : vector<2x8xf32>
    %90 = vector.multi_reduction <maximumf>, %89, %cst_48 [2] : vector<2x8x8xf32> to vector<2x8xf32>
    %91 = vector.shape_cast %90 : vector<2x8xf32> to vector<2x8x1xf32>
    %92 = vector.broadcast %91 : vector<2x8x1xf32> to vector<2x8x8xf32>
    %93 = arith.subf %89, %92 : vector<2x8x8xf32>
    %94 = math.exp %93 : vector<2x8x8xf32>
    %cst_49 = arith.constant dense<0.000000e+00> : vector<2x8xf32>
    %95 = vector.multi_reduction <add>, %94, %cst_49 [2] : vector<2x8x8xf32> to vector<2x8xf32>
    %96 = vector.shape_cast %95 : vector<2x8xf32> to vector<2x8x1xf32>
    %97 = vector.broadcast %96 : vector<2x8x1xf32> to vector<2x8x8xf32>
    %98 = arith.divf %94, %97 : vector<2x8x8xf32>
    %99 = vector.extract_strided_slice %52 {offsets = [0, 0, 16], sizes = [2, 8, 8], strides = [1, 1, 1]} : vector<2x8x32xf32> to vector<2x8x8xf32>
    "tpu.trace_start"() <{level = 10 : i32, message = "bts,bsd->btd"}> : () -> ()
    %cst_50 = arith.constant dense<0.000000e+00> : vector<2x8x8xf32>
    %100 = tpu.matmul %98, %99, %cst_50 {dimension_numbers = #tpu.dot_dimension_numbers<[2], [1], [1], [2], [0, 0, 0, 1, 1, 2], [0], [0]>} : vector<2x8x8xf32>, vector<2x8x8xf32>, vector<2x8x8xf32> -> vector<2x8x8xf32>
    "tpu.trace_stop"() : () -> ()
    %101 = vector.extract_strided_slice %49 {offsets = [0, 0, 24], sizes = [2, 8, 8], strides = [1, 1, 1]} : vector<2x8x32xf32> to vector<2x8x8xf32>
    %102 = vector.extract_strided_slice %51 {offsets = [0, 24, 0], sizes = [2, 8, 8], strides = [1, 1, 1]} : vector<2x32x8xf32> to vector<2x8x8xf32>
    "tpu.trace_start"() <{level = 10 : i32, message = "btd,bds->bts"}> : () -> ()
    %cst_51 = arith.constant dense<0.000000e+00> : vector<2x8x8xf32>
    %103 = tpu.matmul %101, %102, %cst_51 {dimension_numbers = #tpu.dot_dimension_numbers<[2], [1], [1], [2], [0, 0, 0, 1, 1, 2], [0], [0]>} : vector<2x8x8xf32>, vector<2x8x8xf32>, vector<2x8x8xf32> -> vector<2x8x8xf32>
    %cst_52 = arith.constant -1.000000e+09 : f32
    "tpu.trace_stop"() : () -> ()
    %104 = vector.broadcast %cst_52 : f32 to vector<2x8x8xf32>
    %105 = arith.select %6, %103, %104 : vector<2x8x8xi1>, vector<2x8x8xf32>
    %cst_53 = arith.constant dense<0xFF800000> : vector<2x8xf32>
    %106 = vector.multi_reduction <maximumf>, %105, %cst_53 [2] : vector<2x8x8xf32> to vector<2x8xf32>
    %107 = vector.shape_cast %106 : vector<2x8xf32> to vector<2x8x1xf32>
    %108 = vector.broadcast %107 : vector<2x8x1xf32> to vector<2x8x8xf32>
    %109 = arith.subf %105, %108 : vector<2x8x8xf32>
    %110 = math.exp %109 : vector<2x8x8xf32>
    %cst_54 = arith.constant dense<0.000000e+00> : vector<2x8xf32>
    %111 = vector.multi_reduction <add>, %110, %cst_54 [2] : vector<2x8x8xf32> to vector<2x8xf32>
    %112 = vector.shape_cast %111 : vector<2x8xf32> to vector<2x8x1xf32>
    %113 = vector.broadcast %112 : vector<2x8x1xf32> to vector<2x8x8xf32>
    %114 = arith.divf %110, %113 : vector<2x8x8xf32>
    %115 = vector.extract_strided_slice %52 {offsets = [0, 0, 24], sizes = [2, 8, 8], strides = [1, 1, 1]} : vector<2x8x32xf32> to vector<2x8x8xf32>
    "tpu.trace_start"() <{level = 10 : i32, message = "bts,bsd->btd"}> : () -> ()
    %cst_55 = arith.constant dense<0.000000e+00> : vector<2x8x8xf32>
    %116 = tpu.matmul %114, %115, %cst_55 {dimension_numbers = #tpu.dot_dimension_numbers<[2], [1], [1], [2], [0, 0, 0, 1, 1, 2], [0], [0]>} : vector<2x8x8xf32>, vector<2x8x8xf32>, vector<2x8x8xf32> -> vector<2x8x8xf32>
    "tpu.trace_stop"() : () -> ()
    %117 = tpu.concatenate %68, %84, %100, %116 in 2 : vector<2x8x8xf32>, vector<2x8x8xf32>, vector<2x8x8xf32>, vector<2x8x8xf32> -> vector<2x8x32xf32>
    %118 = vector.shape_cast %117 : vector<2x8x32xf32> to vector<16x32xf32>
    %c0_56 = arith.constant 0 : index
    %c0_57 = arith.constant 0 : index
    %119 = vector.load %arg17[%c0_56, %c0_57] : memref<32x32xf32, #tpu.memory_space<vmem>>, vector<32x32xf32>
    %cst_58 = arith.constant dense<0.000000e+00> : vector<16x32xf32>
    %120 = tpu.matmul %118, %119, %cst_58 {dimension_numbers = #tpu.dot_dimension_numbers<[1], [0], [0], [1], [0, 0, 1, 1], [], []>} : vector<16x32xf32>, vector<32x32xf32>, vector<16x32xf32> -> vector<16x32xf32>
    %c0_59 = arith.constant 0 : index
    %c0_60 = arith.constant 0 : index
    %121 = vector.load %arg18[%c0_59, %c0_60] : memref<1x32xf32, #tpu.memory_space<vmem>>, vector<1x32xf32>
    %122 = vector.broadcast %121 : vector<1x32xf32> to vector<16x32xf32>
    %123 = arith.addf %120, %122 : vector<16x32xf32>
    %124 = arith.addf %1, %123 : vector<16x32xf32>
    %c0_61 = arith.constant 0 : index
    %c0_62 = arith.constant 0 : index
    %125 = vector.load %arg7[%c0_61, %c0_62] : memref<1x32xf32, #tpu.memory_space<vmem>>, vector<1x32xf32>
    %c0_63 = arith.constant 0 : index
    %c0_64 = arith.constant 0 : index
    %126 = vector.load %arg8[%c0_63, %c0_64] : memref<1x32xf32, #tpu.memory_space<vmem>>, vector<1x32xf32>
    %cst_65 = arith.constant dense<0.000000e+00> : vector<16xf32>
    %127 = vector.multi_reduction <add>, %124, %cst_65 [1] : vector<16x32xf32> to vector<16xf32>
    %128 = vector.shape_cast %127 : vector<16xf32> to vector<16x1xf32>
    %cst_66 = arith.constant 3.125000e-02 : f32
    %129 = vector.broadcast %cst_66 : f32 to vector<16x1xf32>
    %130 = arith.mulf %128, %129 : vector<16x1xf32>
    %131 = vector.broadcast %130 : vector<16x1xf32> to vector<16x32xf32>
    %132 = arith.subf %124, %131 : vector<16x32xf32>
    %133 = arith.mulf %132, %132 : vector<16x32xf32>
    %cst_67 = arith.constant dense<0.000000e+00> : vector<16xf32>
    %134 = vector.multi_reduction <add>, %133, %cst_67 [1] : vector<16x32xf32> to vector<16xf32>
    %135 = vector.shape_cast %134 : vector<16xf32> to vector<16x1xf32>
    %cst_68 = arith.constant 0.0322580636 : f32
    %136 = vector.broadcast %cst_68 : f32 to vector<16x1xf32>
    %137 = arith.mulf %135, %136 : vector<16x1xf32>
    %138 = math.sqrt %137 : vector<16x1xf32>
    %139 = vector.broadcast %125 : vector<1x32xf32> to vector<16x32xf32>
    %140 = arith.mulf %139, %132 : vector<16x32xf32>
    %cst_69 = arith.constant 9.99999997E-7 : f32
    %141 = vector.broadcast %cst_69 : f32 to vector<16x1xf32>
    %142 = arith.addf %138, %141 : vector<16x1xf32>
    %143 = vector.broadcast %142 : vector<16x1xf32> to vector<16x32xf32>
    %144 = arith.divf %140, %143 : vector<16x32xf32>
    %145 = vector.broadcast %126 : vector<1x32xf32> to vector<16x32xf32>
    %146 = arith.addf %144, %145 : vector<16x32xf32>
    %c0_70 = arith.constant 0 : index
    %c0_71 = arith.constant 0 : index
    %147 = vector.load %arg19[%c0_70, %c0_71] : memref<32x32xf32, #tpu.memory_space<vmem>>, vector<32x32xf32>
    %cst_72 = arith.constant dense<0.000000e+00> : vector<16x32xf32>
    %148 = tpu.matmul %146, %147, %cst_72 {dimension_numbers = #tpu.dot_dimension_numbers<[1], [0], [0], [1], [0, 0, 1, 1], [], []>} : vector<16x32xf32>, vector<32x32xf32>, vector<16x32xf32> -> vector<16x32xf32>
    %c0_73 = arith.constant 0 : index
    %c0_74 = arith.constant 0 : index
    %149 = vector.load %arg20[%c0_73, %c0_74] : memref<1x32xf32, #tpu.memory_space<vmem>>, vector<1x32xf32>
    %150 = vector.broadcast %149 : vector<1x32xf32> to vector<16x32xf32>
    %151 = arith.addf %148, %150 : vector<16x32xf32>
    %cst_75 = arith.constant 0.353553385 : f32
    %152 = vector.broadcast %cst_75 : f32 to vector<16x32xf32>
    %153 = arith.mulf %151, %152 : vector<16x32xf32>
    %c0_76 = arith.constant 0 : index
    %c0_77 = arith.constant 0 : index
    %154 = vector.load %arg21[%c0_76, %c0_77] : memref<32x32xf32, #tpu.memory_space<vmem>>, vector<32x32xf32>
    %cst_78 = arith.constant dense<0.000000e+00> : vector<16x32xf32>
    %155 = tpu.matmul %3, %154, %cst_78 {dimension_numbers = #tpu.dot_dimension_numbers<[1], [0], [0], [1], [0, 0, 1, 1], [], []>} : vector<16x32xf32>, vector<32x32xf32>, vector<16x32xf32> -> vector<16x32xf32>
    %c0_79 = arith.constant 0 : index
    %c0_80 = arith.constant 0 : index
    %156 = vector.load %arg22[%c0_79, %c0_80] : memref<1x32xf32, #tpu.memory_space<vmem>>, vector<1x32xf32>
    %157 = vector.broadcast %156 : vector<1x32xf32> to vector<16x32xf32>
    %158 = arith.addf %155, %157 : vector<16x32xf32>
    %c0_81 = arith.constant 0 : index
    %c0_82 = arith.constant 0 : index
    %159 = vector.load %arg23[%c0_81, %c0_82] : memref<32x32xf32, #tpu.memory_space<vmem>>, vector<32x32xf32>
    %cst_83 = arith.constant dense<0.000000e+00> : vector<16x32xf32>
    %160 = tpu.matmul %3, %159, %cst_83 {dimension_numbers = #tpu.dot_dimension_numbers<[1], [0], [0], [1], [0, 0, 1, 1], [], []>} : vector<16x32xf32>, vector<32x32xf32>, vector<16x32xf32> -> vector<16x32xf32>
    %c0_84 = arith.constant 0 : index
    %c0_85 = arith.constant 0 : index
    %161 = vector.load %arg24[%c0_84, %c0_85] : memref<1x32xf32, #tpu.memory_space<vmem>>, vector<1x32xf32>
    %162 = vector.broadcast %161 : vector<1x32xf32> to vector<16x32xf32>
    %163 = arith.addf %160, %162 : vector<16x32xf32>
    %164 = vector.shape_cast %153 : vector<16x32xf32> to vector<2x8x32xf32>
    %165 = vector.shape_cast %158 : vector<16x32xf32> to vector<2x8x32xf32>
    %166 = tpu.transpose %165, [0, 2, 1] : vector<2x8x32xf32> -> vector<2x32x8xf32>
    %167 = vector.shape_cast %163 : vector<16x32xf32> to vector<2x8x32xf32>
    %168 = vector.extract_strided_slice %164 {offsets = [0, 0, 0], sizes = [2, 8, 8], strides = [1, 1, 1]} : vector<2x8x32xf32> to vector<2x8x8xf32>
    %169 = vector.extract_strided_slice %166 {offsets = [0, 0, 0], sizes = [2, 8, 8], strides = [1, 1, 1]} : vector<2x32x8xf32> to vector<2x8x8xf32>
    "tpu.trace_start"() <{level = 10 : i32, message = "btd,bds->bts"}> : () -> ()
    %cst_86 = arith.constant dense<0.000000e+00> : vector<2x8x8xf32>
    %170 = tpu.matmul %168, %169, %cst_86 {dimension_numbers = #tpu.dot_dimension_numbers<[2], [1], [1], [2], [0, 0, 0, 1, 1, 2], [0], [0]>} : vector<2x8x8xf32>, vector<2x8x8xf32>, vector<2x8x8xf32> -> vector<2x8x8xf32>
    %cst_87 = arith.constant -1.000000e+09 : f32
    "tpu.trace_stop"() : () -> ()
    %171 = vector.broadcast %cst_87 : f32 to vector<2x8x8xf32>
    %172 = arith.select %9, %170, %171 : vector<2x8x8xi1>, vector<2x8x8xf32>
    %cst_88 = arith.constant dense<0xFF800000> : vector<2x8xf32>
    %173 = vector.multi_reduction <maximumf>, %172, %cst_88 [2] : vector<2x8x8xf32> to vector<2x8xf32>
    %174 = vector.shape_cast %173 : vector<2x8xf32> to vector<2x8x1xf32>
    %175 = vector.broadcast %174 : vector<2x8x1xf32> to vector<2x8x8xf32>
    %176 = arith.subf %172, %175 : vector<2x8x8xf32>
    %177 = math.exp %176 : vector<2x8x8xf32>
    %cst_89 = arith.constant dense<0.000000e+00> : vector<2x8xf32>
    %178 = vector.multi_reduction <add>, %177, %cst_89 [2] : vector<2x8x8xf32> to vector<2x8xf32>
    %179 = vector.shape_cast %178 : vector<2x8xf32> to vector<2x8x1xf32>
    %180 = vector.broadcast %179 : vector<2x8x1xf32> to vector<2x8x8xf32>
    %181 = arith.divf %177, %180 : vector<2x8x8xf32>
    %182 = vector.extract_strided_slice %167 {offsets = [0, 0, 0], sizes = [2, 8, 8], strides = [1, 1, 1]} : vector<2x8x32xf32> to vector<2x8x8xf32>
    "tpu.trace_start"() <{level = 10 : i32, message = "bts,bsd->btd"}> : () -> ()
    %cst_90 = arith.constant dense<0.000000e+00> : vector<2x8x8xf32>
    %183 = tpu.matmul %181, %182, %cst_90 {dimension_numbers = #tpu.dot_dimension_numbers<[2], [1], [1], [2], [0, 0, 0, 1, 1, 2], [0], [0]>} : vector<2x8x8xf32>, vector<2x8x8xf32>, vector<2x8x8xf32> -> vector<2x8x8xf32>
    "tpu.trace_stop"() : () -> ()
    %184 = vector.extract_strided_slice %164 {offsets = [0, 0, 8], sizes = [2, 8, 8], strides = [1, 1, 1]} : vector<2x8x32xf32> to vector<2x8x8xf32>
    %185 = vector.extract_strided_slice %166 {offsets = [0, 8, 0], sizes = [2, 8, 8], strides = [1, 1, 1]} : vector<2x32x8xf32> to vector<2x8x8xf32>
    "tpu.trace_start"() <{level = 10 : i32, message = "btd,bds->bts"}> : () -> ()
    %cst_91 = arith.constant dense<0.000000e+00> : vector<2x8x8xf32>
    %186 = tpu.matmul %184, %185, %cst_91 {dimension_numbers = #tpu.dot_dimension_numbers<[2], [1], [1], [2], [0, 0, 0, 1, 1, 2], [0], [0]>} : vector<2x8x8xf32>, vector<2x8x8xf32>, vector<2x8x8xf32> -> vector<2x8x8xf32>
    %cst_92 = arith.constant -1.000000e+09 : f32
    "tpu.trace_stop"() : () -> ()
    %187 = vector.broadcast %cst_92 : f32 to vector<2x8x8xf32>
    %188 = arith.select %9, %186, %187 : vector<2x8x8xi1>, vector<2x8x8xf32>
    %cst_93 = arith.constant dense<0xFF800000> : vector<2x8xf32>
    %189 = vector.multi_reduction <maximumf>, %188, %cst_93 [2] : vector<2x8x8xf32> to vector<2x8xf32>
    %190 = vector.shape_cast %189 : vector<2x8xf32> to vector<2x8x1xf32>
    %191 = vector.broadcast %190 : vector<2x8x1xf32> to vector<2x8x8xf32>
    %192 = arith.subf %188, %191 : vector<2x8x8xf32>
    %193 = math.exp %192 : vector<2x8x8xf32>
    %cst_94 = arith.constant dense<0.000000e+00> : vector<2x8xf32>
    %194 = vector.multi_reduction <add>, %193, %cst_94 [2] : vector<2x8x8xf32> to vector<2x8xf32>
    %195 = vector.shape_cast %194 : vector<2x8xf32> to vector<2x8x1xf32>
    %196 = vector.broadcast %195 : vector<2x8x1xf32> to vector<2x8x8xf32>
    %197 = arith.divf %193, %196 : vector<2x8x8xf32>
    %198 = vector.extract_strided_slice %167 {offsets = [0, 0, 8], sizes = [2, 8, 8], strides = [1, 1, 1]} : vector<2x8x32xf32> to vector<2x8x8xf32>
    "tpu.trace_start"() <{level = 10 : i32, message = "bts,bsd->btd"}> : () -> ()
    %cst_95 = arith.constant dense<0.000000e+00> : vector<2x8x8xf32>
    %199 = tpu.matmul %197, %198, %cst_95 {dimension_numbers = #tpu.dot_dimension_numbers<[2], [1], [1], [2], [0, 0, 0, 1, 1, 2], [0], [0]>} : vector<2x8x8xf32>, vector<2x8x8xf32>, vector<2x8x8xf32> -> vector<2x8x8xf32>
    "tpu.trace_stop"() : () -> ()
    %200 = vector.extract_strided_slice %164 {offsets = [0, 0, 16], sizes = [2, 8, 8], strides = [1, 1, 1]} : vector<2x8x32xf32> to vector<2x8x8xf32>
    %201 = vector.extract_strided_slice %166 {offsets = [0, 16, 0], sizes = [2, 8, 8], strides = [1, 1, 1]} : vector<2x32x8xf32> to vector<2x8x8xf32>
    "tpu.trace_start"() <{level = 10 : i32, message = "btd,bds->bts"}> : () -> ()
    %cst_96 = arith.constant dense<0.000000e+00> : vector<2x8x8xf32>
    %202 = tpu.matmul %200, %201, %cst_96 {dimension_numbers = #tpu.dot_dimension_numbers<[2], [1], [1], [2], [0, 0, 0, 1, 1, 2], [0], [0]>} : vector<2x8x8xf32>, vector<2x8x8xf32>, vector<2x8x8xf32> -> vector<2x8x8xf32>
    %cst_97 = arith.constant -1.000000e+09 : f32
    "tpu.trace_stop"() : () -> ()
    %203 = vector.broadcast %cst_97 : f32 to vector<2x8x8xf32>
    %204 = arith.select %9, %202, %203 : vector<2x8x8xi1>, vector<2x8x8xf32>
    %cst_98 = arith.constant dense<0xFF800000> : vector<2x8xf32>
    %205 = vector.multi_reduction <maximumf>, %204, %cst_98 [2] : vector<2x8x8xf32> to vector<2x8xf32>
    %206 = vector.shape_cast %205 : vector<2x8xf32> to vector<2x8x1xf32>
    %207 = vector.broadcast %206 : vector<2x8x1xf32> to vector<2x8x8xf32>
    %208 = arith.subf %204, %207 : vector<2x8x8xf32>
    %209 = math.exp %208 : vector<2x8x8xf32>
    %cst_99 = arith.constant dense<0.000000e+00> : vector<2x8xf32>
    %210 = vector.multi_reduction <add>, %209, %cst_99 [2] : vector<2x8x8xf32> to vector<2x8xf32>
    %211 = vector.shape_cast %210 : vector<2x8xf32> to vector<2x8x1xf32>
    %212 = vector.broadcast %211 : vector<2x8x1xf32> to vector<2x8x8xf32>
    %213 = arith.divf %209, %212 : vector<2x8x8xf32>
    %214 = vector.extract_strided_slice %167 {offsets = [0, 0, 16], sizes = [2, 8, 8], strides = [1, 1, 1]} : vector<2x8x32xf32> to vector<2x8x8xf32>
    "tpu.trace_start"() <{level = 10 : i32, message = "bts,bsd->btd"}> : () -> ()
    %cst_100 = arith.constant dense<0.000000e+00> : vector<2x8x8xf32>
    %215 = tpu.matmul %213, %214, %cst_100 {dimension_numbers = #tpu.dot_dimension_numbers<[2], [1], [1], [2], [0, 0, 0, 1, 1, 2], [0], [0]>} : vector<2x8x8xf32>, vector<2x8x8xf32>, vector<2x8x8xf32> -> vector<2x8x8xf32>
    "tpu.trace_stop"() : () -> ()
    %216 = vector.extract_strided_slice %164 {offsets = [0, 0, 24], sizes = [2, 8, 8], strides = [1, 1, 1]} : vector<2x8x32xf32> to vector<2x8x8xf32>
    %217 = vector.extract_strided_slice %166 {offsets = [0, 24, 0], sizes = [2, 8, 8], strides = [1, 1, 1]} : vector<2x32x8xf32> to vector<2x8x8xf32>
    "tpu.trace_start"() <{level = 10 : i32, message = "btd,bds->bts"}> : () -> ()
    %cst_101 = arith.constant dense<0.000000e+00> : vector<2x8x8xf32>
    %218 = tpu.matmul %216, %217, %cst_101 {dimension_numbers = #tpu.dot_dimension_numbers<[2], [1], [1], [2], [0, 0, 0, 1, 1, 2], [0], [0]>} : vector<2x8x8xf32>, vector<2x8x8xf32>, vector<2x8x8xf32> -> vector<2x8x8xf32>
    %cst_102 = arith.constant -1.000000e+09 : f32
    "tpu.trace_stop"() : () -> ()
    %219 = vector.broadcast %cst_102 : f32 to vector<2x8x8xf32>
    %220 = arith.select %9, %218, %219 : vector<2x8x8xi1>, vector<2x8x8xf32>
    %cst_103 = arith.constant dense<0xFF800000> : vector<2x8xf32>
    %221 = vector.multi_reduction <maximumf>, %220, %cst_103 [2] : vector<2x8x8xf32> to vector<2x8xf32>
    %222 = vector.shape_cast %221 : vector<2x8xf32> to vector<2x8x1xf32>
    %223 = vector.broadcast %222 : vector<2x8x1xf32> to vector<2x8x8xf32>
    %224 = arith.subf %220, %223 : vector<2x8x8xf32>
    %225 = math.exp %224 : vector<2x8x8xf32>
    %cst_104 = arith.constant dense<0.000000e+00> : vector<2x8xf32>
    %226 = vector.multi_reduction <add>, %225, %cst_104 [2] : vector<2x8x8xf32> to vector<2x8xf32>
    %227 = vector.shape_cast %226 : vector<2x8xf32> to vector<2x8x1xf32>
    %228 = vector.broadcast %227 : vector<2x8x1xf32> to vector<2x8x8xf32>
    %229 = arith.divf %225, %228 : vector<2x8x8xf32>
    %230 = vector.extract_strided_slice %167 {offsets = [0, 0, 24], sizes = [2, 8, 8], strides = [1, 1, 1]} : vector<2x8x32xf32> to vector<2x8x8xf32>
    "tpu.trace_start"() <{level = 10 : i32, message = "bts,bsd->btd"}> : () -> ()
    %cst_105 = arith.constant dense<0.000000e+00> : vector<2x8x8xf32>
    %231 = tpu.matmul %229, %230, %cst_105 {dimension_numbers = #tpu.dot_dimension_numbers<[2], [1], [1], [2], [0, 0, 0, 1, 1, 2], [0], [0]>} : vector<2x8x8xf32>, vector<2x8x8xf32>, vector<2x8x8xf32> -> vector<2x8x8xf32>
    "tpu.trace_stop"() : () -> ()
    %232 = tpu.concatenate %183, %199, %215, %231 in 2 : vector<2x8x8xf32>, vector<2x8x8xf32>, vector<2x8x8xf32>, vector<2x8x8xf32> -> vector<2x8x32xf32>
    %233 = vector.shape_cast %232 : vector<2x8x32xf32> to vector<16x32xf32>
    %c0_106 = arith.constant 0 : index
    %c0_107 = arith.constant 0 : index
    %234 = vector.load %arg25[%c0_106, %c0_107] : memref<32x32xf32, #tpu.memory_space<vmem>>, vector<32x32xf32>
    %cst_108 = arith.constant dense<0.000000e+00> : vector<16x32xf32>
    %235 = tpu.matmul %233, %234, %cst_108 {dimension_numbers = #tpu.dot_dimension_numbers<[1], [0], [0], [1], [0, 0, 1, 1], [], []>} : vector<16x32xf32>, vector<32x32xf32>, vector<16x32xf32> -> vector<16x32xf32>
    %c0_109 = arith.constant 0 : index
    %c0_110 = arith.constant 0 : index
    %236 = vector.load %arg26[%c0_109, %c0_110] : memref<1x32xf32, #tpu.memory_space<vmem>>, vector<1x32xf32>
    %237 = vector.broadcast %236 : vector<1x32xf32> to vector<16x32xf32>
    %238 = arith.addf %235, %237 : vector<16x32xf32>
    %239 = arith.addf %124, %238 : vector<16x32xf32>
    %c0_111 = arith.constant 0 : index
    %c0_112 = arith.constant 0 : index
    %240 = vector.load %arg9[%c0_111, %c0_112] : memref<1x32xf32, #tpu.memory_space<vmem>>, vector<1x32xf32>
    %c0_113 = arith.constant 0 : index
    %c0_114 = arith.constant 0 : index
    %241 = vector.load %arg10[%c0_113, %c0_114] : memref<1x32xf32, #tpu.memory_space<vmem>>, vector<1x32xf32>
    %cst_115 = arith.constant dense<0.000000e+00> : vector<16xf32>
    %242 = vector.multi_reduction <add>, %239, %cst_115 [1] : vector<16x32xf32> to vector<16xf32>
    %243 = vector.shape_cast %242 : vector<16xf32> to vector<16x1xf32>
    %cst_116 = arith.constant 3.125000e-02 : f32
    %244 = vector.broadcast %cst_116 : f32 to vector<16x1xf32>
    %245 = arith.mulf %243, %244 : vector<16x1xf32>
    %246 = vector.broadcast %245 : vector<16x1xf32> to vector<16x32xf32>
    %247 = arith.subf %239, %246 : vector<16x32xf32>
    %248 = arith.mulf %247, %247 : vector<16x32xf32>
    %cst_117 = arith.constant dense<0.000000e+00> : vector<16xf32>
    %249 = vector.multi_reduction <add>, %248, %cst_117 [1] : vector<16x32xf32> to vector<16xf32>
    %250 = vector.shape_cast %249 : vector<16xf32> to vector<16x1xf32>
    %cst_118 = arith.constant 0.0322580636 : f32
    %251 = vector.broadcast %cst_118 : f32 to vector<16x1xf32>
    %252 = arith.mulf %250, %251 : vector<16x1xf32>
    %253 = math.sqrt %252 : vector<16x1xf32>
    %254 = vector.broadcast %240 : vector<1x32xf32> to vector<16x32xf32>
    %255 = arith.mulf %254, %247 : vector<16x32xf32>
    %cst_119 = arith.constant 9.99999997E-7 : f32
    %256 = vector.broadcast %cst_119 : f32 to vector<16x1xf32>
    %257 = arith.addf %253, %256 : vector<16x1xf32>
    %258 = vector.broadcast %257 : vector<16x1xf32> to vector<16x32xf32>
    %259 = arith.divf %255, %258 : vector<16x32xf32>
    %260 = vector.broadcast %241 : vector<1x32xf32> to vector<16x32xf32>
    %261 = arith.addf %259, %260 : vector<16x32xf32>
    %c0_120 = arith.constant 0 : index
    %c0_121 = arith.constant 0 : index
    %262 = vector.load %arg27[%c0_120, %c0_121] : memref<32x64xf32, #tpu.memory_space<vmem>>, vector<32x64xf32>
    %cst_122 = arith.constant dense<0.000000e+00> : vector<16x64xf32>
    %263 = tpu.matmul %261, %262, %cst_122 {dimension_numbers = #tpu.dot_dimension_numbers<[1], [0], [0], [1], [0, 0, 1, 1], [], []>} : vector<16x32xf32>, vector<32x64xf32>, vector<16x64xf32> -> vector<16x64xf32>
    %c0_123 = arith.constant 0 : index
    %c0_124 = arith.constant 0 : index
    %264 = vector.load %arg28[%c0_123, %c0_124] : memref<1x64xf32, #tpu.memory_space<vmem>>, vector<1x64xf32>
    %265 = vector.broadcast %264 : vector<1x64xf32> to vector<16x64xf32>
    %266 = arith.addf %263, %265 : vector<16x64xf32>
    %cst_125 = arith.constant 0.000000e+00 : f32
    %267 = vector.broadcast %cst_125 : f32 to vector<16x64xf32>
    %268 = arith.maximumf %266, %267 : vector<16x64xf32>
    %c0_126 = arith.constant 0 : index
    %c0_127 = arith.constant 0 : index
    %269 = vector.load %arg29[%c0_126, %c0_127] : memref<64x32xf32, #tpu.memory_space<vmem>>, vector<64x32xf32>
    %cst_128 = arith.constant dense<0.000000e+00> : vector<16x32xf32>
    %270 = tpu.matmul %268, %269, %cst_128 {dimension_numbers = #tpu.dot_dimension_numbers<[1], [0], [0], [1], [0, 0, 1, 1], [], []>} : vector<16x64xf32>, vector<64x32xf32>, vector<16x32xf32> -> vector<16x32xf32>
    %c0_129 = arith.constant 0 : index
    %c0_130 = arith.constant 0 : index
    %271 = vector.load %arg30[%c0_129, %c0_130] : memref<1x32xf32, #tpu.memory_space<vmem>>, vector<1x32xf32>
    %272 = vector.broadcast %271 : vector<1x32xf32> to vector<16x32xf32>
    %273 = arith.addf %270, %272 : vector<16x32xf32>
    %274 = arith.addf %239, %273 : vector<16x32xf32>
    %275 = vector.shape_cast %274 : vector<16x32xf32> to vector<2x8x32xf32>
    %c0_131 = arith.constant 0 : index
    %c0_132 = arith.constant 0 : index
    %c0_133 = arith.constant 0 : index
    %276 = vector.load %arg31[%c0_131, %c0_132, %c0_133] : memref<2x8x32xf32, #tpu.memory_space<vmem>>, vector<2x8x32xf32>
    tpu.vector_store %arg31[%c0_131, %c0_132, %c0_133], %275 {strides = array<i32>} : memref<2x8x32xf32, #tpu.memory_space<vmem>>, vector<2x8x32xf32>,
    return
  }
  func.func @transform_0(%arg0: i32) -> (i32, i32, i32) {
    %c0_i32 = arith.constant 0 : i32
    %c0_i32_0 = arith.constant 0 : i32
    %c0_i32_1 = arith.constant 0 : i32
    return %arg0, %c0_i32, %c0_i32_0 : i32, i32, i32
  }
  func.func @transform_1(%arg0: i32) -> (i32, i32, i32) {
    %c0_i32 = arith.constant 0 : i32
    %c0_i32_0 = arith.constant 0 : i32
    %c0_i32_1 = arith.constant 0 : i32
    return %arg0, %c0_i32, %c0_i32_0 : i32, i32, i32
  }
  func.func @transform_2(%arg0: i32) -> (i32, i32, i32) {
    %c0_i32 = arith.constant 0 : i32
    %c0_i32_0 = arith.constant 0 : i32
    %c0_i32_1 = arith.constant 0 : i32
    return %arg0, %c0_i32, %c0_i32_0 : i32, i32, i32
  }
  func.func @transform_3(%arg0: i32) -> (i32, i32, i32) {
    %c0_i32 = arith.constant 0 : i32
    %c0_i32_0 = arith.constant 0 : i32
    %c0_i32_1 = arith.constant 0 : i32
    return %arg0, %c0_i32, %c0_i32_0 : i32, i32, i32
  }
  func.func @transform_4(%arg0: i32) -> (i32, i32) {
    %c0_i32 = arith.constant 0 : i32
    %c0_i32_0 = arith.constant 0 : i32
    %c0_i32_1 = arith.constant 0 : i32
    return %c0_i32, %c0_i32_0 : i32, i32
  }
  func.func @transform_5(%arg0: i32) -> (i32, i32) {
    %c0_i32 = arith.constant 0 : i32
    %c0_i32_0 = arith.constant 0 : i32
    %c0_i32_1 = arith.constant 0 : i32
    return %c0_i32, %c0_i32_0 : i32, i32
  }
  func.func @transform_6(%arg0: i32) -> (i32, i32) {
    %c0_i32 = arith.constant 0 : i32
    %c0_i32_0 = arith.constant 0 : i32
    %c0_i32_1 = arith.constant 0 : i32
    return %c0_i32, %c0_i32_0 : i32, i32
  }
  func.func @transform_7(%arg0: i32) -> (i32, i32) {
    %c0_i32 = arith.constant 0 : i32
    %c0_i32_0 = arith.constant 0 : i32
    %c0_i32_1 = arith.constant 0 : i32
    return %c0_i32, %c0_i32_0 : i32, i32
  }
  func.func @transform_8(%arg0: i32) -> (i32, i32) {
    %c0_i32 = arith.constant 0 : i32
    %c0_i32_0 = arith.constant 0 : i32
    %c0_i32_1 = arith.constant 0 : i32
    return %c0_i32, %c0_i32_0 : i32, i32
  }
  func.func @transform_9(%arg0: i32) -> (i32, i32) {
    %c0_i32 = arith.constant 0 : i32
    %c0_i32_0 = arith.constant 0 : i32
    %c0_i32_1 = arith.constant 0 : i32
    return %c0_i32, %c0_i32_0 : i32, i32
  }
  func.func @transform_10(%arg0: i32) -> (i32, i32) {
    %c0_i32 = arith.constant 0 : i32
    %c0_i32_0 = arith.constant 0 : i32
    %c0_i32_1 = arith.constant 0 : i32
    return %c0_i32, %c0_i32_0 : i32, i32
  }
  func.func @transform_11(%arg0: i32) -> (i32, i32) {
    %c0_i32 = arith.constant 0 : i32
    %c0_i32_0 = arith.constant 0 : i32
    %c0_i32_1 = arith.constant 0 : i32
    return %c0_i32, %c0_i32_0 : i32, i32
  }
  func.func @transform_12(%arg0: i32) -> (i32, i32) {
    %c0_i32 = arith.constant 0 : i32
    %c0_i32_0 = arith.constant 0 : i32
    %c0_i32_1 = arith.constant 0 : i32
    return %c0_i32, %c0_i32_0 : i32, i32
  }
  func.func @transform_13(%arg0: i32) -> (i32, i32) {
    %c0_i32 = arith.constant 0 : i32
    %c0_i32_0 = arith.constant 0 : i32
    %c0_i32_1 = arith.constant 0 : i32
    return %c0_i32, %c0_i32_0 : i32, i32
  }
  func.func @transform_14(%arg0: i32) -> (i32, i32) {
    %c0_i32 = arith.constant 0 : i32
    %c0_i32_0 = arith.constant 0 : i32
    %c0_i32_1 = arith.constant 0 : i32
    return %c0_i32, %c0_i32_0 : i32, i32
  }
  func.func @transform_15(%arg0: i32) -> (i32, i32) {
    %c0_i32 = arith.constant 0 : i32
    %c0_i32_0 = arith.constant 0 : i32
    %c0_i32_1 = arith.constant 0 : i32
    return %c0_i32, %c0_i32_0 : i32, i32
  }
  func.func @transform_16(%arg0: i32) -> (i32, i32) {
    %c0_i32 = arith.constant 0 : i32
    %c0_i32_0 = arith.constant 0 : i32
    %c0_i32_1 = arith.constant 0 : i32
    return %c0_i32, %c0_i32_0 : i32, i32
  }
  func.func @transform_17(%arg0: i32) -> (i32, i32) {
    %c0_i32 = arith.constant 0 : i32
    %c0_i32_0 = arith.constant 0 : i32
    %c0_i32_1 = arith.constant 0 : i32
    return %c0_i32, %c0_i32_0 : i32, i32
  }
  func.func @transform_18(%arg0: i32) -> (i32, i32) {
    %c0_i32 = arith.constant 0 : i32
    %c0_i32_0 = arith.constant 0 : i32
    %c0_i32_1 = arith.constant 0 : i32
    return %c0_i32, %c0_i32_0 : i32, i32
  }
  func.func @transform_19(%arg0: i32) -> (i32, i32) {
    %c0_i32 = arith.constant 0 : i32
    %c0_i32_0 = arith.constant 0 : i32
    %c0_i32_1 = arith.constant 0 : i32
    return %c0_i32, %c0_i32_0 : i32, i32
  }
  func.func @transform_20(%arg0: i32) -> (i32, i32) {
    %c0_i32 = arith.constant 0 : i32
    %c0_i32_0 = arith.constant 0 : i32
    %c0_i32_1 = arith.constant 0 : i32
    return %c0_i32, %c0_i32_0 : i32, i32
  }
  func.func @transform_21(%arg0: i32) -> (i32, i32) {
    %c0_i32 = arith.constant 0 : i32
    %c0_i32_0 = arith.constant 0 : i32
    %c0_i32_1 = arith.constant 0 : i32
    return %c0_i32, %c0_i32_0 : i32, i32
  }
  func.func @transform_22(%arg0: i32) -> (i32, i32) {
    %c0_i32 = arith.constant 0 : i32
    %c0_i32_0 = arith.constant 0 : i32
    %c0_i32_1 = arith.constant 0 : i32
    return %c0_i32, %c0_i32_0 : i32, i32
  }
  func.func @transform_23(%arg0: i32) -> (i32, i32) {
    %c0_i32 = arith.constant 0 : i32
    %c0_i32_0 = arith.constant 0 : i32
    %c0_i32_1 = arith.constant 0 : i32
    return %c0_i32, %c0_i32_0 : i32, i32
  }
  func.func @transform_24(%arg0: i32) -> (i32, i32) {
    %c0_i32 = arith.constant 0 : i32
    %c0_i32_0 = arith.constant 0 : i32
    %c0_i32_1 = arith.constant 0 : i32
    return %c0_i32, %c0_i32_0 : i32, i32
  }
  func.func @transform_25(%arg0: i32) -> (i32, i32) {
    %c0_i32 = arith.constant 0 : i32
    %c0_i32_0 = arith.constant 0 : i32
    %c0_i32_1 = arith.constant 0 : i32
    return %c0_i32, %c0_i32_0 : i32, i32
  }
  func.func @transform_26(%arg0: i32) -> (i32, i32) {
    %c0_i32 = arith.constant 0 : i32
    %c0_i32_0 = arith.constant 0 : i32
    %c0_i32_1 = arith.constant 0 : i32
    return %c0_i32, %c0_i32_0 : i32, i32
  }
  func.func @transform_27(%arg0: i32) -> (i32, i32) {
    %c0_i32 = arith.constant 0 : i32
    %c0_i32_0 = arith.constant 0 : i32
    %c0_i32_1 = arith.constant 0 : i32
    return %c0_i32, %c0_i32_0 : i32, i32
  }
  func.func @transform_28(%arg0: i32) -> (i32, i32) {
    %c0_i32 = arith.constant 0 : i32
    %c0_i32_0 = arith.constant 0 : i32
    %c0_i32_1 = arith.constant 0 : i32
    return %c0_i32, %c0_i32_0 : i32, i32
  }
  func.func @transform_29(%arg0: i32) -> (i32, i32) {
    %c0_i32 = arith.constant 0 : i32
    %c0_i32_0 = arith.constant 0 : i32
    %c0_i32_1 = arith.constant 0 : i32
    return %c0_i32, %c0_i32_0 : i32, i32
  }
  func.func @transform_30(%arg0: i32) -> (i32, i32, i32) {
    %c0_i32 = arith.constant 0 : i32
    %c0_i32_0 = arith.constant 0 : i32
    %c0_i32_1 = arith.constant 0 : i32
    return %arg0, %c0_i32, %c0_i32_0 : i32, i32, i32
  }
}

</mosaic_0001>

<llo_original>
// kernel: tpu_custom_call.1
$region0: #{tpu_custom_call.1}
  #allocation0 [shape = 'u32[]', space=smem, size = 0x4, offset = 0x4, fixed_abs, tag = 'smem constant byte address 0x4 - core index']
  #allocation1 [shape = 'u32[72,128]{1,0:T(1,128)}', space=vmem, size = 0x9000, scoped, tag = 'internal scratch']
  %s0 = inlined_call_operand.smem [shape: u32[31], index: -1, kind: input, shape index: {}]
  %s1 = sld [smem:[%s0]]
  %s2 = scalar_lea.smem %s0, 1
  %s3 = sld [smem:[%s2]]
  %s4 = scalar_lea.smem %s0, 2
  %s5 = sld [smem:[%s4]]
  %s6 = scalar_lea.smem %s0, 3
  %s7 = sld [smem:[%s6]]
  %s8 = scalar_lea.smem %s0, 4
  %s9 = sld [smem:[%s8]]
  %s10 = scalar_lea.smem %s0, 5
  %s11 = sld [smem:[%s10]]
  %s12 = scalar_lea.smem %s0, 6
  %s13 = sld [smem:[%s12]]
  %s14 = scalar_lea.smem %s0, 7
  %s15 = sld [smem:[%s14]]
  %s16 = scalar_lea.smem %s0, 8
  %s17 = sld [smem:[%s16]]
  %s18 = scalar_lea.smem %s0, 9
  %s19 = sld [smem:[%s18]]
  %s20 = scalar_lea.smem %s0, 10
  %s21 = sld [smem:[%s20]]
  %s22 = scalar_lea.smem %s0, 11
  %s23 = sld [smem:[%s22]]
  %s24 = scalar_lea.smem %s0, 12
  %s25 = sld [smem:[%s24]]
  %s26 = scalar_lea.smem %s0, 13
  %s27 = sld [smem:[%s26]]
  %s28 = scalar_lea.smem %s0, 14
  %s29 = sld [smem:[%s28]]
  %s30 = scalar_lea.smem %s0, 15
  %s31 = sld [smem:[%s30]]
  %s32 = scalar_lea.smem %s0, 16
  %s33 = sld [smem:[%s32]]
  %s34 = scalar_lea.smem %s0, 17
  %s35 = sld [smem:[%s34]]
  %s36 = scalar_lea.smem %s0, 18
  %s37 = sld [smem:[%s36]]
  %s38 = scalar_lea.smem %s0, 19
  %s39 = sld [smem:[%s38]]
  %s40 = scalar_lea.smem %s0, 20
  %s41 = sld [smem:[%s40]]
  %s42 = scalar_lea.smem %s0, 21
  %s43 = sld [smem:[%s42]]
  %s44 = scalar_lea.smem %s0, 22
  %s45 = sld [smem:[%s44]]
  %s46 = scalar_lea.smem %s0, 23
  %s47 = sld [smem:[%s46]]
  %s48 = scalar_lea.smem %s0, 24
  %s49 = sld [smem:[%s48]]
  %s50 = scalar_lea.smem %s0, 25
  %s51 = sld [smem:[%s50]]
  %s52 = scalar_lea.smem %s0, 26
  %s53 = sld [smem:[%s52]]
  %s54 = scalar_lea.smem %s0, 27
  %s55 = sld [smem:[%s54]]
  %s56 = scalar_lea.smem %s0, 28
  %s57 = sld [smem:[%s56]]
  %s58 = scalar_lea.smem %s0, 29
  %s59 = sld [smem:[%s58]]
  %s60 = scalar_lea.smem %s0, 30
  %s61 = sld [smem:[%s60]]
  %s62 = sld [smem:[#allocation0]]
  $region170: #{tpu_custom_call.1} parent=0
    _
  %s64 = ssub.s32 1, %s62
  %s65 = scalar_select 0, %s64, %s62
  $region1: #{tpu_custom_call.1} parent=0
    #allocation2 [shape = 'u8[8192]{0}', space=vmem, size = 0x2000, scoped, tag = 'input window, operand 0, single buffered']
    #allocation3 [shape = 's32[1]{0}', space=sflag, size = 0x4, scoped, tag = 'scoped memory for tpu_custom_call.1']
    #allocation4 [shape = 's32[1]{0}', space=sflag, size = 0x4, scoped, tag = 'scoped memory for tpu_custom_call.1']
    #allocation5 [shape = 'u8[8192]{0}', space=vmem, size = 0x2000, scoped, tag = 'input window, operand 1, single buffered']
    #allocation6 [shape = 's32[1]{0}', space=sflag, size = 0x4, scoped, tag = 'scoped memory for tpu_custom_call.1']
    #allocation7 [shape = 'u8[2048]{0}', space=vmem, size = 0x800, scoped, tag = 'input window, operand 2, single buffered']
    #allocation8 [shape = 'u8[2048]{0}', space=vmem, size = 0x800, scoped, tag = 'input window, operand 3, single buffered']
    #allocation9 [shape = 's32[1]{0}', space=sflag, size = 0x4, scoped, tag = 'scoped memory for tpu_custom_call.1']
    #allocation10 [shape = 'u8[16384]{0}', space=vmem, size = 0x4000, scoped, tag = 'input window, operand 16, single buffered']
    #allocation11 [shape = 'u8[16384]{0}', space=vmem, size = 0x4000, scoped, tag = 'input window, operand 18, single buffered']
    #allocation12 [shape = 's32[1]{0}', space=sflag, size = 0x4, scoped, tag = 'scoped memory for tpu_custom_call.1']
    #allocation13 [shape = 'u8[16384]{0}', space=vmem, size = 0x4000, scoped, tag = 'input window, operand 20, single buffered']
    #allocation14 [shape = 'u8[16384]{0}', space=vmem, size = 0x4000, scoped, tag = 'input window, operand 22, single buffered']
    #allocation15 [shape = 's32[1]{0}', space=sflag, size = 0x4, scoped, tag = 'scoped memory for tpu_custom_call.1']
    #allocation16 [shape = 'u8[16384]{0}', space=vmem, size = 0x4000, scoped, tag = 'input window, operand 24, single buffered']
    #allocation17 [shape = 'u8[16384]{0}', space=vmem, size = 0x4000, scoped, tag = 'input window, operand 26, single buffered']
    #allocation18 [shape = 's32[1]{0}', space=sflag, size = 0x4, scoped, tag = 'scoped memory for tpu_custom_call.1']
    #allocation19 [shape = 'u8[8192]{0}', space=vmem, size = 0x2000, scoped, tag = 'output window, operand 0, single buffered']
    %66 = vsyncpa [#allocation3], 0
    %67 = vsyncpa [#allocation6], 0
    %68 = vsyncpa [#allocation9], 0
    %69 = vsyncpa [#allocation12], 0
    %70 = vsyncpa [#allocation15], 0
    %71 = vsyncpa [#allocation18], 0
    %72 = vsyncpa [#allocation4], 0
    // Predicated region
    $region2: #{tpu_custom_call.1} parent=1 // pred_check
      _
    $region3: #{tpu_custom_call.1} parent=1 // pred_check_branch
      %74 = sbr.rel (0) target = $region5
    $region4: #{tpu_custom_call.1} parent=1 // pred_region
      %76 = vsyncadd [#allocation3], 0
      %s77 = sshll.u32 %s1, 4
      %s78 = int_to_ptr.hbm [resolvable:$true] %s77
      %s79 = sshll.u32 [#allocation2], 4
      %s80 = int_to_ptr.vmem [resolvable:$true] %s79
      %85 = dma.hbm_to_vmem [thread:$0]  %s78, 256, %s80, [#allocation3], 128, 128, 8
    $region5: #{tpu_custom_call.1} parent=1 // pred_fallthru
      _
    // Predicated region
    $region6: #{tpu_custom_call.1} parent=1 // pred_check
      _
    $region7: #{tpu_custom_call.1} parent=1 // pred_check_branch
      %87 = sbr.rel (0) target = $region9
    $region8: #{tpu_custom_call.1} parent=1 // pred_region
      %89 = vsyncadd [#allocation6], 0
      %s90 = sshll.u32 %s3, 4
      %s91 = int_to_ptr.hbm [resolvable:$true] %s90
      %s92 = sshll.u32 [#allocation5], 4
      %s93 = int_to_ptr.vmem [resolvable:$true] %s92
      %98 = dma.hbm_to_vmem [thread:$0]  %s91, 256, %s93, [#allocation6], 128, 128, 8
    $region9: #{tpu_custom_call.1} parent=1 // pred_fallthru
      _
    // Predicated region
    $region10: #{tpu_custom_call.1} parent=1 // pred_check
      _
    $region11: #{tpu_custom_call.1} parent=1 // pred_check_branch
      %100 = sbr.rel (0) target = $region13
    $region12: #{tpu_custom_call.1} parent=1 // pred_region
      %102 = vsyncadd [#allocation6], 0
      %s103 = sshll.u32 %s5, 4
      %s104 = int_to_ptr.hbm [resolvable:$true] %s103
      %s105 = sshll.u32 [#allocation7], 4
      %s106 = int_to_ptr.vmem [resolvable:$true] %s105
      %111 = dma.hbm_to_vmem [thread:$0]  %s104, 64, %s106, [#allocation6], 32, 32, 2
    $region13: #{tpu_custom_call.1} parent=1 // pred_fallthru
      _
    // Predicated region
    $region14: #{tpu_custom_call.1} parent=1 // pred_check
      _
    $region15: #{tpu_custom_call.1} parent=1 // pred_check_branch
      %113 = sbr.rel (0) target = $region17
    $region16: #{tpu_custom_call.1} parent=1 // pred_region
      %115 = vsyncadd [#allocation9], 0
      %s116 = sshll.u32 %s7, 4
      %s117 = int_to_ptr.hbm [resolvable:$true] %s116
      %s118 = sshll.u32 [#allocation8], 4
      %s119 = int_to_ptr.vmem [resolvable:$true] %s118
      %124 = dma.hbm_to_vmem [thread:$0]  %s117, 64, %s119, [#allocation9], 32, 32, 2
    $region17: #{tpu_custom_call.1} parent=1 // pred_fallthru
      _
    // Predicated region
    $region18: #{tpu_custom_call.1} parent=1 // pred_check
      _
    $region19: #{tpu_custom_call.1} parent=1 // pred_check_branch
      %126 = sbr.rel (0) target = $region21
    $region20: #{tpu_custom_call.1} parent=1 // pred_region
      _
    $region21: #{tpu_custom_call.1} parent=1 // pred_fallthru
      _
    // Predicated region
    $region22: #{tpu_custom_call.1} parent=1 // pred_check
      _
    $region23: #{tpu_custom_call.1} parent=1 // pred_check_branch
      %128 = sbr.rel (0) target = $region25
    $region24: #{tpu_custom_call.1} parent=1 // pred_region
      _
    $region25: #{tpu_custom_call.1} parent=1 // pred_fallthru
      _
    // Predicated region
    $region26: #{tpu_custom_call.1} parent=1 // pred_check
      _
    $region27: #{tpu_custom_call.1} parent=1 // pred_check_branch
      %130 = sbr.rel (0) target = $region29
    $region28: #{tpu_custom_call.1} parent=1 // pred_region
      _
    $region29: #{tpu_custom_call.1} parent=1 // pred_fallthru
      _
    // Predicated region
    $region30: #{tpu_custom_call.1} parent=1 // pred_check
      _
    $region31: #{tpu_custom_call.1} parent=1 // pred_check_branch
      %132 = sbr.rel (0) target = $region33
    $region32: #{tpu_custom_call.1} parent=1 // pred_region
      _
    $region33: #{tpu_custom_call.1} parent=1 // pred_fallthru
      _
    // Predicated region
    $region34: #{tpu_custom_call.1} parent=1 // pred_check
      _
    $region35: #{tpu_custom_call.1} parent=1 // pred_check_branch
      %134 = sbr.rel (0) target = $region37
    $region36: #{tpu_custom_call.1} parent=1 // pred_region
      _
    $region37: #{tpu_custom_call.1} parent=1 // pred_fallthru
      _
    // Predicated region
    $region38: #{tpu_custom_call.1} parent=1 // pred_check
      _
    $region39: #{tpu_custom_call.1} parent=1 // pred_check_branch
      %136 = sbr.rel (0) target = $region41
    $region40: #{tpu_custom_call.1} parent=1 // pred_region
      _
    $region41: #{tpu_custom_call.1} parent=1 // pred_fallthru
      _
    // Predicated region
    $region42: #{tpu_custom_call.1} parent=1 // pred_check
      _
    $region43: #{tpu_custom_call.1} parent=1 // pred_check_branch
      %138 = sbr.rel (0) target = $region45
    $region44: #{tpu_custom_call.1} parent=1 // pred_region
      _
    $region45: #{tpu_custom_call.1} parent=1 // pred_fallthru
      _
    // Predicated region
    $region46: #{tpu_custom_call.1} parent=1 // pred_check
      _
    $region47: #{tpu_custom_call.1} parent=1 // pred_check_branch
      %140 = sbr.rel (0) target = $region49
    $region48: #{tpu_custom_call.1} parent=1 // pred_region
      _
    $region49: #{tpu_custom_call.1} parent=1 // pred_fallthru
      _
    // Predicated region
    $region50: #{tpu_custom_call.1} parent=1 // pred_check
      _
    $region51: #{tpu_custom_call.1} parent=1 // pred_check_branch
      %142 = sbr.rel (0) target = $region53
    $region52: #{tpu_custom_call.1} parent=1 // pred_region
      _
    $region53: #{tpu_custom_call.1} parent=1 // pred_fallthru
      _
    // Predicated region
    $region54: #{tpu_custom_call.1} parent=1 // pred_check
      _
    $region55: #{tpu_custom_call.1} parent=1 // pred_check_branch
      %144 = sbr.rel (0) target = $region57
    $region56: #{tpu_custom_call.1} parent=1 // pred_region
      _
    $region57: #{tpu_custom_call.1} parent=1 // pred_fallthru
      _
    // Predicated region
    $region58: #{tpu_custom_call.1} parent=1 // pred_check
      _
    $region59: #{tpu_custom_call.1} parent=1 // pred_check_branch
      %146 = sbr.rel (0) target = $region61
    $region60: #{tpu_custom_call.1} parent=1 // pred_region
      _
    $region61: #{tpu_custom_call.1} parent=1 // pred_fallthru
      _
    // Predicated region
    $region62: #{tpu_custom_call.1} parent=1 // pred_check
      _
    $region63: #{tpu_custom_call.1} parent=1 // pred_check_branch
      %148 = sbr.rel (0) target = $region65
    $region64: #{tpu_custom_call.1} parent=1 // pred_region
      _
    $region65: #{tpu_custom_call.1} parent=1 // pred_fallthru
      _
    // Predicated region
    $region66: #{tpu_custom_call.1} parent=1 // pred_check
      _
    $region67: #{tpu_custom_call.1} parent=1 // pred_check_branch
      %150 = sbr.rel (0) target = $region69
    $region68: #{tpu_custom_call.1} parent=1 // pred_region
      %152 = vsyncadd [#allocation9], 0
      %s153 = sshll.u32 %s33, 4
      %s154 = int_to_ptr.hbm [resolvable:$true] %s153
      %s155 = sshll.u32 [#allocation10], 4
      %s156 = int_to_ptr.vmem [resolvable:$true] %s155
      %161 = dma.hbm_to_vmem [thread:$0]  %s154, 512, %s156, [#allocation9], 128, 128, 8
    $region69: #{tpu_custom_call.1} parent=1 // pred_fallthru
      _
    // Predicated region
    $region70: #{tpu_custom_call.1} parent=1 // pred_check
      _
    $region71: #{tpu_custom_call.1} parent=1 // pred_check_branch
      %163 = sbr.rel (0) target = $region73
    $region72: #{tpu_custom_call.1} parent=1 // pred_region
      _
    $region73: #{tpu_custom_call.1} parent=1 // pred_fallthru
      _
    // Predicated region
    $region74: #{tpu_custom_call.1} parent=1 // pred_check
      _
    $region75: #{tpu_custom_call.1} parent=1 // pred_check_branch
      %165 = sbr.rel (0) target = $region77
    $region76: #{tpu_custom_call.1} parent=1 // pred_region
      %167 = vsyncadd [#allocation12], 0
      %s168 = sshll.u32 %s37, 4
      %s169 = int_to_ptr.hbm [resolvable:$true] %s168
      %s170 = sshll.u32 [#allocation11], 4
      %s171 = int_to_ptr.vmem [resolvable:$true] %s170
      %176 = dma.hbm_to_vmem [thread:$0]  %s169, 512, %s171, [#allocation12], 128, 128, 8
    $region77: #{tpu_custom_call.1} parent=1 // pred_fallthru
      _
    // Predicated region
    $region78: #{tpu_custom_call.1} parent=1 // pred_check
      _
    $region79: #{tpu_custom_call.1} parent=1 // pred_check_branch
      %178 = sbr.rel (0) target = $region81
    $region80: #{tpu_custom_call.1} parent=1 // pred_region
      _
    $region81: #{tpu_custom_call.1} parent=1 // pred_fallthru
      _
    // Predicated region
    $region82: #{tpu_custom_call.1} parent=1 // pred_check
      _
    $region83: #{tpu_custom_call.1} parent=1 // pred_check_branch
      %180 = sbr.rel (0) target = $region85
    $region84: #{tpu_custom_call.1} parent=1 // pred_region
      %182 = vsyncadd [#allocation12], 0
      %s183 = sshll.u32 %s41, 4
      %s184 = int_to_ptr.hbm [resolvable:$true] %s183
      %s185 = sshll.u32 [#allocation13], 4
      %s186 = int_to_ptr.vmem [resolvable:$true] %s185
      %191 = dma.hbm_to_vmem [thread:$0]  %s184, 512, %s186, [#allocation12], 128, 128, 8
    $region85: #{tpu_custom_call.1} parent=1 // pred_fallthru
      _
    // Predicated region
    $region86: #{tpu_custom_call.1} parent=1 // pred_check
      _
    $region87: #{tpu_custom_call.1} parent=1 // pred_check_branch
      %193 = sbr.rel (0) target = $region89
    $region88: #{tpu_custom_call.1} parent=1 // pred_region
      _
    $region89: #{tpu_custom_call.1} parent=1 // pred_fallthru
      _
    // Predicated region
    $region90: #{tpu_custom_call.1} parent=1 // pred_check
      _
    $region91: #{tpu_custom_call.1} parent=1 // pred_check_branch
      %195 = sbr.rel (0) target = $region93
    $region92: #{tpu_custom_call.1} parent=1 // pred_region
      %197 = vsyncadd [#allocation15], 0
      %s198 = sshll.u32 %s45, 4
      %s199 = int_to_ptr.hbm [resolvable:$true] %s198
      %s200 = sshll.u32 [#allocation14], 4
      %s201 = int_to_ptr.vmem [resolvable:$true] %s200
      %206 = dma.hbm_to_vmem [thread:$0]  %s199, 512, %s201, [#allocation15], 128, 128, 8
    $region93: #{tpu_custom_call.1} parent=1 // pred_fallthru
      _
    // Predicated region
    $region94: #{tpu_custom_call.1} parent=1 // pred_check
      _
    $region95: #{tpu_custom_call.1} parent=1 // pred_check_branch
      %208 = sbr.rel (0) target = $region97
    $region96: #{tpu_custom_call.1} parent=1 // pred_region
      _
    $region97: #{tpu_custom_call.1} parent=1 // pred_fallthru
      _
    // Predicated region
    $region98: #{tpu_custom_call.1} parent=1 // pred_check
      _
    $region99: #{tpu_custom_call.1} parent=1 // pred_check_branch
      %210 = sbr.rel (0) target = $region101
    $region100: #{tpu_custom_call.1} parent=1 // pred_region
      %212 = vsyncadd [#allocation15], 0
      %s213 = sshll.u32 %s49, 4
      %s214 = int_to_ptr.hbm [resolvable:$true] %s213
      %s215 = sshll.u32 [#allocation16], 4
      %s216 = int_to_ptr.vmem [resolvable:$true] %s215
      %221 = dma.hbm_to_vmem [thread:$0]  %s214, 512, %s216, [#allocation15], 128, 128, 8
    $region101: #{tpu_custom_call.1} parent=1 // pred_fallthru
      _
    // Predicated region
    $region102: #{tpu_custom_call.1} parent=1 // pred_check
      _
    $region103: #{tpu_custom_call.1} parent=1 // pred_check_branch
      %223 = sbr.rel (0) target = $region105
    $region104: #{tpu_custom_call.1} parent=1 // pred_region
      _
    $region105: #{tpu_custom_call.1} parent=1 // pred_fallthru
      _
    // Predicated region
    $region106: #{tpu_custom_call.1} parent=1 // pred_check
      _
    $region107: #{tpu_custom_call.1} parent=1 // pred_check_branch
      %225 = sbr.rel (0) target = $region109
    $region108: #{tpu_custom_call.1} parent=1 // pred_region
      %227 = vsyncadd [#allocation18], 0
      %s228 = sshll.u32 %s53, 4
      %s229 = int_to_ptr.hbm [resolvable:$true] %s228
      %s230 = sshll.u32 [#allocation17], 4
      %s231 = int_to_ptr.vmem [resolvable:$true] %s230
      %236 = dma.hbm_to_vmem [thread:$0]  %s229, 512, %s231, [#allocation18], 128, 128, 8
    $region109: #{tpu_custom_call.1} parent=1 // pred_fallthru
      _
    // Predicated region
    $region110: #{tpu_custom_call.1} parent=1 // pred_check
      _
    $region111: #{tpu_custom_call.1} parent=1 // pred_check_branch
      %238 = sbr.rel (0) target = $region113
    $region112: #{tpu_custom_call.1} parent=1 // pred_region
      _
    $region113: #{tpu_custom_call.1} parent=1 // pred_fallthru
      _
    // Predicated region
    $region114: #{tpu_custom_call.1} parent=1 // pred_check
      _
    $region115: #{tpu_custom_call.1} parent=1 // pred_check_branch
      %240 = sbr.rel (0) target = $region117
    $region116: #{tpu_custom_call.1} parent=1 // pred_region
      _
    $region117: #{tpu_custom_call.1} parent=1 // pred_fallthru
      _
    // Predicated region
    $region118: #{tpu_custom_call.1} parent=1 // pred_check
      _
    $region119: #{tpu_custom_call.1} parent=1 // pred_check_branch
      %242 = sbr.rel (0) target = $region121
    $region120: #{tpu_custom_call.1} parent=1 // pred_region
      _
    $region121: #{tpu_custom_call.1} parent=1 // pred_fallthru
      _
    // Predicated region
    $region122: #{tpu_custom_call.1} parent=1 // pred_check
      _
    $region123: #{tpu_custom_call.1} parent=1 // pred_check_branch
      %244 = sbr.rel (0) target = $region125
    $region124: #{tpu_custom_call.1} parent=1 // pred_region
      %246 = dma.done [#allocation3], 256
    $region125: #{tpu_custom_call.1} parent=1 // pred_fallthru
      _
    // Predicated region
    $region126: #{tpu_custom_call.1} parent=1 // pred_check
      _
    $region127: #{tpu_custom_call.1} parent=1 // pred_check_branch
      %248 = sbr.rel (0) target = $region129
    $region128: #{tpu_custom_call.1} parent=1 // pred_region
      %250 = dma.done [#allocation6], 256
    $region129: #{tpu_custom_call.1} parent=1 // pred_fallthru
      _
    // Predicated region
    $region130: #{tpu_custom_call.1} parent=1 // pred_check
      _
    $region131: #{tpu_custom_call.1} parent=1 // pred_check_branch
      %252 = sbr.rel (0) target = $region133
    $region132: #{tpu_custom_call.1} parent=1 // pred_region
      %254 = dma.done [#allocation6], 64
    $region133: #{tpu_custom_call.1} parent=1 // pred_fallthru
      _
    // Predicated region
    $region134: #{tpu_custom_call.1} parent=1 // pred_check
      _
    $region135: #{tpu_custom_call.1} parent=1 // pred_check_branch
      %256 = sbr.rel (0) target = $region137
    $region136: #{tpu_custom_call.1} parent=1 // pred_region
      %258 = dma.done [#allocation9], 64
    $region137: #{tpu_custom_call.1} parent=1 // pred_fallthru
      _
    // Predicated region
    $region138: #{tpu_custom_call.1} parent=1 // pred_check
      _
    $region139: #{tpu_custom_call.1} parent=1 // pred_check_branch
      %260 = sbr.rel (0) target = $region141
    $region140: #{tpu_custom_call.1} parent=1 // pred_region
      %262 = dma.done [#allocation9], 512
    $region141: #{tpu_custom_call.1} parent=1 // pred_fallthru
      _
    // Predicated region
    $region142: #{tpu_custom_call.1} parent=1 // pred_check
      _
    $region143: #{tpu_custom_call.1} parent=1 // pred_check_branch
      %264 = sbr.rel (0) target = $region145
    $region144: #{tpu_custom_call.1} parent=1 // pred_region
      %266 = dma.done [#allocation12], 512
    $region145: #{tpu_custom_call.1} parent=1 // pred_fallthru
      _
    // Predicated region
    $region146: #{tpu_custom_call.1} parent=1 // pred_check
      _
    $region147: #{tpu_custom_call.1} parent=1 // pred_check_branch
      %268 = sbr.rel (0) target = $region149
    $region148: #{tpu_custom_call.1} parent=1 // pred_region
      %270 = dma.done [#allocation12], 512
    $region149: #{tpu_custom_call.1} parent=1 // pred_fallthru
      _
    // Predicated region
    $region150: #{tpu_custom_call.1} parent=1 // pred_check
      _
    $region151: #{tpu_custom_call.1} parent=1 // pred_check_branch
      %272 = sbr.rel (0) target = $region153
    $region152: #{tpu_custom_call.1} parent=1 // pred_region
      %274 = dma.done [#allocation15], 512
    $region153: #{tpu_custom_call.1} parent=1 // pred_fallthru
      _
    // Predicated region
    $region154: #{tpu_custom_call.1} parent=1 // pred_check
      _
    $region155: #{tpu_custom_call.1} parent=1 // pred_check_branch
      %276 = sbr.rel (0) target = $region157
    $region156: #{tpu_custom_call.1} parent=1 // pred_region
      %278 = dma.done [#allocation15], 512
    $region157: #{tpu_custom_call.1} parent=1 // pred_fallthru
      _
    // Predicated region
    $region158: #{tpu_custom_call.1} parent=1 // pred_check
      _
    $region159: #{tpu_custom_call.1} parent=1 // pred_check_branch
      %280 = sbr.rel (0) target = $region161
    $region160: #{tpu_custom_call.1} parent=1 // pred_region
      %282 = dma.done [#allocation18], 512
    $region161: #{tpu_custom_call.1} parent=1 // pred_fallthru
      _
    %v285 = vld [vmem:[#allocation2] sm:$0xff]
    %v286 = vld [vmem:[#allocation2 + $0x8] sm:$0xff]
    %v287 = vld [vmem:[#allocation5] sm:$0xff]
    %v288 = vld [vmem:[#allocation5 + $0x8] sm:$0xff]
    %v289 = vld [vmem:[#allocation7] sm:$0x3]
    %v290 = vld [vmem:[#allocation7 + $0x2] sm:$0x3]
    %vm291 = vnez %v289
    %vm292 = vnez %v290
    %v293 = vld [vmem:[#allocation8] sm:$0x3]
    %v294 = vld [vmem:[#allocation8 + $0x2] sm:$0x3]
    %vm295 = vnez %v293
    %vm296 = vnez %v294
    %v297 = vld [vmem:[%s9] sm:$0x1]
    %v298 = vld [vmem:[%s11] sm:$0x1]
    %vm299 = vcmask 261120
    %v300 = vsel %vm299, %v285, 0.0
    %301 = vadd.xlane.f32.xlu0 %v300
    %v302 = vpop.xlane.xlu0 %301
    %v303 = vsel %vm299, %v286, 0.0
    %304 = vadd.xlane.f32.xlu0 %v303
    %v305 = vpop.xlane.xlu0 %304
    %v306 = vmul.f32 %v302, 0.03125
    %v307 = vmul.f32 %v305, 0.03125
    %v308 = vsub.f32 %v285, %v306
    %v309 = vsub.f32 %v286, %v307
    %v310 = vmul.f32 %v308, %v308
    %v311 = vmul.f32 %v309, %v309
    %v312 = vsel %vm299, %v310, 0.0
    %313 = vadd.xlane.f32.xlu0 %v312
    %v314 = vpop.xlane.xlu0 %313
    %v315 = vsel %vm299, %v311, 0.0
    %316 = vadd.xlane.f32.xlu0 %v315
    %v317 = vpop.xlane.xlu0 %316
    %v318 = vmul.f32 %v314, 0.032258064
    %v319 = vmul.f32 %v317, 0.032258064
    %v320 = vrsqrt.pop %v318
    %v321 = vmul.f32 %v320, %v318
    %v322 = vmul.f32 %v321, %v320
    %v323 = vmul.f32 0.5, %v322
    %v324 = vsub.f32 1.5, %v323
    %v325 = vmul.f32 %v320, %v324
    %v326 = vmul.f32 %v318, %v325
    %vm327 = vcmp.eq.f32.partialorder %v318, inf
    %v328 = vsel %vm327, %v318, %v326
    %vm329 = vcmp.eq.f32.partialorder %v318, 0.0
    %v330 = vand.u32 %v318, 2147483648
    %v331 = vsel %vm329, %v330, %v328
    %v332 = vrsqrt.pop %v319
    %v333 = vmul.f32 %v332, %v319
    %v334 = vmul.f32 %v333, %v332
    %v335 = vmul.f32 0.5, %v334
    %v336 = vsub.f32 1.5, %v335
    %v337 = vmul.f32 %v332, %v336
    %v338 = vmul.f32 %v319, %v337
    %vm339 = vcmp.eq.f32.partialorder %v319, inf
    %v340 = vsel %vm339, %v319, %v338
    %vm341 = vcmp.eq.f32.partialorder %v319, 0.0
    %v342 = vand.u32 %v319, 2147483648
    %v343 = vsel %vm341, %v342, %v340
    %v345 = vperm.slane %v297, 0
    %v347 = vmul.f32 %v345, %v308
    %v348 = vmul.f32 %v345, %v309
    %v349 = vadd.f32 %v331, 1e-06
    %v350 = vadd.f32 %v343, 1e-06
    %v351 = vrcp.pop %v349
    %v352 = vmul.f32 %v349, %v351
    %v353 = vsub.f32 1.0, %v352
    %v354 = vmul.f32 %v351, %v353
    %v355 = vadd.f32 %v351, %v354
    %vm356 = vweird.f32 %v349
    %vm357 = vweird.f32 %v351
    %vm358 = vmor %vm356, %vm357
    %v359 = vsel %vm358, %v351, %v355
    %v360 = vand.u32 2147483647, %v349
    %vm361 = vcmp.eq.f32.partialorder %v360, 8.507059e+37
    %v362 = vand.u32 %v349, 2147483648
    %v363 = vor.u32 1.1754944e-38, %v362
    %v364 = vsel %vm361, %v363, %v359
    %v365 = vmul.f32 %v347, %v364
    %v366 = vrcp.pop %v350
    %v367 = vmul.f32 %v350, %v366
    %v368 = vsub.f32 1.0, %v367
    %v369 = vmul.f32 %v366, %v368
    %v370 = vadd.f32 %v366, %v369
    %vm371 = vweird.f32 %v350
    %vm372 = vweird.f32 %v366
    %vm373 = vmor %vm371, %vm372
    %v374 = vsel %vm373, %v366, %v370
    %v375 = vand.u32 2147483647, %v350
    %vm376 = vcmp.eq.f32.partialorder %v375, 8.507059e+37
    %v377 = vand.u32 %v350, 2147483648
    %v378 = vor.u32 1.1754944e-38, %v377
    %v379 = vsel %vm376, %v378, %v374
    %v380 = vmul.f32 %v348, %v379
    %v382 = vperm.slane %v298, 0
    %v384 = vadd.f32 %v365, %v382
    %v385 = vadd.f32 %v380, %v382
    %v386 = vld [vmem:[%s21] sm:$0xff]
    %v387 = vld [vmem:[%s21 + $0x8] sm:$0xff]
    %v388 = vld [vmem:[%s21 + $0x10] sm:$0xff]
    %v389 = vld [vmem:[%s21 + $0x18] sm:$0xff]
    %v390 = vld [vmem:[%s23] sm:$0x1]
    %v392 = vperm.slane %v390, 0
    %v395 = vsel %vm299, %v384, 0
    %v398 = vsel %vm299, %v385, 0
    %400 = vmatpush.msra.mxu0 0.0
    %401 = vmatpush.msra.mxu0 0.0
    %402 = vmatpush.msra.mxu0 0.0
    %403 = vmatpush.msra.mxu0 0.0
    %404 = vmatpush.msra.mxu0 0.0
    %405 = vmatpush.msra.mxu0 0.0
    %406 = vmatpush.msra.mxu0 0.0
    %407 = vmatpush.msra.mxu0 0.0
    %408 = vmatpush.msra.mxu0 0.0
    %409 = vmatpush.msra.mxu0 0.0
    %410 = vmatpush.msra.mxu0 0.0
    %411 = vmatpush.msra.mxu0 0.0
    %412 = vmatpush.msra.mxu0 %v389
    %413 = vmatpush.msra.mxu0 %v388
    %414 = vmatpush.msra.mxu0 %v387
    %415 = vmatpush.msra.mxu0 %v386
    %416 = vmatmul.f32.gmra.mxu0 %v395
    %v417 = vpop.f32.mrf.mxu0
    %v418 = vadd.f32 %v392, %v417
    %419 = vmatmul.f32.gmra.mxu0 %v398
    %v420 = vpop.f32.mrf.mxu0
    %v421 = vadd.f32 %v392, %v420
    %422 = vdwg.mxu0
    %v423 = vmul.f32 %v418, 0.35355338
    %v424 = vmul.f32 %v421, 0.35355338
    %v425 = vld [vmem:[%s25] sm:$0xff]
    %v426 = vld [vmem:[%s25 + $0x8] sm:$0xff]
    %v427 = vld [vmem:[%s25 + $0x10] sm:$0xff]
    %v428 = vld [vmem:[%s25 + $0x18] sm:$0xff]
    %v429 = vld [vmem:[%s27] sm:$0x1]
    %v431 = vperm.slane %v429, 0
    %433 = vmatpush.msra.mxu0 0.0
    %434 = vmatpush.msra.mxu0 0.0
    %435 = vmatpush.msra.mxu0 0.0
    %436 = vmatpush.msra.mxu0 0.0
    %437 = vmatpush.msra.mxu0 0.0
    %438 = vmatpush.msra.mxu0 0.0
    %439 = vmatpush.msra.mxu0 0.0
    %440 = vmatpush.msra.mxu0 0.0
    %441 = vmatpush.msra.mxu0 0.0
    %442 = vmatpush.msra.mxu0 0.0
    %443 = vmatpush.msra.mxu0 0.0
    %444 = vmatpush.msra.mxu0 0.0
    %445 = vmatpush.msra.mxu0 %v428
    %446 = vmatpush.msra.mxu0 %v427
    %447 = vmatpush.msra.mxu0 %v426
    %448 = vmatpush.msra.mxu0 %v425
    %449 = vmatmul.f32.gmra.mxu0 %v395
    %v450 = vpop.f32.mrf.mxu0
    %v451 = vadd.f32 %v431, %v450
    %452 = vmatmul.f32.gmra.mxu0 %v398
    %v453 = vpop.f32.mrf.mxu0
    %v454 = vadd.f32 %v431, %v453
    %455 = vdwg.mxu0
    %v456 = vld [vmem:[%s29] sm:$0xff]
    %v457 = vld [vmem:[%s29 + $0x8] sm:$0xff]
    %v458 = vld [vmem:[%s29 + $0x10] sm:$0xff]
    %v459 = vld [vmem:[%s29 + $0x18] sm:$0xff]
    %v460 = vld [vmem:[%s31] sm:$0x1]
    %v462 = vperm.slane %v460, 0
    %464 = vmatpush.msra.mxu0 0.0
    %465 = vmatpush.msra.mxu0 0.0
    %466 = vmatpush.msra.mxu0 0.0
    %467 = vmatpush.msra.mxu0 0.0
    %468 = vmatpush.msra.mxu0 0.0
    %469 = vmatpush.msra.mxu0 0.0
    %470 = vmatpush.msra.mxu0 0.0
    %471 = vmatpush.msra.mxu0 0.0
    %472 = vmatpush.msra.mxu0 0.0
    %473 = vmatpush.msra.mxu0 0.0
    %474 = vmatpush.msra.mxu0 0.0
    %475 = vmatpush.msra.mxu0 0.0
    %476 = vmatpush.msra.mxu0 %v459
    %477 = vmatpush.msra.mxu0 %v458
    %478 = vmatpush.msra.mxu0 %v457
    %479 = vmatpush.msra.mxu0 %v456
    %480 = vmatmul.f32.gmra.mxu0 %v395
    %v481 = vpop.f32.mrf.mxu0
    %v482 = vadd.f32 %v462, %v481
    %483 = vmatmul.f32.gmra.mxu0 %v398
    %v484 = vpop.f32.mrf.mxu0
    %v485 = vadd.f32 %v462, %v484
    %486 = vdwg.mxu0
    %vm487 = vcmask 64512
    %v489 = vsel %vm487, %v423, 0
    %v492 = vsel %vm487, %v451, 0
    %494 = vmatpush.xpose.msra.mxu0 0.0
    %495 = vmatpush.xpose.msra.mxu0 0.0
    %496 = vmatpush.xpose.msra.mxu0 0.0
    %497 = vmatpush.xpose.msra.mxu0 0.0
    %498 = vmatpush.xpose.msra.mxu0 0.0
    %499 = vmatpush.xpose.msra.mxu0 0.0
    %500 = vmatpush.xpose.msra.mxu0 0.0
    %501 = vmatpush.xpose.msra.mxu0 0.0
    %502 = vmatpush.xpose.msra.mxu0 0.0
    %503 = vmatpush.xpose.msra.mxu0 0.0
    %504 = vmatpush.xpose.msra.mxu0 0.0
    %505 = vmatpush.xpose.msra.mxu0 0.0
    %506 = vmatpush.xpose.msra.mxu0 0.0
    %507 = vmatpush.xpose.msra.mxu0 0.0
    %508 = vmatpush.xpose.msra.mxu0 0.0
    %509 = vmatpush.xpose.msra.mxu0 %v492
    %510 = vmatmul.f32.gmra.mxu0 %v489
    %v511 = vpop.f32.mrf.mxu0
    %v512 = vadd.f32 0.0, %v511
    %513 = vdwg.mxu0
    %v515 = vsel %vm487, %v424, 0
    %v518 = vsel %vm487, %v454, 0
    %520 = vmatpush.xpose.msra.mxu0 0.0
    %521 = vmatpush.xpose.msra.mxu0 0.0
    %522 = vmatpush.xpose.msra.mxu0 0.0
    %523 = vmatpush.xpose.msra.mxu0 0.0
    %524 = vmatpush.xpose.msra.mxu0 0.0
    %525 = vmatpush.xpose.msra.mxu0 0.0
    %526 = vmatpush.xpose.msra.mxu0 0.0
    %527 = vmatpush.xpose.msra.mxu0 0.0
    %528 = vmatpush.xpose.msra.mxu0 0.0
    %529 = vmatpush.xpose.msra.mxu0 0.0
    %530 = vmatpush.xpose.msra.mxu0 0.0
    %531 = vmatpush.xpose.msra.mxu0 0.0
    %532 = vmatpush.xpose.msra.mxu0 0.0
    %533 = vmatpush.xpose.msra.mxu0 0.0
    %534 = vmatpush.xpose.msra.mxu0 0.0
    %535 = vmatpush.xpose.msra.mxu0 %v518
    %536 = vmatmul.f32.gmra.mxu0 %v515
    %v537 = vpop.f32.mrf.mxu0
    %v538 = vadd.f32 0.0, %v537
    %539 = vdwg.mxu0
    %v540 = vsel %vm291, 16843009, 0
    %v541 = vsel %vm292, 16843009, 0
    %v542 = vunpack.c.0.s8 %v540
    %v543 = vunpack.c.0.s8 %v541
    %vm544 = vcmp.ne.s32.totalorder %v542, 0
    %vm545 = vcmp.ne.s32.totalorder %v543, 0
    %v546 = vsel %vm544, %v512, -1e+09
    %v547 = vsel %vm545, %v538, -1e+09
    %v548 = vsel %vm487, %v546, -inf
    %549 = vmax.xlane.f32.xlu0 %v548
    %v550 = vpop.xlane.xlu0 %549
    %v551 = vsel %vm487, %v547, -inf
    %552 = vmax.xlane.f32.xlu0 %v551
    %v553 = vpop.xlane.xlu0 %552
    %v554 = vsub.f32 %v546, %v550
    %v555 = vsub.f32 %v547, %v553
    %v556 = vmul.f32 %v554, 1.442695
    %v557 = vpow.pop %v556
    %v558 = vmul.f32 %v555, 1.442695
    %v559 = vpow.pop %v558
    %v560 = vsel %vm487, %v557, 0.0
    %561 = vadd.xlane.f32.xlu0 %v560
    %v562 = vpop.xlane.xlu0 %561
    %v563 = vsel %vm487, %v559, 0.0
    %564 = vadd.xlane.f32.xlu0 %v563
    %v565 = vpop.xlane.xlu0 %564
    %v566 = vrcp.pop %v562
    %v567 = vmul.f32 %v562, %v566
    %v568 = vsub.f32 1.0, %v567
    %v569 = vmul.f32 %v566, %v568
    %v570 = vadd.f32 %v566, %v569
    %vm571 = vweird.f32 %v562
    %vm572 = vweird.f32 %v566
    %vm573 = vmor %vm571, %vm572
    %v574 = vsel %vm573, %v566, %v570
    %v575 = vand.u32 2147483647, %v562
    %vm576 = vcmp.eq.f32.partialorder %v575, 8.507059e+37
    %v577 = vand.u32 %v562, 2147483648
    %v578 = vor.u32 1.1754944e-38, %v577
    %v579 = vsel %vm576, %v578, %v574
    %v580 = vmul.f32 %v557, %v579
    %v581 = vrcp.pop %v565
    %v582 = vmul.f32 %v565, %v581
    %v583 = vsub.f32 1.0, %v582
    %v584 = vmul.f32 %v581, %v583
    %v585 = vadd.f32 %v581, %v584
    %vm586 = vweird.f32 %v565
    %vm587 = vweird.f32 %v581
    %vm588 = vmor %vm586, %vm587
    %v589 = vsel %vm588, %v581, %v585
    %v590 = vand.u32 2147483647, %v565
    %vm591 = vcmp.eq.f32.partialorder %v590, 8.507059e+37
    %v592 = vand.u32 %v565, 2147483648
    %v593 = vor.u32 1.1754944e-38, %v592
    %v594 = vsel %vm591, %v593, %v589
    %v595 = vmul.f32 %v559, %v594
    %v597 = vsel %vm487, %v580, 0
    %599 = vmatpush.msra.mxu0 0.0
    %600 = vmatpush.msra.mxu0 0.0
    %601 = vmatpush.msra.mxu0 0.0
    %602 = vmatpush.msra.mxu0 0.0
    %603 = vmatpush.msra.mxu0 0.0
    %604 = vmatpush.msra.mxu0 0.0
    %605 = vmatpush.msra.mxu0 0.0
    %606 = vmatpush.msra.mxu0 0.0
    %607 = vmatpush.msra.mxu0 0.0
    %608 = vmatpush.msra.mxu0 0.0
    %609 = vmatpush.msra.mxu0 0.0
    %610 = vmatpush.msra.mxu0 0.0
    %611 = vmatpush.msra.mxu0 0.0
    %612 = vmatpush.msra.mxu0 0.0
    %613 = vmatpush.msra.mxu0 0.0
    %614 = vmatpush.msra.mxu0 %v482
    %615 = vmatmul.f32.gmra.mxu0 %v597
    %v616 = vpop.f32.mrf.mxu0
    %v617 = vadd.f32 0.0, %v616
    %618 = vdwg.mxu0
    %v620 = vsel %vm487, %v595, 0
    %622 = vmatpush.msra.mxu0 0.0
    %623 = vmatpush.msra.mxu0 0.0
    %624 = vmatpush.msra.mxu0 0.0
    %625 = vmatpush.msra.mxu0 0.0
    %626 = vmatpush.msra.mxu0 0.0
    %627 = vmatpush.msra.mxu0 0.0
    %628 = vmatpush.msra.mxu0 0.0
    %629 = vmatpush.msra.mxu0 0.0
    %630 = vmatpush.msra.mxu0 0.0
    %631 = vmatpush.msra.mxu0 0.0
    %632 = vmatpush.msra.mxu0 0.0
    %633 = vmatpush.msra.mxu0 0.0
    %634 = vmatpush.msra.mxu0 0.0
    %635 = vmatpush.msra.mxu0 0.0
    %636 = vmatpush.msra.mxu0 0.0
    %637 = vmatpush.msra.mxu0 %v485
    %638 = vmatmul.f32.gmra.mxu0 %v620
    %v639 = vpop.f32.mrf.mxu0
    %v640 = vadd.f32 0.0, %v639
    %641 = vdwg.mxu0
    %642 = vrot.lane.b32.xlu0 %v423, 120
    %v643 = vpop.permute.xlu0 %642
    %644 = vrot.lane.b32.xlu0 %v451, 120
    %v645 = vpop.permute.xlu0 %644
    %v646 = vsel %vm487, %v643, 0
    %v648 = vsel %vm487, %v645, 0
    %650 = vmatpush.xpose.msra.mxu0 0.0
    %651 = vmatpush.xpose.msra.mxu0 0.0
    %652 = vmatpush.xpose.msra.mxu0 0.0
    %653 = vmatpush.xpose.msra.mxu0 0.0
    %654 = vmatpush.xpose.msra.mxu0 0.0
    %655 = vmatpush.xpose.msra.mxu0 0.0
    %656 = vmatpush.xpose.msra.mxu0 0.0
    %657 = vmatpush.xpose.msra.mxu0 0.0
    %658 = vmatpush.xpose.msra.mxu0 0.0
    %659 = vmatpush.xpose.msra.mxu0 0.0
    %660 = vmatpush.xpose.msra.mxu0 0.0
    %661 = vmatpush.xpose.msra.mxu0 0.0
    %662 = vmatpush.xpose.msra.mxu0 0.0
    %663 = vmatpush.xpose.msra.mxu0 0.0
    %664 = vmatpush.xpose.msra.mxu0 0.0
    %665 = vmatpush.xpose.msra.mxu0 %v648
    %666 = vmatmul.f32.gmra.mxu0 %v646
    %v667 = vpop.f32.mrf.mxu0
    %v668 = vadd.f32 0.0, %v667
    %669 = vdwg.mxu0
    %670 = vrot.lane.b32.xlu0 %v424, 120
    %v671 = vpop.permute.xlu0 %670
    %672 = vrot.lane.b32.xlu0 %v454, 120
    %v673 = vpop.permute.xlu0 %672
    %v674 = vsel %vm487, %v671, 0
    %v676 = vsel %vm487, %v673, 0
    %678 = vmatpush.xpose.msra.mxu0 0.0
    %679 = vmatpush.xpose.msra.mxu0 0.0
    %680 = vmatpush.xpose.msra.mxu0 0.0
    %681 = vmatpush.xpose.msra.mxu0 0.0
    %682 = vmatpush.xpose.msra.mxu0 0.0
    %683 = vmatpush.xpose.msra.mxu0 0.0
    %684 = vmatpush.xpose.msra.mxu0 0.0
    %685 = vmatpush.xpose.msra.mxu0 0.0
    %686 = vmatpush.xpose.msra.mxu0 0.0
    %687 = vmatpush.xpose.msra.mxu0 0.0
    %688 = vmatpush.xpose.msra.mxu0 0.0
    %689 = vmatpush.xpose.msra.mxu0 0.0
    %690 = vmatpush.xpose.msra.mxu0 0.0
    %691 = vmatpush.xpose.msra.mxu0 0.0
    %692 = vmatpush.xpose.msra.mxu0 0.0
    %693 = vmatpush.xpose.msra.mxu0 %v676
    %694 = vmatmul.f32.gmra.mxu0 %v674
    %v695 = vpop.f32.mrf.mxu0
    %v696 = vadd.f32 0.0, %v695
    %697 = vdwg.mxu0
    %v698 = vsel %vm544, %v668, -1e+09
    %v699 = vsel %vm545, %v696, -1e+09
    %v700 = vsel %vm487, %v698, -inf
    %701 = vmax.xlane.f32.xlu0 %v700
    %v702 = vpop.xlane.xlu0 %701
    %v703 = vsel %vm487, %v699, -inf
    %704 = vmax.xlane.f32.xlu0 %v703
    %v705 = vpop.xlane.xlu0 %704
    %v706 = vsub.f32 %v698, %v702
    %v707 = vsub.f32 %v699, %v705
    %v708 = vmul.f32 %v706, 1.442695
    %v709 = vpow.pop %v708
    %v710 = vmul.f32 %v707, 1.442695
    %v711 = vpow.pop %v710
    %v712 = vsel %vm487, %v709, 0.0
    %713 = vadd.xlane.f32.xlu0 %v712
    %v714 = vpop.xlane.xlu0 %713
    %v715 = vsel %vm487, %v711, 0.0
    %716 = vadd.xlane.f32.xlu0 %v715
    %v717 = vpop.xlane.xlu0 %716
    %v718 = vrcp.pop %v714
    %v719 = vmul.f32 %v714, %v718
    %v720 = vsub.f32 1.0, %v719
    %v721 = vmul.f32 %v718, %v720
    %v722 = vadd.f32 %v718, %v721
    %vm723 = vweird.f32 %v714
    %vm724 = vweird.f32 %v718
    %vm725 = vmor %vm723, %vm724
    %v726 = vsel %vm725, %v718, %v722
    %v727 = vand.u32 2147483647, %v714
    %vm728 = vcmp.eq.f32.partialorder %v727, 8.507059e+37
    %v729 = vand.u32 %v714, 2147483648
    %v730 = vor.u32 1.1754944e-38, %v729
    %v731 = vsel %vm728, %v730, %v726
    %v732 = vmul.f32 %v709, %v731
    %v733 = vrcp.pop %v717
    %v734 = vmul.f32 %v717, %v733
    %v735 = vsub.f32 1.0, %v734
    %v736 = vmul.f32 %v733, %v735
    %v737 = vadd.f32 %v733, %v736
    %vm738 = vweird.f32 %v717
    %vm739 = vweird.f32 %v733
    %vm740 = vmor %vm738, %vm739
    %v741 = vsel %vm740, %v733, %v737
    %v742 = vand.u32 2147483647, %v717
    %vm743 = vcmp.eq.f32.partialorder %v742, 8.507059e+37
    %v744 = vand.u32 %v717, 2147483648
    %v745 = vor.u32 1.1754944e-38, %v744
    %v746 = vsel %vm743, %v745, %v741
    %v747 = vmul.f32 %v711, %v746
    %749 = vrot.lane.b32.xlu0 %v482, 120
    %v750 = vpop.permute.xlu0 %749
    %v753 = vsel %vm487, %v732, 0
    %755 = vmatpush.msra.mxu0 0.0
    %756 = vmatpush.msra.mxu0 0.0
    %757 = vmatpush.msra.mxu0 0.0
    %758 = vmatpush.msra.mxu0 0.0
    %759 = vmatpush.msra.mxu0 0.0
    %760 = vmatpush.msra.mxu0 0.0
    %761 = vmatpush.msra.mxu0 0.0
    %762 = vmatpush.msra.mxu0 0.0
    %763 = vmatpush.msra.mxu0 0.0
    %764 = vmatpush.msra.mxu0 0.0
    %765 = vmatpush.msra.mxu0 0.0
    %766 = vmatpush.msra.mxu0 0.0
    %767 = vmatpush.msra.mxu0 0.0
    %768 = vmatpush.msra.mxu0 0.0
    %769 = vmatpush.msra.mxu0 0.0
    %770 = vmatpush.msra.mxu0 %v750
    %771 = vmatmul.f32.gmra.mxu0 %v753
    %v772 = vpop.f32.mrf.mxu0
    %v773 = vadd.f32 0.0, %v772
    %774 = vdwg.mxu0
    %776 = vrot.lane.b32.xlu0 %v485, 120
    %v777 = vpop.permute.xlu0 %776
    %v780 = vsel %vm487, %v747, 0
    %782 = vmatpush.msra.mxu0 0.0
    %783 = vmatpush.msra.mxu0 0.0
    %784 = vmatpush.msra.mxu0 0.0
    %785 = vmatpush.msra.mxu0 0.0
    %786 = vmatpush.msra.mxu0 0.0
    %787 = vmatpush.msra.mxu0 0.0
    %788 = vmatpush.msra.mxu0 0.0
    %789 = vmatpush.msra.mxu0 0.0
    %790 = vmatpush.msra.mxu0 0.0
    %791 = vmatpush.msra.mxu0 0.0
    %792 = vmatpush.msra.mxu0 0.0
    %793 = vmatpush.msra.mxu0 0.0
    %794 = vmatpush.msra.mxu0 0.0
    %795 = vmatpush.msra.mxu0 0.0
    %796 = vmatpush.msra.mxu0 0.0
    %797 = vmatpush.msra.mxu0 %v777
    %798 = vmatmul.f32.gmra.mxu0 %v780
    %v799 = vpop.f32.mrf.mxu0
    %v800 = vadd.f32 0.0, %v799
    %801 = vdwg.mxu0
    %802 = vrot.lane.b32.xlu0 %v423, 112
    %v803 = vpop.permute.xlu0 %802
    %804 = vrot.lane.b32.xlu0 %v451, 112
    %v805 = vpop.permute.xlu0 %804
    %v806 = vsel %vm487, %v803, 0
    %v808 = vsel %vm487, %v805, 0
    %810 = vmatpush.xpose.msra.mxu0 0.0
    %811 = vmatpush.xpose.msra.mxu0 0.0
    %812 = vmatpush.xpose.msra.mxu0 0.0
    %813 = vmatpush.xpose.msra.mxu0 0.0
    %814 = vmatpush.xpose.msra.mxu0 0.0
    %815 = vmatpush.xpose.msra.mxu0 0.0
    %816 = vmatpush.xpose.msra.mxu0 0.0
    %817 = vmatpush.xpose.msra.mxu0 0.0
    %818 = vmatpush.xpose.msra.mxu0 0.0
    %819 = vmatpush.xpose.msra.mxu0 0.0
    %820 = vmatpush.xpose.msra.mxu0 0.0
    %821 = vmatpush.xpose.msra.mxu0 0.0
    %822 = vmatpush.xpose.msra.mxu0 0.0
    %823 = vmatpush.xpose.msra.mxu0 0.0
    %824 = vmatpush.xpose.msra.mxu0 0.0
    %825 = vmatpush.xpose.msra.mxu0 %v808
    %826 = vmatmul.f32.gmra.mxu0 %v806
    %v827 = vpop.f32.mrf.mxu0
    %v828 = vadd.f32 0.0, %v827
    %829 = vdwg.mxu0
    %830 = vrot.lane.b32.xlu0 %v424, 112
    %v831 = vpop.permute.xlu0 %830
    %832 = vrot.lane.b32.xlu0 %v454, 112
    %v833 = vpop.permute.xlu0 %832
    %v834 = vsel %vm487, %v831, 0
    %v836 = vsel %vm487, %v833, 0
    %838 = vmatpush.xpose.msra.mxu0 0.0
    %839 = vmatpush.xpose.msra.mxu0 0.0
    %840 = vmatpush.xpose.msra.mxu0 0.0
    %841 = vmatpush.xpose.msra.mxu0 0.0
    %842 = vmatpush.xpose.msra.mxu0 0.0
    %843 = vmatpush.xpose.msra.mxu0 0.0
    %844 = vmatpush.xpose.msra.mxu0 0.0
    %845 = vmatpush.xpose.msra.mxu0 0.0
    %846 = vmatpush.xpose.msra.mxu0 0.0
    %847 = vmatpush.xpose.msra.mxu0 0.0
    %848 = vmatpush.xpose.msra.mxu0 0.0
    %849 = vmatpush.xpose.msra.mxu0 0.0
    %850 = vmatpush.xpose.msra.mxu0 0.0
    %851 = vmatpush.xpose.msra.mxu0 0.0
    %852 = vmatpush.xpose.msra.mxu0 0.0
    %853 = vmatpush.xpose.msra.mxu0 %v836
    %854 = vmatmul.f32.gmra.mxu0 %v834
    %v855 = vpop.f32.mrf.mxu0
    %v856 = vadd.f32 0.0, %v855
    %857 = vdwg.mxu0
    %v858 = vsel %vm544, %v828, -1e+09
    %v859 = vsel %vm545, %v856, -1e+09
    %v860 = vsel %vm487, %v858, -inf
    %861 = vmax.xlane.f32.xlu0 %v860
    %v862 = vpop.xlane.xlu0 %861
    %v863 = vsel %vm487, %v859, -inf
    %864 = vmax.xlane.f32.xlu0 %v863
    %v865 = vpop.xlane.xlu0 %864
    %v866 = vsub.f32 %v858, %v862
    %v867 = vsub.f32 %v859, %v865
    %v868 = vmul.f32 %v866, 1.442695
    %v869 = vpow.pop %v868
    %v870 = vmul.f32 %v867, 1.442695
    %v871 = vpow.pop %v870
    %v872 = vsel %vm487, %v869, 0.0
    %873 = vadd.xlane.f32.xlu0 %v872
    %v874 = vpop.xlane.xlu0 %873
    %v875 = vsel %vm487, %v871, 0.0
    %876 = vadd.xlane.f32.xlu0 %v875
    %v877 = vpop.xlane.xlu0 %876
    %v878 = vrcp.pop %v874
    %v879 = vmul.f32 %v874, %v878
    %v880 = vsub.f32 1.0, %v879
    %v881 = vmul.f32 %v878, %v880
    %v882 = vadd.f32 %v878, %v881
    %vm883 = vweird.f32 %v874
    %vm884 = vweird.f32 %v878
    %vm885 = vmor %vm883, %vm884
    %v886 = vsel %vm885, %v878, %v882
    %v887 = vand.u32 2147483647, %v874
    %vm888 = vcmp.eq.f32.partialorder %v887, 8.507059e+37
    %v889 = vand.u32 %v874, 2147483648
    %v890 = vor.u32 1.1754944e-38, %v889
    %v891 = vsel %vm888, %v890, %v886
    %v892 = vmul.f32 %v869, %v891
    %v893 = vrcp.pop %v877
    %v894 = vmul.f32 %v877, %v893
    %v895 = vsub.f32 1.0, %v894
    %v896 = vmul.f32 %v893, %v895
    %v897 = vadd.f32 %v893, %v896
    %vm898 = vweird.f32 %v877
    %vm899 = vweird.f32 %v893
    %vm900 = vmor %vm898, %vm899
    %v901 = vsel %vm900, %v893, %v897
    %v902 = vand.u32 2147483647, %v877
    %vm903 = vcmp.eq.f32.partialorder %v902, 8.507059e+37
    %v904 = vand.u32 %v877, 2147483648
    %v905 = vor.u32 1.1754944e-38, %v904
    %v906 = vsel %vm903, %v905, %v901
    %v907 = vmul.f32 %v871, %v906
    %908 = vrot.lane.b32.xlu0 %v482, 112
    %v909 = vpop.permute.xlu0 %908
    %v912 = vsel %vm487, %v892, 0
    %914 = vmatpush.msra.mxu0 0.0
    %915 = vmatpush.msra.mxu0 0.0
    %916 = vmatpush.msra.mxu0 0.0
    %917 = vmatpush.msra.mxu0 0.0
    %918 = vmatpush.msra.mxu0 0.0
    %919 = vmatpush.msra.mxu0 0.0
    %920 = vmatpush.msra.mxu0 0.0
    %921 = vmatpush.msra.mxu0 0.0
    %922 = vmatpush.msra.mxu0 0.0
    %923 = vmatpush.msra.mxu0 0.0
    %924 = vmatpush.msra.mxu0 0.0
    %925 = vmatpush.msra.mxu0 0.0
    %926 = vmatpush.msra.mxu0 0.0
    %927 = vmatpush.msra.mxu0 0.0
    %928 = vmatpush.msra.mxu0 0.0
    %929 = vmatpush.msra.mxu0 %v909
    %930 = vmatmul.f32.gmra.mxu0 %v912
    %v931 = vpop.f32.mrf.mxu0
    %v932 = vadd.f32 0.0, %v931
    %933 = vdwg.mxu0
    %934 = vrot.lane.b32.xlu0 %v485, 112
    %v935 = vpop.permute.xlu0 %934
    %v938 = vsel %vm487, %v907, 0
    %940 = vmatpush.msra.mxu0 0.0
    %941 = vmatpush.msra.mxu0 0.0
    %942 = vmatpush.msra.mxu0 0.0
    %943 = vmatpush.msra.mxu0 0.0
    %944 = vmatpush.msra.mxu0 0.0
    %945 = vmatpush.msra.mxu0 0.0
    %946 = vmatpush.msra.mxu0 0.0
    %947 = vmatpush.msra.mxu0 0.0
    %948 = vmatpush.msra.mxu0 0.0
    %949 = vmatpush.msra.mxu0 0.0
    %950 = vmatpush.msra.mxu0 0.0
    %951 = vmatpush.msra.mxu0 0.0
    %952 = vmatpush.msra.mxu0 0.0
    %953 = vmatpush.msra.mxu0 0.0
    %954 = vmatpush.msra.mxu0 0.0
    %955 = vmatpush.msra.mxu0 %v935
    %956 = vmatmul.f32.gmra.mxu0 %v938
    %v957 = vpop.f32.mrf.mxu0
    %v958 = vadd.f32 0.0, %v957
    %959 = vdwg.mxu0
    %960 = vrot.lane.b32.xlu0 %v423, 104
    %v961 = vpop.permute.xlu0 %960
    %962 = vrot.lane.b32.xlu0 %v451, 104
    %v963 = vpop.permute.xlu0 %962
    %v964 = vsel %vm487, %v961, 0
    %v966 = vsel %vm487, %v963, 0
    %968 = vmatpush.xpose.msra.mxu0 0.0
    %969 = vmatpush.xpose.msra.mxu0 0.0
    %970 = vmatpush.xpose.msra.mxu0 0.0
    %971 = vmatpush.xpose.msra.mxu0 0.0
    %972 = vmatpush.xpose.msra.mxu0 0.0
    %973 = vmatpush.xpose.msra.mxu0 0.0
    %974 = vmatpush.xpose.msra.mxu0 0.0
    %975 = vmatpush.xpose.msra.mxu0 0.0
    %976 = vmatpush.xpose.msra.mxu0 0.0
    %977 = vmatpush.xpose.msra.mxu0 0.0
    %978 = vmatpush.xpose.msra.mxu0 0.0
    %979 = vmatpush.xpose.msra.mxu0 0.0
    %980 = vmatpush.xpose.msra.mxu0 0.0
    %981 = vmatpush.xpose.msra.mxu0 0.0
    %982 = vmatpush.xpose.msra.mxu0 0.0
    %983 = vmatpush.xpose.msra.mxu0 %v966
    %984 = vmatmul.f32.gmra.mxu0 %v964
    %v985 = vpop.f32.mrf.mxu0
    %v986 = vadd.f32 0.0, %v985
    %987 = vdwg.mxu0
    %988 = vrot.lane.b32.xlu0 %v424, 104
    %v989 = vpop.permute.xlu0 %988
    %990 = vrot.lane.b32.xlu0 %v454, 104
    %v991 = vpop.permute.xlu0 %990
    %v992 = vsel %vm487, %v989, 0
    %v994 = vsel %vm487, %v991, 0
    %996 = vmatpush.xpose.msra.mxu0 0.0
    %997 = vmatpush.xpose.msra.mxu0 0.0
    %998 = vmatpush.xpose.msra.mxu0 0.0
    %999 = vmatpush.xpose.msra.mxu0 0.0
    %1000 = vmatpush.xpose.msra.mxu0 0.0
    %1001 = vmatpush.xpose.msra.mxu0 0.0
    %1002 = vmatpush.xpose.msra.mxu0 0.0
    %1003 = vmatpush.xpose.msra.mxu0 0.0
    %1004 = vmatpush.xpose.msra.mxu0 0.0
    %1005 = vmatpush.xpose.msra.mxu0 0.0
    %1006 = vmatpush.xpose.msra.mxu0 0.0
    %1007 = vmatpush.xpose.msra.mxu0 0.0
    %1008 = vmatpush.xpose.msra.mxu0 0.0
    %1009 = vmatpush.xpose.msra.mxu0 0.0
    %1010 = vmatpush.xpose.msra.mxu0 0.0
    %1011 = vmatpush.xpose.msra.mxu0 %v994
    %1012 = vmatmul.f32.gmra.mxu0 %v992
    %v1013 = vpop.f32.mrf.mxu0
    %v1014 = vadd.f32 0.0, %v1013
    %1015 = vdwg.mxu0
    %v1016 = vsel %vm544, %v986, -1e+09
    %v1017 = vsel %vm545, %v1014, -1e+09
    %v1018 = vsel %vm487, %v1016, -inf
    %1019 = vmax.xlane.f32.xlu0 %v1018
    %v1020 = vpop.xlane.xlu0 %1019
    %v1021 = vsel %vm487, %v1017, -inf
    %1022 = vmax.xlane.f32.xlu0 %v1021
    %v1023 = vpop.xlane.xlu0 %1022
    %v1024 = vsub.f32 %v1016, %v1020
    %v1025 = vsub.f32 %v1017, %v1023
    %v1026 = vmul.f32 %v1024, 1.442695
    %v1027 = vpow.pop %v1026
    %v1028 = vmul.f32 %v1025, 1.442695
    %v1029 = vpow.pop %v1028
    %v1030 = vsel %vm487, %v1027, 0.0
    %1031 = vadd.xlane.f32.xlu0 %v1030
    %v1032 = vpop.xlane.xlu0 %1031
    %v1033 = vsel %vm487, %v1029, 0.0
    %1034 = vadd.xlane.f32.xlu0 %v1033
    %v1035 = vpop.xlane.xlu0 %1034
    %v1036 = vrcp.pop %v1032
    %v1037 = vmul.f32 %v1032, %v1036
    %v1038 = vsub.f32 1.0, %v1037
    %v1039 = vmul.f32 %v1036, %v1038
    %v1040 = vadd.f32 %v1036, %v1039
    %vm1041 = vweird.f32 %v1032
    %vm1042 = vweird.f32 %v1036
    %vm1043 = vmor %vm1041, %vm1042
    %v1044 = vsel %vm1043, %v1036, %v1040
    %v1045 = vand.u32 2147483647, %v1032
    %vm1046 = vcmp.eq.f32.partialorder %v1045, 8.507059e+37
    %v1047 = vand.u32 %v1032, 2147483648
    %v1048 = vor.u32 1.1754944e-38, %v1047
    %v1049 = vsel %vm1046, %v1048, %v1044
    %v1050 = vmul.f32 %v1027, %v1049
    %v1051 = vrcp.pop %v1035
    %v1052 = vmul.f32 %v1035, %v1051
    %v1053 = vsub.f32 1.0, %v1052
    %v1054 = vmul.f32 %v1051, %v1053
    %v1055 = vadd.f32 %v1051, %v1054
    %vm1056 = vweird.f32 %v1035
    %vm1057 = vweird.f32 %v1051
    %vm1058 = vmor %vm1056, %vm1057
    %v1059 = vsel %vm1058, %v1051, %v1055
    %v1060 = vand.u32 2147483647, %v1035
    %vm1061 = vcmp.eq.f32.partialorder %v1060, 8.507059e+37
    %v1062 = vand.u32 %v1035, 2147483648
    %v1063 = vor.u32 1.1754944e-38, %v1062
    %v1064 = vsel %vm1061, %v1063, %v1059
    %v1065 = vmul.f32 %v1029, %v1064
    %1066 = vrot.lane.b32.xlu0 %v482, 104
    %v1067 = vpop.permute.xlu0 %1066
    %v1070 = vsel %vm487, %v1050, 0
    %1072 = vmatpush.msra.mxu0 0.0
    %1073 = vmatpush.msra.mxu0 0.0
    %1074 = vmatpush.msra.mxu0 0.0
    %1075 = vmatpush.msra.mxu0 0.0
    %1076 = vmatpush.msra.mxu0 0.0
    %1077 = vmatpush.msra.mxu0 0.0
    %1078 = vmatpush.msra.mxu0 0.0
    %1079 = vmatpush.msra.mxu0 0.0
    %1080 = vmatpush.msra.mxu0 0.0
    %1081 = vmatpush.msra.mxu0 0.0
    %1082 = vmatpush.msra.mxu0 0.0
    %1083 = vmatpush.msra.mxu0 0.0
    %1084 = vmatpush.msra.mxu0 0.0
    %1085 = vmatpush.msra.mxu0 0.0
    %1086 = vmatpush.msra.mxu0 0.0
    %1087 = vmatpush.msra.mxu0 %v1067
    %1088 = vmatmul.f32.gmra.mxu0 %v1070
    %v1089 = vpop.f32.mrf.mxu0
    %v1090 = vadd.f32 0.0, %v1089
    %1091 = vdwg.mxu0
    %1092 = vrot.lane.b32.xlu0 %v485, 104
    %v1093 = vpop.permute.xlu0 %1092
    %v1096 = vsel %vm487, %v1065, 0
    %1098 = vmatpush.msra.mxu0 0.0
    %1099 = vmatpush.msra.mxu0 0.0
    %1100 = vmatpush.msra.mxu0 0.0
    %1101 = vmatpush.msra.mxu0 0.0
    %1102 = vmatpush.msra.mxu0 0.0
    %1103 = vmatpush.msra.mxu0 0.0
    %1104 = vmatpush.msra.mxu0 0.0
    %1105 = vmatpush.msra.mxu0 0.0
    %1106 = vmatpush.msra.mxu0 0.0
    %1107 = vmatpush.msra.mxu0 0.0
    %1108 = vmatpush.msra.mxu0 0.0
    %1109 = vmatpush.msra.mxu0 0.0
    %1110 = vmatpush.msra.mxu0 0.0
    %1111 = vmatpush.msra.mxu0 0.0
    %1112 = vmatpush.msra.mxu0 0.0
    %1113 = vmatpush.msra.mxu0 %v1093
    %1114 = vmatmul.f32.gmra.mxu0 %v1096
    %v1115 = vpop.f32.mrf.mxu0
    %v1116 = vadd.f32 0.0, %v1115
    %1117 = vdwg.mxu0
    %1120 = vrot.lane.b32.xlu0 %v773, 8
    %v1121 = vpop.permute.xlu0 %1120
    %1122 = vrot.lane.b32.xlu0 %v800, 8
    %v1123 = vpop.permute.xlu0 %1122
    %1128 = vrot.lane.b32.xlu0 %v932, 16
    %v1129 = vpop.permute.xlu0 %1128
    %1130 = vrot.lane.b32.xlu0 %v958, 16
    %v1131 = vpop.permute.xlu0 %1130
    %1136 = vrot.lane.b32.xlu0 %v1090, 24
    %v1137 = vpop.permute.xlu0 %1136
    %1138 = vrot.lane.b32.xlu0 %v1116, 24
    %v1139 = vpop.permute.xlu0 %1138
    %v1142 = vsel %vm487, %v617, %v1121
    %v1143 = vsel %vm487, %v640, %v1123
    %vm1144 = vcmask 130048
    %v1145 = vsel %vm1144, %v1142, %v1129
    %v1146 = vsel %vm1144, %v1143, %v1131
    %vm1147 = vcmask 195584
    %v1148 = vsel %vm1147, %v1145, %v1137
    %v1149 = vsel %vm1147, %v1146, %v1139
    %v1150 = vld [vmem:[#allocation10] sm:$0xff]
    %v1151 = vld [vmem:[#allocation10 + $0x8] sm:$0xff]
    %v1152 = vld [vmem:[#allocation10 + $0x10] sm:$0xff]
    %v1153 = vld [vmem:[#allocation10 + $0x18] sm:$0xff]
    %v1154 = vld [vmem:[%s35] sm:$0x1]
    %v1156 = vperm.slane %v1154, 0
    %v1159 = vsel %vm299, %v1148, 0
    %v1162 = vsel %vm299, %v1149, 0
    %1164 = vmatpush.msra.mxu0 0.0
    %1165 = vmatpush.msra.mxu0 0.0
    %1166 = vmatpush.msra.mxu0 0.0
    %1167 = vmatpush.msra.mxu0 0.0
    %1168 = vmatpush.msra.mxu0 0.0
    %1169 = vmatpush.msra.mxu0 0.0
    %1170 = vmatpush.msra.mxu0 0.0
    %1171 = vmatpush.msra.mxu0 0.0
    %1172 = vmatpush.msra.mxu0 0.0
    %1173 = vmatpush.msra.mxu0 0.0
    %1174 = vmatpush.msra.mxu0 0.0
    %1175 = vmatpush.msra.mxu0 0.0
    %1176 = vmatpush.msra.mxu0 %v1153
    %1177 = vmatpush.msra.mxu0 %v1152
    %1178 = vmatpush.msra.mxu0 %v1151
    %1179 = vmatpush.msra.mxu0 %v1150
    %1180 = vmatmul.f32.gmra.mxu0 %v1159
    %v1181 = vpop.f32.mrf.mxu0
    %v1182 = vadd.f32 %v1156, %v1181
    %1183 = vmatmul.f32.gmra.mxu0 %v1162
    %v1184 = vpop.f32.mrf.mxu0
    %v1185 = vadd.f32 %v1156, %v1184
    %1186 = vdwg.mxu0
    %v1187 = vadd.f32 %v285, %v1182
    %v1188 = vadd.f32 %v286, %v1185
    %v1189 = vld [vmem:[%s13] sm:$0x1]
    %v1190 = vld [vmem:[%s15] sm:$0x1]
    %v1191 = vsel %vm299, %v1187, 0.0
    %1192 = vadd.xlane.f32.xlu0 %v1191
    %v1193 = vpop.xlane.xlu0 %1192
    %v1194 = vsel %vm299, %v1188, 0.0
    %1195 = vadd.xlane.f32.xlu0 %v1194
    %v1196 = vpop.xlane.xlu0 %1195
    %v1197 = vmul.f32 %v1193, 0.03125
    %v1198 = vmul.f32 %v1196, 0.03125
    %v1199 = vsub.f32 %v1187, %v1197
    %v1200 = vsub.f32 %v1188, %v1198
    %v1201 = vmul.f32 %v1199, %v1199
    %v1202 = vmul.f32 %v1200, %v1200
    %v1203 = vsel %vm299, %v1201, 0.0
    %1204 = vadd.xlane.f32.xlu0 %v1203
    %v1205 = vpop.xlane.xlu0 %1204
    %v1206 = vsel %vm299, %v1202, 0.0
    %1207 = vadd.xlane.f32.xlu0 %v1206
    %v1208 = vpop.xlane.xlu0 %1207
    %v1209 = vmul.f32 %v1205, 0.032258064
    %v1210 = vmul.f32 %v1208, 0.032258064
    %v1211 = vrsqrt.pop %v1209
    %v1212 = vmul.f32 %v1211, %v1209
    %v1213 = vmul.f32 %v1212, %v1211
    %v1214 = vmul.f32 0.5, %v1213
    %v1215 = vsub.f32 1.5, %v1214
    %v1216 = vmul.f32 %v1211, %v1215
    %v1217 = vmul.f32 %v1209, %v1216
    %vm1218 = vcmp.eq.f32.partialorder %v1209, inf
    %v1219 = vsel %vm1218, %v1209, %v1217
    %vm1220 = vcmp.eq.f32.partialorder %v1209, 0.0
    %v1221 = vand.u32 %v1209, 2147483648
    %v1222 = vsel %vm1220, %v1221, %v1219
    %v1223 = vrsqrt.pop %v1210
    %v1224 = vmul.f32 %v1223, %v1210
    %v1225 = vmul.f32 %v1224, %v1223
    %v1226 = vmul.f32 0.5, %v1225
    %v1227 = vsub.f32 1.5, %v1226
    %v1228 = vmul.f32 %v1223, %v1227
    %v1229 = vmul.f32 %v1210, %v1228
    %vm1230 = vcmp.eq.f32.partialorder %v1210, inf
    %v1231 = vsel %vm1230, %v1210, %v1229
    %vm1232 = vcmp.eq.f32.partialorder %v1210, 0.0
    %v1233 = vand.u32 %v1210, 2147483648
    %v1234 = vsel %vm1232, %v1233, %v1231
    %v1236 = vperm.slane %v1189, 0
    %v1238 = vmul.f32 %v1236, %v1199
    %v1239 = vmul.f32 %v1236, %v1200
    %v1240 = vadd.f32 %v1222, 1e-06
    %v1241 = vadd.f32 %v1234, 1e-06
    %v1242 = vrcp.pop %v1240
    %v1243 = vmul.f32 %v1240, %v1242
    %v1244 = vsub.f32 1.0, %v1243
    %v1245 = vmul.f32 %v1242, %v1244
    %v1246 = vadd.f32 %v1242, %v1245
    %vm1247 = vweird.f32 %v1240
    %vm1248 = vweird.f32 %v1242
    %vm1249 = vmor %vm1247, %vm1248
    %v1250 = vsel %vm1249, %v1242, %v1246
    %v1251 = vand.u32 2147483647, %v1240
    %vm1252 = vcmp.eq.f32.partialorder %v1251, 8.507059e+37
    %v1253 = vand.u32 %v1240, 2147483648
    %v1254 = vor.u32 1.1754944e-38, %v1253
    %v1255 = vsel %vm1252, %v1254, %v1250
    %v1256 = vmul.f32 %v1238, %v1255
    %v1257 = vrcp.pop %v1241
    %v1258 = vmul.f32 %v1241, %v1257
    %v1259 = vsub.f32 1.0, %v1258
    %v1260 = vmul.f32 %v1257, %v1259
    %v1261 = vadd.f32 %v1257, %v1260
    %vm1262 = vweird.f32 %v1241
    %vm1263 = vweird.f32 %v1257
    %vm1264 = vmor %vm1262, %vm1263
    %v1265 = vsel %vm1264, %v1257, %v1261
    %v1266 = vand.u32 2147483647, %v1241
    %vm1267 = vcmp.eq.f32.partialorder %v1266, 8.507059e+37
    %v1268 = vand.u32 %v1241, 2147483648
    %v1269 = vor.u32 1.1754944e-38, %v1268
    %v1270 = vsel %vm1267, %v1269, %v1265
    %v1271 = vmul.f32 %v1239, %v1270
    %v1273 = vperm.slane %v1190, 0
    %v1275 = vadd.f32 %v1256, %v1273
    %v1276 = vadd.f32 %v1271, %v1273
    %v1277 = vld [vmem:[#allocation11] sm:$0xff]
    %v1278 = vld [vmem:[#allocation11 + $0x8] sm:$0xff]
    %v1279 = vld [vmem:[#allocation11 + $0x10] sm:$0xff]
    %v1280 = vld [vmem:[#allocation11 + $0x18] sm:$0xff]
    %v1281 = vld [vmem:[%s39] sm:$0x1]
    %v1283 = vperm.slane %v1281, 0
    %v1286 = vsel %vm299, %v1275, 0
    %v1289 = vsel %vm299, %v1276, 0
    %1291 = vmatpush.msra.mxu0 0.0
    %1292 = vmatpush.msra.mxu0 0.0
    %1293 = vmatpush.msra.mxu0 0.0
    %1294 = vmatpush.msra.mxu0 0.0
    %1295 = vmatpush.msra.mxu0 0.0
    %1296 = vmatpush.msra.mxu0 0.0
    %1297 = vmatpush.msra.mxu0 0.0
    %1298 = vmatpush.msra.mxu0 0.0
    %1299 = vmatpush.msra.mxu0 0.0
    %1300 = vmatpush.msra.mxu0 0.0
    %1301 = vmatpush.msra.mxu0 0.0
    %1302 = vmatpush.msra.mxu0 0.0
    %1303 = vmatpush.msra.mxu0 %v1280
    %1304 = vmatpush.msra.mxu0 %v1279
    %1305 = vmatpush.msra.mxu0 %v1278
    %1306 = vmatpush.msra.mxu0 %v1277
    %1307 = vmatmul.f32.gmra.mxu0 %v1286
    %v1308 = vpop.f32.mrf.mxu0
    %v1309 = vadd.f32 %v1283, %v1308
    %1310 = vmatmul.f32.gmra.mxu0 %v1289
    %v1311 = vpop.f32.mrf.mxu0
    %v1312 = vadd.f32 %v1283, %v1311
    %1313 = vdwg.mxu0
    %v1314 = vmul.f32 %v1309, 0.35355338
    %v1315 = vmul.f32 %v1312, 0.35355338
    %v1316 = vld [vmem:[#allocation13] sm:$0xff]
    %v1317 = vld [vmem:[#allocation13 + $0x8] sm:$0xff]
    %v1318 = vld [vmem:[#allocation13 + $0x10] sm:$0xff]
    %v1319 = vld [vmem:[#allocation13 + $0x18] sm:$0xff]
    %v1320 = vld [vmem:[%s43] sm:$0x1]
    %v1322 = vperm.slane %v1320, 0
    %v1325 = vsel %vm299, %v287, 0
    %v1328 = vsel %vm299, %v288, 0
    %1330 = vmatpush.msra.mxu0 0.0
    %1331 = vmatpush.msra.mxu0 0.0
    %1332 = vmatpush.msra.mxu0 0.0
    %1333 = vmatpush.msra.mxu0 0.0
    %1334 = vmatpush.msra.mxu0 0.0
    %1335 = vmatpush.msra.mxu0 0.0
    %1336 = vmatpush.msra.mxu0 0.0
    %1337 = vmatpush.msra.mxu0 0.0
    %1338 = vmatpush.msra.mxu0 0.0
    %1339 = vmatpush.msra.mxu0 0.0
    %1340 = vmatpush.msra.mxu0 0.0
    %1341 = vmatpush.msra.mxu0 0.0
    %1342 = vmatpush.msra.mxu0 %v1319
    %1343 = vmatpush.msra.mxu0 %v1318
    %1344 = vmatpush.msra.mxu0 %v1317
    %1345 = vmatpush.msra.mxu0 %v1316
    %1346 = vmatmul.f32.gmra.mxu0 %v1325
    %v1347 = vpop.f32.mrf.mxu0
    %v1348 = vadd.f32 %v1322, %v1347
    %1349 = vmatmul.f32.gmra.mxu0 %v1328
    %v1350 = vpop.f32.mrf.mxu0
    %v1351 = vadd.f32 %v1322, %v1350
    %1352 = vdwg.mxu0
    %v1353 = vld [vmem:[#allocation14] sm:$0xff]
    %v1354 = vld [vmem:[#allocation14 + $0x8] sm:$0xff]
    %v1355 = vld [vmem:[#allocation14 + $0x10] sm:$0xff]
    %v1356 = vld [vmem:[#allocation14 + $0x18] sm:$0xff]
    %v1357 = vld [vmem:[%s47] sm:$0x1]
    %v1359 = vperm.slane %v1357, 0
    %1361 = vmatpush.msra.mxu0 0.0
    %1362 = vmatpush.msra.mxu0 0.0
    %1363 = vmatpush.msra.mxu0 0.0
    %1364 = vmatpush.msra.mxu0 0.0
    %1365 = vmatpush.msra.mxu0 0.0
    %1366 = vmatpush.msra.mxu0 0.0
    %1367 = vmatpush.msra.mxu0 0.0
    %1368 = vmatpush.msra.mxu0 0.0
    %1369 = vmatpush.msra.mxu0 0.0
    %1370 = vmatpush.msra.mxu0 0.0
    %1371 = vmatpush.msra.mxu0 0.0
    %1372 = vmatpush.msra.mxu0 0.0
    %1373 = vmatpush.msra.mxu0 %v1356
    %1374 = vmatpush.msra.mxu0 %v1355
    %1375 = vmatpush.msra.mxu0 %v1354
    %1376 = vmatpush.msra.mxu0 %v1353
    %1377 = vmatmul.f32.gmra.mxu0 %v1325
    %v1378 = vpop.f32.mrf.mxu0
    %v1379 = vadd.f32 %v1359, %v1378
    %1380 = vmatmul.f32.gmra.mxu0 %v1328
    %v1381 = vpop.f32.mrf.mxu0
    %v1382 = vadd.f32 %v1359, %v1381
    %1383 = vdwg.mxu0
    %v1385 = vsel %vm487, %v1314, 0
    %v1388 = vsel %vm487, %v1348, 0
    %1390 = vmatpush.xpose.msra.mxu0 0.0
    %1391 = vmatpush.xpose.msra.mxu0 0.0
    %1392 = vmatpush.xpose.msra.mxu0 0.0
    %1393 = vmatpush.xpose.msra.mxu0 0.0
    %1394 = vmatpush.xpose.msra.mxu0 0.0
    %1395 = vmatpush.xpose.msra.mxu0 0.0
    %1396 = vmatpush.xpose.msra.mxu0 0.0
    %1397 = vmatpush.xpose.msra.mxu0 0.0
    %1398 = vmatpush.xpose.msra.mxu0 0.0
    %1399 = vmatpush.xpose.msra.mxu0 0.0
    %1400 = vmatpush.xpose.msra.mxu0 0.0
    %1401 = vmatpush.xpose.msra.mxu0 0.0
    %1402 = vmatpush.xpose.msra.mxu0 0.0
    %1403 = vmatpush.xpose.msra.mxu0 0.0
    %1404 = vmatpush.xpose.msra.mxu0 0.0
    %1405 = vmatpush.xpose.msra.mxu0 %v1388
    %1406 = vmatmul.f32.gmra.mxu0 %v1385
    %v1407 = vpop.f32.mrf.mxu0
    %v1408 = vadd.f32 0.0, %v1407
    %1409 = vdwg.mxu0
    %v1411 = vsel %vm487, %v1315, 0
    %v1414 = vsel %vm487, %v1351, 0
    %1416 = vmatpush.xpose.msra.mxu0 0.0
    %1417 = vmatpush.xpose.msra.mxu0 0.0
    %1418 = vmatpush.xpose.msra.mxu0 0.0
    %1419 = vmatpush.xpose.msra.mxu0 0.0
    %1420 = vmatpush.xpose.msra.mxu0 0.0
    %1421 = vmatpush.xpose.msra.mxu0 0.0
    %1422 = vmatpush.xpose.msra.mxu0 0.0
    %1423 = vmatpush.xpose.msra.mxu0 0.0
    %1424 = vmatpush.xpose.msra.mxu0 0.0
    %1425 = vmatpush.xpose.msra.mxu0 0.0
    %1426 = vmatpush.xpose.msra.mxu0 0.0
    %1427 = vmatpush.xpose.msra.mxu0 0.0
    %1428 = vmatpush.xpose.msra.mxu0 0.0
    %1429 = vmatpush.xpose.msra.mxu0 0.0
    %1430 = vmatpush.xpose.msra.mxu0 0.0
    %1431 = vmatpush.xpose.msra.mxu0 %v1414
    %1432 = vmatmul.f32.gmra.mxu0 %v1411
    %v1433 = vpop.f32.mrf.mxu0
    %v1434 = vadd.f32 0.0, %v1433
    %1435 = vdwg.mxu0
    %v1436 = vsel %vm295, 16843009, 0
    %v1437 = vsel %vm296, 16843009, 0
    %v1438 = vunpack.c.0.s8 %v1436
    %v1439 = vunpack.c.0.s8 %v1437
    %vm1440 = vcmp.ne.s32.totalorder %v1438, 0
    %vm1441 = vcmp.ne.s32.totalorder %v1439, 0
    %v1442 = vsel %vm1440, %v1408, -1e+09
    %v1443 = vsel %vm1441, %v1434, -1e+09
    %v1444 = vsel %vm487, %v1442, -inf
    %1445 = vmax.xlane.f32.xlu0 %v1444
    %v1446 = vpop.xlane.xlu0 %1445
    %v1447 = vsel %vm487, %v1443, -inf
    %1448 = vmax.xlane.f32.xlu0 %v1447
    %v1449 = vpop.xlane.xlu0 %1448
    %v1450 = vsub.f32 %v1442, %v1446
    %v1451 = vsub.f32 %v1443, %v1449
    %v1452 = vmul.f32 %v1450, 1.442695
    %v1453 = vpow.pop %v1452
    %v1454 = vmul.f32 %v1451, 1.442695
    %v1455 = vpow.pop %v1454
    %v1456 = vsel %vm487, %v1453, 0.0
    %1457 = vadd.xlane.f32.xlu0 %v1456
    %v1458 = vpop.xlane.xlu0 %1457
    %v1459 = vsel %vm487, %v1455, 0.0
    %1460 = vadd.xlane.f32.xlu0 %v1459
    %v1461 = vpop.xlane.xlu0 %1460
    %v1462 = vrcp.pop %v1458
    %v1463 = vmul.f32 %v1458, %v1462
    %v1464 = vsub.f32 1.0, %v1463
    %v1465 = vmul.f32 %v1462, %v1464
    %v1466 = vadd.f32 %v1462, %v1465
    %vm1467 = vweird.f32 %v1458
    %vm1468 = vweird.f32 %v1462
    %vm1469 = vmor %vm1467, %vm1468
    %v1470 = vsel %vm1469, %v1462, %v1466
    %v1471 = vand.u32 2147483647, %v1458
    %vm1472 = vcmp.eq.f32.partialorder %v1471, 8.507059e+37
    %v1473 = vand.u32 %v1458, 2147483648
    %v1474 = vor.u32 1.1754944e-38, %v1473
    %v1475 = vsel %vm1472, %v1474, %v1470
    %v1476 = vmul.f32 %v1453, %v1475
    %v1477 = vrcp.pop %v1461
    %v1478 = vmul.f32 %v1461, %v1477
    %v1479 = vsub.f32 1.0, %v1478
    %v1480 = vmul.f32 %v1477, %v1479
    %v1481 = vadd.f32 %v1477, %v1480
    %vm1482 = vweird.f32 %v1461
    %vm1483 = vweird.f32 %v1477
    %vm1484 = vmor %vm1482, %vm1483
    %v1485 = vsel %vm1484, %v1477, %v1481
    %v1486 = vand.u32 2147483647, %v1461
    %vm1487 = vcmp.eq.f32.partialorder %v1486, 8.507059e+37
    %v1488 = vand.u32 %v1461, 2147483648
    %v1489 = vor.u32 1.1754944e-38, %v1488
    %v1490 = vsel %vm1487, %v1489, %v1485
    %v1491 = vmul.f32 %v1455, %v1490
    %v1493 = vsel %vm487, %v1476, 0
    %1495 = vmatpush.msra.mxu0 0.0
    %1496 = vmatpush.msra.mxu0 0.0
    %1497 = vmatpush.msra.mxu0 0.0
    %1498 = vmatpush.msra.mxu0 0.0
    %1499 = vmatpush.msra.mxu0 0.0
    %1500 = vmatpush.msra.mxu0 0.0
    %1501 = vmatpush.msra.mxu0 0.0
    %1502 = vmatpush.msra.mxu0 0.0
    %1503 = vmatpush.msra.mxu0 0.0
    %1504 = vmatpush.msra.mxu0 0.0
    %1505 = vmatpush.msra.mxu0 0.0
    %1506 = vmatpush.msra.mxu0 0.0
    %1507 = vmatpush.msra.mxu0 0.0
    %1508 = vmatpush.msra.mxu0 0.0
    %1509 = vmatpush.msra.mxu0 0.0
    %1510 = vmatpush.msra.mxu0 %v1379
    %1511 = vmatmul.f32.gmra.mxu0 %v1493
    %v1512 = vpop.f32.mrf.mxu0
    %v1513 = vadd.f32 0.0, %v1512
    %1514 = vdwg.mxu0
    %v1516 = vsel %vm487, %v1491, 0
    %1518 = vmatpush.msra.mxu0 0.0
    %1519 = vmatpush.msra.mxu0 0.0
    %1520 = vmatpush.msra.mxu0 0.0
    %1521 = vmatpush.msra.mxu0 0.0
    %1522 = vmatpush.msra.mxu0 0.0
    %1523 = vmatpush.msra.mxu0 0.0
    %1524 = vmatpush.msra.mxu0 0.0
    %1525 = vmatpush.msra.mxu0 0.0
    %1526 = vmatpush.msra.mxu0 0.0
    %1527 = vmatpush.msra.mxu0 0.0
    %1528 = vmatpush.msra.mxu0 0.0
    %1529 = vmatpush.msra.mxu0 0.0
    %1530 = vmatpush.msra.mxu0 0.0
    %1531 = vmatpush.msra.mxu0 0.0
    %1532 = vmatpush.msra.mxu0 0.0
    %1533 = vmatpush.msra.mxu0 %v1382
    %1534 = vmatmul.f32.gmra.mxu0 %v1516
    %v1535 = vpop.f32.mrf.mxu0
    %v1536 = vadd.f32 0.0, %v1535
    %1537 = vdwg.mxu0
    %1538 = vrot.lane.b32.xlu0 %v1314, 120
    %v1539 = vpop.permute.xlu0 %1538
    %1540 = vrot.lane.b32.xlu0 %v1348, 120
    %v1541 = vpop.permute.xlu0 %1540
    %v1542 = vsel %vm487, %v1539, 0
    %v1544 = vsel %vm487, %v1541, 0
    %1546 = vmatpush.xpose.msra.mxu0 0.0
    %1547 = vmatpush.xpose.msra.mxu0 0.0
    %1548 = vmatpush.xpose.msra.mxu0 0.0
    %1549 = vmatpush.xpose.msra.mxu0 0.0
    %1550 = vmatpush.xpose.msra.mxu0 0.0
    %1551 = vmatpush.xpose.msra.mxu0 0.0
    %1552 = vmatpush.xpose.msra.mxu0 0.0
    %1553 = vmatpush.xpose.msra.mxu0 0.0
    %1554 = vmatpush.xpose.msra.mxu0 0.0
    %1555 = vmatpush.xpose.msra.mxu0 0.0
    %1556 = vmatpush.xpose.msra.mxu0 0.0
    %1557 = vmatpush.xpose.msra.mxu0 0.0
    %1558 = vmatpush.xpose.msra.mxu0 0.0
    %1559 = vmatpush.xpose.msra.mxu0 0.0
    %1560 = vmatpush.xpose.msra.mxu0 0.0
    %1561 = vmatpush.xpose.msra.mxu0 %v1544
    %1562 = vmatmul.f32.gmra.mxu0 %v1542
    %v1563 = vpop.f32.mrf.mxu0
    %v1564 = vadd.f32 0.0, %v1563
    %1565 = vdwg.mxu0
    %1566 = vrot.lane.b32.xlu0 %v1315, 120
    %v1567 = vpop.permute.xlu0 %1566
    %1568 = vrot.lane.b32.xlu0 %v1351, 120
    %v1569 = vpop.permute.xlu0 %1568
    %v1570 = vsel %vm487, %v1567, 0
    %v1572 = vsel %vm487, %v1569, 0
    %1574 = vmatpush.xpose.msra.mxu0 0.0
    %1575 = vmatpush.xpose.msra.mxu0 0.0
    %1576 = vmatpush.xpose.msra.mxu0 0.0
    %1577 = vmatpush.xpose.msra.mxu0 0.0
    %1578 = vmatpush.xpose.msra.mxu0 0.0
    %1579 = vmatpush.xpose.msra.mxu0 0.0
    %1580 = vmatpush.xpose.msra.mxu0 0.0
    %1581 = vmatpush.xpose.msra.mxu0 0.0
    %1582 = vmatpush.xpose.msra.mxu0 0.0
    %1583 = vmatpush.xpose.msra.mxu0 0.0
    %1584 = vmatpush.xpose.msra.mxu0 0.0
    %1585 = vmatpush.xpose.msra.mxu0 0.0
    %1586 = vmatpush.xpose.msra.mxu0 0.0
    %1587 = vmatpush.xpose.msra.mxu0 0.0
    %1588 = vmatpush.xpose.msra.mxu0 0.0
    %1589 = vmatpush.xpose.msra.mxu0 %v1572
    %1590 = vmatmul.f32.gmra.mxu0 %v1570
    %v1591 = vpop.f32.mrf.mxu0
    %v1592 = vadd.f32 0.0, %v1591
    %1593 = vdwg.mxu0
    %v1594 = vsel %vm1440, %v1564, -1e+09
    %v1595 = vsel %vm1441, %v1592, -1e+09
    %v1596 = vsel %vm487, %v1594, -inf
    %1597 = vmax.xlane.f32.xlu0 %v1596
    %v1598 = vpop.xlane.xlu0 %1597
    %v1599 = vsel %vm487, %v1595, -inf
    %1600 = vmax.xlane.f32.xlu0 %v1599
    %v1601 = vpop.xlane.xlu0 %1600
    %v1602 = vsub.f32 %v1594, %v1598
    %v1603 = vsub.f32 %v1595, %v1601
    %v1604 = vmul.f32 %v1602, 1.442695
    %v1605 = vpow.pop %v1604
    %v1606 = vmul.f32 %v1603, 1.442695
    %v1607 = vpow.pop %v1606
    %v1608 = vsel %vm487, %v1605, 0.0
    %1609 = vadd.xlane.f32.xlu0 %v1608
    %v1610 = vpop.xlane.xlu0 %1609
    %v1611 = vsel %vm487, %v1607, 0.0
    %1612 = vadd.xlane.f32.xlu0 %v1611
    %v1613 = vpop.xlane.xlu0 %1612
    %v1614 = vrcp.pop %v1610
    %v1615 = vmul.f32 %v1610, %v1614
    %v1616 = vsub.f32 1.0, %v1615
    %v1617 = vmul.f32 %v1614, %v1616
    %v1618 = vadd.f32 %v1614, %v1617
    %vm1619 = vweird.f32 %v1610
    %vm1620 = vweird.f32 %v1614
    %vm1621 = vmor %vm1619, %vm1620
    %v1622 = vsel %vm1621, %v1614, %v1618
    %v1623 = vand.u32 2147483647, %v1610
    %vm1624 = vcmp.eq.f32.partialorder %v1623, 8.507059e+37
    %v1625 = vand.u32 %v1610, 2147483648
    %v1626 = vor.u32 1.1754944e-38, %v1625
    %v1627 = vsel %vm1624, %v1626, %v1622
    %v1628 = vmul.f32 %v1605, %v1627
    %v1629 = vrcp.pop %v1613
    %v1630 = vmul.f32 %v1613, %v1629
    %v1631 = vsub.f32 1.0, %v1630
    %v1632 = vmul.f32 %v1629, %v1631
    %v1633 = vadd.f32 %v1629, %v1632
    %vm1634 = vweird.f32 %v1613
    %vm1635 = vweird.f32 %v1629
    %vm1636 = vmor %vm1634, %vm1635
    %v1637 = vsel %vm1636, %v1629, %v1633
    %v1638 = vand.u32 2147483647, %v1613
    %vm1639 = vcmp.eq.f32.partialorder %v1638, 8.507059e+37
    %v1640 = vand.u32 %v1613, 2147483648
    %v1641 = vor.u32 1.1754944e-38, %v1640
    %v1642 = vsel %vm1639, %v1641, %v1637
    %v1643 = vmul.f32 %v1607, %v1642
    %1645 = vrot.lane.b32.xlu0 %v1379, 120
    %v1646 = vpop.permute.xlu0 %1645
    %v1649 = vsel %vm487, %v1628, 0
    %1651 = vmatpush.msra.mxu0 0.0
    %1652 = vmatpush.msra.mxu0 0.0
    %1653 = vmatpush.msra.mxu0 0.0
    %1654 = vmatpush.msra.mxu0 0.0
    %1655 = vmatpush.msra.mxu0 0.0
    %1656 = vmatpush.msra.mxu0 0.0
    %1657 = vmatpush.msra.mxu0 0.0
    %1658 = vmatpush.msra.mxu0 0.0
    %1659 = vmatpush.msra.mxu0 0.0
    %1660 = vmatpush.msra.mxu0 0.0
    %1661 = vmatpush.msra.mxu0 0.0
    %1662 = vmatpush.msra.mxu0 0.0
    %1663 = vmatpush.msra.mxu0 0.0
    %1664 = vmatpush.msra.mxu0 0.0
    %1665 = vmatpush.msra.mxu0 0.0
    %1666 = vmatpush.msra.mxu0 %v1646
    %1667 = vmatmul.f32.gmra.mxu0 %v1649
    %v1668 = vpop.f32.mrf.mxu0
    %v1669 = vadd.f32 0.0, %v1668
    %1670 = vdwg.mxu0
    %1672 = vrot.lane.b32.xlu0 %v1382, 120
    %v1673 = vpop.permute.xlu0 %1672
    %v1676 = vsel %vm487, %v1643, 0
    %1678 = vmatpush.msra.mxu0 0.0
    %1679 = vmatpush.msra.mxu0 0.0
    %1680 = vmatpush.msra.mxu0 0.0
    %1681 = vmatpush.msra.mxu0 0.0
    %1682 = vmatpush.msra.mxu0 0.0
    %1683 = vmatpush.msra.mxu0 0.0
    %1684 = vmatpush.msra.mxu0 0.0
    %1685 = vmatpush.msra.mxu0 0.0
    %1686 = vmatpush.msra.mxu0 0.0
    %1687 = vmatpush.msra.mxu0 0.0
    %1688 = vmatpush.msra.mxu0 0.0
    %1689 = vmatpush.msra.mxu0 0.0
    %1690 = vmatpush.msra.mxu0 0.0
    %1691 = vmatpush.msra.mxu0 0.0
    %1692 = vmatpush.msra.mxu0 0.0
    %1693 = vmatpush.msra.mxu0 %v1673
    %1694 = vmatmul.f32.gmra.mxu0 %v1676
    %v1695 = vpop.f32.mrf.mxu0
    %v1696 = vadd.f32 0.0, %v1695
    %1697 = vdwg.mxu0
    %1698 = vrot.lane.b32.xlu0 %v1314, 112
    %v1699 = vpop.permute.xlu0 %1698
    %1700 = vrot.lane.b32.xlu0 %v1348, 112
    %v1701 = vpop.permute.xlu0 %1700
    %v1702 = vsel %vm487, %v1699, 0
    %v1704 = vsel %vm487, %v1701, 0
    %1706 = vmatpush.xpose.msra.mxu0 0.0
    %1707 = vmatpush.xpose.msra.mxu0 0.0
    %1708 = vmatpush.xpose.msra.mxu0 0.0
    %1709 = vmatpush.xpose.msra.mxu0 0.0
    %1710 = vmatpush.xpose.msra.mxu0 0.0
    %1711 = vmatpush.xpose.msra.mxu0 0.0
    %1712 = vmatpush.xpose.msra.mxu0 0.0
    %1713 = vmatpush.xpose.msra.mxu0 0.0
    %1714 = vmatpush.xpose.msra.mxu0 0.0
    %1715 = vmatpush.xpose.msra.mxu0 0.0
    %1716 = vmatpush.xpose.msra.mxu0 0.0
    %1717 = vmatpush.xpose.msra.mxu0 0.0
    %1718 = vmatpush.xpose.msra.mxu0 0.0
    %1719 = vmatpush.xpose.msra.mxu0 0.0
    %1720 = vmatpush.xpose.msra.mxu0 0.0
    %1721 = vmatpush.xpose.msra.mxu0 %v1704
    %1722 = vmatmul.f32.gmra.mxu0 %v1702
    %v1723 = vpop.f32.mrf.mxu0
    %v1724 = vadd.f32 0.0, %v1723
    %1725 = vdwg.mxu0
    %1726 = vrot.lane.b32.xlu0 %v1315, 112
    %v1727 = vpop.permute.xlu0 %1726
    %1728 = vrot.lane.b32.xlu0 %v1351, 112
    %v1729 = vpop.permute.xlu0 %1728
    %v1730 = vsel %vm487, %v1727, 0
    %v1732 = vsel %vm487, %v1729, 0
    %1734 = vmatpush.xpose.msra.mxu0 0.0
    %1735 = vmatpush.xpose.msra.mxu0 0.0
    %1736 = vmatpush.xpose.msra.mxu0 0.0
    %1737 = vmatpush.xpose.msra.mxu0 0.0
    %1738 = vmatpush.xpose.msra.mxu0 0.0
    %1739 = vmatpush.xpose.msra.mxu0 0.0
    %1740 = vmatpush.xpose.msra.mxu0 0.0
    %1741 = vmatpush.xpose.msra.mxu0 0.0
    %1742 = vmatpush.xpose.msra.mxu0 0.0
    %1743 = vmatpush.xpose.msra.mxu0 0.0
    %1744 = vmatpush.xpose.msra.mxu0 0.0
    %1745 = vmatpush.xpose.msra.mxu0 0.0
    %1746 = vmatpush.xpose.msra.mxu0 0.0
    %1747 = vmatpush.xpose.msra.mxu0 0.0
    %1748 = vmatpush.xpose.msra.mxu0 0.0
    %1749 = vmatpush.xpose.msra.mxu0 %v1732
    %1750 = vmatmul.f32.gmra.mxu0 %v1730
    %v1751 = vpop.f32.mrf.mxu0
    %v1752 = vadd.f32 0.0, %v1751
    %1753 = vdwg.mxu0
    %v1754 = vsel %vm1440, %v1724, -1e+09
    %v1755 = vsel %vm1441, %v1752, -1e+09
    %v1756 = vsel %vm487, %v1754, -inf
    %1757 = vmax.xlane.f32.xlu0 %v1756
    %v1758 = vpop.xlane.xlu0 %1757
    %v1759 = vsel %vm487, %v1755, -inf
    %1760 = vmax.xlane.f32.xlu0 %v1759
    %v1761 = vpop.xlane.xlu0 %1760
    %v1762 = vsub.f32 %v1754, %v1758
    %v1763 = vsub.f32 %v1755, %v1761
    %v1764 = vmul.f32 %v1762, 1.442695
    %v1765 = vpow.pop %v1764
    %v1766 = vmul.f32 %v1763, 1.442695
    %v1767 = vpow.pop %v1766
    %v1768 = vsel %vm487, %v1765, 0.0
    %1769 = vadd.xlane.f32.xlu0 %v1768
    %v1770 = vpop.xlane.xlu0 %1769
    %v1771 = vsel %vm487, %v1767, 0.0
    %1772 = vadd.xlane.f32.xlu0 %v1771
    %v1773 = vpop.xlane.xlu0 %1772
    %v1774 = vrcp.pop %v1770
    %v1775 = vmul.f32 %v1770, %v1774
    %v1776 = vsub.f32 1.0, %v1775
    %v1777 = vmul.f32 %v1774, %v1776
    %v1778 = vadd.f32 %v1774, %v1777
    %vm1779 = vweird.f32 %v1770
    %vm1780 = vweird.f32 %v1774
    %vm1781 = vmor %vm1779, %vm1780
    %v1782 = vsel %vm1781, %v1774, %v1778
    %v1783 = vand.u32 2147483647, %v1770
    %vm1784 = vcmp.eq.f32.partialorder %v1783, 8.507059e+37
    %v1785 = vand.u32 %v1770, 2147483648
    %v1786 = vor.u32 1.1754944e-38, %v1785
    %v1787 = vsel %vm1784, %v1786, %v1782
    %v1788 = vmul.f32 %v1765, %v1787
    %v1789 = vrcp.pop %v1773
    %v1790 = vmul.f32 %v1773, %v1789
    %v1791 = vsub.f32 1.0, %v1790
    %v1792 = vmul.f32 %v1789, %v1791
    %v1793 = vadd.f32 %v1789, %v1792
    %vm1794 = vweird.f32 %v1773
    %vm1795 = vweird.f32 %v1789
    %vm1796 = vmor %vm1794, %vm1795
    %v1797 = vsel %vm1796, %v1789, %v1793
    %v1798 = vand.u32 2147483647, %v1773
    %vm1799 = vcmp.eq.f32.partialorder %v1798, 8.507059e+37
    %v1800 = vand.u32 %v1773, 2147483648
    %v1801 = vor.u32 1.1754944e-38, %v1800
    %v1802 = vsel %vm1799, %v1801, %v1797
    %v1803 = vmul.f32 %v1767, %v1802
    %1804 = vrot.lane.b32.xlu0 %v1379, 112
    %v1805 = vpop.permute.xlu0 %1804
    %v1808 = vsel %vm487, %v1788, 0
    %1810 = vmatpush.msra.mxu0 0.0
    %1811 = vmatpush.msra.mxu0 0.0
    %1812 = vmatpush.msra.mxu0 0.0
    %1813 = vmatpush.msra.mxu0 0.0
    %1814 = vmatpush.msra.mxu0 0.0
    %1815 = vmatpush.msra.mxu0 0.0
    %1816 = vmatpush.msra.mxu0 0.0
    %1817 = vmatpush.msra.mxu0 0.0
    %1818 = vmatpush.msra.mxu0 0.0
    %1819 = vmatpush.msra.mxu0 0.0
    %1820 = vmatpush.msra.mxu0 0.0
    %1821 = vmatpush.msra.mxu0 0.0
    %1822 = vmatpush.msra.mxu0 0.0
    %1823 = vmatpush.msra.mxu0 0.0
    %1824 = vmatpush.msra.mxu0 0.0
    %1825 = vmatpush.msra.mxu0 %v1805
    %1826 = vmatmul.f32.gmra.mxu0 %v1808
    %v1827 = vpop.f32.mrf.mxu0
    %v1828 = vadd.f32 0.0, %v1827
    %1829 = vdwg.mxu0
    %1830 = vrot.lane.b32.xlu0 %v1382, 112
    %v1831 = vpop.permute.xlu0 %1830
    %v1834 = vsel %vm487, %v1803, 0
    %1836 = vmatpush.msra.mxu0 0.0
    %1837 = vmatpush.msra.mxu0 0.0
    %1838 = vmatpush.msra.mxu0 0.0
    %1839 = vmatpush.msra.mxu0 0.0
    %1840 = vmatpush.msra.mxu0 0.0
    %1841 = vmatpush.msra.mxu0 0.0
    %1842 = vmatpush.msra.mxu0 0.0
    %1843 = vmatpush.msra.mxu0 0.0
    %1844 = vmatpush.msra.mxu0 0.0
    %1845 = vmatpush.msra.mxu0 0.0
    %1846 = vmatpush.msra.mxu0 0.0
    %1847 = vmatpush.msra.mxu0 0.0
    %1848 = vmatpush.msra.mxu0 0.0
    %1849 = vmatpush.msra.mxu0 0.0
    %1850 = vmatpush.msra.mxu0 0.0
    %1851 = vmatpush.msra.mxu0 %v1831
    %1852 = vmatmul.f32.gmra.mxu0 %v1834
    %v1853 = vpop.f32.mrf.mxu0
    %v1854 = vadd.f32 0.0, %v1853
    %1855 = vdwg.mxu0
    %1856 = vrot.lane.b32.xlu0 %v1314, 104
    %v1857 = vpop.permute.xlu0 %1856
    %1858 = vrot.lane.b32.xlu0 %v1348, 104
    %v1859 = vpop.permute.xlu0 %1858
    %v1860 = vsel %vm487, %v1857, 0
    %v1862 = vsel %vm487, %v1859, 0
    %1864 = vmatpush.xpose.msra.mxu0 0.0
    %1865 = vmatpush.xpose.msra.mxu0 0.0
    %1866 = vmatpush.xpose.msra.mxu0 0.0
    %1867 = vmatpush.xpose.msra.mxu0 0.0
    %1868 = vmatpush.xpose.msra.mxu0 0.0
    %1869 = vmatpush.xpose.msra.mxu0 0.0
    %1870 = vmatpush.xpose.msra.mxu0 0.0
    %1871 = vmatpush.xpose.msra.mxu0 0.0
    %1872 = vmatpush.xpose.msra.mxu0 0.0
    %1873 = vmatpush.xpose.msra.mxu0 0.0
    %1874 = vmatpush.xpose.msra.mxu0 0.0
    %1875 = vmatpush.xpose.msra.mxu0 0.0
    %1876 = vmatpush.xpose.msra.mxu0 0.0
    %1877 = vmatpush.xpose.msra.mxu0 0.0
    %1878 = vmatpush.xpose.msra.mxu0 0.0
    %1879 = vmatpush.xpose.msra.mxu0 %v1862
    %1880 = vmatmul.f32.gmra.mxu0 %v1860
    %v1881 = vpop.f32.mrf.mxu0
    %v1882 = vadd.f32 0.0, %v1881
    %1883 = vdwg.mxu0
    %1884 = vrot.lane.b32.xlu0 %v1315, 104
    %v1885 = vpop.permute.xlu0 %1884
    %1886 = vrot.lane.b32.xlu0 %v1351, 104
    %v1887 = vpop.permute.xlu0 %1886
    %v1888 = vsel %vm487, %v1885, 0
    %v1890 = vsel %vm487, %v1887, 0
    %1892 = vmatpush.xpose.msra.mxu0 0.0
    %1893 = vmatpush.xpose.msra.mxu0 0.0
    %1894 = vmatpush.xpose.msra.mxu0 0.0
    %1895 = vmatpush.xpose.msra.mxu0 0.0
    %1896 = vmatpush.xpose.msra.mxu0 0.0
    %1897 = vmatpush.xpose.msra.mxu0 0.0
    %1898 = vmatpush.xpose.msra.mxu0 0.0
    %1899 = vmatpush.xpose.msra.mxu0 0.0
    %1900 = vmatpush.xpose.msra.mxu0 0.0
    %1901 = vmatpush.xpose.msra.mxu0 0.0
    %1902 = vmatpush.xpose.msra.mxu0 0.0
    %1903 = vmatpush.xpose.msra.mxu0 0.0
    %1904 = vmatpush.xpose.msra.mxu0 0.0
    %1905 = vmatpush.xpose.msra.mxu0 0.0
    %1906 = vmatpush.xpose.msra.mxu0 0.0
    %1907 = vmatpush.xpose.msra.mxu0 %v1890
    %1908 = vmatmul.f32.gmra.mxu0 %v1888
    %v1909 = vpop.f32.mrf.mxu0
    %v1910 = vadd.f32 0.0, %v1909
    %1911 = vdwg.mxu0
    %v1912 = vsel %vm1440, %v1882, -1e+09
    %v1913 = vsel %vm1441, %v1910, -1e+09
    %v1914 = vsel %vm487, %v1912, -inf
    %1915 = vmax.xlane.f32.xlu0 %v1914
    %v1916 = vpop.xlane.xlu0 %1915
    %v1917 = vsel %vm487, %v1913, -inf
    %1918 = vmax.xlane.f32.xlu0 %v1917
    %v1919 = vpop.xlane.xlu0 %1918
    %v1920 = vsub.f32 %v1912, %v1916
    %v1921 = vsub.f32 %v1913, %v1919
    %v1922 = vmul.f32 %v1920, 1.442695
    %v1923 = vpow.pop %v1922
    %v1924 = vmul.f32 %v1921, 1.442695
    %v1925 = vpow.pop %v1924
    %v1926 = vsel %vm487, %v1923, 0.0
    %1927 = vadd.xlane.f32.xlu0 %v1926
    %v1928 = vpop.xlane.xlu0 %1927
    %v1929 = vsel %vm487, %v1925, 0.0
    %1930 = vadd.xlane.f32.xlu0 %v1929
    %v1931 = vpop.xlane.xlu0 %1930
    %v1932 = vrcp.pop %v1928
    %v1933 = vmul.f32 %v1928, %v1932
    %v1934 = vsub.f32 1.0, %v1933
    %v1935 = vmul.f32 %v1932, %v1934
    %v1936 = vadd.f32 %v1932, %v1935
    %vm1937 = vweird.f32 %v1928
    %vm1938 = vweird.f32 %v1932
    %vm1939 = vmor %vm1937, %vm1938
    %v1940 = vsel %vm1939, %v1932, %v1936
    %v1941 = vand.u32 2147483647, %v1928
    %vm1942 = vcmp.eq.f32.partialorder %v1941, 8.507059e+37
    %v1943 = vand.u32 %v1928, 2147483648
    %v1944 = vor.u32 1.1754944e-38, %v1943
    %v1945 = vsel %vm1942, %v1944, %v1940
    %v1946 = vmul.f32 %v1923, %v1945
    %v1947 = vrcp.pop %v1931
    %v1948 = vmul.f32 %v1931, %v1947
    %v1949 = vsub.f32 1.0, %v1948
    %v1950 = vmul.f32 %v1947, %v1949
    %v1951 = vadd.f32 %v1947, %v1950
    %vm1952 = vweird.f32 %v1931
    %vm1953 = vweird.f32 %v1947
    %vm1954 = vmor %vm1952, %vm1953
    %v1955 = vsel %vm1954, %v1947, %v1951
    %v1956 = vand.u32 2147483647, %v1931
    %vm1957 = vcmp.eq.f32.partialorder %v1956, 8.507059e+37
    %v1958 = vand.u32 %v1931, 2147483648
    %v1959 = vor.u32 1.1754944e-38, %v1958
    %v1960 = vsel %vm1957, %v1959, %v1955
    %v1961 = vmul.f32 %v1925, %v1960
    %1962 = vrot.lane.b32.xlu0 %v1379, 104
    %v1963 = vpop.permute.xlu0 %1962
    %v1966 = vsel %vm487, %v1946, 0
    %1968 = vmatpush.msra.mxu0 0.0
    %1969 = vmatpush.msra.mxu0 0.0
    %1970 = vmatpush.msra.mxu0 0.0
    %1971 = vmatpush.msra.mxu0 0.0
    %1972 = vmatpush.msra.mxu0 0.0
    %1973 = vmatpush.msra.mxu0 0.0
    %1974 = vmatpush.msra.mxu0 0.0
    %1975 = vmatpush.msra.mxu0 0.0
    %1976 = vmatpush.msra.mxu0 0.0
    %1977 = vmatpush.msra.mxu0 0.0
    %1978 = vmatpush.msra.mxu0 0.0
    %1979 = vmatpush.msra.mxu0 0.0
    %1980 = vmatpush.msra.mxu0 0.0
    %1981 = vmatpush.msra.mxu0 0.0
    %1982 = vmatpush.msra.mxu0 0.0
    %1983 = vmatpush.msra.mxu0 %v1963
    %1984 = vmatmul.f32.gmra.mxu0 %v1966
    %v1985 = vpop.f32.mrf.mxu0
    %v1986 = vadd.f32 0.0, %v1985
    %1987 = vdwg.mxu0
    %1988 = vrot.lane.b32.xlu0 %v1382, 104
    %v1989 = vpop.permute.xlu0 %1988
    %v1992 = vsel %vm487, %v1961, 0
    %1994 = vmatpush.msra.mxu0 0.0
    %1995 = vmatpush.msra.mxu0 0.0
    %1996 = vmatpush.msra.mxu0 0.0
    %1997 = vmatpush.msra.mxu0 0.0
    %1998 = vmatpush.msra.mxu0 0.0
    %1999 = vmatpush.msra.mxu0 0.0
    %2000 = vmatpush.msra.mxu0 0.0
    %2001 = vmatpush.msra.mxu0 0.0
    %2002 = vmatpush.msra.mxu0 0.0
    %2003 = vmatpush.msra.mxu0 0.0
    %2004 = vmatpush.msra.mxu0 0.0
    %2005 = vmatpush.msra.mxu0 0.0
    %2006 = vmatpush.msra.mxu0 0.0
    %2007 = vmatpush.msra.mxu0 0.0
    %2008 = vmatpush.msra.mxu0 0.0
    %2009 = vmatpush.msra.mxu0 %v1989
    %2010 = vmatmul.f32.gmra.mxu0 %v1992
    %v2011 = vpop.f32.mrf.mxu0
    %v2012 = vadd.f32 0.0, %v2011
    %2013 = vdwg.mxu0
    %2016 = vrot.lane.b32.xlu0 %v1669, 8
    %v2017 = vpop.permute.xlu0 %2016
    %2018 = vrot.lane.b32.xlu0 %v1696, 8
    %v2019 = vpop.permute.xlu0 %2018
    %2024 = vrot.lane.b32.xlu0 %v1828, 16
    %v2025 = vpop.permute.xlu0 %2024
    %2026 = vrot.lane.b32.xlu0 %v1854, 16
    %v2027 = vpop.permute.xlu0 %2026
    %2032 = vrot.lane.b32.xlu0 %v1986, 24
    %v2033 = vpop.permute.xlu0 %2032
    %2034 = vrot.lane.b32.xlu0 %v2012, 24
    %v2035 = vpop.permute.xlu0 %2034
    %v2038 = vsel %vm487, %v1513, %v2017
    %v2039 = vsel %vm487, %v1536, %v2019
    %v2040 = vsel %vm1144, %v2038, %v2025
    %v2041 = vsel %vm1144, %v2039, %v2027
    %v2042 = vsel %vm1147, %v2040, %v2033
    %v2043 = vsel %vm1147, %v2041, %v2035
    %v2044 = vld [vmem:[#allocation16] sm:$0xff]
    %v2045 = vld [vmem:[#allocation16 + $0x8] sm:$0xff]
    %v2046 = vld [vmem:[#allocation16 + $0x10] sm:$0xff]
    %v2047 = vld [vmem:[#allocation16 + $0x18] sm:$0xff]
    %v2048 = vld [vmem:[%s51] sm:$0x1]
    %v2050 = vperm.slane %v2048, 0
    %v2053 = vsel %vm299, %v2042, 0
    %v2056 = vsel %vm299, %v2043, 0
    %2058 = vmatpush.msra.mxu0 0.0
    %2059 = vmatpush.msra.mxu0 0.0
    %2060 = vmatpush.msra.mxu0 0.0
    %2061 = vmatpush.msra.mxu0 0.0
    %2062 = vmatpush.msra.mxu0 0.0
    %2063 = vmatpush.msra.mxu0 0.0
    %2064 = vmatpush.msra.mxu0 0.0
    %2065 = vmatpush.msra.mxu0 0.0
    %2066 = vmatpush.msra.mxu0 0.0
    %2067 = vmatpush.msra.mxu0 0.0
    %2068 = vmatpush.msra.mxu0 0.0
    %2069 = vmatpush.msra.mxu0 0.0
    %2070 = vmatpush.msra.mxu0 %v2047
    %2071 = vmatpush.msra.mxu0 %v2046
    %2072 = vmatpush.msra.mxu0 %v2045
    %2073 = vmatpush.msra.mxu0 %v2044
    %2074 = vmatmul.f32.gmra.mxu0 %v2053
    %v2075 = vpop.f32.mrf.mxu0
    %v2076 = vadd.f32 %v2050, %v2075
    %2077 = vmatmul.f32.gmra.mxu0 %v2056
    %v2078 = vpop.f32.mrf.mxu0
    %v2079 = vadd.f32 %v2050, %v2078
    %2080 = vdwg.mxu0
    %v2081 = vadd.f32 %v1187, %v2076
    %v2082 = vadd.f32 %v1188, %v2079
    %v2083 = vld [vmem:[%s17] sm:$0x1]
    %v2084 = vld [vmem:[%s19] sm:$0x1]
    %v2085 = vsel %vm299, %v2081, 0.0
    %2086 = vadd.xlane.f32.xlu0 %v2085
    %v2087 = vpop.xlane.xlu0 %2086
    %v2088 = vsel %vm299, %v2082, 0.0
    %2089 = vadd.xlane.f32.xlu0 %v2088
    %v2090 = vpop.xlane.xlu0 %2089
    %v2091 = vmul.f32 %v2087, 0.03125
    %v2092 = vmul.f32 %v2090, 0.03125
    %v2093 = vsub.f32 %v2081, %v2091
    %v2094 = vsub.f32 %v2082, %v2092
    %v2095 = vmul.f32 %v2093, %v2093
    %v2096 = vmul.f32 %v2094, %v2094
    %v2097 = vsel %vm299, %v2095, 0.0
    %2098 = vadd.xlane.f32.xlu0 %v2097
    %v2099 = vpop.xlane.xlu0 %2098
    %v2100 = vsel %vm299, %v2096, 0.0
    %2101 = vadd.xlane.f32.xlu0 %v2100
    %v2102 = vpop.xlane.xlu0 %2101
    %v2103 = vmul.f32 %v2099, 0.032258064
    %v2104 = vmul.f32 %v2102, 0.032258064
    %v2105 = vrsqrt.pop %v2103
    %v2106 = vmul.f32 %v2105, %v2103
    %v2107 = vmul.f32 %v2106, %v2105
    %v2108 = vmul.f32 0.5, %v2107
    %v2109 = vsub.f32 1.5, %v2108
    %v2110 = vmul.f32 %v2105, %v2109
    %v2111 = vmul.f32 %v2103, %v2110
    %vm2112 = vcmp.eq.f32.partialorder %v2103, inf
    %v2113 = vsel %vm2112, %v2103, %v2111
    %vm2114 = vcmp.eq.f32.partialorder %v2103, 0.0
    %v2115 = vand.u32 %v2103, 2147483648
    %v2116 = vsel %vm2114, %v2115, %v2113
    %v2117 = vrsqrt.pop %v2104
    %v2118 = vmul.f32 %v2117, %v2104
    %v2119 = vmul.f32 %v2118, %v2117
    %v2120 = vmul.f32 0.5, %v2119
    %v2121 = vsub.f32 1.5, %v2120
    %v2122 = vmul.f32 %v2117, %v2121
    %v2123 = vmul.f32 %v2104, %v2122
    %vm2124 = vcmp.eq.f32.partialorder %v2104, inf
    %v2125 = vsel %vm2124, %v2104, %v2123
    %vm2126 = vcmp.eq.f32.partialorder %v2104, 0.0
    %v2127 = vand.u32 %v2104, 2147483648
    %v2128 = vsel %vm2126, %v2127, %v2125
    %v2130 = vperm.slane %v2083, 0
    %v2132 = vmul.f32 %v2130, %v2093
    %v2133 = vmul.f32 %v2130, %v2094
    %v2134 = vadd.f32 %v2116, 1e-06
    %v2135 = vadd.f32 %v2128, 1e-06
    %v2136 = vrcp.pop %v2134
    %v2137 = vmul.f32 %v2134, %v2136
    %v2138 = vsub.f32 1.0, %v2137
    %v2139 = vmul.f32 %v2136, %v2138
    %v2140 = vadd.f32 %v2136, %v2139
    %vm2141 = vweird.f32 %v2134
    %vm2142 = vweird.f32 %v2136
    %vm2143 = vmor %vm2141, %vm2142
    %v2144 = vsel %vm2143, %v2136, %v2140
    %v2145 = vand.u32 2147483647, %v2134
    %vm2146 = vcmp.eq.f32.partialorder %v2145, 8.507059e+37
    %v2147 = vand.u32 %v2134, 2147483648
    %v2148 = vor.u32 1.1754944e-38, %v2147
    %v2149 = vsel %vm2146, %v2148, %v2144
    %v2150 = vmul.f32 %v2132, %v2149
    %v2151 = vrcp.pop %v2135
    %v2152 = vmul.f32 %v2135, %v2151
    %v2153 = vsub.f32 1.0, %v2152
    %v2154 = vmul.f32 %v2151, %v2153
    %v2155 = vadd.f32 %v2151, %v2154
    %vm2156 = vweird.f32 %v2135
    %vm2157 = vweird.f32 %v2151
    %vm2158 = vmor %vm2156, %vm2157
    %v2159 = vsel %vm2158, %v2151, %v2155
    %v2160 = vand.u32 2147483647, %v2135
    %vm2161 = vcmp.eq.f32.partialorder %v2160, 8.507059e+37
    %v2162 = vand.u32 %v2135, 2147483648
    %v2163 = vor.u32 1.1754944e-38, %v2162
    %v2164 = vsel %vm2161, %v2163, %v2159
    %v2165 = vmul.f32 %v2133, %v2164
    %v2167 = vperm.slane %v2084, 0
    %v2169 = vadd.f32 %v2150, %v2167
    %v2170 = vadd.f32 %v2165, %v2167
    %v2171 = vld [vmem:[#allocation17] sm:$0xff]
    %v2172 = vld [vmem:[#allocation17 + $0x8] sm:$0xff]
    %v2173 = vld [vmem:[#allocation17 + $0x10] sm:$0xff]
    %v2174 = vld [vmem:[#allocation17 + $0x18] sm:$0xff]
    %v2175 = vld [vmem:[%s55] sm:$0x1]
    %v2177 = vperm.slane %v2175, 0
    %v2180 = vsel %vm299, %v2169, 0
    %v2183 = vsel %vm299, %v2170, 0
    %2185 = vmatpush.msra.mxu0 0.0
    %2186 = vmatpush.msra.mxu0 0.0
    %2187 = vmatpush.msra.mxu0 0.0
    %2188 = vmatpush.msra.mxu0 0.0
    %2189 = vmatpush.msra.mxu0 0.0
    %2190 = vmatpush.msra.mxu0 0.0
    %2191 = vmatpush.msra.mxu0 0.0
    %2192 = vmatpush.msra.mxu0 0.0
    %2193 = vmatpush.msra.mxu0 0.0
    %2194 = vmatpush.msra.mxu0 0.0
    %2195 = vmatpush.msra.mxu0 0.0
    %2196 = vmatpush.msra.mxu0 0.0
    %2197 = vmatpush.msra.mxu0 %v2174
    %2198 = vmatpush.msra.mxu0 %v2173
    %2199 = vmatpush.msra.mxu0 %v2172
    %2200 = vmatpush.msra.mxu0 %v2171
    %2201 = vmatmul.f32.gmra.mxu0 %v2180
    %v2202 = vpop.f32.mrf.mxu0
    %v2203 = vadd.f32 %v2177, %v2202
    %2204 = vmatmul.f32.gmra.mxu0 %v2183
    %v2205 = vpop.f32.mrf.mxu0
    %v2206 = vadd.f32 %v2177, %v2205
    %2207 = vdwg.mxu0
    %v2208 = vmax.f32 %v2203, 0.0
    %v2209 = vmax.f32 %v2206, 0.0
    %v2210 = vld [vmem:[%s57] sm:$0xff]
    %v2211 = vld [vmem:[%s57 + $0x8] sm:$0xff]
    %v2212 = vld [vmem:[%s57 + $0x10] sm:$0xff]
    %v2213 = vld [vmem:[%s57 + $0x18] sm:$0xff]
    %v2214 = vld [vmem:[%s57 + $0x20] sm:$0xff]
    %v2215 = vld [vmem:[%s57 + $0x28] sm:$0xff]
    %v2216 = vld [vmem:[%s57 + $0x30] sm:$0xff]
    %v2217 = vld [vmem:[%s57 + $0x38] sm:$0xff]
    %v2218 = vld [vmem:[%s59] sm:$0x1]
    %v2220 = vperm.slane %v2218, 0
    %vm2222 = vcmask 523264
    %v2224 = vsel %vm2222, %v2208, 0
    %v2227 = vsel %vm2222, %v2209, 0
    %2229 = vmatpush.msra.mxu0 0.0
    %2230 = vmatpush.msra.mxu0 0.0
    %2231 = vmatpush.msra.mxu0 0.0
    %2232 = vmatpush.msra.mxu0 0.0
    %2233 = vmatpush.msra.mxu0 0.0
    %2234 = vmatpush.msra.mxu0 0.0
    %2235 = vmatpush.msra.mxu0 0.0
    %2236 = vmatpush.msra.mxu0 0.0
    %2237 = vmatpush.msra.mxu0 %v2217
    %2238 = vmatpush.msra.mxu0 %v2216
    %2239 = vmatpush.msra.mxu0 %v2215
    %2240 = vmatpush.msra.mxu0 %v2214
    %2241 = vmatpush.msra.mxu0 %v2213
    %2242 = vmatpush.msra.mxu0 %v2212
    %2243 = vmatpush.msra.mxu0 %v2211
    %2244 = vmatpush.msra.mxu0 %v2210
    %2245 = vmatmul.f32.gmra.mxu0 %v2224
    %v2246 = vpop.f32.mrf.mxu0
    %v2247 = vadd.f32 %v2220, %v2246
    %2248 = vmatmul.f32.gmra.mxu0 %v2227
    %v2249 = vpop.f32.mrf.mxu0
    %v2250 = vadd.f32 %v2220, %v2249
    %2251 = vdwg.mxu0
    %v2252 = vadd.f32 %v2081, %v2247
    %v2253 = vadd.f32 %v2082, %v2250
    %2254 = vst.msk [vmem:[#allocation19] sm:$0xff] %vm299, %v2252
    %2255 = vst.msk [vmem:[#allocation19 + $0x8] sm:$0xff] %vm299, %v2253
    // Predicated region
    $region162: #{tpu_custom_call.1} parent=1 // pred_check
      _
    $region163: #{tpu_custom_call.1} parent=1 // pred_check_branch
      %2257 = sbr.rel (0) target = $region165
    $region164: #{tpu_custom_call.1} parent=1 // pred_region
      %2259 = vsyncadd [#allocation4], 0
      %s2260 = sshll.u32 [#allocation19], 4
      %s2261 = int_to_ptr.vmem [resolvable:$true] %s2260
      %s2262 = sshll.u32 %s61, 4
      %s2263 = int_to_ptr.hbm [resolvable:$true] %s2262
      %2268 = dma.vmem_to_hbm [thread:$0]  %s2261, 256, %s2263, [#allocation4], 128, 128, 8
    $region165: #{tpu_custom_call.1} parent=1 // pred_fallthru
      _
    // Predicated region
    $region166: #{tpu_custom_call.1} parent=1 // pred_check
      _
    $region167: #{tpu_custom_call.1} parent=1 // pred_check_branch
      %2270 = sbr.rel (0) target = $region169
    $region168: #{tpu_custom_call.1} parent=1 // pred_region
      %2272 = dma.done [#allocation4], 256
    $region169: #{tpu_custom_call.1} parent=1 // pred_fallthru
      _
    %2273 = vsyncpa [#allocation3], 1
    %2274 = vsyncpa [#allocation6], 1
    %2275 = vsyncpa [#allocation9], 1
    %2276 = vsyncpa [#allocation12], 1
    %2277 = vsyncpa [#allocation15], 1
    %2278 = vsyncpa [#allocation18], 1
    %2279 = vsyncpa [#allocation4], 1

// kernel: tpu_custom_call.1
$region0: #{tpu_custom_call.1}
  #allocation0 [shape = 'u32[]', space=smem, size = 0x4, offset = 0x4, fixed_abs, tag = 'smem constant byte address 0x4 - core index']
  #allocation1 [shape = 'u32[72,128]{1,0:T(1,128)}', space=vmem, size = 0x9000, scoped, tag = 'internal scratch']
  %s0 = inlined_call_operand.smem [shape: u32[31], index: -1, kind: input, shape index: {}]
  %s1 = sld [smem:[%s0]]
  %s2 = scalar_lea.smem %s0, 1
  %s3 = sld [smem:[%s2]]
  %s4 = scalar_lea.smem %s0, 2
  %s5 = sld [smem:[%s4]]
  %s6 = scalar_lea.smem %s0, 3
  %s7 = sld [smem:[%s6]]
  %s8 = scalar_lea.smem %s0, 4
  %s9 = sld [smem:[%s8]]
  %s10 = scalar_lea.smem %s0, 5
  %s11 = sld [smem:[%s10]]
  %s12 = scalar_lea.smem %s0, 6
  %s13 = sld [smem:[%s12]]
  %s14 = scalar_lea.smem %s0, 7
  %s15 = sld [smem:[%s14]]
  %s16 = scalar_lea.smem %s0, 8
  %s17 = sld [smem:[%s16]]
  %s18 = scalar_lea.smem %s0, 9
  %s19 = sld [smem:[%s18]]
  %s20 = scalar_lea.smem %s0, 10
  %s21 = sld [smem:[%s20]]
  %s22 = scalar_lea.smem %s0, 11
  %s23 = sld [smem:[%s22]]
  %s24 = scalar_lea.smem %s0, 12
  %s25 = sld [smem:[%s24]]
  %s26 = scalar_lea.smem %s0, 13
  %s27 = sld [smem:[%s26]]
  %s28 = scalar_lea.smem %s0, 14
  %s29 = sld [smem:[%s28]]
  %s30 = scalar_lea.smem %s0, 15
  %s31 = sld [smem:[%s30]]
  %s32 = scalar_lea.smem %s0, 16
  %s33 = sld [smem:[%s32]]
  %s34 = scalar_lea.smem %s0, 17
  %s35 = sld [smem:[%s34]]
  %s36 = scalar_lea.smem %s0, 18
  %s37 = sld [smem:[%s36]]
  %s38 = scalar_lea.smem %s0, 19
  %s39 = sld [smem:[%s38]]
  %s40 = scalar_lea.smem %s0, 20
  %s41 = sld [smem:[%s40]]
  %s42 = scalar_lea.smem %s0, 21
  %s43 = sld [smem:[%s42]]
  %s44 = scalar_lea.smem %s0, 22
  %s45 = sld [smem:[%s44]]
  %s46 = scalar_lea.smem %s0, 23
  %s47 = sld [smem:[%s46]]
  %s48 = scalar_lea.smem %s0, 24
  %s49 = sld [smem:[%s48]]
  %s50 = scalar_lea.smem %s0, 25
  %s51 = sld [smem:[%s50]]
  %s52 = scalar_lea.smem %s0, 26
  %s53 = sld [smem:[%s52]]
  %s54 = scalar_lea.smem %s0, 27
  %s55 = sld [smem:[%s54]]
  %s56 = scalar_lea.smem %s0, 28
  %s57 = sld [smem:[%s56]]
  %s58 = scalar_lea.smem %s0, 29
  %s59 = sld [smem:[%s58]]
  %s60 = scalar_lea.smem %s0, 30
  %s61 = sld [smem:[%s60]]
  %s62 = sld [smem:[#allocation0]]
  $region170: #{tpu_custom_call.1} parent=0
    _
  %s64 = ssub.s32 1, %s62
  %s65 = scalar_select 0, %s64, %s62
  $region1: #{tpu_custom_call.1} parent=0
    #allocation2 [shape = 'u8[8192]{0}', space=vmem, size = 0x2000, scoped, tag = 'input window, operand 0, single buffered']
    #allocation3 [shape = 's32[1]{0}', space=sflag, size = 0x4, scoped, tag = 'scoped memory for tpu_custom_call.1']
    #allocation4 [shape = 's32[1]{0}', space=sflag, size = 0x4, scoped, tag = 'scoped memory for tpu_custom_call.1']
    #allocation5 [shape = 'u8[8192]{0}', space=vmem, size = 0x2000, scoped, tag = 'input window, operand 1, single buffered']
    #allocation6 [shape = 's32[1]{0}', space=sflag, size = 0x4, scoped, tag = 'scoped memory for tpu_custom_call.1']
    #allocation7 [shape = 'u8[2048]{0}', space=vmem, size = 0x800, scoped, tag = 'input window, operand 2, single buffered']
    #allocation8 [shape = 'u8[2048]{0}', space=vmem, size = 0x800, scoped, tag = 'input window, operand 3, single buffered']
    #allocation9 [shape = 's32[1]{0}', space=sflag, size = 0x4, scoped, tag = 'scoped memory for tpu_custom_call.1']
    #allocation10 [shape = 'u8[16384]{0}', space=vmem, size = 0x4000, scoped, tag = 'input window, operand 16, single buffered']
    #allocation11 [shape = 'u8[16384]{0}', space=vmem, size = 0x4000, scoped, tag = 'input window, operand 18, single buffered']
    #allocation12 [shape = 's32[1]{0}', space=sflag, size = 0x4, scoped, tag = 'scoped memory for tpu_custom_call.1']
    #allocation13 [shape = 'u8[16384]{0}', space=vmem, size = 0x4000, scoped, tag = 'input window, operand 20, single buffered']
    #allocation14 [shape = 'u8[16384]{0}', space=vmem, size = 0x4000, scoped, tag = 'input window, operand 22, single buffered']
    #allocation15 [shape = 's32[1]{0}', space=sflag, size = 0x4, scoped, tag = 'scoped memory for tpu_custom_call.1']
    #allocation16 [shape = 'u8[16384]{0}', space=vmem, size = 0x4000, scoped, tag = 'input window, operand 24, single buffered']
    #allocation17 [shape = 'u8[16384]{0}', space=vmem, size = 0x4000, scoped, tag = 'input window, operand 26, single buffered']
    #allocation18 [shape = 's32[1]{0}', space=sflag, size = 0x4, scoped, tag = 'scoped memory for tpu_custom_call.1']
    #allocation19 [shape = 'u8[8192]{0}', space=vmem, size = 0x2000, scoped, tag = 'output window, operand 0, single buffered']
    %66 = vsyncpa [#allocation3], 0
    %67 = vsyncpa [#allocation6], 0
    %68 = vsyncpa [#allocation9], 0
    %69 = vsyncpa [#allocation12], 0
    %70 = vsyncpa [#allocation15], 0
    %71 = vsyncpa [#allocation18], 0
    %72 = vsyncpa [#allocation4], 0
    // Predicated region
    $region2: #{tpu_custom_call.1} parent=1 // pred_check
      _
    $region3: #{tpu_custom_call.1} parent=1 // pred_check_branch
      %74 = sbr.rel (0) target = $region5
    $region4: #{tpu_custom_call.1} parent=1 // pred_region
      %76 = vsyncadd [#allocation3], 0
      %s77 = sshll.u32 %s1, 4
      %s78 = int_to_ptr.hbm [resolvable:$true] %s77
      %s79 = sshll.u32 [#allocation2], 4
      %s80 = int_to_ptr.vmem [resolvable:$true] %s79
      %85 = dma.hbm_to_vmem [thread:$0]  %s78, 256, %s80, [#allocation3], 128, 128, 8
    $region5: #{tpu_custom_call.1} parent=1 // pred_fallthru
      _
    // Predicated region
    $region6: #{tpu_custom_call.1} parent=1 // pred_check
      _
    $region7: #{tpu_custom_call.1} parent=1 // pred_check_branch
      %87 = sbr.rel (0) target = $region9
    $region8: #{tpu_custom_call.1} parent=1 // pred_region
      %89 = vsyncadd [#allocation6], 0
      %s90 = sshll.u32 %s3, 4
      %s91 = int_to_ptr.hbm [resolvable:$true] %s90
      %s92 = sshll.u32 [#allocation5], 4
      %s93 = int_to_ptr.vmem [resolvable:$true] %s92
      %98 = dma.hbm_to_vmem [thread:$0]  %s91, 256, %s93, [#allocation6], 128, 128, 8
    $region9: #{tpu_custom_call.1} parent=1 // pred_fallthru
      _
    // Predicated region
    $region10: #{tpu_custom_call.1} parent=1 // pred_check
      _
    $region11: #{tpu_custom_call.1} parent=1 // pred_check_branch
      %100 = sbr.rel (0) target = $region13
    $region12: #{tpu_custom_call.1} parent=1 // pred_region
      %102 = vsyncadd [#allocation6], 0
      %s103 = sshll.u32 %s5, 4
      %s104 = int_to_ptr.hbm [resolvable:$true] %s103
      %s105 = sshll.u32 [#allocation7], 4
      %s106 = int_to_ptr.vmem [resolvable:$true] %s105
      %111 = dma.hbm_to_vmem [thread:$0]  %s104, 64, %s106, [#allocation6], 32, 32, 2
    $region13: #{tpu_custom_call.1} parent=1 // pred_fallthru
      _
    // Predicated region
    $region14: #{tpu_custom_call.1} parent=1 // pred_check
      _
    $region15: #{tpu_custom_call.1} parent=1 // pred_check_branch
      %113 = sbr.rel (0) target = $region17
    $region16: #{tpu_custom_call.1} parent=1 // pred_region
      %115 = vsyncadd [#allocation9], 0
      %s116 = sshll.u32 %s7, 4
      %s117 = int_to_ptr.hbm [resolvable:$true] %s116
      %s118 = sshll.u32 [#allocation8], 4
      %s119 = int_to_ptr.vmem [resolvable:$true] %s118
      %124 = dma.hbm_to_vmem [thread:$0]  %s117, 64, %s119, [#allocation9], 32, 32, 2
    $region17: #{tpu_custom_call.1} parent=1 // pred_fallthru
      _
    // Predicated region
    $region18: #{tpu_custom_call.1} parent=1 // pred_check
      _
    $region19: #{tpu_custom_call.1} parent=1 // pred_check_branch
      %126 = sbr.rel (0) target = $region21
    $region20: #{tpu_custom_call.1} parent=1 // pred_region
      _
    $region21: #{tpu_custom_call.1} parent=1 // pred_fallthru
      _
    // Predicated region
    $region22: #{tpu_custom_call.1} parent=1 // pred_check
      _
    $region23: #{tpu_custom_call.1} parent=1 // pred_check_branch
      %128 = sbr.rel (0) target = $region25
    $region24: #{tpu_custom_call.1} parent=1 // pred_region
      _
    $region25: #{tpu_custom_call.1} parent=1 // pred_fallthru
      _
    // Predicated region
    $region26: #{tpu_custom_call.1} parent=1 // pred_check
      _
    $region27: #{tpu_custom_call.1} parent=1 // pred_check_branch
      %130 = sbr.rel (0) target = $region29
    $region28: #{tpu_custom_call.1} parent=1 // pred_region
      _
    $region29: #{tpu_custom_call.1} parent=1 // pred_fallthru
      _
    // Predicated region
    $region30: #{tpu_custom_call.1} parent=1 // pred_check
      _
    $region31: #{tpu_custom_call.1} parent=1 // pred_check_branch
      %132 = sbr.rel (0) target = $region33
    $region32: #{tpu_custom_call.1} parent=1 // pred_region
      _
    $region33: #{tpu_custom_call.1} parent=1 // pred_fallthru
      _
    // Predicated region
    $region34: #{tpu_custom_call.1} parent=1 // pred_check
      _
    $region35: #{tpu_custom_call.1} parent=1 // pred_check_branch
      %134 = sbr.rel (0) target = $region37
    $region36: #{tpu_custom_call.1} parent=1 // pred_region
      _
    $region37: #{tpu_custom_call.1} parent=1 // pred_fallthru
      _
    // Predicated region
    $region38: #{tpu_custom_call.1} parent=1 // pred_check
      _
    $region39: #{tpu_custom_call.1} parent=1 // pred_check_branch
      %136 = sbr.rel (0) target = $region41
    $region40: #{tpu_custom_call.1} parent=1 // pred_region
      _
    $region41: #{tpu_custom_call.1} parent=1 // pred_fallthru
      _
    // Predicated region
    $region42: #{tpu_custom_call.1} parent=1 // pred_check
      _
    $region43: #{tpu_custom_call.1} parent=1 // pred_check_branch
      %138 = sbr.rel (0) target = $region45
    $region44: #{tpu_custom_call.1} parent=1 // pred_region
      _
    $region45: #{tpu_custom_call.1} parent=1 // pred_fallthru
      _
    // Predicated region
    $region46: #{tpu_custom_call.1} parent=1 // pred_check
      _
    $region47: #{tpu_custom_call.1} parent=1 // pred_check_branch
      %140 = sbr.rel (0) target = $region49
    $region48: #{tpu_custom_call.1} parent=1 // pred_region
      _
    $region49: #{tpu_custom_call.1} parent=1 // pred_fallthru
      _
    // Predicated region
    $region50: #{tpu_custom_call.1} parent=1 // pred_check
      _
    $region51: #{tpu_custom_call.1} parent=1 // pred_check_branch
      %142 = sbr.rel (0) target = $region53
    $region52: #{tpu_custom_call.1} parent=1 // pred_region
      _
    $region53: #{tpu_custom_call.1} parent=1 // pred_fallthru
      _
    // Predicated region
    $region54: #{tpu_custom_call.1} parent=1 // pred_check
      _
    $region55: #{tpu_custom_call.1} parent=1 // pred_check_branch
      %144 = sbr.rel (0) target = $region57
    $region56: #{tpu_custom_call.1} parent=1 // pred_region
      _
    $region57: #{tpu_custom_call.1} parent=1 // pred_fallthru
      _
    // Predicated region
    $region58: #{tpu_custom_call.1} parent=1 // pred_check
      _
    $region59: #{tpu_custom_call.1} parent=1 // pred_check_branch
      %146 = sbr.rel (0) target = $region61
    $region60: #{tpu_custom_call.1} parent=1 // pred_region
      _
    $region61: #{tpu_custom_call.1} parent=1 // pred_fallthru
      _
    // Predicated region
    $region62: #{tpu_custom_call.1} parent=1 // pred_check
      _
    $region63: #{tpu_custom_call.1} parent=1 // pred_check_branch
      %148 = sbr.rel (0) target = $region65
    $region64: #{tpu_custom_call.1} parent=1 // pred_region
      _
    $region65: #{tpu_custom_call.1} parent=1 // pred_fallthru
      _
    // Predicated region
    $region66: #{tpu_custom_call.1} parent=1 // pred_check
      _
    $region67: #{tpu_custom_call.1} parent=1 // pred_check_branch
      %150 = sbr.rel (0) target = $region69
    $region68: #{tpu_custom_call.1} parent=1 // pred_region
      %152 = vsyncadd [#allocation9], 0
      %s153 = sshll.u32 %s33, 4
      %s154 = int_to_ptr.hbm [resolvable:$true] %s153
      %s155 = sshll.u32 [#allocation10], 4
      %s156 = int_to_ptr.vmem [resolvable:$true] %s155
      %161 = dma.hbm_to_vmem [thread:$0]  %s154, 512, %s156, [#allocation9], 128, 128, 8
    $region69: #{tpu_custom_call.1} parent=1 // pred_fallthru
      _
    // Predicated region
    $region70: #{tpu_custom_call.1} parent=1 // pred_check
      _
    $region71: #{tpu_custom_call.1} parent=1 // pred_check_branch
      %163 = sbr.rel (0) target = $region73
    $region72: #{tpu_custom_call.1} parent=1 // pred_region
      _
    $region73: #{tpu_custom_call.1} parent=1 // pred_fallthru
      _
    // Predicated region
    $region74: #{tpu_custom_call.1} parent=1 // pred_check
      _
    $region75: #{tpu_custom_call.1} parent=1 // pred_check_branch
      %165 = sbr.rel (0) target = $region77
    $region76: #{tpu_custom_call.1} parent=1 // pred_region
      %167 = vsyncadd [#allocation12], 0
      %s168 = sshll.u32 %s37, 4
      %s169 = int_to_ptr.hbm [resolvable:$true] %s168
      %s170 = sshll.u32 [#allocation11], 4
      %s171 = int_to_ptr.vmem [resolvable:$true] %s170
      %176 = dma.hbm_to_vmem [thread:$0]  %s169, 512, %s171, [#allocation12], 128, 128, 8
    $region77: #{tpu_custom_call.1} parent=1 // pred_fallthru
      _
    // Predicated region
    $region78: #{tpu_custom_call.1} parent=1 // pred_check
      _
    $region79: #{tpu_custom_call.1} parent=1 // pred_check_branch
      %178 = sbr.rel (0) target = $region81
    $region80: #{tpu_custom_call.1} parent=1 // pred_region
      _
    $region81: #{tpu_custom_call.1} parent=1 // pred_fallthru
      _
    // Predicated region
    $region82: #{tpu_custom_call.1} parent=1 // pred_check
      _
    $region83: #{tpu_custom_call.1} parent=1 // pred_check_branch
      %180 = sbr.rel (0) target = $region85
    $region84: #{tpu_custom_call.1} parent=1 // pred_region
      %182 = vsyncadd [#allocation12], 0
      %s183 = sshll.u32 %s41, 4
      %s184 = int_to_ptr.hbm [resolvable:$true] %s183
      %s185 = sshll.u32 [#allocation13], 4
      %s186 = int_to_ptr.vmem [resolvable:$true] %s185
      %191 = dma.hbm_to_vmem [thread:$0]  %s184, 512, %s186, [#allocation12], 128, 128, 8
    $region85: #{tpu_custom_call.1} parent=1 // pred_fallthru
      _
    // Predicated region
    $region86: #{tpu_custom_call.1} parent=1 // pred_check
      _
    $region87: #{tpu_custom_call.1} parent=1 // pred_check_branch
      %193 = sbr.rel (0) target = $region89
    $region88: #{tpu_custom_call.1} parent=1 // pred_region
      _
    $region89: #{tpu_custom_call.1} parent=1 // pred_fallthru
      _
    // Predicated region
    $region90: #{tpu_custom_call.1} parent=1 // pred_check
      _
    $region91: #{tpu_custom_call.1} parent=1 // pred_check_branch
      %195 = sbr.rel (0) target = $region93
    $region92: #{tpu_custom_call.1} parent=1 // pred_region
      %197 = vsyncadd [#allocation15], 0
      %s198 = sshll.u32 %s45, 4
      %s199 = int_to_ptr.hbm [resolvable:$true] %s198
      %s200 = sshll.u32 [#allocation14], 4
      %s201 = int_to_ptr.vmem [resolvable:$true] %s200
      %206 = dma.hbm_to_vmem [thread:$0]  %s199, 512, %s201, [#allocation15], 128, 128, 8
    $region93: #{tpu_custom_call.1} parent=1 // pred_fallthru
      _
    // Predicated region
    $region94: #{tpu_custom_call.1} parent=1 // pred_check
      _
    $region95: #{tpu_custom_call.1} parent=1 // pred_check_branch
      %208 = sbr.rel (0) target = $region97
    $region96: #{tpu_custom_call.1} parent=1 // pred_region
      _
    $region97: #{tpu_custom_call.1} parent=1 // pred_fallthru
      _
    // Predicated region
    $region98: #{tpu_custom_call.1} parent=1 // pred_check
      _
    $region99: #{tpu_custom_call.1} parent=1 // pred_check_branch
      %210 = sbr.rel (0) target = $region101
    $region100: #{tpu_custom_call.1} parent=1 // pred_region
      %212 = vsyncadd [#allocation15], 0
      %s213 = sshll.u32 %s49, 4
      %s214 = int_to_ptr.hbm [resolvable:$true] %s213
      %s215 = sshll.u32 [#allocation16], 4
      %s216 = int_to_ptr.vmem [resolvable:$true] %s215
      %221 = dma.hbm_to_vmem [thread:$0]  %s214, 512, %s216, [#allocation15], 128, 128, 8
    $region101: #{tpu_custom_call.1} parent=1 // pred_fallthru
      _
    // Predicated region
    $region102: #{tpu_custom_call.1} parent=1 // pred_check
      _
    $region103: #{tpu_custom_call.1} parent=1 // pred_check_branch
      %223 = sbr.rel (0) target = $region105
    $region104: #{tpu_custom_call.1} parent=1 // pred_region
      _
    $region105: #{tpu_custom_call.1} parent=1 // pred_fallthru
      _
    // Predicated region
    $region106: #{tpu_custom_call.1} parent=1 // pred_check
      _
    $region107: #{tpu_custom_call.1} parent=1 // pred_check_branch
      %225 = sbr.rel (0) target = $region109
    $region108: #{tpu_custom_call.1} parent=1 // pred_region
      %227 = vsyncadd [#allocation18], 0
      %s228 = sshll.u32 %s53, 4
      %s229 = int_to_ptr.hbm [resolvable:$true] %s228
      %s230 = sshll.u32 [#allocation17], 4
      %s231 = int_to_ptr.vmem [resolvable:$true] %s230
      %236 = dma.hbm_to_vmem [thread:$0]  %s229, 512, %s231, [#allocation18], 128, 128, 8
    $region109: #{tpu_custom_call.1} parent=1 // pred_fallthru
      _
    // Predicated region
    $region110: #{tpu_custom_call.1} parent=1 // pred_check
      _
    $region111: #{tpu_custom_call.1} parent=1 // pred_check_branch
      %238 = sbr.rel (0) target = $region113
    $region112: #{tpu_custom_call.1} parent=1 // pred_region
      _
    $region113: #{tpu_custom_call.1} parent=1 // pred_fallthru
      _
    // Predicated region
    $region114: #{tpu_custom_call.1} parent=1 // pred_check
      _
    $region115: #{tpu_custom_call.1} parent=1 // pred_check_branch
      %240 = sbr.rel (0) target = $region117
    $region116: #{tpu_custom_call.1} parent=1 // pred_region
      _
    $region117: #{tpu_custom_call.1} parent=1 // pred_fallthru
      _
    // Predicated region
    $region118: #{tpu_custom_call.1} parent=1 // pred_check
      _
    $region119: #{tpu_custom_call.1} parent=1 // pred_check_branch
      %242 = sbr.rel (0) target = $region121
    $region120: #{tpu_custom_call.1} parent=1 // pred_region
      _
    $region121: #{tpu_custom_call.1} parent=1 // pred_fallthru
      _
    // Predicated region
    $region122: #{tpu_custom_call.1} parent=1 // pred_check
      _
    $region123: #{tpu_custom_call.1} parent=1 // pred_check_branch
      %244 = sbr.rel (0) target = $region125
    $region124: #{tpu_custom_call.1} parent=1 // pred_region
      %246 = dma.done [#allocation3], 256
    $region125: #{tpu_custom_call.1} parent=1 // pred_fallthru
      _
    // Predicated region
    $region126: #{tpu_custom_call.1} parent=1 // pred_check
      _
    $region127: #{tpu_custom_call.1} parent=1 // pred_check_branch
      %248 = sbr.rel (0) target = $region129
    $region128: #{tpu_custom_call.1} parent=1 // pred_region
      %250 = dma.done [#allocation6], 256
    $region129: #{tpu_custom_call.1} parent=1 // pred_fallthru
      _
    // Predicated region
    $region130: #{tpu_custom_call.1} parent=1 // pred_check
      _
    $region131: #{tpu_custom_call.1} parent=1 // pred_check_branch
      %252 = sbr.rel (0) target = $region133
    $region132: #{tpu_custom_call.1} parent=1 // pred_region
      %254 = dma.done [#allocation6], 64
    $region133: #{tpu_custom_call.1} parent=1 // pred_fallthru
      _
    // Predicated region
    $region134: #{tpu_custom_call.1} parent=1 // pred_check
      _
    $region135: #{tpu_custom_call.1} parent=1 // pred_check_branch
      %256 = sbr.rel (0) target = $region137
    $region136: #{tpu_custom_call.1} parent=1 // pred_region
      %258 = dma.done [#allocation9], 64
    $region137: #{tpu_custom_call.1} parent=1 // pred_fallthru
      _
    // Predicated region
    $region138: #{tpu_custom_call.1} parent=1 // pred_check
      _
    $region139: #{tpu_custom_call.1} parent=1 // pred_check_branch
      %260 = sbr.rel (0) target = $region141
    $region140: #{tpu_custom_call.1} parent=1 // pred_region
      %262 = dma.done [#allocation9], 512
    $region141: #{tpu_custom_call.1} parent=1 // pred_fallthru
      _
    // Predicated region
    $region142: #{tpu_custom_call.1} parent=1 // pred_check
      _
    $region143: #{tpu_custom_call.1} parent=1 // pred_check_branch
      %264 = sbr.rel (0) target = $region145
    $region144: #{tpu_custom_call.1} parent=1 // pred_region
      %266 = dma.done [#allocation12], 512
    $region145: #{tpu_custom_call.1} parent=1 // pred_fallthru
      _
    // Predicated region
    $region146: #{tpu_custom_call.1} parent=1 // pred_check
      _
    $region147: #{tpu_custom_call.1} parent=1 // pred_check_branch
      %268 = sbr.rel (0) target = $region149
    $region148: #{tpu_custom_call.1} parent=1 // pred_region
      %270 = dma.done [#allocation12], 512
    $region149: #{tpu_custom_call.1} parent=1 // pred_fallthru
      _
    // Predicated region
    $region150: #{tpu_custom_call.1} parent=1 // pred_check
      _
    $region151: #{tpu_custom_call.1} parent=1 // pred_check_branch
      %272 = sbr.rel (0) target = $region153
    $region152: #{tpu_custom_call.1} parent=1 // pred_region
      %274 = dma.done [#allocation15], 512
    $region153: #{tpu_custom_call.1} parent=1 // pred_fallthru
      _
    // Predicated region
    $region154: #{tpu_custom_call.1} parent=1 // pred_check
      _
    $region155: #{tpu_custom_call.1} parent=1 // pred_check_branch
      %276 = sbr.rel (0) target = $region157
    $region156: #{tpu_custom_call.1} parent=1 // pred_region
      %278 = dma.done [#allocation15], 512
    $region157: #{tpu_custom_call.1} parent=1 // pred_fallthru
      _
    // Predicated region
    $region158: #{tpu_custom_call.1} parent=1 // pred_check
      _
    $region159: #{tpu_custom_call.1} parent=1 // pred_check_branch
      %280 = sbr.rel (0) target = $region161
    $region160: #{tpu_custom_call.1} parent=1 // pred_region
      %282 = dma.done [#allocation18], 512
    $region161: #{tpu_custom_call.1} parent=1 // pred_fallthru
      _
    %v285 = vld [vmem:[#allocation2] sm:$0xff]
    %v286 = vld [vmem:[#allocation2 + $0x8] sm:$0xff]
    %v287 = vld [vmem:[#allocation5] sm:$0xff]
    %v288 = vld [vmem:[#allocation5 + $0x8] sm:$0xff]
    %v289 = vld [vmem:[#allocation7] sm:$0x3]
    %v290 = vld [vmem:[#allocation7 + $0x2] sm:$0x3]
    %vm291 = vnez %v289
    %vm292 = vnez %v290
    %v293 = vld [vmem:[#allocation8] sm:$0x3]
    %v294 = vld [vmem:[#allocation8 + $0x2] sm:$0x3]
    %vm295 = vnez %v293
    %vm296 = vnez %v294
    %v297 = vld [vmem:[%s9] sm:$0x1]
    %v298 = vld [vmem:[%s11] sm:$0x1]
    %vm299 = vcmask 261120
    %v300 = vsel %vm299, %v285, 0.0
    %301 = vadd.xlane.f32.xlu0 %v300
    %v302 = vpop.xlane.xlu0 %301
    %v303 = vsel %vm299, %v286, 0.0
    %304 = vadd.xlane.f32.xlu0 %v303
    %v305 = vpop.xlane.xlu0 %304
    %v306 = vmul.f32 %v302, 0.03125
    %v307 = vmul.f32 %v305, 0.03125
    %v308 = vsub.f32 %v285, %v306
    %v309 = vsub.f32 %v286, %v307
    %v310 = vmul.f32 %v308, %v308
    %v311 = vmul.f32 %v309, %v309
    %v312 = vsel %vm299, %v310, 0.0
    %313 = vadd.xlane.f32.xlu0 %v312
    %v314 = vpop.xlane.xlu0 %313
    %v315 = vsel %vm299, %v311, 0.0
    %316 = vadd.xlane.f32.xlu0 %v315
    %v317 = vpop.xlane.xlu0 %316
    %v318 = vmul.f32 %v314, 0.032258064
    %v319 = vmul.f32 %v317, 0.032258064
    %v320 = vrsqrt.pop %v318
    %v321 = vmul.f32 %v320, %v318
    %v322 = vmul.f32 %v321, %v320
    %v323 = vmul.f32 0.5, %v322
    %v324 = vsub.f32 1.5, %v323
    %v325 = vmul.f32 %v320, %v324
    %v326 = vmul.f32 %v318, %v325
    %vm327 = vcmp.eq.f32.partialorder %v318, inf
    %v328 = vsel %vm327, %v318, %v326
    %vm329 = vcmp.eq.f32.partialorder %v318, 0.0
    %v330 = vand.u32 %v318, 2147483648
    %v331 = vsel %vm329, %v330, %v328
    %v332 = vrsqrt.pop %v319
    %v333 = vmul.f32 %v332, %v319
    %v334 = vmul.f32 %v333, %v332
    %v335 = vmul.f32 0.5, %v334
    %v336 = vsub.f32 1.5, %v335
    %v337 = vmul.f32 %v332, %v336
    %v338 = vmul.f32 %v319, %v337
    %vm339 = vcmp.eq.f32.partialorder %v319, inf
    %v340 = vsel %vm339, %v319, %v338
    %vm341 = vcmp.eq.f32.partialorder %v319, 0.0
    %v342 = vand.u32 %v319, 2147483648
    %v343 = vsel %vm341, %v342, %v340
    %v345 = vperm.slane %v297, 0
    %v347 = vmul.f32 %v345, %v308
    %v348 = vmul.f32 %v345, %v309
    %v349 = vadd.f32 %v331, 1e-06
    %v350 = vadd.f32 %v343, 1e-06
    %v351 = vrcp.pop %v349
    %v352 = vmul.f32 %v349, %v351
    %v353 = vsub.f32 1.0, %v352
    %v354 = vmul.f32 %v351, %v353
    %v355 = vadd.f32 %v351, %v354
    %vm356 = vweird.f32 %v349
    %vm357 = vweird.f32 %v351
    %vm358 = vmor %vm356, %vm357
    %v359 = vsel %vm358, %v351, %v355
    %v360 = vand.u32 2147483647, %v349
    %vm361 = vcmp.eq.f32.partialorder %v360, 8.507059e+37
    %v362 = vand.u32 %v349, 2147483648
    %v363 = vor.u32 1.1754944e-38, %v362
    %v364 = vsel %vm361, %v363, %v359
    %v365 = vmul.f32 %v347, %v364
    %v366 = vrcp.pop %v350
    %v367 = vmul.f32 %v350, %v366
    %v368 = vsub.f32 1.0, %v367
    %v369 = vmul.f32 %v366, %v368
    %v370 = vadd.f32 %v366, %v369
    %vm371 = vweird.f32 %v350
    %vm372 = vweird.f32 %v366
    %vm373 = vmor %vm371, %vm372
    %v374 = vsel %vm373, %v366, %v370
    %v375 = vand.u32 2147483647, %v350
    %vm376 = vcmp.eq.f32.partialorder %v375, 8.507059e+37
    %v377 = vand.u32 %v350, 2147483648
    %v378 = vor.u32 1.1754944e-38, %v377
    %v379 = vsel %vm376, %v378, %v374
    %v380 = vmul.f32 %v348, %v379
    %v382 = vperm.slane %v298, 0
    %v384 = vadd.f32 %v365, %v382
    %v385 = vadd.f32 %v380, %v382
    %v386 = vld [vmem:[%s21] sm:$0xff]
    %v387 = vld [vmem:[%s21 + $0x8] sm:$0xff]
    %v388 = vld [vmem:[%s21 + $0x10] sm:$0xff]
    %v389 = vld [vmem:[%s21 + $0x18] sm:$0xff]
    %v390 = vld [vmem:[%s23] sm:$0x1]
    %v392 = vperm.slane %v390, 0
    %v395 = vsel %vm299, %v384, 0
    %v398 = vsel %vm299, %v385, 0
    %400 = vmatpush.msra.mxu0 0.0
    %401 = vmatpush.msra.mxu0 0.0
    %402 = vmatpush.msra.mxu0 0.0
    %403 = vmatpush.msra.mxu0 0.0
    %404 = vmatpush.msra.mxu0 0.0
    %405 = vmatpush.msra.mxu0 0.0
    %406 = vmatpush.msra.mxu0 0.0
    %407 = vmatpush.msra.mxu0 0.0
    %408 = vmatpush.msra.mxu0 0.0
    %409 = vmatpush.msra.mxu0 0.0
    %410 = vmatpush.msra.mxu0 0.0
    %411 = vmatpush.msra.mxu0 0.0
    %412 = vmatpush.msra.mxu0 %v389
    %413 = vmatpush.msra.mxu0 %v388
    %414 = vmatpush.msra.mxu0 %v387
    %415 = vmatpush.msra.mxu0 %v386
    %416 = vmatmul.f32.gmra.mxu0 %v395
    %v417 = vpop.f32.mrf.mxu0
    %v418 = vadd.f32 %v392, %v417
    %419 = vmatmul.f32.gmra.mxu0 %v398
    %v420 = vpop.f32.mrf.mxu0
    %v421 = vadd.f32 %v392, %v420
    %422 = vdwg.mxu0
    %v423 = vmul.f32 %v418, 0.35355338
    %v424 = vmul.f32 %v421, 0.35355338
    %v425 = vld [vmem:[%s25] sm:$0xff]
    %v426 = vld [vmem:[%s25 + $0x8] sm:$0xff]
    %v427 = vld [vmem:[%s25 + $0x10] sm:$0xff]
    %v428 = vld [vmem:[%s25 + $0x18] sm:$0xff]
    %v429 = vld [vmem:[%s27] sm:$0x1]
    %v431 = vperm.slane %v429, 0
    %433 = vmatpush.msra.mxu0 0.0
    %434 = vmatpush.msra.mxu0 0.0
    %435 = vmatpush.msra.mxu0 0.0
    %436 = vmatpush.msra.mxu0 0.0
    %437 = vmatpush.msra.mxu0 0.0
    %438 = vmatpush.msra.mxu0 0.0
    %439 = vmatpush.msra.mxu0 0.0
    %440 = vmatpush.msra.mxu0 0.0
    %441 = vmatpush.msra.mxu0 0.0
    %442 = vmatpush.msra.mxu0 0.0
    %443 = vmatpush.msra.mxu0 0.0
    %444 = vmatpush.msra.mxu0 0.0
    %445 = vmatpush.msra.mxu0 %v428
    %446 = vmatpush.msra.mxu0 %v427
    %447 = vmatpush.msra.mxu0 %v426
    %448 = vmatpush.msra.mxu0 %v425
    %449 = vmatmul.f32.gmra.mxu0 %v395
    %v450 = vpop.f32.mrf.mxu0
    %v451 = vadd.f32 %v431, %v450
    %452 = vmatmul.f32.gmra.mxu0 %v398
    %v453 = vpop.f32.mrf.mxu0
    %v454 = vadd.f32 %v431, %v453
    %455 = vdwg.mxu0
    %v456 = vld [vmem:[%s29] sm:$0xff]
    %v457 = vld [vmem:[%s29 + $0x8] sm:$0xff]
    %v458 = vld [vmem:[%s29 + $0x10] sm:$0xff]
    %v459 = vld [vmem:[%s29 + $0x18] sm:$0xff]
    %v460 = vld [vmem:[%s31] sm:$0x1]
    %v462 = vperm.slane %v460, 0
    %464 = vmatpush.msra.mxu0 0.0
    %465 = vmatpush.msra.mxu0 0.0
    %466 = vmatpush.msra.mxu0 0.0
    %467 = vmatpush.msra.mxu0 0.0
    %468 = vmatpush.msra.mxu0 0.0
    %469 = vmatpush.msra.mxu0 0.0
    %470 = vmatpush.msra.mxu0 0.0
    %471 = vmatpush.msra.mxu0 0.0
    %472 = vmatpush.msra.mxu0 0.0
    %473 = vmatpush.msra.mxu0 0.0
    %474 = vmatpush.msra.mxu0 0.0
    %475 = vmatpush.msra.mxu0 0.0
    %476 = vmatpush.msra.mxu0 %v459
    %477 = vmatpush.msra.mxu0 %v458
    %478 = vmatpush.msra.mxu0 %v457
    %479 = vmatpush.msra.mxu0 %v456
    %480 = vmatmul.f32.gmra.mxu0 %v395
    %v481 = vpop.f32.mrf.mxu0
    %v482 = vadd.f32 %v462, %v481
    %483 = vmatmul.f32.gmra.mxu0 %v398
    %v484 = vpop.f32.mrf.mxu0
    %v485 = vadd.f32 %v462, %v484
    %486 = vdwg.mxu0
    %vm487 = vcmask 64512
    %v489 = vsel %vm487, %v423, 0
    %v492 = vsel %vm487, %v451, 0
    %494 = vmatpush.xpose.msra.mxu0 0.0
    %495 = vmatpush.xpose.msra.mxu0 0.0
    %496 = vmatpush.xpose.msra.mxu0 0.0
    %497 = vmatpush.xpose.msra.mxu0 0.0
    %498 = vmatpush.xpose.msra.mxu0 0.0
    %499 = vmatpush.xpose.msra.mxu0 0.0
    %500 = vmatpush.xpose.msra.mxu0 0.0
    %501 = vmatpush.xpose.msra.mxu0 0.0
    %502 = vmatpush.xpose.msra.mxu0 0.0
    %503 = vmatpush.xpose.msra.mxu0 0.0
    %504 = vmatpush.xpose.msra.mxu0 0.0
    %505 = vmatpush.xpose.msra.mxu0 0.0
    %506 = vmatpush.xpose.msra.mxu0 0.0
    %507 = vmatpush.xpose.msra.mxu0 0.0
    %508 = vmatpush.xpose.msra.mxu0 0.0
    %509 = vmatpush.xpose.msra.mxu0 %v492
    %510 = vmatmul.f32.gmra.mxu0 %v489
    %v511 = vpop.f32.mrf.mxu0
    %v512 = vadd.f32 0.0, %v511
    %513 = vdwg.mxu0
    %v515 = vsel %vm487, %v424, 0
    %v518 = vsel %vm487, %v454, 0
    %520 = vmatpush.xpose.msra.mxu0 0.0
    %521 = vmatpush.xpose.msra.mxu0 0.0
    %522 = vmatpush.xpose.msra.mxu0 0.0
    %523 = vmatpush.xpose.msra.mxu0 0.0
    %524 = vmatpush.xpose.msra.mxu0 0.0
    %525 = vmatpush.xpose.msra.mxu0 0.0
    %526 = vmatpush.xpose.msra.mxu0 0.0
    %527 = vmatpush.xpose.msra.mxu0 0.0
    %528 = vmatpush.xpose.msra.mxu0 0.0
    %529 = vmatpush.xpose.msra.mxu0 0.0
    %530 = vmatpush.xpose.msra.mxu0 0.0
    %531 = vmatpush.xpose.msra.mxu0 0.0
    %532 = vmatpush.xpose.msra.mxu0 0.0
    %533 = vmatpush.xpose.msra.mxu0 0.0
    %534 = vmatpush.xpose.msra.mxu0 0.0
    %535 = vmatpush.xpose.msra.mxu0 %v518
    %536 = vmatmul.f32.gmra.mxu0 %v515
    %v537 = vpop.f32.mrf.mxu0
    %v538 = vadd.f32 0.0, %v537
    %539 = vdwg.mxu0
    %v540 = vsel %vm291, 16843009, 0
    %v541 = vsel %vm292, 16843009, 0
    %v542 = vunpack.c.0.s8 %v540
    %v543 = vunpack.c.0.s8 %v541
    %vm544 = vcmp.ne.s32.totalorder %v542, 0
    %vm545 = vcmp.ne.s32.totalorder %v543, 0
    %v546 = vsel %vm544, %v512, -1e+09
    %v547 = vsel %vm545, %v538, -1e+09
    %v548 = vsel %vm487, %v546, -inf
    %549 = vmax.xlane.f32.xlu0 %v548
    %v550 = vpop.xlane.xlu0 %549
    %v551 = vsel %vm487, %v547, -inf
    %552 = vmax.xlane.f32.xlu0 %v551
    %v553 = vpop.xlane.xlu0 %552
    %v554 = vsub.f32 %v546, %v550
    %v555 = vsub.f32 %v547, %v553
    %v556 = vmul.f32 %v554, 1.442695
    %v557 = vpow.pop %v556
    %v558 = vmul.f32 %v555, 1.442695
    %v559 = vpow.pop %v558
    %v560 = vsel %vm487, %v557, 0.0
    %561 = vadd.xlane.f32.xlu0 %v560
    %v562 = vpop.xlane.xlu0 %561
    %v563 = vsel %vm487, %v559, 0.0
    %564 = vadd.xlane.f32.xlu0 %v563
    %v565 = vpop.xlane.xlu0 %564
    %v566 = vrcp.pop %v562
    %v567 = vmul.f32 %v562, %v566
    %v568 = vsub.f32 1.0, %v567
    %v569 = vmul.f32 %v566, %v568
    %v570 = vadd.f32 %v566, %v569
    %vm571 = vweird.f32 %v562
    %vm572 = vweird.f32 %v566
    %vm573 = vmor %vm571, %vm572
    %v574 = vsel %vm573, %v566, %v570
    %v575 = vand.u32 2147483647, %v562
    %vm576 = vcmp.eq.f32.partialorder %v575, 8.507059e+37
    %v577 = vand.u32 %v562, 2147483648
    %v578 = vor.u32 1.1754944e-38, %v577
    %v579 = vsel %vm576, %v578, %v574
    %v580 = vmul.f32 %v557, %v579
    %v581 = vrcp.pop %v565
    %v582 = vmul.f32 %v565, %v581
    %v583 = vsub.f32 1.0, %v582
    %v584 = vmul.f32 %v581, %v583
    %v585 = vadd.f32 %v581, %v584
    %vm586 = vweird.f32 %v565
    %vm587 = vweird.f32 %v581
    %vm588 = vmor %vm586, %vm587
    %v589 = vsel %vm588, %v581, %v585
    %v590 = vand.u32 2147483647, %v565
    %vm591 = vcmp.eq.f32.partialorder %v590, 8.507059e+37
    %v592 = vand.u32 %v565, 2147483648
    %v593 = vor.u32 1.1754944e-38, %v592
    %v594 = vsel %vm591, %v593, %v589
    %v595 = vmul.f32 %v559, %v594
    %v597 = vsel %vm487, %v580, 0
    %599 = vmatpush.msra.mxu0 0.0
    %600 = vmatpush.msra.mxu0 0.0
    %601 = vmatpush.msra.mxu0 0.0
    %602 = vmatpush.msra.mxu0 0.0
    %603 = vmatpush.msra.mxu0 0.0
    %604 = vmatpush.msra.mxu0 0.0
    %605 = vmatpush.msra.mxu0 0.0
    %606 = vmatpush.msra.mxu0 0.0
    %607 = vmatpush.msra.mxu0 0.0
    %608 = vmatpush.msra.mxu0 0.0
    %609 = vmatpush.msra.mxu0 0.0
    %610 = vmatpush.msra.mxu0 0.0
    %611 = vmatpush.msra.mxu0 0.0
    %612 = vmatpush.msra.mxu0 0.0
    %613 = vmatpush.msra.mxu0 0.0
    %614 = vmatpush.msra.mxu0 %v482
    %615 = vmatmul.f32.gmra.mxu0 %v597
    %v616 = vpop.f32.mrf.mxu0
    %v617 = vadd.f32 0.0, %v616
    %618 = vdwg.mxu0
    %v620 = vsel %vm487, %v595, 0
    %622 = vmatpush.msra.mxu0 0.0
    %623 = vmatpush.msra.mxu0 0.0
    %624 = vmatpush.msra.mxu0 0.0
    %625 = vmatpush.msra.mxu0 0.0
    %626 = vmatpush.msra.mxu0 0.0
    %627 = vmatpush.msra.mxu0 0.0
    %628 = vmatpush.msra.mxu0 0.0
    %629 = vmatpush.msra.mxu0 0.0
    %630 = vmatpush.msra.mxu0 0.0
    %631 = vmatpush.msra.mxu0 0.0
    %632 = vmatpush.msra.mxu0 0.0
    %633 = vmatpush.msra.mxu0 0.0
    %634 = vmatpush.msra.mxu0 0.0
    %635 = vmatpush.msra.mxu0 0.0
    %636 = vmatpush.msra.mxu0 0.0
    %637 = vmatpush.msra.mxu0 %v485
    %638 = vmatmul.f32.gmra.mxu0 %v620
    %v639 = vpop.f32.mrf.mxu0
    %v640 = vadd.f32 0.0, %v639
    %641 = vdwg.mxu0
    %642 = vrot.lane.b32.xlu0 %v423, 120
    %v643 = vpop.permute.xlu0 %642
    %644 = vrot.lane.b32.xlu0 %v451, 120
    %v645 = vpop.permute.xlu0 %644
    %v646 = vsel %vm487, %v643, 0
    %v648 = vsel %vm487, %v645, 0
    %650 = vmatpush.xpose.msra.mxu0 0.0
    %651 = vmatpush.xpose.msra.mxu0 0.0
    %652 = vmatpush.xpose.msra.mxu0 0.0
    %653 = vmatpush.xpose.msra.mxu0 0.0
    %654 = vmatpush.xpose.msra.mxu0 0.0
    %655 = vmatpush.xpose.msra.mxu0 0.0
    %656 = vmatpush.xpose.msra.mxu0 0.0
    %657 = vmatpush.xpose.msra.mxu0 0.0
    %658 = vmatpush.xpose.msra.mxu0 0.0
    %659 = vmatpush.xpose.msra.mxu0 0.0
    %660 = vmatpush.xpose.msra.mxu0 0.0
    %661 = vmatpush.xpose.msra.mxu0 0.0
    %662 = vmatpush.xpose.msra.mxu0 0.0
    %663 = vmatpush.xpose.msra.mxu0 0.0
    %664 = vmatpush.xpose.msra.mxu0 0.0
    %665 = vmatpush.xpose.msra.mxu0 %v648
    %666 = vmatmul.f32.gmra.mxu0 %v646
    %v667 = vpop.f32.mrf.mxu0
    %v668 = vadd.f32 0.0, %v667
    %669 = vdwg.mxu0
    %670 = vrot.lane.b32.xlu0 %v424, 120
    %v671 = vpop.permute.xlu0 %670
    %672 = vrot.lane.b32.xlu0 %v454, 120
    %v673 = vpop.permute.xlu0 %672
    %v674 = vsel %vm487, %v671, 0
    %v676 = vsel %vm487, %v673, 0
    %678 = vmatpush.xpose.msra.mxu0 0.0
    %679 = vmatpush.xpose.msra.mxu0 0.0
    %680 = vmatpush.xpose.msra.mxu0 0.0
    %681 = vmatpush.xpose.msra.mxu0 0.0
    %682 = vmatpush.xpose.msra.mxu0 0.0
    %683 = vmatpush.xpose.msra.mxu0 0.0
    %684 = vmatpush.xpose.msra.mxu0 0.0
    %685 = vmatpush.xpose.msra.mxu0 0.0
    %686 = vmatpush.xpose.msra.mxu0 0.0
    %687 = vmatpush.xpose.msra.mxu0 0.0
    %688 = vmatpush.xpose.msra.mxu0 0.0
    %689 = vmatpush.xpose.msra.mxu0 0.0
    %690 = vmatpush.xpose.msra.mxu0 0.0
    %691 = vmatpush.xpose.msra.mxu0 0.0
    %692 = vmatpush.xpose.msra.mxu0 0.0
    %693 = vmatpush.xpose.msra.mxu0 %v676
    %694 = vmatmul.f32.gmra.mxu0 %v674
    %v695 = vpop.f32.mrf.mxu0
    %v696 = vadd.f32 0.0, %v695
    %697 = vdwg.mxu0
    %v698 = vsel %vm544, %v668, -1e+09
    %v699 = vsel %vm545, %v696, -1e+09
    %v700 = vsel %vm487, %v698, -inf
    %701 = vmax.xlane.f32.xlu0 %v700
    %v702 = vpop.xlane.xlu0 %701
    %v703 = vsel %vm487, %v699, -inf
    %704 = vmax.xlane.f32.xlu0 %v703
    %v705 = vpop.xlane.xlu0 %704
    %v706 = vsub.f32 %v698, %v702
    %v707 = vsub.f32 %v699, %v705
    %v708 = vmul.f32 %v706, 1.442695
    %v709 = vpow.pop %v708
    %v710 = vmul.f32 %v707, 1.442695
    %v711 = vpow.pop %v710
    %v712 = vsel %vm487, %v709, 0.0
    %713 = vadd.xlane.f32.xlu0 %v712
    %v714 = vpop.xlane.xlu0 %713
    %v715 = vsel %vm487, %v711, 0.0
    %716 = vadd.xlane.f32.xlu0 %v715
    %v717 = vpop.xlane.xlu0 %716
    %v718 = vrcp.pop %v714
    %v719 = vmul.f32 %v714, %v718
    %v720 = vsub.f32 1.0, %v719
    %v721 = vmul.f32 %v718, %v720
    %v722 = vadd.f32 %v718, %v721
    %vm723 = vweird.f32 %v714
    %vm724 = vweird.f32 %v718
    %vm725 = vmor %vm723, %vm724
    %v726 = vsel %vm725, %v718, %v722
    %v727 = vand.u32 2147483647, %v714
    %vm728 = vcmp.eq.f32.partialorder %v727, 8.507059e+37
    %v729 = vand.u32 %v714, 2147483648
    %v730 = vor.u32 1.1754944e-38, %v729
    %v731 = vsel %vm728, %v730, %v726
    %v732 = vmul.f32 %v709, %v731
    %v733 = vrcp.pop %v717
    %v734 = vmul.f32 %v717, %v733
    %v735 = vsub.f32 1.0, %v734
    %v736 = vmul.f32 %v733, %v735
    %v737 = vadd.f32 %v733, %v736
    %vm738 = vweird.f32 %v717
    %vm739 = vweird.f32 %v733
    %vm740 = vmor %vm738, %vm739
    %v741 = vsel %vm740, %v733, %v737
    %v742 = vand.u32 2147483647, %v717
    %vm743 = vcmp.eq.f32.partialorder %v742, 8.507059e+37
    %v744 = vand.u32 %v717, 2147483648
    %v745 = vor.u32 1.1754944e-38, %v744
    %v746 = vsel %vm743, %v745, %v741
    %v747 = vmul.f32 %v711, %v746
    %749 = vrot.lane.b32.xlu0 %v482, 120
    %v750 = vpop.permute.xlu0 %749
    %v753 = vsel %vm487, %v732, 0
    %755 = vmatpush.msra.mxu0 0.0
    %756 = vmatpush.msra.mxu0 0.0
    %757 = vmatpush.msra.mxu0 0.0
    %758 = vmatpush.msra.mxu0 0.0
    %759 = vmatpush.msra.mxu0 0.0
    %760 = vmatpush.msra.mxu0 0.0
    %761 = vmatpush.msra.mxu0 0.0
    %762 = vmatpush.msra.mxu0 0.0
    %763 = vmatpush.msra.mxu0 0.0
    %764 = vmatpush.msra.mxu0 0.0
    %765 = vmatpush.msra.mxu0 0.0
    %766 = vmatpush.msra.mxu0 0.0
    %767 = vmatpush.msra.mxu0 0.0
    %768 = vmatpush.msra.mxu0 0.0
    %769 = vmatpush.msra.mxu0 0.0
    %770 = vmatpush.msra.mxu0 %v750
    %771 = vmatmul.f32.gmra.mxu0 %v753
    %v772 = vpop.f32.mrf.mxu0
    %v773 = vadd.f32 0.0, %v772
    %774 = vdwg.mxu0
    %776 = vrot.lane.b32.xlu0 %v485, 120
    %v777 = vpop.permute.xlu0 %776
    %v780 = vsel %vm487, %v747, 0
    %782 = vmatpush.msra.mxu0 0.0
    %783 = vmatpush.msra.mxu0 0.0
    %784 = vmatpush.msra.mxu0 0.0
    %785 = vmatpush.msra.mxu0 0.0
    %786 = vmatpush.msra.mxu0 0.0
    %787 = vmatpush.msra.mxu0 0.0
    %788 = vmatpush.msra.mxu0 0.0
    %789 = vmatpush.msra.mxu0 0.0
    %790 = vmatpush.msra.mxu0 0.0
    %791 = vmatpush.msra.mxu0 0.0
    %792 = vmatpush.msra.mxu0 0.0
    %793 = vmatpush.msra.mxu0 0.0
    %794 = vmatpush.msra.mxu0 0.0
    %795 = vmatpush.msra.mxu0 0.0
    %796 = vmatpush.msra.mxu0 0.0
    %797 = vmatpush.msra.mxu0 %v777
    %798 = vmatmul.f32.gmra.mxu0 %v780
    %v799 = vpop.f32.mrf.mxu0
    %v800 = vadd.f32 0.0, %v799
    %801 = vdwg.mxu0
    %802 = vrot.lane.b32.xlu0 %v423, 112
    %v803 = vpop.permute.xlu0 %802
    %804 = vrot.lane.b32.xlu0 %v451, 112
    %v805 = vpop.permute.xlu0 %804
    %v806 = vsel %vm487, %v803, 0
    %v808 = vsel %vm487, %v805, 0
    %810 = vmatpush.xpose.msra.mxu0 0.0
    %811 = vmatpush.xpose.msra.mxu0 0.0
    %812 = vmatpush.xpose.msra.mxu0 0.0
    %813 = vmatpush.xpose.msra.mxu0 0.0
    %814 = vmatpush.xpose.msra.mxu0 0.0
    %815 = vmatpush.xpose.msra.mxu0 0.0
    %816 = vmatpush.xpose.msra.mxu0 0.0
    %817 = vmatpush.xpose.msra.mxu0 0.0
    %818 = vmatpush.xpose.msra.mxu0 0.0
    %819 = vmatpush.xpose.msra.mxu0 0.0
    %820 = vmatpush.xpose.msra.mxu0 0.0
    %821 = vmatpush.xpose.msra.mxu0 0.0
    %822 = vmatpush.xpose.msra.mxu0 0.0
    %823 = vmatpush.xpose.msra.mxu0 0.0
    %824 = vmatpush.xpose.msra.mxu0 0.0
    %825 = vmatpush.xpose.msra.mxu0 %v808
    %826 = vmatmul.f32.gmra.mxu0 %v806
    %v827 = vpop.f32.mrf.mxu0
    %v828 = vadd.f32 0.0, %v827
    %829 = vdwg.mxu0
    %830 = vrot.lane.b32.xlu0 %v424, 112
    %v831 = vpop.permute.xlu0 %830
    %832 = vrot.lane.b32.xlu0 %v454, 112
    %v833 = vpop.permute.xlu0 %832
    %v834 = vsel %vm487, %v831, 0
    %v836 = vsel %vm487, %v833, 0
    %838 = vmatpush.xpose.msra.mxu0 0.0
    %839 = vmatpush.xpose.msra.mxu0 0.0
    %840 = vmatpush.xpose.msra.mxu0 0.0
    %841 = vmatpush.xpose.msra.mxu0 0.0
    %842 = vmatpush.xpose.msra.mxu0 0.0
    %843 = vmatpush.xpose.msra.mxu0 0.0
    %844 = vmatpush.xpose.msra.mxu0 0.0
    %845 = vmatpush.xpose.msra.mxu0 0.0
    %846 = vmatpush.xpose.msra.mxu0 0.0
    %847 = vmatpush.xpose.msra.mxu0 0.0
    %848 = vmatpush.xpose.msra.mxu0 0.0
    %849 = vmatpush.xpose.msra.mxu0 0.0
    %850 = vmatpush.xpose.msra.mxu0 0.0
    %851 = vmatpush.xpose.msra.mxu0 0.0
    %852 = vmatpush.xpose.msra.mxu0 0.0
    %853 = vmatpush.xpose.msra.mxu0 %v836
    %854 = vmatmul.f32.gmra.mxu0 %v834
    %v855 = vpop.f32.mrf.mxu0
    %v856 = vadd.f32 0.0, %v855
    %857 = vdwg.mxu0
    %v858 = vsel %vm544, %v828, -1e+09
    %v859 = vsel %vm545, %v856, -1e+09
    %v860 = vsel %vm487, %v858, -inf
    %861 = vmax.xlane.f32.xlu0 %v860
    %v862 = vpop.xlane.xlu0 %861
    %v863 = vsel %vm487, %v859, -inf
    %864 = vmax.xlane.f32.xlu0 %v863
    %v865 = vpop.xlane.xlu0 %864
    %v866 = vsub.f32 %v858, %v862
    %v867 = vsub.f32 %v859, %v865
    %v868 = vmul.f32 %v866, 1.442695
    %v869 = vpow.pop %v868
    %v870 = vmul.f32 %v867, 1.442695
    %v871 = vpow.pop %v870
    %v872 = vsel %vm487, %v869, 0.0
    %873 = vadd.xlane.f32.xlu0 %v872
    %v874 = vpop.xlane.xlu0 %873
    %v875 = vsel %vm487, %v871, 0.0
    %876 = vadd.xlane.f32.xlu0 %v875
    %v877 = vpop.xlane.xlu0 %876
    %v878 = vrcp.pop %v874
    %v879 = vmul.f32 %v874, %v878
    %v880 = vsub.f32 1.0, %v879
    %v881 = vmul.f32 %v878, %v880
    %v882 = vadd.f32 %v878, %v881
    %vm883 = vweird.f32 %v874
    %vm884 = vweird.f32 %v878
    %vm885 = vmor %vm883, %vm884
    %v886 = vsel %vm885, %v878, %v882
    %v887 = vand.u32 2147483647, %v874
    %vm888 = vcmp.eq.f32.partialorder %v887, 8.507059e+37
    %v889 = vand.u32 %v874, 2147483648
    %v890 = vor.u32 1.1754944e-38, %v889
    %v891 = vsel %vm888, %v890, %v886
    %v892 = vmul.f32 %v869, %v891
    %v893 = vrcp.pop %v877
    %v894 = vmul.f32 %v877, %v893
    %v895 = vsub.f32 1.0, %v894
    %v896 = vmul.f32 %v893, %v895
    %v897 = vadd.f32 %v893, %v896
    %vm898 = vweird.f32 %v877
    %vm899 = vweird.f32 %v893
    %vm900 = vmor %vm898, %vm899
    %v901 = vsel %vm900, %v893, %v897
    %v902 = vand.u32 2147483647, %v877
    %vm903 = vcmp.eq.f32.partialorder %v902, 8.507059e+37
    %v904 = vand.u32 %v877, 2147483648
    %v905 = vor.u32 1.1754944e-38, %v904
    %v906 = vsel %vm903, %v905, %v901
    %v907 = vmul.f32 %v871, %v906
    %908 = vrot.lane.b32.xlu0 %v482, 112
    %v909 = vpop.permute.xlu0 %908
    %v912 = vsel %vm487, %v892, 0
    %914 = vmatpush.msra.mxu0 0.0
    %915 = vmatpush.msra.mxu0 0.0
    %916 = vmatpush.msra.mxu0 0.0
    %917 = vmatpush.msra.mxu0 0.0
    %918 = vmatpush.msra.mxu0 0.0
    %919 = vmatpush.msra.mxu0 0.0
    %920 = vmatpush.msra.mxu0 0.0
    %921 = vmatpush.msra.mxu0 0.0
    %922 = vmatpush.msra.mxu0 0.0
    %923 = vmatpush.msra.mxu0 0.0
    %924 = vmatpush.msra.mxu0 0.0
    %925 = vmatpush.msra.mxu0 0.0
    %926 = vmatpush.msra.mxu0 0.0
    %927 = vmatpush.msra.mxu0 0.0
    %928 = vmatpush.msra.mxu0 0.0
    %929 = vmatpush.msra.mxu0 %v909
    %930 = vmatmul.f32.gmra.mxu0 %v912
    %v931 = vpop.f32.mrf.mxu0
    %v932 = vadd.f32 0.0, %v931
    %933 = vdwg.mxu0
    %934 = vrot.lane.b32.xlu0 %v485, 112
    %v935 = vpop.permute.xlu0 %934
    %v938 = vsel %vm487, %v907, 0
    %940 = vmatpush.msra.mxu0 0.0
    %941 = vmatpush.msra.mxu0 0.0
    %942 = vmatpush.msra.mxu0 0.0
    %943 = vmatpush.msra.mxu0 0.0
    %944 = vmatpush.msra.mxu0 0.0
    %945 = vmatpush.msra.mxu0 0.0
    %946 = vmatpush.msra.mxu0 0.0
    %947 = vmatpush.msra.mxu0 0.0
    %948 = vmatpush.msra.mxu0 0.0
    %949 = vmatpush.msra.mxu0 0.0
    %950 = vmatpush.msra.mxu0 0.0
    %951 = vmatpush.msra.mxu0 0.0
    %952 = vmatpush.msra.mxu0 0.0
    %953 = vmatpush.msra.mxu0 0.0
    %954 = vmatpush.msra.mxu0 0.0
    %955 = vmatpush.msra.mxu0 %v935
    %956 = vmatmul.f32.gmra.mxu0 %v938
    %v957 = vpop.f32.mrf.mxu0
    %v958 = vadd.f32 0.0, %v957
    %959 = vdwg.mxu0
    %960 = vrot.lane.b32.xlu0 %v423, 104
    %v961 = vpop.permute.xlu0 %960
    %962 = vrot.lane.b32.xlu0 %v451, 104
    %v963 = vpop.permute.xlu0 %962
    %v964 = vsel %vm487, %v961, 0
    %v966 = vsel %vm487, %v963, 0
    %968 = vmatpush.xpose.msra.mxu0 0.0
    %969 = vmatpush.xpose.msra.mxu0 0.0
    %970 = vmatpush.xpose.msra.mxu0 0.0
    %971 = vmatpush.xpose.msra.mxu0 0.0
    %972 = vmatpush.xpose.msra.mxu0 0.0
    %973 = vmatpush.xpose.msra.mxu0 0.0
    %974 = vmatpush.xpose.msra.mxu0 0.0
    %975 = vmatpush.xpose.msra.mxu0 0.0
    %976 = vmatpush.xpose.msra.mxu0 0.0
    %977 = vmatpush.xpose.msra.mxu0 0.0
    %978 = vmatpush.xpose.msra.mxu0 0.0
    %979 = vmatpush.xpose.msra.mxu0 0.0
    %980 = vmatpush.xpose.msra.mxu0 0.0
    %981 = vmatpush.xpose.msra.mxu0 0.0
    %982 = vmatpush.xpose.msra.mxu0 0.0
    %983 = vmatpush.xpose.msra.mxu0 %v966
    %984 = vmatmul.f32.gmra.mxu0 %v964
    %v985 = vpop.f32.mrf.mxu0
    %v986 = vadd.f32 0.0, %v985
    %987 = vdwg.mxu0
    %988 = vrot.lane.b32.xlu0 %v424, 104
    %v989 = vpop.permute.xlu0 %988
    %990 = vrot.lane.b32.xlu0 %v454, 104
    %v991 = vpop.permute.xlu0 %990
    %v992 = vsel %vm487, %v989, 0
    %v994 = vsel %vm487, %v991, 0
    %996 = vmatpush.xpose.msra.mxu0 0.0
    %997 = vmatpush.xpose.msra.mxu0 0.0
    %998 = vmatpush.xpose.msra.mxu0 0.0
    %999 = vmatpush.xpose.msra.mxu0 0.0
    %1000 = vmatpush.xpose.msra.mxu0 0.0
    %1001 = vmatpush.xpose.msra.mxu0 0.0
    %1002 = vmatpush.xpose.msra.mxu0 0.0
    %1003 = vmatpush.xpose.msra.mxu0 0.0
    %1004 = vmatpush.xpose.msra.mxu0 0.0
    %1005 = vmatpush.xpose.msra.mxu0 0.0
    %1006 = vmatpush.xpose.msra.mxu0 0.0
    %1007 = vmatpush.xpose.msra.mxu0 0.0
    %1008 = vmatpush.xpose.msra.mxu0 0.0
    %1009 = vmatpush.xpose.msra.mxu0 0.0
    %1010 = vmatpush.xpose.msra.mxu0 0.0
    %1011 = vmatpush.xpose.msra.mxu0 %v994
    %1012 = vmatmul.f32.gmra.mxu0 %v992
    %v1013 = vpop.f32.mrf.mxu0
    %v1014 = vadd.f32 0.0, %v1013
    %1015 = vdwg.mxu0
    %v1016 = vsel %vm544, %v986, -1e+09
    %v1017 = vsel %vm545, %v1014, -1e+09
    %v1018 = vsel %vm487, %v1016, -inf
    %1019 = vmax.xlane.f32.xlu0 %v1018
    %v1020 = vpop.xlane.xlu0 %1019
    %v1021 = vsel %vm487, %v1017, -inf
    %1022 = vmax.xlane.f32.xlu0 %v1021
    %v1023 = vpop.xlane.xlu0 %1022
    %v1024 = vsub.f32 %v1016, %v1020
    %v1025 = vsub.f32 %v1017, %v1023
    %v1026 = vmul.f32 %v1024, 1.442695
    %v1027 = vpow.pop %v1026
    %v1028 = vmul.f32 %v1025, 1.442695
    %v1029 = vpow.pop %v1028
    %v1030 = vsel %vm487, %v1027, 0.0
    %1031 = vadd.xlane.f32.xlu0 %v1030
    %v1032 = vpop.xlane.xlu0 %1031
    %v1033 = vsel %vm487, %v1029, 0.0
    %1034 = vadd.xlane.f32.xlu0 %v1033
    %v1035 = vpop.xlane.xlu0 %1034
    %v1036 = vrcp.pop %v1032
    %v1037 = vmul.f32 %v1032, %v1036
    %v1038 = vsub.f32 1.0, %v1037
    %v1039 = vmul.f32 %v1036, %v1038
    %v1040 = vadd.f32 %v1036, %v1039
    %vm1041 = vweird.f32 %v1032
    %vm1042 = vweird.f32 %v1036
    %vm1043 = vmor %vm1041, %vm1042
    %v1044 = vsel %vm1043, %v1036, %v1040
    %v1045 = vand.u32 2147483647, %v1032
    %vm1046 = vcmp.eq.f32.partialorder %v1045, 8.507059e+37
    %v1047 = vand.u32 %v1032, 2147483648
    %v1048 = vor.u32 1.1754944e-38, %v1047
    %v1049 = vsel %vm1046, %v1048, %v1044
    %v1050 = vmul.f32 %v1027, %v1049
    %v1051 = vrcp.pop %v1035
    %v1052 = vmul.f32 %v1035, %v1051
    %v1053 = vsub.f32 1.0, %v1052
    %v1054 = vmul.f32 %v1051, %v1053
    %v1055 = vadd.f32 %v1051, %v1054
    %vm1056 = vweird.f32 %v1035
    %vm1057 = vweird.f32 %v1051
    %vm1058 = vmor %vm1056, %vm1057
    %v1059 = vsel %vm1058, %v1051, %v1055
    %v1060 = vand.u32 2147483647, %v1035
    %vm1061 = vcmp.eq.f32.partialorder %v1060, 8.507059e+37
    %v1062 = vand.u32 %v1035, 2147483648
    %v1063 = vor.u32 1.1754944e-38, %v1062
    %v1064 = vsel %vm1061, %v1063, %v1059
    %v1065 = vmul.f32 %v1029, %v1064
    %1066 = vrot.lane.b32.xlu0 %v482, 104
    %v1067 = vpop.permute.xlu0 %1066
    %v1070 = vsel %vm487, %v1050, 0
    %1072 = vmatpush.msra.mxu0 0.0
    %1073 = vmatpush.msra.mxu0 0.0
    %1074 = vmatpush.msra.mxu0 0.0
    %1075 = vmatpush.msra.mxu0 0.0
    %1076 = vmatpush.msra.mxu0 0.0
    %1077 = vmatpush.msra.mxu0 0.0
    %1078 = vmatpush.msra.mxu0 0.0
    %1079 = vmatpush.msra.mxu0 0.0
    %1080 = vmatpush.msra.mxu0 0.0
    %1081 = vmatpush.msra.mxu0 0.0
    %1082 = vmatpush.msra.mxu0 0.0
    %1083 = vmatpush.msra.mxu0 0.0
    %1084 = vmatpush.msra.mxu0 0.0
    %1085 = vmatpush.msra.mxu0 0.0
    %1086 = vmatpush.msra.mxu0 0.0
    %1087 = vmatpush.msra.mxu0 %v1067
    %1088 = vmatmul.f32.gmra.mxu0 %v1070
    %v1089 = vpop.f32.mrf.mxu0
    %v1090 = vadd.f32 0.0, %v1089
    %1091 = vdwg.mxu0
    %1092 = vrot.lane.b32.xlu0 %v485, 104
    %v1093 = vpop.permute.xlu0 %1092
    %v1096 = vsel %vm487, %v1065, 0
    %1098 = vmatpush.msra.mxu0 0.0
    %1099 = vmatpush.msra.mxu0 0.0
    %1100 = vmatpush.msra.mxu0 0.0
    %1101 = vmatpush.msra.mxu0 0.0
    %1102 = vmatpush.msra.mxu0 0.0
    %1103 = vmatpush.msra.mxu0 0.0
    %1104 = vmatpush.msra.mxu0 0.0
    %1105 = vmatpush.msra.mxu0 0.0
    %1106 = vmatpush.msra.mxu0 0.0
    %1107 = vmatpush.msra.mxu0 0.0
    %1108 = vmatpush.msra.mxu0 0.0
    %1109 = vmatpush.msra.mxu0 0.0
    %1110 = vmatpush.msra.mxu0 0.0
    %1111 = vmatpush.msra.mxu0 0.0
    %1112 = vmatpush.msra.mxu0 0.0
    %1113 = vmatpush.msra.mxu0 %v1093
    %1114 = vmatmul.f32.gmra.mxu0 %v1096
    %v1115 = vpop.f32.mrf.mxu0
    %v1116 = vadd.f32 0.0, %v1115
    %1117 = vdwg.mxu0
    %1120 = vrot.lane.b32.xlu0 %v773, 8
    %v1121 = vpop.permute.xlu0 %1120
    %1122 = vrot.lane.b32.xlu0 %v800, 8
    %v1123 = vpop.permute.xlu0 %1122
    %1128 = vrot.lane.b32.xlu0 %v932, 16
    %v1129 = vpop.permute.xlu0 %1128
    %1130 = vrot.lane.b32.xlu0 %v958, 16
    %v1131 = vpop.permute.xlu0 %1130
    %1136 = vrot.lane.b32.xlu0 %v1090, 24
    %v1137 = vpop.permute.xlu0 %1136
    %1138 = vrot.lane.b32.xlu0 %v1116, 24
    %v1139 = vpop.permute.xlu0 %1138
    %v1142 = vsel %vm487, %v617, %v1121
    %v1143 = vsel %vm487, %v640, %v1123
    %vm1144 = vcmask 130048
    %v1145 = vsel %vm1144, %v1142, %v1129
    %v1146 = vsel %vm1144, %v1143, %v1131
    %vm1147 = vcmask 195584
    %v1148 = vsel %vm1147, %v1145, %v1137
    %v1149 = vsel %vm1147, %v1146, %v1139
    %v1150 = vld [vmem:[#allocation10] sm:$0xff]
    %v1151 = vld [vmem:[#allocation10 + $0x8] sm:$0xff]
    %v1152 = vld [vmem:[#allocation10 + $0x10] sm:$0xff]
    %v1153 = vld [vmem:[#allocation10 + $0x18] sm:$0xff]
    %v1154 = vld [vmem:[%s35] sm:$0x1]
    %v1156 = vperm.slane %v1154, 0
    %v1159 = vsel %vm299, %v1148, 0
    %v1162 = vsel %vm299, %v1149, 0
    %1164 = vmatpush.msra.mxu0 0.0
    %1165 = vmatpush.msra.mxu0 0.0
    %1166 = vmatpush.msra.mxu0 0.0
    %1167 = vmatpush.msra.mxu0 0.0
    %1168 = vmatpush.msra.mxu0 0.0
    %1169 = vmatpush.msra.mxu0 0.0
    %1170 = vmatpush.msra.mxu0 0.0
    %1171 = vmatpush.msra.mxu0 0.0
    %1172 = vmatpush.msra.mxu0 0.0
    %1173 = vmatpush.msra.mxu0 0.0
    %1174 = vmatpush.msra.mxu0 0.0
    %1175 = vmatpush.msra.mxu0 0.0
    %1176 = vmatpush.msra.mxu0 %v1153
    %1177 = vmatpush.msra.mxu0 %v1152
    %1178 = vmatpush.msra.mxu0 %v1151
    %1179 = vmatpush.msra.mxu0 %v1150
    %1180 = vmatmul.f32.gmra.mxu0 %v1159
    %v1181 = vpop.f32.mrf.mxu0
    %v1182 = vadd.f32 %v1156, %v1181
    %1183 = vmatmul.f32.gmra.mxu0 %v1162
    %v1184 = vpop.f32.mrf.mxu0
    %v1185 = vadd.f32 %v1156, %v1184
    %1186 = vdwg.mxu0
    %v1187 = vadd.f32 %v285, %v1182
    %v1188 = vadd.f32 %v286, %v1185
    %v1189 = vld [vmem:[%s13] sm:$0x1]
    %v1190 = vld [vmem:[%s15] sm:$0x1]
    %v1191 = vsel %vm299, %v1187, 0.0
    %1192 = vadd.xlane.f32.xlu0 %v1191
    %v1193 = vpop.xlane.xlu0 %1192
    %v1194 = vsel %vm299, %v1188, 0.0
    %1195 = vadd.xlane.f32.xlu0 %v1194
    %v1196 = vpop.xlane.xlu0 %1195
    %v1197 = vmul.f32 %v1193, 0.03125
    %v1198 = vmul.f32 %v1196, 0.03125
    %v1199 = vsub.f32 %v1187, %v1197
    %v1200 = vsub.f32 %v1188, %v1198
    %v1201 = vmul.f32 %v1199, %v1199
    %v1202 = vmul.f32 %v1200, %v1200
    %v1203 = vsel %vm299, %v1201, 0.0
    %1204 = vadd.xlane.f32.xlu0 %v1203
    %v1205 = vpop.xlane.xlu0 %1204
    %v1206 = vsel %vm299, %v1202, 0.0
    %1207 = vadd.xlane.f32.xlu0 %v1206
    %v1208 = vpop.xlane.xlu0 %1207
    %v1209 = vmul.f32 %v1205, 0.032258064
    %v1210 = vmul.f32 %v1208, 0.032258064
    %v1211 = vrsqrt.pop %v1209
    %v1212 = vmul.f32 %v1211, %v1209
    %v1213 = vmul.f32 %v1212, %v1211
    %v1214 = vmul.f32 0.5, %v1213
    %v1215 = vsub.f32 1.5, %v1214
    %v1216 = vmul.f32 %v1211, %v1215
    %v1217 = vmul.f32 %v1209, %v1216
    %vm1218 = vcmp.eq.f32.partialorder %v1209, inf
    %v1219 = vsel %vm1218, %v1209, %v1217
    %vm1220 = vcmp.eq.f32.partialorder %v1209, 0.0
    %v1221 = vand.u32 %v1209, 2147483648
    %v1222 = vsel %vm1220, %v1221, %v1219
    %v1223 = vrsqrt.pop %v1210
    %v1224 = vmul.f32 %v1223, %v1210
    %v1225 = vmul.f32 %v1224, %v1223
    %v1226 = vmul.f32 0.5, %v1225
    %v1227 = vsub.f32 1.5, %v1226
    %v1228 = vmul.f32 %v1223, %v1227
    %v1229 = vmul.f32 %v1210, %v1228
    %vm1230 = vcmp.eq.f32.partialorder %v1210, inf
    %v1231 = vsel %vm1230, %v1210, %v1229
    %vm1232 = vcmp.eq.f32.partialorder %v1210, 0.0
    %v1233 = vand.u32 %v1210, 2147483648
    %v1234 = vsel %vm1232, %v1233, %v1231
    %v1236 = vperm.slane %v1189, 0
    %v1238 = vmul.f32 %v1236, %v1199
    %v1239 = vmul.f32 %v1236, %v1200
    %v1240 = vadd.f32 %v1222, 1e-06
    %v1241 = vadd.f32 %v1234, 1e-06
    %v1242 = vrcp.pop %v1240
    %v1243 = vmul.f32 %v1240, %v1242
    %v1244 = vsub.f32 1.0, %v1243
    %v1245 = vmul.f32 %v1242, %v1244
    %v1246 = vadd.f32 %v1242, %v1245
    %vm1247 = vweird.f32 %v1240
    %vm1248 = vweird.f32 %v1242
    %vm1249 = vmor %vm1247, %vm1248
    %v1250 = vsel %vm1249, %v1242, %v1246
    %v1251 = vand.u32 2147483647, %v1240
    %vm1252 = vcmp.eq.f32.partialorder %v1251, 8.507059e+37
    %v1253 = vand.u32 %v1240, 2147483648
    %v1254 = vor.u32 1.1754944e-38, %v1253
    %v1255 = vsel %vm1252, %v1254, %v1250
    %v1256 = vmul.f32 %v1238, %v1255
    %v1257 = vrcp.pop %v1241
    %v1258 = vmul.f32 %v1241, %v1257
    %v1259 = vsub.f32 1.0, %v1258
    %v1260 = vmul.f32 %v1257, %v1259
    %v1261 = vadd.f32 %v1257, %v1260
    %vm1262 = vweird.f32 %v1241
    %vm1263 = vweird.f32 %v1257
    %vm1264 = vmor %vm1262, %vm1263
    %v1265 = vsel %vm1264, %v1257, %v1261
    %v1266 = vand.u32 2147483647, %v1241
    %vm1267 = vcmp.eq.f32.partialorder %v1266, 8.507059e+37
    %v1268 = vand.u32 %v1241, 2147483648
    %v1269 = vor.u32 1.1754944e-38, %v1268
    %v1270 = vsel %vm1267, %v1269, %v1265
    %v1271 = vmul.f32 %v1239, %v1270
    %v1273 = vperm.slane %v1190, 0
    %v1275 = vadd.f32 %v1256, %v1273
    %v1276 = vadd.f32 %v1271, %v1273
    %v1277 = vld [vmem:[#allocation11] sm:$0xff]
    %v1278 = vld [vmem:[#allocation11 + $0x8] sm:$0xff]
    %v1279 = vld [vmem:[#allocation11 + $0x10] sm:$0xff]
    %v1280 = vld [vmem:[#allocation11 + $0x18] sm:$0xff]
    %v1281 = vld [vmem:[%s39] sm:$0x1]
    %v1283 = vperm.slane %v1281, 0
    %v1286 = vsel %vm299, %v1275, 0
    %v1289 = vsel %vm299, %v1276, 0
    %1291 = vmatpush.msra.mxu0 0.0
    %1292 = vmatpush.msra.mxu0 0.0
    %1293 = vmatpush.msra.mxu0 0.0
    %1294 = vmatpush.msra.mxu0 0.0
    %1295 = vmatpush.msra.mxu0 0.0
    %1296 = vmatpush.msra.mxu0 0.0
    %1297 = vmatpush.msra.mxu0 0.0
    %1298 = vmatpush.msra.mxu0 0.0
    %1299 = vmatpush.msra.mxu0 0.0
    %1300 = vmatpush.msra.mxu0 0.0
    %1301 = vmatpush.msra.mxu0 0.0
    %1302 = vmatpush.msra.mxu0 0.0
    %1303 = vmatpush.msra.mxu0 %v1280
    %1304 = vmatpush.msra.mxu0 %v1279
    %1305 = vmatpush.msra.mxu0 %v1278
    %1306 = vmatpush.msra.mxu0 %v1277
    %1307 = vmatmul.f32.gmra.mxu0 %v1286
    %v1308 = vpop.f32.mrf.mxu0
    %v1309 = vadd.f32 %v1283, %v1308
    %1310 = vmatmul.f32.gmra.mxu0 %v1289
    %v1311 = vpop.f32.mrf.mxu0
    %v1312 = vadd.f32 %v1283, %v1311
    %1313 = vdwg.mxu0
    %v1314 = vmul.f32 %v1309, 0.35355338
    %v1315 = vmul.f32 %v1312, 0.35355338
    %v1316 = vld [vmem:[#allocation13] sm:$0xff]
    %v1317 = vld [vmem:[#allocation13 + $0x8] sm:$0xff]
    %v1318 = vld [vmem:[#allocation13 + $0x10] sm:$0xff]
    %v1319 = vld [vmem:[#allocation13 + $0x18] sm:$0xff]
    %v1320 = vld [vmem:[%s43] sm:$0x1]
    %v1322 = vperm.slane %v1320, 0
    %v1325 = vsel %vm299, %v287, 0
    %v1328 = vsel %vm299, %v288, 0
    %1330 = vmatpush.msra.mxu0 0.0
    %1331 = vmatpush.msra.mxu0 0.0
    %1332 = vmatpush.msra.mxu0 0.0
    %1333 = vmatpush.msra.mxu0 0.0
    %1334 = vmatpush.msra.mxu0 0.0
    %1335 = vmatpush.msra.mxu0 0.0
    %1336 = vmatpush.msra.mxu0 0.0
    %1337 = vmatpush.msra.mxu0 0.0
    %1338 = vmatpush.msra.mxu0 0.0
    %1339 = vmatpush.msra.mxu0 0.0
    %1340 = vmatpush.msra.mxu0 0.0
    %1341 = vmatpush.msra.mxu0 0.0
    %1342 = vmatpush.msra.mxu0 %v1319
    %1343 = vmatpush.msra.mxu0 %v1318
    %1344 = vmatpush.msra.mxu0 %v1317
    %1345 = vmatpush.msra.mxu0 %v1316
    %1346 = vmatmul.f32.gmra.mxu0 %v1325
    %v1347 = vpop.f32.mrf.mxu0
    %v1348 = vadd.f32 %v1322, %v1347
    %1349 = vmatmul.f32.gmra.mxu0 %v1328
    %v1350 = vpop.f32.mrf.mxu0
    %v1351 = vadd.f32 %v1322, %v1350
    %1352 = vdwg.mxu0
    %v1353 = vld [vmem:[#allocation14] sm:$0xff]
    %v1354 = vld [vmem:[#allocation14 + $0x8] sm:$0xff]
    %v1355 = vld [vmem:[#allocation14 + $0x10] sm:$0xff]
    %v1356 = vld [vmem:[#allocation14 + $0x18] sm:$0xff]
    %v1357 = vld [vmem:[%s47] sm:$0x1]
    %v1359 = vperm.slane %v1357, 0
    %1361 = vmatpush.msra.mxu0 0.0
    %1362 = vmatpush.msra.mxu0 0.0
    %1363 = vmatpush.msra.mxu0 0.0
    %1364 = vmatpush.msra.mxu0 0.0
    %1365 = vmatpush.msra.mxu0 0.0
    %1366 = vmatpush.msra.mxu0 0.0
    %1367 = vmatpush.msra.mxu0 0.0
    %1368 = vmatpush.msra.mxu0 0.0
    %1369 = vmatpush.msra.mxu0 0.0
    %1370 = vmatpush.msra.mxu0 0.0
    %1371 = vmatpush.msra.mxu0 0.0
    %1372 = vmatpush.msra.mxu0 0.0
    %1373 = vmatpush.msra.mxu0 %v1356
    %1374 = vmatpush.msra.mxu0 %v1355
    %1375 = vmatpush.msra.mxu0 %v1354
    %1376 = vmatpush.msra.mxu0 %v1353
    %1377 = vmatmul.f32.gmra.mxu0 %v1325
    %v1378 = vpop.f32.mrf.mxu0
    %v1379 = vadd.f32 %v1359, %v1378
    %1380 = vmatmul.f32.gmra.mxu0 %v1328
    %v1381 = vpop.f32.mrf.mxu0
    %v1382 = vadd.f32 %v1359, %v1381
    %1383 = vdwg.mxu0
    %v1385 = vsel %vm487, %v1314, 0
    %v1388 = vsel %vm487, %v1348, 0
    %1390 = vmatpush.xpose.msra.mxu0 0.0
    %1391 = vmatpush.xpose.msra.mxu0 0.0
    %1392 = vmatpush.xpose.msra.mxu0 0.0
    %1393 = vmatpush.xpose.msra.mxu0 0.0
    %1394 = vmatpush.xpose.msra.mxu0 0.0
    %1395 = vmatpush.xpose.msra.mxu0 0.0
    %1396 = vmatpush.xpose.msra.mxu0 0.0
    %1397 = vmatpush.xpose.msra.mxu0 0.0
    %1398 = vmatpush.xpose.msra.mxu0 0.0
    %1399 = vmatpush.xpose.msra.mxu0 0.0
    %1400 = vmatpush.xpose.msra.mxu0 0.0
    %1401 = vmatpush.xpose.msra.mxu0 0.0
    %1402 = vmatpush.xpose.msra.mxu0 0.0
    %1403 = vmatpush.xpose.msra.mxu0 0.0
    %1404 = vmatpush.xpose.msra.mxu0 0.0
    %1405 = vmatpush.xpose.msra.mxu0 %v1388
    %1406 = vmatmul.f32.gmra.mxu0 %v1385
    %v1407 = vpop.f32.mrf.mxu0
    %v1408 = vadd.f32 0.0, %v1407
    %1409 = vdwg.mxu0
    %v1411 = vsel %vm487, %v1315, 0
    %v1414 = vsel %vm487, %v1351, 0
    %1416 = vmatpush.xpose.msra.mxu0 0.0
    %1417 = vmatpush.xpose.msra.mxu0 0.0
    %1418 = vmatpush.xpose.msra.mxu0 0.0
    %1419 = vmatpush.xpose.msra.mxu0 0.0
    %1420 = vmatpush.xpose.msra.mxu0 0.0
    %1421 = vmatpush.xpose.msra.mxu0 0.0
    %1422 = vmatpush.xpose.msra.mxu0 0.0
    %1423 = vmatpush.xpose.msra.mxu0 0.0
    %1424 = vmatpush.xpose.msra.mxu0 0.0
    %1425 = vmatpush.xpose.msra.mxu0 0.0
    %1426 = vmatpush.xpose.msra.mxu0 0.0
    %1427 = vmatpush.xpose.msra.mxu0 0.0
    %1428 = vmatpush.xpose.msra.mxu0 0.0
    %1429 = vmatpush.xpose.msra.mxu0 0.0
    %1430 = vmatpush.xpose.msra.mxu0 0.0
    %1431 = vmatpush.xpose.msra.mxu0 %v1414
    %1432 = vmatmul.f32.gmra.mxu0 %v1411
    %v1433 = vpop.f32.mrf.mxu0
    %v1434 = vadd.f32 0.0, %v1433
    %1435 = vdwg.mxu0
    %v1436 = vsel %vm295, 16843009, 0
    %v1437 = vsel %vm296, 16843009, 0
    %v1438 = vunpack.c.0.s8 %v1436
    %v1439 = vunpack.c.0.s8 %v1437
    %vm1440 = vcmp.ne.s32.totalorder %v1438, 0
    %vm1441 = vcmp.ne.s32.totalorder %v1439, 0
    %v1442 = vsel %vm1440, %v1408, -1e+09
    %v1443 = vsel %vm1441, %v1434, -1e+09
    %v1444 = vsel %vm487, %v1442, -inf
    %1445 = vmax.xlane.f32.xlu0 %v1444
    %v1446 = vpop.xlane.xlu0 %1445
    %v1447 = vsel %vm487, %v1443, -inf
    %1448 = vmax.xlane.f32.xlu0 %v1447
    %v1449 = vpop.xlane.xlu0 %1448
    %v1450 = vsub.f32 %v1442, %v1446
    %v1451 = vsub.f32 %v1443, %v1449
    %v1452 = vmul.f32 %v1450, 1.442695
    %v1453 = vpow.pop %v1452
    %v1454 = vmul.f32 %v1451, 1.442695
    %v1455 = vpow.pop %v1454
    %v1456 = vsel %vm487, %v1453, 0.0
    %1457 = vadd.xlane.f32.xlu0 %v1456
    %v1458 = vpop.xlane.xlu0 %1457
    %v1459 = vsel %vm487, %v1455, 0.0
    %1460 = vadd.xlane.f32.xlu0 %v1459
    %v1461 = vpop.xlane.xlu0 %1460
    %v1462 = vrcp.pop %v1458
    %v1463 = vmul.f32 %v1458, %v1462
    %v1464 = vsub.f32 1.0, %v1463
    %v1465 = vmul.f32 %v1462, %v1464
    %v1466 = vadd.f32 %v1462, %v1465
    %vm1467 = vweird.f32 %v1458
    %vm1468 = vweird.f32 %v1462
    %vm1469 = vmor %vm1467, %vm1468
    %v1470 = vsel %vm1469, %v1462, %v1466
    %v1471 = vand.u32 2147483647, %v1458
    %vm1472 = vcmp.eq.f32.partialorder %v1471, 8.507059e+37
    %v1473 = vand.u32 %v1458, 2147483648
    %v1474 = vor.u32 1.1754944e-38, %v1473
    %v1475 = vsel %vm1472, %v1474, %v1470
    %v1476 = vmul.f32 %v1453, %v1475
    %v1477 = vrcp.pop %v1461
    %v1478 = vmul.f32 %v1461, %v1477
    %v1479 = vsub.f32 1.0, %v1478
    %v1480 = vmul.f32 %v1477, %v1479
    %v1481 = vadd.f32 %v1477, %v1480
    %vm1482 = vweird.f32 %v1461
    %vm1483 = vweird.f32 %v1477
    %vm1484 = vmor %vm1482, %vm1483
    %v1485 = vsel %vm1484, %v1477, %v1481
    %v1486 = vand.u32 2147483647, %v1461
    %vm1487 = vcmp.eq.f32.partialorder %v1486, 8.507059e+37
    %v1488 = vand.u32 %v1461, 2147483648
    %v1489 = vor.u32 1.1754944e-38, %v1488
    %v1490 = vsel %vm1487, %v1489, %v1485
    %v1491 = vmul.f32 %v1455, %v1490
    %v1493 = vsel %vm487, %v1476, 0
    %1495 = vmatpush.msra.mxu0 0.0
    %1496 = vmatpush.msra.mxu0 0.0
    %1497 = vmatpush.msra.mxu0 0.0
    %1498 = vmatpush.msra.mxu0 0.0
    %1499 = vmatpush.msra.mxu0 0.0
    %1500 = vmatpush.msra.mxu0 0.0
    %1501 = vmatpush.msra.mxu0 0.0
    %1502 = vmatpush.msra.mxu0 0.0
    %1503 = vmatpush.msra.mxu0 0.0
    %1504 = vmatpush.msra.mxu0 0.0
    %1505 = vmatpush.msra.mxu0 0.0
    %1506 = vmatpush.msra.mxu0 0.0
    %1507 = vmatpush.msra.mxu0 0.0
    %1508 = vmatpush.msra.mxu0 0.0
    %1509 = vmatpush.msra.mxu0 0.0
    %1510 = vmatpush.msra.mxu0 %v1379
    %1511 = vmatmul.f32.gmra.mxu0 %v1493
    %v1512 = vpop.f32.mrf.mxu0
    %v1513 = vadd.f32 0.0, %v1512
    %1514 = vdwg.mxu0
    %v1516 = vsel %vm487, %v1491, 0
    %1518 = vmatpush.msra.mxu0 0.0
    %1519 = vmatpush.msra.mxu0 0.0
    %1520 = vmatpush.msra.mxu0 0.0
    %1521 = vmatpush.msra.mxu0 0.0
    %1522 = vmatpush.msra.mxu0 0.0
    %1523 = vmatpush.msra.mxu0 0.0
    %1524 = vmatpush.msra.mxu0 0.0
    %1525 = vmatpush.msra.mxu0 0.0
    %1526 = vmatpush.msra.mxu0 0.0
    %1527 = vmatpush.msra.mxu0 0.0
    %1528 = vmatpush.msra.mxu0 0.0
    %1529 = vmatpush.msra.mxu0 0.0
    %1530 = vmatpush.msra.mxu0 0.0
    %1531 = vmatpush.msra.mxu0 0.0
    %1532 = vmatpush.msra.mxu0 0.0
    %1533 = vmatpush.msra.mxu0 %v1382
    %1534 = vmatmul.f32.gmra.mxu0 %v1516
    %v1535 = vpop.f32.mrf.mxu0
    %v1536 = vadd.f32 0.0, %v1535
    %1537 = vdwg.mxu0
    %1538 = vrot.lane.b32.xlu0 %v1314, 120
    %v1539 = vpop.permute.xlu0 %1538
    %1540 = vrot.lane.b32.xlu0 %v1348, 120
    %v1541 = vpop.permute.xlu0 %1540
    %v1542 = vsel %vm487, %v1539, 0
    %v1544 = vsel %vm487, %v1541, 0
    %1546 = vmatpush.xpose.msra.mxu0 0.0
    %1547 = vmatpush.xpose.msra.mxu0 0.0
    %1548 = vmatpush.xpose.msra.mxu0 0.0
    %1549 = vmatpush.xpose.msra.mxu0 0.0
    %1550 = vmatpush.xpose.msra.mxu0 0.0
    %1551 = vmatpush.xpose.msra.mxu0 0.0
    %1552 = vmatpush.xpose.msra.mxu0 0.0
    %1553 = vmatpush.xpose.msra.mxu0 0.0
    %1554 = vmatpush.xpose.msra.mxu0 0.0
    %1555 = vmatpush.xpose.msra.mxu0 0.0
    %1556 = vmatpush.xpose.msra.mxu0 0.0
    %1557 = vmatpush.xpose.msra.mxu0 0.0
    %1558 = vmatpush.xpose.msra.mxu0 0.0
    %1559 = vmatpush.xpose.msra.mxu0 0.0
    %1560 = vmatpush.xpose.msra.mxu0 0.0
    %1561 = vmatpush.xpose.msra.mxu0 %v1544
    %1562 = vmatmul.f32.gmra.mxu0 %v1542
    %v1563 = vpop.f32.mrf.mxu0
    %v1564 = vadd.f32 0.0, %v1563
    %1565 = vdwg.mxu0
    %1566 = vrot.lane.b32.xlu0 %v1315, 120
    %v1567 = vpop.permute.xlu0 %1566
    %1568 = vrot.lane.b32.xlu0 %v1351, 120
    %v1569 = vpop.permute.xlu0 %1568
    %v1570 = vsel %vm487, %v1567, 0
    %v1572 = vsel %vm487, %v1569, 0
    %1574 = vmatpush.xpose.msra.mxu0 0.0
    %1575 = vmatpush.xpose.msra.mxu0 0.0
    %1576 = vmatpush.xpose.msra.mxu0 0.0
    %1577 = vmatpush.xpose.msra.mxu0 0.0
    %1578 = vmatpush.xpose.msra.mxu0 0.0
    %1579 = vmatpush.xpose.msra.mxu0 0.0
    %1580 = vmatpush.xpose.msra.mxu0 0.0
    %1581 = vmatpush.xpose.msra.mxu0 0.0
    %1582 = vmatpush.xpose.msra.mxu0 0.0
    %1583 = vmatpush.xpose.msra.mxu0 0.0
    %1584 = vmatpush.xpose.msra.mxu0 0.0
    %1585 = vmatpush.xpose.msra.mxu0 0.0
    %1586 = vmatpush.xpose.msra.mxu0 0.0
    %1587 = vmatpush.xpose.msra.mxu0 0.0
    %1588 = vmatpush.xpose.msra.mxu0 0.0
    %1589 = vmatpush.xpose.msra.mxu0 %v1572
    %1590 = vmatmul.f32.gmra.mxu0 %v1570
    %v1591 = vpop.f32.mrf.mxu0
    %v1592 = vadd.f32 0.0, %v1591
    %1593 = vdwg.mxu0
    %v1594 = vsel %vm1440, %v1564, -1e+09
    %v1595 = vsel %vm1441, %v1592, -1e+09
    %v1596 = vsel %vm487, %v1594, -inf
    %1597 = vmax.xlane.f32.xlu0 %v1596
    %v1598 = vpop.xlane.xlu0 %1597
    %v1599 = vsel %vm487, %v1595, -inf
    %1600 = vmax.xlane.f32.xlu0 %v1599
    %v1601 = vpop.xlane.xlu0 %1600
    %v1602 = vsub.f32 %v1594, %v1598
    %v1603 = vsub.f32 %v1595, %v1601
    %v1604 = vmul.f32 %v1602, 1.442695
    %v1605 = vpow.pop %v1604
    %v1606 = vmul.f32 %v1603, 1.442695
    %v1607 = vpow.pop %v1606
    %v1608 = vsel %vm487, %v1605, 0.0
    %1609 = vadd.xlane.f32.xlu0 %v1608
    %v1610 = vpop.xlane.xlu0 %1609
    %v1611 = vsel %vm487, %v1607, 0.0
    %1612 = vadd.xlane.f32.xlu0 %v1611
    %v1613 = vpop.xlane.xlu0 %1612
    %v1614 = vrcp.pop %v1610
    %v1615 = vmul.f32 %v1610, %v1614
    %v1616 = vsub.f32 1.0, %v1615
    %v1617 = vmul.f32 %v1614, %v1616
    %v1618 = vadd.f32 %v1614, %v1617
    %vm1619 = vweird.f32 %v1610
    %vm1620 = vweird.f32 %v1614
    %vm1621 = vmor %vm1619, %vm1620
    %v1622 = vsel %vm1621, %v1614, %v1618
    %v1623 = vand.u32 2147483647, %v1610
    %vm1624 = vcmp.eq.f32.partialorder %v1623, 8.507059e+37
    %v1625 = vand.u32 %v1610, 2147483648
    %v1626 = vor.u32 1.1754944e-38, %v1625
    %v1627 = vsel %vm1624, %v1626, %v1622
    %v1628 = vmul.f32 %v1605, %v1627
    %v1629 = vrcp.pop %v1613
    %v1630 = vmul.f32 %v1613, %v1629
    %v1631 = vsub.f32 1.0, %v1630
    %v1632 = vmul.f32 %v1629, %v1631
    %v1633 = vadd.f32 %v1629, %v1632
    %vm1634 = vweird.f32 %v1613
    %vm1635 = vweird.f32 %v1629
    %vm1636 = vmor %vm1634, %vm1635
    %v1637 = vsel %vm1636, %v1629, %v1633
    %v1638 = vand.u32 2147483647, %v1613
    %vm1639 = vcmp.eq.f32.partialorder %v1638, 8.507059e+37
    %v1640 = vand.u32 %v1613, 2147483648
    %v1641 = vor.u32 1.1754944e-38, %v1640
    %v1642 = vsel %vm1639, %v1641, %v1637
    %v1643 = vmul.f32 %v1607, %v1642
    %1645 = vrot.lane.b32.xlu0 %v1379, 120
    %v1646 = vpop.permute.xlu0 %1645
    %v1649 = vsel %vm487, %v1628, 0
    %1651 = vmatpush.msra.mxu0 0.0
    %1652 = vmatpush.msra.mxu0 0.0
    %1653 = vmatpush.msra.mxu0 0.0
    %1654 = vmatpush.msra.mxu0 0.0
    %1655 = vmatpush.msra.mxu0 0.0
    %1656 = vmatpush.msra.mxu0 0.0
    %1657 = vmatpush.msra.mxu0 0.0
    %1658 = vmatpush.msra.mxu0 0.0
    %1659 = vmatpush.msra.mxu0 0.0
    %1660 = vmatpush.msra.mxu0 0.0
    %1661 = vmatpush.msra.mxu0 0.0
    %1662 = vmatpush.msra.mxu0 0.0
    %1663 = vmatpush.msra.mxu0 0.0
    %1664 = vmatpush.msra.mxu0 0.0
    %1665 = vmatpush.msra.mxu0 0.0
    %1666 = vmatpush.msra.mxu0 %v1646
    %1667 = vmatmul.f32.gmra.mxu0 %v1649
    %v1668 = vpop.f32.mrf.mxu0
    %v1669 = vadd.f32 0.0, %v1668
    %1670 = vdwg.mxu0
    %1672 = vrot.lane.b32.xlu0 %v1382, 120
    %v1673 = vpop.permute.xlu0 %1672
    %v1676 = vsel %vm487, %v1643, 0
    %1678 = vmatpush.msra.mxu0 0.0
    %1679 = vmatpush.msra.mxu0 0.0
    %1680 = vmatpush.msra.mxu0 0.0
    %1681 = vmatpush.msra.mxu0 0.0
    %1682 = vmatpush.msra.mxu0 0.0
    %1683 = vmatpush.msra.mxu0 0.0
    %1684 = vmatpush.msra.mxu0 0.0
    %1685 = vmatpush.msra.mxu0 0.0
    %1686 = vmatpush.msra.mxu0 0.0
    %1687 = vmatpush.msra.mxu0 0.0
    %1688 = vmatpush.msra.mxu0 0.0
    %1689 = vmatpush.msra.mxu0 0.0
    %1690 = vmatpush.msra.mxu0 0.0
    %1691 = vmatpush.msra.mxu0 0.0
    %1692 = vmatpush.msra.mxu0 0.0
    %1693 = vmatpush.msra.mxu0 %v1673
    %1694 = vmatmul.f32.gmra.mxu0 %v1676
    %v1695 = vpop.f32.mrf.mxu0
    %v1696 = vadd.f32 0.0, %v1695
    %1697 = vdwg.mxu0
    %1698 = vrot.lane.b32.xlu0 %v1314, 112
    %v1699 = vpop.permute.xlu0 %1698
    %1700 = vrot.lane.b32.xlu0 %v1348, 112
    %v1701 = vpop.permute.xlu0 %1700
    %v1702 = vsel %vm487, %v1699, 0
    %v1704 = vsel %vm487, %v1701, 0
    %1706 = vmatpush.xpose.msra.mxu0 0.0
    %1707 = vmatpush.xpose.msra.mxu0 0.0
    %1708 = vmatpush.xpose.msra.mxu0 0.0
    %1709 = vmatpush.xpose.msra.mxu0 0.0
    %1710 = vmatpush.xpose.msra.mxu0 0.0
    %1711 = vmatpush.xpose.msra.mxu0 0.0
    %1712 = vmatpush.xpose.msra.mxu0 0.0
    %1713 = vmatpush.xpose.msra.mxu0 0.0
    %1714 = vmatpush.xpose.msra.mxu0 0.0
    %1715 = vmatpush.xpose.msra.mxu0 0.0
    %1716 = vmatpush.xpose.msra.mxu0 0.0
    %1717 = vmatpush.xpose.msra.mxu0 0.0
    %1718 = vmatpush.xpose.msra.mxu0 0.0
    %1719 = vmatpush.xpose.msra.mxu0 0.0
    %1720 = vmatpush.xpose.msra.mxu0 0.0
    %1721 = vmatpush.xpose.msra.mxu0 %v1704
    %1722 = vmatmul.f32.gmra.mxu0 %v1702
    %v1723 = vpop.f32.mrf.mxu0
    %v1724 = vadd.f32 0.0, %v1723
    %1725 = vdwg.mxu0
    %1726 = vrot.lane.b32.xlu0 %v1315, 112
    %v1727 = vpop.permute.xlu0 %1726
    %1728 = vrot.lane.b32.xlu0 %v1351, 112
    %v1729 = vpop.permute.xlu0 %1728
    %v1730 = vsel %vm487, %v1727, 0
    %v1732 = vsel %vm487, %v1729, 0
    %1734 = vmatpush.xpose.msra.mxu0 0.0
    %1735 = vmatpush.xpose.msra.mxu0 0.0
    %1736 = vmatpush.xpose.msra.mxu0 0.0
    %1737 = vmatpush.xpose.msra.mxu0 0.0
    %1738 = vmatpush.xpose.msra.mxu0 0.0
    %1739 = vmatpush.xpose.msra.mxu0 0.0
    %1740 = vmatpush.xpose.msra.mxu0 0.0
    %1741 = vmatpush.xpose.msra.mxu0 0.0
    %1742 = vmatpush.xpose.msra.mxu0 0.0
    %1743 = vmatpush.xpose.msra.mxu0 0.0
    %1744 = vmatpush.xpose.msra.mxu0 0.0
    %1745 = vmatpush.xpose.msra.mxu0 0.0
    %1746 = vmatpush.xpose.msra.mxu0 0.0
    %1747 = vmatpush.xpose.msra.mxu0 0.0
    %1748 = vmatpush.xpose.msra.mxu0 0.0
    %1749 = vmatpush.xpose.msra.mxu0 %v1732
    %1750 = vmatmul.f32.gmra.mxu0 %v1730
    %v1751 = vpop.f32.mrf.mxu0
    %v1752 = vadd.f32 0.0, %v1751
    %1753 = vdwg.mxu0
    %v1754 = vsel %vm1440, %v1724, -1e+09
    %v1755 = vsel %vm1441, %v1752, -1e+09
    %v1756 = vsel %vm487, %v1754, -inf
    %1757 = vmax.xlane.f32.xlu0 %v1756
    %v1758 = vpop.xlane.xlu0 %1757
    %v1759 = vsel %vm487, %v1755, -inf
    %1760 = vmax.xlane.f32.xlu0 %v1759
    %v1761 = vpop.xlane.xlu0 %1760
    %v1762 = vsub.f32 %v1754, %v1758
    %v1763 = vsub.f32 %v1755, %v1761
    %v1764 = vmul.f32 %v1762, 1.442695
    %v1765 = vpow.pop %v1764
    %v1766 = vmul.f32 %v1763, 1.442695
    %v1767 = vpow.pop %v1766
    %v1768 = vsel %vm487, %v1765, 0.0
    %1769 = vadd.xlane.f32.xlu0 %v1768
    %v1770 = vpop.xlane.xlu0 %1769
    %v1771 = vsel %vm487, %v1767, 0.0
    %1772 = vadd.xlane.f32.xlu0 %v1771
    %v1773 = vpop.xlane.xlu0 %1772
    %v1774 = vrcp.pop %v1770
    %v1775 = vmul.f32 %v1770, %v1774
    %v1776 = vsub.f32 1.0, %v1775
    %v1777 = vmul.f32 %v1774, %v1776
    %v1778 = vadd.f32 %v1774, %v1777
    %vm1779 = vweird.f32 %v1770
    %vm1780 = vweird.f32 %v1774
    %vm1781 = vmor %vm1779, %vm1780
    %v1782 = vsel %vm1781, %v1774, %v1778
    %v1783 = vand.u32 2147483647, %v1770
    %vm1784 = vcmp.eq.f32.partialorder %v1783, 8.507059e+37
    %v1785 = vand.u32 %v1770, 2147483648
    %v1786 = vor.u32 1.1754944e-38, %v1785
    %v1787 = vsel %vm1784, %v1786, %v1782
    %v1788 = vmul.f32 %v1765, %v1787
    %v1789 = vrcp.pop %v1773
    %v1790 = vmul.f32 %v1773, %v1789
    %v1791 = vsub.f32 1.0, %v1790
    %v1792 = vmul.f32 %v1789, %v1791
    %v1793 = vadd.f32 %v1789, %v1792
    %vm1794 = vweird.f32 %v1773
    %vm1795 = vweird.f32 %v1789
    %vm1796 = vmor %vm1794, %vm1795
    %v1797 = vsel %vm1796, %v1789, %v1793
    %v1798 = vand.u32 2147483647, %v1773
    %vm1799 = vcmp.eq.f32.partialorder %v1798, 8.507059e+37
    %v1800 = vand.u32 %v1773, 2147483648
    %v1801 = vor.u32 1.1754944e-38, %v1800
    %v1802 = vsel %vm1799, %v1801, %v1797
    %v1803 = vmul.f32 %v1767, %v1802
    %1804 = vrot.lane.b32.xlu0 %v1379, 112
    %v1805 = vpop.permute.xlu0 %1804
    %v1808 = vsel %vm487, %v1788, 0
    %1810 = vmatpush.msra.mxu0 0.0
    %1811 = vmatpush.msra.mxu0 0.0
    %1812 = vmatpush.msra.mxu0 0.0
    %1813 = vmatpush.msra.mxu0 0.0
    %1814 = vmatpush.msra.mxu0 0.0
    %1815 = vmatpush.msra.mxu0 0.0
    %1816 = vmatpush.msra.mxu0 0.0
    %1817 = vmatpush.msra.mxu0 0.0
    %1818 = vmatpush.msra.mxu0 0.0
    %1819 = vmatpush.msra.mxu0 0.0
    %1820 = vmatpush.msra.mxu0 0.0
    %1821 = vmatpush.msra.mxu0 0.0
    %1822 = vmatpush.msra.mxu0 0.0
    %1823 = vmatpush.msra.mxu0 0.0
    %1824 = vmatpush.msra.mxu0 0.0
    %1825 = vmatpush.msra.mxu0 %v1805
    %1826 = vmatmul.f32.gmra.mxu0 %v1808
    %v1827 = vpop.f32.mrf.mxu0
    %v1828 = vadd.f32 0.0, %v1827
    %1829 = vdwg.mxu0
    %1830 = vrot.lane.b32.xlu0 %v1382, 112
    %v1831 = vpop.permute.xlu0 %1830
    %v1834 = vsel %vm487, %v1803, 0
    %1836 = vmatpush.msra.mxu0 0.0
    %1837 = vmatpush.msra.mxu0 0.0
    %1838 = vmatpush.msra.mxu0 0.0
    %1839 = vmatpush.msra.mxu0 0.0
    %1840 = vmatpush.msra.mxu0 0.0
    %1841 = vmatpush.msra.mxu0 0.0
    %1842 = vmatpush.msra.mxu0 0.0
    %1843 = vmatpush.msra.mxu0 0.0
    %1844 = vmatpush.msra.mxu0 0.0
    %1845 = vmatpush.msra.mxu0 0.0
    %1846 = vmatpush.msra.mxu0 0.0
    %1847 = vmatpush.msra.mxu0 0.0
    %1848 = vmatpush.msra.mxu0 0.0
    %1849 = vmatpush.msra.mxu0 0.0
    %1850 = vmatpush.msra.mxu0 0.0
    %1851 = vmatpush.msra.mxu0 %v1831
    %1852 = vmatmul.f32.gmra.mxu0 %v1834
    %v1853 = vpop.f32.mrf.mxu0
    %v1854 = vadd.f32 0.0, %v1853
    %1855 = vdwg.mxu0
    %1856 = vrot.lane.b32.xlu0 %v1314, 104
    %v1857 = vpop.permute.xlu0 %1856
    %1858 = vrot.lane.b32.xlu0 %v1348, 104
    %v1859 = vpop.permute.xlu0 %1858
    %v1860 = vsel %vm487, %v1857, 0
    %v1862 = vsel %vm487, %v1859, 0
    %1864 = vmatpush.xpose.msra.mxu0 0.0
    %1865 = vmatpush.xpose.msra.mxu0 0.0
    %1866 = vmatpush.xpose.msra.mxu0 0.0
    %1867 = vmatpush.xpose.msra.mxu0 0.0
    %1868 = vmatpush.xpose.msra.mxu0 0.0
    %1869 = vmatpush.xpose.msra.mxu0 0.0
    %1870 = vmatpush.xpose.msra.mxu0 0.0
    %1871 = vmatpush.xpose.msra.mxu0 0.0
    %1872 = vmatpush.xpose.msra.mxu0 0.0
    %1873 = vmatpush.xpose.msra.mxu0 0.0
    %1874 = vmatpush.xpose.msra.mxu0 0.0
    %1875 = vmatpush.xpose.msra.mxu0 0.0
    %1876 = vmatpush.xpose.msra.mxu0 0.0
    %1877 = vmatpush.xpose.msra.mxu0 0.0
    %1878 = vmatpush.xpose.msra.mxu0 0.0
    %1879 = vmatpush.xpose.msra.mxu0 %v1862
    %1880 = vmatmul.f32.gmra.mxu0 %v1860
    %v1881 = vpop.f32.mrf.mxu0
    %v1882 = vadd.f32 0.0, %v1881
    %1883 = vdwg.mxu0
    %1884 = vrot.lane.b32.xlu0 %v1315, 104
    %v1885 = vpop.permute.xlu0 %1884
    %1886 = vrot.lane.b32.xlu0 %v1351, 104
    %v1887 = vpop.permute.xlu0 %1886
    %v1888 = vsel %vm487, %v1885, 0
    %v1890 = vsel %vm487, %v1887, 0
    %1892 = vmatpush.xpose.msra.mxu0 0.0
    %1893 = vmatpush.xpose.msra.mxu0 0.0
    %1894 = vmatpush.xpose.msra.mxu0 0.0
    %1895 = vmatpush.xpose.msra.mxu0 0.0
    %1896 = vmatpush.xpose.msra.mxu0 0.0
    %1897 = vmatpush.xpose.msra.mxu0 0.0
    %1898 = vmatpush.xpose.msra.mxu0 0.0
    %1899 = vmatpush.xpose.msra.mxu0 0.0
    %1900 = vmatpush.xpose.msra.mxu0 0.0
    %1901 = vmatpush.xpose.msra.mxu0 0.0
    %1902 = vmatpush.xpose.msra.mxu0 0.0
    %1903 = vmatpush.xpose.msra.mxu0 0.0
    %1904 = vmatpush.xpose.msra.mxu0 0.0
    %1905 = vmatpush.xpose.msra.mxu0 0.0
    %1906 = vmatpush.xpose.msra.mxu0 0.0
    %1907 = vmatpush.xpose.msra.mxu0 %v1890
    %1908 = vmatmul.f32.gmra.mxu0 %v1888
    %v1909 = vpop.f32.mrf.mxu0
    %v1910 = vadd.f32 0.0, %v1909
    %1911 = vdwg.mxu0
    %v1912 = vsel %vm1440, %v1882, -1e+09
    %v1913 = vsel %vm1441, %v1910, -1e+09
    %v1914 = vsel %vm487, %v1912, -inf
    %1915 = vmax.xlane.f32.xlu0 %v1914
    %v1916 = vpop.xlane.xlu0 %1915
    %v1917 = vsel %vm487, %v1913, -inf
    %1918 = vmax.xlane.f32.xlu0 %v1917
    %v1919 = vpop.xlane.xlu0 %1918
    %v1920 = vsub.f32 %v1912, %v1916
    %v1921 = vsub.f32 %v1913, %v1919
    %v1922 = vmul.f32 %v1920, 1.442695
    %v1923 = vpow.pop %v1922
    %v1924 = vmul.f32 %v1921, 1.442695
    %v1925 = vpow.pop %v1924
    %v1926 = vsel %vm487, %v1923, 0.0
    %1927 = vadd.xlane.f32.xlu0 %v1926
    %v1928 = vpop.xlane.xlu0 %1927
    %v1929 = vsel %vm487, %v1925, 0.0
    %1930 = vadd.xlane.f32.xlu0 %v1929
    %v1931 = vpop.xlane.xlu0 %1930
    %v1932 = vrcp.pop %v1928
    %v1933 = vmul.f32 %v1928, %v1932
    %v1934 = vsub.f32 1.0, %v1933
    %v1935 = vmul.f32 %v1932, %v1934
    %v1936 = vadd.f32 %v1932, %v1935
    %vm1937 = vweird.f32 %v1928
    %vm1938 = vweird.f32 %v1932
    %vm1939 = vmor %vm1937, %vm1938
    %v1940 = vsel %vm1939, %v1932, %v1936
    %v1941 = vand.u32 2147483647, %v1928
    %vm1942 = vcmp.eq.f32.partialorder %v1941, 8.507059e+37
    %v1943 = vand.u32 %v1928, 2147483648
    %v1944 = vor.u32 1.1754944e-38, %v1943
    %v1945 = vsel %vm1942, %v1944, %v1940
    %v1946 = vmul.f32 %v1923, %v1945
    %v1947 = vrcp.pop %v1931
    %v1948 = vmul.f32 %v1931, %v1947
    %v1949 = vsub.f32 1.0, %v1948
    %v1950 = vmul.f32 %v1947, %v1949
    %v1951 = vadd.f32 %v1947, %v1950
    %vm1952 = vweird.f32 %v1931
    %vm1953 = vweird.f32 %v1947
    %vm1954 = vmor %vm1952, %vm1953
    %v1955 = vsel %vm1954, %v1947, %v1951
    %v1956 = vand.u32 2147483647, %v1931
    %vm1957 = vcmp.eq.f32.partialorder %v1956, 8.507059e+37
    %v1958 = vand.u32 %v1931, 2147483648
    %v1959 = vor.u32 1.1754944e-38, %v1958
    %v1960 = vsel %vm1957, %v1959, %v1955
    %v1961 = vmul.f32 %v1925, %v1960
    %1962 = vrot.lane.b32.xlu0 %v1379, 104
    %v1963 = vpop.permute.xlu0 %1962
    %v1966 = vsel %vm487, %v1946, 0
    %1968 = vmatpush.msra.mxu0 0.0
    %1969 = vmatpush.msra.mxu0 0.0
    %1970 = vmatpush.msra.mxu0 0.0
    %1971 = vmatpush.msra.mxu0 0.0
    %1972 = vmatpush.msra.mxu0 0.0
    %1973 = vmatpush.msra.mxu0 0.0
    %1974 = vmatpush.msra.mxu0 0.0
    %1975 = vmatpush.msra.mxu0 0.0
    %1976 = vmatpush.msra.mxu0 0.0
    %1977 = vmatpush.msra.mxu0 0.0
    %1978 = vmatpush.msra.mxu0 0.0
    %1979 = vmatpush.msra.mxu0 0.0
    %1980 = vmatpush.msra.mxu0 0.0
    %1981 = vmatpush.msra.mxu0 0.0
    %1982 = vmatpush.msra.mxu0 0.0
    %1983 = vmatpush.msra.mxu0 %v1963
    %1984 = vmatmul.f32.gmra.mxu0 %v1966
    %v1985 = vpop.f32.mrf.mxu0
    %v1986 = vadd.f32 0.0, %v1985
    %1987 = vdwg.mxu0
    %1988 = vrot.lane.b32.xlu0 %v1382, 104
    %v1989 = vpop.permute.xlu0 %1988
    %v1992 = vsel %vm487, %v1961, 0
    %1994 = vmatpush.msra.mxu0 0.0
    %1995 = vmatpush.msra.mxu0 0.0
    %1996 = vmatpush.msra.mxu0 0.0
    %1997 = vmatpush.msra.mxu0 0.0
    %1998 = vmatpush.msra.mxu0 0.0
    %1999 = vmatpush.msra.mxu0 0.0
    %2000 = vmatpush.msra.mxu0 0.0
    %2001 = vmatpush.msra.mxu0 0.0
    %2002 = vmatpush.msra.mxu0 0.0
    %2003 = vmatpush.msra.mxu0 0.0
    %2004 = vmatpush.msra.mxu0 0.0
    %2005 = vmatpush.msra.mxu0 0.0
    %2006 = vmatpush.msra.mxu0 0.0
    %2007 = vmatpush.msra.mxu0 0.0
    %2008 = vmatpush.msra.mxu0 0.0
    %2009 = vmatpush.msra.mxu0 %v1989
    %2010 = vmatmul.f32.gmra.mxu0 %v1992
    %v2011 = vpop.f32.mrf.mxu0
    %v2012 = vadd.f32 0.0, %v2011
    %2013 = vdwg.mxu0
    %2016 = vrot.lane.b32.xlu0 %v1669, 8
    %v2017 = vpop.permute.xlu0 %2016
    %2018 = vrot.lane.b32.xlu0 %v1696, 8
    %v2019 = vpop.permute.xlu0 %2018
    %2024 = vrot.lane.b32.xlu0 %v1828, 16
    %v2025 = vpop.permute.xlu0 %2024
    %2026 = vrot.lane.b32.xlu0 %v1854, 16
    %v2027 = vpop.permute.xlu0 %2026
    %2032 = vrot.lane.b32.xlu0 %v1986, 24
    %v2033 = vpop.permute.xlu0 %2032
    %2034 = vrot.lane.b32.xlu0 %v2012, 24
    %v2035 = vpop.permute.xlu0 %2034
    %v2038 = vsel %vm487, %v1513, %v2017
    %v2039 = vsel %vm487, %v1536, %v2019
    %v2040 = vsel %vm1144, %v2038, %v2025
    %v2041 = vsel %vm1144, %v2039, %v2027
    %v2042 = vsel %vm1147, %v2040, %v2033
    %v2043 = vsel %vm1147, %v2041, %v2035
    %v2044 = vld [vmem:[#allocation16] sm:$0xff]
    %v2045 = vld [vmem:[#allocation16 + $0x8] sm:$0xff]
    %v2046 = vld [vmem:[#allocation16 + $0x10] sm:$0xff]
    %v2047 = vld [vmem:[#allocation16 + $0x18] sm:$0xff]
    %v2048 = vld [vmem:[%s51] sm:$0x1]
    %v2050 = vperm.slane %v2048, 0
    %v2053 = vsel %vm299, %v2042, 0
    %v2056 = vsel %vm299, %v2043, 0
    %2058 = vmatpush.msra.mxu0 0.0
    %2059 = vmatpush.msra.mxu0 0.0
    %2060 = vmatpush.msra.mxu0 0.0
    %2061 = vmatpush.msra.mxu0 0.0
    %2062 = vmatpush.msra.mxu0 0.0
    %2063 = vmatpush.msra.mxu0 0.0
    %2064 = vmatpush.msra.mxu0 0.0
    %2065 = vmatpush.msra.mxu0 0.0
    %2066 = vmatpush.msra.mxu0 0.0
    %2067 = vmatpush.msra.mxu0 0.0
    %2068 = vmatpush.msra.mxu0 0.0
    %2069 = vmatpush.msra.mxu0 0.0
    %2070 = vmatpush.msra.mxu0 %v2047
    %2071 = vmatpush.msra.mxu0 %v2046
    %2072 = vmatpush.msra.mxu0 %v2045
    %2073 = vmatpush.msra.mxu0 %v2044
    %2074 = vmatmul.f32.gmra.mxu0 %v2053
    %v2075 = vpop.f32.mrf.mxu0
    %v2076 = vadd.f32 %v2050, %v2075
    %2077 = vmatmul.f32.gmra.mxu0 %v2056
    %v2078 = vpop.f32.mrf.mxu0
    %v2079 = vadd.f32 %v2050, %v2078
    %2080 = vdwg.mxu0
    %v2081 = vadd.f32 %v1187, %v2076
    %v2082 = vadd.f32 %v1188, %v2079
    %v2083 = vld [vmem:[%s17] sm:$0x1]
    %v2084 = vld [vmem:[%s19] sm:$0x1]
    %v2085 = vsel %vm299, %v2081, 0.0
    %2086 = vadd.xlane.f32.xlu0 %v2085
    %v2087 = vpop.xlane.xlu0 %2086
    %v2088 = vsel %vm299, %v2082, 0.0
    %2089 = vadd.xlane.f32.xlu0 %v2088
    %v2090 = vpop.xlane.xlu0 %2089
    %v2091 = vmul.f32 %v2087, 0.03125
    %v2092 = vmul.f32 %v2090, 0.03125
    %v2093 = vsub.f32 %v2081, %v2091
    %v2094 = vsub.f32 %v2082, %v2092
    %v2095 = vmul.f32 %v2093, %v2093
    %v2096 = vmul.f32 %v2094, %v2094
    %v2097 = vsel %vm299, %v2095, 0.0
    %2098 = vadd.xlane.f32.xlu0 %v2097
    %v2099 = vpop.xlane.xlu0 %2098
    %v2100 = vsel %vm299, %v2096, 0.0
    %2101 = vadd.xlane.f32.xlu0 %v2100
    %v2102 = vpop.xlane.xlu0 %2101
    %v2103 = vmul.f32 %v2099, 0.032258064
    %v2104 = vmul.f32 %v2102, 0.032258064
    %v2105 = vrsqrt.pop %v2103
    %v2106 = vmul.f32 %v2105, %v2103
    %v2107 = vmul.f32 %v2106, %v2105
    %v2108 = vmul.f32 0.5, %v2107
    %v2109 = vsub.f32 1.5, %v2108
    %v2110 = vmul.f32 %v2105, %v2109
    %v2111 = vmul.f32 %v2103, %v2110
    %vm2112 = vcmp.eq.f32.partialorder %v2103, inf
    %v2113 = vsel %vm2112, %v2103, %v2111
    %vm2114 = vcmp.eq.f32.partialorder %v2103, 0.0
    %v2115 = vand.u32 %v2103, 2147483648
    %v2116 = vsel %vm2114, %v2115, %v2113
    %v2117 = vrsqrt.pop %v2104
    %v2118 = vmul.f32 %v2117, %v2104
    %v2119 = vmul.f32 %v2118, %v2117
    %v2120 = vmul.f32 0.5, %v2119
    %v2121 = vsub.f32 1.5, %v2120
    %v2122 = vmul.f32 %v2117, %v2121
    %v2123 = vmul.f32 %v2104, %v2122
    %vm2124 = vcmp.eq.f32.partialorder %v2104, inf
    %v2125 = vsel %vm2124, %v2104, %v2123
    %vm2126 = vcmp.eq.f32.partialorder %v2104, 0.0
    %v2127 = vand.u32 %v2104, 2147483648
    %v2128 = vsel %vm2126, %v2127, %v2125
    %v2130 = vperm.slane %v2083, 0
    %v2132 = vmul.f32 %v2130, %v2093
    %v2133 = vmul.f32 %v2130, %v2094
    %v2134 = vadd.f32 %v2116, 1e-06
    %v2135 = vadd.f32 %v2128, 1e-06
    %v2136 = vrcp.pop %v2134
    %v2137 = vmul.f32 %v2134, %v2136
    %v2138 = vsub.f32 1.0, %v2137
    %v2139 = vmul.f32 %v2136, %v2138
    %v2140 = vadd.f32 %v2136, %v2139
    %vm2141 = vweird.f32 %v2134
    %vm2142 = vweird.f32 %v2136
    %vm2143 = vmor %vm2141, %vm2142
    %v2144 = vsel %vm2143, %v2136, %v2140
    %v2145 = vand.u32 2147483647, %v2134
    %vm2146 = vcmp.eq.f32.partialorder %v2145, 8.507059e+37
    %v2147 = vand.u32 %v2134, 2147483648
    %v2148 = vor.u32 1.1754944e-38, %v2147
    %v2149 = vsel %vm2146, %v2148, %v2144
    %v2150 = vmul.f32 %v2132, %v2149
    %v2151 = vrcp.pop %v2135
    %v2152 = vmul.f32 %v2135, %v2151
    %v2153 = vsub.f32 1.0, %v2152
    %v2154 = vmul.f32 %v2151, %v2153
    %v2155 = vadd.f32 %v2151, %v2154
    %vm2156 = vweird.f32 %v2135
    %vm2157 = vweird.f32 %v2151
    %vm2158 = vmor %vm2156, %vm2157
    %v2159 = vsel %vm2158, %v2151, %v2155
    %v2160 = vand.u32 2147483647, %v2135
    %vm2161 = vcmp.eq.f32.partialorder %v2160, 8.507059e+37
    %v2162 = vand.u32 %v2135, 2147483648
    %v2163 = vor.u32 1.1754944e-38, %v2162
    %v2164 = vsel %vm2161, %v2163, %v2159
    %v2165 = vmul.f32 %v2133, %v2164
    %v2167 = vperm.slane %v2084, 0
    %v2169 = vadd.f32 %v2150, %v2167
    %v2170 = vadd.f32 %v2165, %v2167
    %v2171 = vld [vmem:[#allocation17] sm:$0xff]
    %v2172 = vld [vmem:[#allocation17 + $0x8] sm:$0xff]
    %v2173 = vld [vmem:[#allocation17 + $0x10] sm:$0xff]
    %v2174 = vld [vmem:[#allocation17 + $0x18] sm:$0xff]
    %v2175 = vld [vmem:[%s55] sm:$0x1]
    %v2177 = vperm.slane %v2175, 0
    %v2180 = vsel %vm299, %v2169, 0
    %v2183 = vsel %vm299, %v2170, 0
    %2185 = vmatpush.msra.mxu0 0.0
    %2186 = vmatpush.msra.mxu0 0.0
    %2187 = vmatpush.msra.mxu0 0.0
    %2188 = vmatpush.msra.mxu0 0.0
    %2189 = vmatpush.msra.mxu0 0.0
    %2190 = vmatpush.msra.mxu0 0.0
    %2191 = vmatpush.msra.mxu0 0.0
    %2192 = vmatpush.msra.mxu0 0.0
    %2193 = vmatpush.msra.mxu0 0.0
    %2194 = vmatpush.msra.mxu0 0.0
    %2195 = vmatpush.msra.mxu0 0.0
    %2196 = vmatpush.msra.mxu0 0.0
    %2197 = vmatpush.msra.mxu0 %v2174
    %2198 = vmatpush.msra.mxu0 %v2173
    %2199 = vmatpush.msra.mxu0 %v2172
    %2200 = vmatpush.msra.mxu0 %v2171
    %2201 = vmatmul.f32.gmra.mxu0 %v2180
    %v2202 = vpop.f32.mrf.mxu0
    %v2203 = vadd.f32 %v2177, %v2202
    %2204 = vmatmul.f32.gmra.mxu0 %v2183
    %v2205 = vpop.f32.mrf.mxu0
    %v2206 = vadd.f32 %v2177, %v2205
    %2207 = vdwg.mxu0
    %v2208 = vmax.f32 %v2203, 0.0
    %v2209 = vmax.f32 %v2206, 0.0
    %v2210 = vld [vmem:[%s57] sm:$0xff]
    %v2211 = vld [vmem:[%s57 + $0x8] sm:$0xff]
    %v2212 = vld [vmem:[%s57 + $0x10] sm:$0xff]
    %v2213 = vld [vmem:[%s57 + $0x18] sm:$0xff]
    %v2214 = vld [vmem:[%s57 + $0x20] sm:$0xff]
    %v2215 = vld [vmem:[%s57 + $0x28] sm:$0xff]
    %v2216 = vld [vmem:[%s57 + $0x30] sm:$0xff]
    %v2217 = vld [vmem:[%s57 + $0x38] sm:$0xff]
    %v2218 = vld [vmem:[%s59] sm:$0x1]
    %v2220 = vperm.slane %v2218, 0
    %vm2222 = vcmask 523264
    %v2224 = vsel %vm2222, %v2208, 0
    %v2227 = vsel %vm2222, %v2209, 0
    %2229 = vmatpush.msra.mxu0 0.0
    %2230 = vmatpush.msra.mxu0 0.0
    %2231 = vmatpush.msra.mxu0 0.0
    %2232 = vmatpush.msra.mxu0 0.0
    %2233 = vmatpush.msra.mxu0 0.0
    %2234 = vmatpush.msra.mxu0 0.0
    %2235 = vmatpush.msra.mxu0 0.0
    %2236 = vmatpush.msra.mxu0 0.0
    %2237 = vmatpush.msra.mxu0 %v2217
    %2238 = vmatpush.msra.mxu0 %v2216
    %2239 = vmatpush.msra.mxu0 %v2215
    %2240 = vmatpush.msra.mxu0 %v2214
    %2241 = vmatpush.msra.mxu0 %v2213
    %2242 = vmatpush.msra.mxu0 %v2212
    %2243 = vmatpush.msra.mxu0 %v2211
    %2244 = vmatpush.msra.mxu0 %v2210
    %2245 = vmatmul.f32.gmra.mxu0 %v2224
    %v2246 = vpop.f32.mrf.mxu0
    %v2247 = vadd.f32 %v2220, %v2246
    %2248 = vmatmul.f32.gmra.mxu0 %v2227
    %v2249 = vpop.f32.mrf.mxu0
    %v2250 = vadd.f32 %v2220, %v2249
    %2251 = vdwg.mxu0
    %v2252 = vadd.f32 %v2081, %v2247
    %v2253 = vadd.f32 %v2082, %v2250
    %2254 = vst.msk [vmem:[#allocation19] sm:$0xff] %vm299, %v2252
    %2255 = vst.msk [vmem:[#allocation19 + $0x8] sm:$0xff] %vm299, %v2253
    // Predicated region
    $region162: #{tpu_custom_call.1} parent=1 // pred_check
      _
    $region163: #{tpu_custom_call.1} parent=1 // pred_check_branch
      %2257 = sbr.rel (0) target = $region165
    $region164: #{tpu_custom_call.1} parent=1 // pred_region
      %2259 = vsyncadd [#allocation4], 0
      %s2260 = sshll.u32 [#allocation19], 4
      %s2261 = int_to_ptr.vmem [resolvable:$true] %s2260
      %s2262 = sshll.u32 %s61, 4
      %s2263 = int_to_ptr.hbm [resolvable:$true] %s2262
      %2268 = dma.vmem_to_hbm [thread:$0]  %s2261, 256, %s2263, [#allocation4], 128, 128, 8
    $region165: #{tpu_custom_call.1} parent=1 // pred_fallthru
      _
    // Predicated region
    $region166: #{tpu_custom_call.1} parent=1 // pred_check
      _
    $region167: #{tpu_custom_call.1} parent=1 // pred_check_branch
      %2270 = sbr.rel (0) target = $region169
    $region168: #{tpu_custom_call.1} parent=1 // pred_region
      %2272 = dma.done [#allocation4], 256
    $region169: #{tpu_custom_call.1} parent=1 // pred_fallthru
      _
    %2273 = vsyncpa [#allocation3], 1
    %2274 = vsyncpa [#allocation6], 1
    %2275 = vsyncpa [#allocation9], 1
    %2276 = vsyncpa [#allocation12], 1
    %2277 = vsyncpa [#allocation15], 1
    %2278 = vsyncpa [#allocation18], 1
    %2279 = vsyncpa [#allocation4], 1

</llo_original>
